<compile_context>
chip_gen: v7x
topology: tpu7x:2x2x1
jax: 0.10.0
libtpu: 0.0.40
codegen_flags: <defaults>
</compile_context>

<pallas_src>
import math
from functools import partial

import jax
import jax.numpy as jnp
import numpy as np
from jax import lax
from jax.experimental import pallas as pl
from jax.experimental.pallas import tpu as pltpu


# ----------------------------------------------------------------------------
# Compile-time (numpy) operator construction
# ----------------------------------------------------------------------------
def _np_gaussian_1d(kernel_size: int, sigma: float) -> np.ndarray:
    ax = np.arange(kernel_size, dtype=np.float64) - (kernel_size - 1) / 2.0
    g = np.exp(-0.5 * (ax / sigma) ** 2)
    return g / g.sum()


def _np_blur_matrix(n: int, g: np.ndarray, pad: int) -> np.ndarray:
    """(n, n) matrix M with M[i, j] = g[j - i + pad] (zero-padded conv2d)."""
    k = g.shape[0]
    i = np.arange(n)[:, None]
    j = np.arange(n)[None, :]
    a = j - i + pad
    m = np.zeros((n, n), dtype=np.float64)
    valid = (a >= 0) & (a < k)
    m[valid] = g[a[valid]]
    return m


def _np_resize_matrix(n_in: int, n_out: int) -> np.ndarray:
    """(n_out, n_in) bilinear interpolation matrix, align_corners=False."""
    scale = n_in / n_out
    dst = np.arange(n_out, dtype=np.float64)
    src = np.maximum(scale * (dst + 0.5) - 0.5, 0.0)
    i0 = np.minimum(np.floor(src).astype(np.int64), n_in - 1)
    lam = src - i0
    i1 = np.minimum(i0 + 1, n_in - 1)
    m = np.zeros((n_out, n_in), dtype=np.float64)
    rows = np.arange(n_out)
    np.add.at(m, (rows, i0), 1.0 - lam)
    np.add.at(m, (rows, i1), lam)
    return m


def _build_level_operators(H, W, max_levels, kernel_size, sigma):
    """Composite downsample (blur folded in) + upsample operators per level."""
    pad = kernel_size // 2
    g = _np_gaussian_1d(kernel_size, sigma)
    shapes = [(H, W)]
    ops = []
    h, w = H, W
    for _ in range(max_levels):
        h2 = int(math.floor(h * 0.5))      # recompute_scale_factor=True
        w2 = int(math.floor(w * 0.5))
        bh = _np_blur_matrix(h, g, pad)
        bw = _np_blur_matrix(w, g, pad)
        rh = _np_resize_matrix(h, h2)
        rw = _np_resize_matrix(w, w2)
        uh = _np_resize_matrix(h2, h)
        uw = _np_resize_matrix(w2, w)
        A_h = (rh @ bh).astype(np.float32)         # (h2, h): down = A_h @ x @ A_wT
        A_wT = (bw.T @ rw.T).astype(np.float32)    # (w, w2)
        U_h = uh.astype(np.float32)                # (h, h2): up = U_h @ d @ U_wT
        U_wT = uw.T.astype(np.float32)             # (w2, w)
        ops.extend([A_h, A_wT, U_h, U_wT])
        shapes.append((h2, w2))
        h, w = h2, w2
    return shapes, ops


def _pick_tile_bc(bc: int, target: int = 8) -> int:
    t = min(bc, target)
    while bc % t != 0:
        t -= 1
    return t


# ----------------------------------------------------------------------------
# In-kernel helpers (tile = planes per grid step)
# ----------------------------------------------------------------------------
def _apply_cols(x, m, tile, rows, c_in, c_out):
    """x: (tile, rows, c_in) times m: (c_in, c_out) -> (tile, rows, c_out)."""
    if rows % 8 == 0:
        # One MXU-sized matmul over all planes of the tile (layout-trivial
        # reshape since `rows` is sublane aligned).
        y = jnp.dot(x.reshape(tile * rows, c_in), m,
                    preferred_element_type=jnp.float32)
        return y.reshape(tile, rows, c_out)
    mb = jnp.broadcast_to(m[None, :, :], (tile, c_in, c_out))
    return lax.dot_general(x, mb, (((2,), (1,)), ((0,), (0,))),
                           preferred_element_type=jnp.float32)


def _apply_rows(x, m, tile, r_in, r_out, cols):
    """m: (r_out, r_in) left-applied per plane of x: (tile, r_in, cols)."""
    mb = jnp.broadcast_to(m[None, :, :], (tile, r_out, r_in))
    return lax.dot_general(mb, x, (((2,), (1,)), ((0,), (0,))),
                           preferred_element_type=jnp.float32)


def _down_and_up(x, A_h, A_wT, U_h, U_wT, tile, h, w, h2, w2):
    t = _apply_cols(x, A_wT, tile, h, w, w2)        # (tile, h, w2)
    d = _apply_rows(t, A_h, tile, h, h2, w2)        # (tile, h2, w2) gaussian next
    u = _apply_rows(d, U_h, tile, h2, h, w2)        # (tile, h, w2)
    u = _apply_cols(u, U_wT, tile, h, w2, w)        # (tile, h, w)   upsampled
    return d, u


def _make_kernel(level_shapes, tile, n_levels):
    def kernel(*refs):
        xin_ref, xtg_ref = refs[0], refs[1]
        op_refs = refs[2:2 + 4 * n_levels]
        out_refs = refs[2 + 4 * n_levels:]

        xi = xin_ref[...]            # (tile, H, W) f32
        xt = xtg_ref[...]

        for l in range(n_levels):
            h, w = level_shapes[l]
            h2, w2 = level_shapes[l + 1]
            A_h = op_refs[4 * l + 0][...]
            A_wT = op_refs[4 * l + 1][...]
            U_h = op_refs[4 * l + 2][...]
            U_wT = op_refs[4 * l + 3][...]

            di, ui = _down_and_up(xi, A_h, A_wT, U_h, U_wT, tile, h, w, h2, w2)
            dt, ut = _down_and_up(xt, A_h, A_wT, U_h, U_wT, tile, h, w, h2, w2)

            # Laplacian difference at this level: (x - up(x)) - (y - up(y)).
            s = jnp.sum(jnp.abs((xi - ui) - (xt - ut)))
            out_refs[l][...] = jnp.full((1, 8, 128), s, dtype=jnp.float32)

            xi, xt = di, dt

        # Final (coarsest) gaussian level L1 term, fused into the same kernel.
        s_last = jnp.sum(jnp.abs(xi - xt))
        out_refs[n_levels][...] = jnp.full((1, 8, 128), s_last, dtype=jnp.float32)

    return kernel


# ----------------------------------------------------------------------------
# Wrapper reproducing LaplacianPyramidLoss.forward
# ----------------------------------------------------------------------------
@partial(jax.jit, static_argnames=("max_levels", "kernel_size", "sigma"))
def laplacian_pyramid_loss(x, y, max_levels: int = 3, kernel_size: int = 5,
                           sigma: float = 1.0):
    B, C, H, W = x.shape
    bc = B * C
    xin = x.reshape(bc, H, W).astype(jnp.float32)
    xtg = y.reshape(bc, H, W).astype(jnp.float32)

    level_shapes, op_mats = _build_level_operators(H, W, max_levels,
                                                   kernel_size, sigma)

    tile = _pick_tile_bc(bc, 8)
    num_tiles = bc // tile

    kernel = _make_kernel(tuple(level_shapes), tile, max_levels)

    in_specs = [
        pl.BlockSpec((tile, H, W), lambda i: (i, 0, 0)),
        pl.BlockSpec((tile, H, W), lambda i: (i, 0, 0)),
    ]
    for m in op_mats:
        in_specs.append(pl.BlockSpec(m.shape, lambda i: (0, 0)))

    n_out = max_levels + 1
    out_shape = tuple(jax.ShapeDtypeStruct((num_tiles, 8, 128), jnp.float32)
                      for _ in range(n_out))
    out_specs = tuple(pl.BlockSpec((1, 8, 128), lambda i: (i, 0, 0))
                      for _ in range(n_out))

    partial_sums = pl.pallas_call(
        kernel,
        out_shape=out_shape,
        grid_spec=pltpu.PrefetchScalarGridSpec(
            num_scalar_prefetch=0,
            grid=(num_tiles,),
            in_specs=in_specs,
            out_specs=out_specs,
        ),
        compiler_params=pltpu.CompilerParams(
            dimension_semantics=("parallel",),   # disjoint per-tile outputs
            vmem_limit_bytes=32 * 1024 * 1024,
        ),
    )(xin, xtg, *[jnp.asarray(m) for m in op_mats])

    # Cross-tile reduction + per-level mean normalization (F.l1_loss mean).
    loss = jnp.float32(0.0)
    for l in range(max_levels):
        hl, wl = level_shapes[l]
        loss = loss + jnp.sum(partial_sums[l][:, 0, 0]) / (bc * hl * wl)
    hL, wL = level_shapes[-1]
    loss = loss + jnp.sum(partial_sums[-1][:, 0, 0]) / (bc * hL * wL)
    return loss


# ----------------------------------------------------------------------------
# Pure-JAX reference (non-composited operators, plain einsum) for sanity check.
# ----------------------------------------------------------------------------
def _reference_loss(x, y, max_levels=3, kernel_size=5, sigma=1.0):
    B, C, H, W = x.shape
    pad = kernel_size // 2
    g = _np_gaussian_1d(kernel_size, sigma)
    xi = x.reshape(B * C, H, W).astype(jnp.float32)
    yi = y.reshape(B * C, H, W).astype(jnp.float32)
    loss = jnp.float32(0.0)
    h, w = H, W
    for _ in range(max_levels):
        h2, w2 = h // 2, w // 2
        bh = jnp.asarray(_np_blur_matrix(h, g, pad), jnp.float32)
        bw = jnp.asarray(_np_blur_matrix(w, g, pad), jnp.float32)
        dh = jnp.asarray(_np_resize_matrix(h, h2), jnp.float32)
        dw = jnp.asarray(_np_resize_matrix(w, w2), jnp.float32)
        uh = jnp.asarray(_np_resize_matrix(h2, h), jnp.float32)
        uw = jnp.asarray(_np_resize_matrix(w2, w), jnp.float32)
        apply = lambda ml, z, mr: jnp.einsum('ij,bjk,lk->bil', ml, z, mr)
        bi, bt = apply(bh, xi, bw), apply(bh, yi, bw)
        di, dt = apply(dh, bi, dw), apply(dh, bt, dw)
        ui, ut = apply(uh, di, uw), apply(uh, dt, uw)
        loss = loss + jnp.mean(jnp.abs((xi - ui) - (yi - ut)))
        xi, yi, h, w = di, dt, h2, w2
    return loss + jnp.mean(jnp.abs(xi - yi))


if __name__ == "__main__":
    key = jax.random.PRNGKey(0)
    k1, k2 = jax.random.split(key)
    x = jax.random.uniform(k1, (2, 4, 16, 16), dtype=jnp.float32)
    y = jax.random.uniform(k2, (2, 4, 16, 16), dtype=jnp.float32)

    loss = laplacian_pyramid_loss(x, y, max_levels=3, kernel_size=5, sigma=1.0)
    loss = jax.block_until_ready(loss)

    ref = jax.block_until_ready(_reference_loss(x, y))
    np.testing.assert_allclose(np.asarray(loss), np.asarray(ref),
                               rtol=1e-3, atol=1e-5)
    print("KERNEL_OK")
</pallas_src>

<mosaic_0001>
module attributes {stable_mosaic.version = 11 : i64} {
  func.func @kernel(%arg0: i32, %arg1: memref<8x16x16xf32, #tpu.memory_space<vmem>>, %arg2: memref<8x16x16xf32, #tpu.memory_space<vmem>>, %arg3: memref<8x16xf32, #tpu.memory_space<vmem>>, %arg4: memref<16x8xf32, #tpu.memory_space<vmem>>, %arg5: memref<16x8xf32, #tpu.memory_space<vmem>>, %arg6: memref<8x16xf32, #tpu.memory_space<vmem>>, %arg7: memref<4x8xf32, #tpu.memory_space<vmem>>, %arg8: memref<8x4xf32, #tpu.memory_space<vmem>>, %arg9: memref<8x4xf32, #tpu.memory_space<vmem>>, %arg10: memref<4x8xf32, #tpu.memory_space<vmem>>, %arg11: memref<2x4xf32, #tpu.memory_space<vmem>>, %arg12: memref<4x2xf32, #tpu.memory_space<vmem>>, %arg13: memref<4x2xf32, #tpu.memory_space<vmem>>, %arg14: memref<2x4xf32, #tpu.memory_space<vmem>>, %arg15: memref<1x8x128xf32, #tpu.memory_space<vmem>>, %arg16: memref<1x8x128xf32, #tpu.memory_space<vmem>>, %arg17: memref<1x8x128xf32, #tpu.memory_space<vmem>>, %arg18: memref<1x8x128xf32, #tpu.memory_space<vmem>>) attributes {dimension_semantics = [#tpu.dimension_semantics<parallel>], iteration_bounds = array<i64: 1>, scalar_prefetch = 0 : i64, scratch_operands = 0 : i64, tpu.core_type = #tpu.core_type<tc>, window_params = [{transform_indices = @transform_0, window_bounds = array<i64: 8, 16, 16>}, {transform_indices = @transform_1, window_bounds = array<i64: 8, 16, 16>}, {pipeline_mode = #tpu.pipeline_mode<synchronous>, transform_indices = @transform_2, window_bounds = array<i64: 8, 16>}, {pipeline_mode = #tpu.pipeline_mode<synchronous>, transform_indices = @transform_3, window_bounds = array<i64: 16, 8>}, {pipeline_mode = #tpu.pipeline_mode<synchronous>, transform_indices = @transform_4, window_bounds = array<i64: 16, 8>}, {pipeline_mode = #tpu.pipeline_mode<synchronous>, transform_indices = @transform_5, window_bounds = array<i64: 8, 16>}, {pipeline_mode = #tpu.pipeline_mode<synchronous>, transform_indices = @transform_6, window_bounds = array<i64: 4, 8>}, {pipeline_mode = #tpu.pipeline_mode<synchronous>, transform_indices = @transform_7, window_bounds = array<i64: 8, 4>}, {pipeline_mode = #tpu.pipeline_mode<synchronous>, transform_indices = @transform_8, window_bounds = array<i64: 8, 4>}, {pipeline_mode = #tpu.pipeline_mode<synchronous>, transform_indices = @transform_9, window_bounds = array<i64: 4, 8>}, {pipeline_mode = #tpu.pipeline_mode<synchronous>, transform_indices = @transform_10, window_bounds = array<i64: 2, 4>}, {pipeline_mode = #tpu.pipeline_mode<synchronous>, transform_indices = @transform_11, window_bounds = array<i64: 4, 2>}, {pipeline_mode = #tpu.pipeline_mode<synchronous>, transform_indices = @transform_12, window_bounds = array<i64: 4, 2>}, {pipeline_mode = #tpu.pipeline_mode<synchronous>, transform_indices = @transform_13, window_bounds = array<i64: 2, 4>}, {transform_indices = @transform_14, window_bounds = array<i64: 1, 8, 128>}, {transform_indices = @transform_15, window_bounds = array<i64: 1, 8, 128>}, {transform_indices = @transform_16, window_bounds = array<i64: 1, 8, 128>}, {transform_indices = @transform_17, window_bounds = array<i64: 1, 8, 128>}]} {
    %c0 = arith.constant 0 : index
    %c0_0 = arith.constant 0 : index
    %c0_1 = arith.constant 0 : index
    %0 = vector.load %arg1[%c0, %c0_0, %c0_1] : memref<8x16x16xf32, #tpu.memory_space<vmem>>, vector<8x16x16xf32>
    %c0_2 = arith.constant 0 : index
    %c0_3 = arith.constant 0 : index
    %c0_4 = arith.constant 0 : index
    %1 = vector.load %arg2[%c0_2, %c0_3, %c0_4] : memref<8x16x16xf32, #tpu.memory_space<vmem>>, vector<8x16x16xf32>
    %c0_5 = arith.constant 0 : index
    %c0_6 = arith.constant 0 : index
    %2 = vector.load %arg3[%c0_5, %c0_6] : memref<8x16xf32, #tpu.memory_space<vmem>>, vector<8x16xf32>
    %c0_7 = arith.constant 0 : index
    %c0_8 = arith.constant 0 : index
    %3 = vector.load %arg4[%c0_7, %c0_8] : memref<16x8xf32, #tpu.memory_space<vmem>>, vector<16x8xf32>
    %c0_9 = arith.constant 0 : index
    %c0_10 = arith.constant 0 : index
    %4 = vector.load %arg5[%c0_9, %c0_10] : memref<16x8xf32, #tpu.memory_space<vmem>>, vector<16x8xf32>
    %c0_11 = arith.constant 0 : index
    %c0_12 = arith.constant 0 : index
    %5 = vector.load %arg6[%c0_11, %c0_12] : memref<8x16xf32, #tpu.memory_space<vmem>>, vector<8x16xf32>
    %6 = vector.shape_cast %0 : vector<8x16x16xf32> to vector<128x16xf32>
    %cst = arith.constant dense<0.000000e+00> : vector<128x8xf32>
    %7 = tpu.matmul %6, %3, %cst {dimension_numbers = #tpu.dot_dimension_numbers<[1], [0], [0], [1], [0, 0, 1, 1], [], []>} : vector<128x16xf32>, vector<16x8xf32>, vector<128x8xf32> -> vector<128x8xf32>
    %8 = vector.shape_cast %7 : vector<128x8xf32> to vector<8x16x8xf32>
    %9 = vector.shape_cast %2 : vector<8x16xf32> to vector<1x8x16xf32>
    %10 = vector.shape_cast %9 : vector<1x8x16xf32> to vector<1x8x16xf32>
    %11 = vector.broadcast %10 : vector<1x8x16xf32> to vector<8x8x16xf32>
    %cst_13 = arith.constant dense<0.000000e+00> : vector<8x8x8xf32>
    %12 = tpu.matmul %11, %8, %cst_13 {dimension_numbers = #tpu.dot_dimension_numbers<[2], [1], [1], [2], [0, 0, 0, 1, 1, 2], [0], [0]>} : vector<8x8x16xf32>, vector<8x16x8xf32>, vector<8x8x8xf32> -> vector<8x8x8xf32>
    %13 = vector.shape_cast %4 : vector<16x8xf32> to vector<1x16x8xf32>
    %14 = vector.shape_cast %13 : vector<1x16x8xf32> to vector<1x16x8xf32>
    %15 = vector.broadcast %14 : vector<1x16x8xf32> to vector<8x16x8xf32>
    %cst_14 = arith.constant dense<0.000000e+00> : vector<8x16x8xf32>
    %16 = tpu.matmul %15, %12, %cst_14 {dimension_numbers = #tpu.dot_dimension_numbers<[2], [1], [1], [2], [0, 0, 0, 1, 1, 2], [0], [0]>} : vector<8x16x8xf32>, vector<8x8x8xf32>, vector<8x16x8xf32> -> vector<8x16x8xf32>
    %17 = vector.shape_cast %16 : vector<8x16x8xf32> to vector<128x8xf32>
    %cst_15 = arith.constant dense<0.000000e+00> : vector<128x16xf32>
    %18 = tpu.matmul %17, %5, %cst_15 {dimension_numbers = #tpu.dot_dimension_numbers<[1], [0], [0], [1], [0, 0, 1, 1], [], []>} : vector<128x8xf32>, vector<8x16xf32>, vector<128x16xf32> -> vector<128x16xf32>
    %19 = vector.shape_cast %18 : vector<128x16xf32> to vector<8x16x16xf32>
    %20 = vector.shape_cast %1 : vector<8x16x16xf32> to vector<128x16xf32>
    %cst_16 = arith.constant dense<0.000000e+00> : vector<128x8xf32>
    %21 = tpu.matmul %20, %3, %cst_16 {dimension_numbers = #tpu.dot_dimension_numbers<[1], [0], [0], [1], [0, 0, 1, 1], [], []>} : vector<128x16xf32>, vector<16x8xf32>, vector<128x8xf32> -> vector<128x8xf32>
    %22 = vector.shape_cast %21 : vector<128x8xf32> to vector<8x16x8xf32>
    %23 = vector.shape_cast %2 : vector<8x16xf32> to vector<1x8x16xf32>
    %24 = vector.shape_cast %23 : vector<1x8x16xf32> to vector<1x8x16xf32>
    %25 = vector.broadcast %24 : vector<1x8x16xf32> to vector<8x8x16xf32>
    %cst_17 = arith.constant dense<0.000000e+00> : vector<8x8x8xf32>
    %26 = tpu.matmul %25, %22, %cst_17 {dimension_numbers = #tpu.dot_dimension_numbers<[2], [1], [1], [2], [0, 0, 0, 1, 1, 2], [0], [0]>} : vector<8x8x16xf32>, vector<8x16x8xf32>, vector<8x8x8xf32> -> vector<8x8x8xf32>
    %27 = vector.shape_cast %4 : vector<16x8xf32> to vector<1x16x8xf32>
    %28 = vector.shape_cast %27 : vector<1x16x8xf32> to vector<1x16x8xf32>
    %29 = vector.broadcast %28 : vector<1x16x8xf32> to vector<8x16x8xf32>
    %cst_18 = arith.constant dense<0.000000e+00> : vector<8x16x8xf32>
    %30 = tpu.matmul %29, %26, %cst_18 {dimension_numbers = #tpu.dot_dimension_numbers<[2], [1], [1], [2], [0, 0, 0, 1, 1, 2], [0], [0]>} : vector<8x16x8xf32>, vector<8x8x8xf32>, vector<8x16x8xf32> -> vector<8x16x8xf32>
    %31 = vector.shape_cast %30 : vector<8x16x8xf32> to vector<128x8xf32>
    %cst_19 = arith.constant dense<0.000000e+00> : vector<128x16xf32>
    %32 = tpu.matmul %31, %5, %cst_19 {dimension_numbers = #tpu.dot_dimension_numbers<[1], [0], [0], [1], [0, 0, 1, 1], [], []>} : vector<128x8xf32>, vector<8x16xf32>, vector<128x16xf32> -> vector<128x16xf32>
    %33 = vector.shape_cast %32 : vector<128x16xf32> to vector<8x16x16xf32>
    %34 = arith.subf %0, %19 : vector<8x16x16xf32>
    %35 = arith.subf %1, %33 : vector<8x16x16xf32>
    %36 = arith.subf %34, %35 : vector<8x16x16xf32>
    %37 = math.absf %36 : vector<8x16x16xf32>
    %38 = vector.shape_cast %37 : vector<8x16x16xf32> to vector<1x8x16x16xf32>
    %cst_20 = arith.constant dense<0.000000e+00> : vector<1xf32>
    %39 = vector.multi_reduction <add>, %38, %cst_20 [1, 2, 3] : vector<1x8x16x16xf32> to vector<1xf32>
    %40 = vector.shape_cast %39 : vector<1xf32> to vector<1x1x1x1xf32>
    %41 = vector.extract %40[0, 0, 0, 0] : f32 from vector<1x1x1x1xf32>
    %42 = vector.broadcast %41 : f32 to vector<1x8x128xf32>
    %c0_21 = arith.constant 0 : index
    %c0_22 = arith.constant 0 : index
    %c0_23 = arith.constant 0 : index
    %43 = vector.load %arg15[%c0_21, %c0_22, %c0_23] : memref<1x8x128xf32, #tpu.memory_space<vmem>>, vector<1x8x128xf32>
    tpu.vector_store %arg15[%c0_21, %c0_22, %c0_23], %42 {strides = array<i32>} : memref<1x8x128xf32, #tpu.memory_space<vmem>>, vector<1x8x128xf32>,
    %c0_24 = arith.constant 0 : index
    %c0_25 = arith.constant 0 : index
    %44 = vector.load %arg7[%c0_24, %c0_25] : memref<4x8xf32, #tpu.memory_space<vmem>>, vector<4x8xf32>
    %c0_26 = arith.constant 0 : index
    %c0_27 = arith.constant 0 : index
    %45 = vector.load %arg8[%c0_26, %c0_27] : memref<8x4xf32, #tpu.memory_space<vmem>>, vector<8x4xf32>
    %c0_28 = arith.constant 0 : index
    %c0_29 = arith.constant 0 : index
    %46 = vector.load %arg9[%c0_28, %c0_29] : memref<8x4xf32, #tpu.memory_space<vmem>>, vector<8x4xf32>
    %c0_30 = arith.constant 0 : index
    %c0_31 = arith.constant 0 : index
    %47 = vector.load %arg10[%c0_30, %c0_31] : memref<4x8xf32, #tpu.memory_space<vmem>>, vector<4x8xf32>
    %48 = vector.shape_cast %12 : vector<8x8x8xf32> to vector<64x8xf32>
    %cst_32 = arith.constant dense<0.000000e+00> : vector<64x4xf32>
    %49 = tpu.matmul %48, %45, %cst_32 {dimension_numbers = #tpu.dot_dimension_numbers<[1], [0], [0], [1], [0, 0, 1, 1], [], []>} : vector<64x8xf32>, vector<8x4xf32>, vector<64x4xf32> -> vector<64x4xf32>
    %50 = vector.shape_cast %49 : vector<64x4xf32> to vector<8x8x4xf32>
    %51 = vector.shape_cast %44 : vector<4x8xf32> to vector<1x4x8xf32>
    %52 = vector.shape_cast %51 : vector<1x4x8xf32> to vector<1x4x8xf32>
    %53 = vector.broadcast %52 : vector<1x4x8xf32> to vector<8x4x8xf32>
    %cst_33 = arith.constant dense<0.000000e+00> : vector<8x4x4xf32>
    %54 = tpu.matmul %53, %50, %cst_33 {dimension_numbers = #tpu.dot_dimension_numbers<[2], [1], [1], [2], [0, 0, 0, 1, 1, 2], [0], [0]>} : vector<8x4x8xf32>, vector<8x8x4xf32>, vector<8x4x4xf32> -> vector<8x4x4xf32>
    %55 = vector.shape_cast %46 : vector<8x4xf32> to vector<1x8x4xf32>
    %56 = vector.shape_cast %55 : vector<1x8x4xf32> to vector<1x8x4xf32>
    %57 = vector.broadcast %56 : vector<1x8x4xf32> to vector<8x8x4xf32>
    %cst_34 = arith.constant dense<0.000000e+00> : vector<8x8x4xf32>
    %58 = tpu.matmul %57, %54, %cst_34 {dimension_numbers = #tpu.dot_dimension_numbers<[2], [1], [1], [2], [0, 0, 0, 1, 1, 2], [0], [0]>} : vector<8x8x4xf32>, vector<8x4x4xf32>, vector<8x8x4xf32> -> vector<8x8x4xf32>
    %59 = vector.shape_cast %58 : vector<8x8x4xf32> to vector<64x4xf32>
    %cst_35 = arith.constant dense<0.000000e+00> : vector<64x8xf32>
    %60 = tpu.matmul %59, %47, %cst_35 {dimension_numbers = #tpu.dot_dimension_numbers<[1], [0], [0], [1], [0, 0, 1, 1], [], []>} : vector<64x4xf32>, vector<4x8xf32>, vector<64x8xf32> -> vector<64x8xf32>
    %61 = vector.shape_cast %60 : vector<64x8xf32> to vector<8x8x8xf32>
    %62 = vector.shape_cast %26 : vector<8x8x8xf32> to vector<64x8xf32>
    %cst_36 = arith.constant dense<0.000000e+00> : vector<64x4xf32>
    %63 = tpu.matmul %62, %45, %cst_36 {dimension_numbers = #tpu.dot_dimension_numbers<[1], [0], [0], [1], [0, 0, 1, 1], [], []>} : vector<64x8xf32>, vector<8x4xf32>, vector<64x4xf32> -> vector<64x4xf32>
    %64 = vector.shape_cast %63 : vector<64x4xf32> to vector<8x8x4xf32>
    %65 = vector.shape_cast %44 : vector<4x8xf32> to vector<1x4x8xf32>
    %66 = vector.shape_cast %65 : vector<1x4x8xf32> to vector<1x4x8xf32>
    %67 = vector.broadcast %66 : vector<1x4x8xf32> to vector<8x4x8xf32>
    %cst_37 = arith.constant dense<0.000000e+00> : vector<8x4x4xf32>
    %68 = tpu.matmul %67, %64, %cst_37 {dimension_numbers = #tpu.dot_dimension_numbers<[2], [1], [1], [2], [0, 0, 0, 1, 1, 2], [0], [0]>} : vector<8x4x8xf32>, vector<8x8x4xf32>, vector<8x4x4xf32> -> vector<8x4x4xf32>
    %69 = vector.shape_cast %46 : vector<8x4xf32> to vector<1x8x4xf32>
    %70 = vector.shape_cast %69 : vector<1x8x4xf32> to vector<1x8x4xf32>
    %71 = vector.broadcast %70 : vector<1x8x4xf32> to vector<8x8x4xf32>
    %cst_38 = arith.constant dense<0.000000e+00> : vector<8x8x4xf32>
    %72 = tpu.matmul %71, %68, %cst_38 {dimension_numbers = #tpu.dot_dimension_numbers<[2], [1], [1], [2], [0, 0, 0, 1, 1, 2], [0], [0]>} : vector<8x8x4xf32>, vector<8x4x4xf32>, vector<8x8x4xf32> -> vector<8x8x4xf32>
    %73 = vector.shape_cast %72 : vector<8x8x4xf32> to vector<64x4xf32>
    %cst_39 = arith.constant dense<0.000000e+00> : vector<64x8xf32>
    %74 = tpu.matmul %73, %47, %cst_39 {dimension_numbers = #tpu.dot_dimension_numbers<[1], [0], [0], [1], [0, 0, 1, 1], [], []>} : vector<64x4xf32>, vector<4x8xf32>, vector<64x8xf32> -> vector<64x8xf32>
    %75 = vector.shape_cast %74 : vector<64x8xf32> to vector<8x8x8xf32>
    %76 = arith.subf %12, %61 : vector<8x8x8xf32>
    %77 = arith.subf %26, %75 : vector<8x8x8xf32>
    %78 = arith.subf %76, %77 : vector<8x8x8xf32>
    %79 = math.absf %78 : vector<8x8x8xf32>
    %80 = vector.shape_cast %79 : vector<8x8x8xf32> to vector<1x8x8x8xf32>
    %cst_40 = arith.constant dense<0.000000e+00> : vector<1xf32>
    %81 = vector.multi_reduction <add>, %80, %cst_40 [1, 2, 3] : vector<1x8x8x8xf32> to vector<1xf32>
    %82 = vector.shape_cast %81 : vector<1xf32> to vector<1x1x1x1xf32>
    %83 = vector.extract %82[0, 0, 0, 0] : f32 from vector<1x1x1x1xf32>
    %84 = vector.broadcast %83 : f32 to vector<1x8x128xf32>
    %c0_41 = arith.constant 0 : index
    %c0_42 = arith.constant 0 : index
    %c0_43 = arith.constant 0 : index
    %85 = vector.load %arg16[%c0_41, %c0_42, %c0_43] : memref<1x8x128xf32, #tpu.memory_space<vmem>>, vector<1x8x128xf32>
    tpu.vector_store %arg16[%c0_41, %c0_42, %c0_43], %84 {strides = array<i32>} : memref<1x8x128xf32, #tpu.memory_space<vmem>>, vector<1x8x128xf32>,
    %c0_44 = arith.constant 0 : index
    %c0_45 = arith.constant 0 : index
    %86 = vector.load %arg11[%c0_44, %c0_45] : memref<2x4xf32, #tpu.memory_space<vmem>>, vector<2x4xf32>
    %c0_46 = arith.constant 0 : index
    %c0_47 = arith.constant 0 : index
    %87 = vector.load %arg12[%c0_46, %c0_47] : memref<4x2xf32, #tpu.memory_space<vmem>>, vector<4x2xf32>
    %c0_48 = arith.constant 0 : index
    %c0_49 = arith.constant 0 : index
    %88 = vector.load %arg13[%c0_48, %c0_49] : memref<4x2xf32, #tpu.memory_space<vmem>>, vector<4x2xf32>
    %c0_50 = arith.constant 0 : index
    %c0_51 = arith.constant 0 : index
    %89 = vector.load %arg14[%c0_50, %c0_51] : memref<2x4xf32, #tpu.memory_space<vmem>>, vector<2x4xf32>
    %90 = vector.shape_cast %87 : vector<4x2xf32> to vector<1x4x2xf32>
    %91 = vector.shape_cast %90 : vector<1x4x2xf32> to vector<1x4x2xf32>
    %92 = vector.broadcast %91 : vector<1x4x2xf32> to vector<8x4x2xf32>
    %cst_52 = arith.constant dense<0.000000e+00> : vector<8x4x2xf32>
    %93 = tpu.matmul %54, %92, %cst_52 {dimension_numbers = #tpu.dot_dimension_numbers<[2], [1], [1], [2], [0, 0, 0, 1, 1, 2], [0], [0]>} : vector<8x4x4xf32>, vector<8x4x2xf32>, vector<8x4x2xf32> -> vector<8x4x2xf32>
    %94 = vector.shape_cast %86 : vector<2x4xf32> to vector<1x2x4xf32>
    %95 = vector.shape_cast %94 : vector<1x2x4xf32> to vector<1x2x4xf32>
    %96 = vector.broadcast %95 : vector<1x2x4xf32> to vector<8x2x4xf32>
    %cst_53 = arith.constant dense<0.000000e+00> : vector<8x2x2xf32>
    %97 = tpu.matmul %96, %93, %cst_53 {dimension_numbers = #tpu.dot_dimension_numbers<[2], [1], [1], [2], [0, 0, 0, 1, 1, 2], [0], [0]>} : vector<8x2x4xf32>, vector<8x4x2xf32>, vector<8x2x2xf32> -> vector<8x2x2xf32>
    %98 = vector.shape_cast %88 : vector<4x2xf32> to vector<1x4x2xf32>
    %99 = vector.shape_cast %98 : vector<1x4x2xf32> to vector<1x4x2xf32>
    %100 = vector.broadcast %99 : vector<1x4x2xf32> to vector<8x4x2xf32>
    %cst_54 = arith.constant dense<0.000000e+00> : vector<8x4x2xf32>
    %101 = tpu.matmul %100, %97, %cst_54 {dimension_numbers = #tpu.dot_dimension_numbers<[2], [1], [1], [2], [0, 0, 0, 1, 1, 2], [0], [0]>} : vector<8x4x2xf32>, vector<8x2x2xf32>, vector<8x4x2xf32> -> vector<8x4x2xf32>
    %102 = vector.shape_cast %89 : vector<2x4xf32> to vector<1x2x4xf32>
    %103 = vector.shape_cast %102 : vector<1x2x4xf32> to vector<1x2x4xf32>
    %104 = vector.broadcast %103 : vector<1x2x4xf32> to vector<8x2x4xf32>
    %cst_55 = arith.constant dense<0.000000e+00> : vector<8x4x4xf32>
    %105 = tpu.matmul %101, %104, %cst_55 {dimension_numbers = #tpu.dot_dimension_numbers<[2], [1], [1], [2], [0, 0, 0, 1, 1, 2], [0], [0]>} : vector<8x4x2xf32>, vector<8x2x4xf32>, vector<8x4x4xf32> -> vector<8x4x4xf32>
    %106 = vector.shape_cast %87 : vector<4x2xf32> to vector<1x4x2xf32>
    %107 = vector.shape_cast %106 : vector<1x4x2xf32> to vector<1x4x2xf32>
    %108 = vector.broadcast %107 : vector<1x4x2xf32> to vector<8x4x2xf32>
    %cst_56 = arith.constant dense<0.000000e+00> : vector<8x4x2xf32>
    %109 = tpu.matmul %68, %108, %cst_56 {dimension_numbers = #tpu.dot_dimension_numbers<[2], [1], [1], [2], [0, 0, 0, 1, 1, 2], [0], [0]>} : vector<8x4x4xf32>, vector<8x4x2xf32>, vector<8x4x2xf32> -> vector<8x4x2xf32>
    %110 = vector.shape_cast %86 : vector<2x4xf32> to vector<1x2x4xf32>
    %111 = vector.shape_cast %110 : vector<1x2x4xf32> to vector<1x2x4xf32>
    %112 = vector.broadcast %111 : vector<1x2x4xf32> to vector<8x2x4xf32>
    %cst_57 = arith.constant dense<0.000000e+00> : vector<8x2x2xf32>
    %113 = tpu.matmul %112, %109, %cst_57 {dimension_numbers = #tpu.dot_dimension_numbers<[2], [1], [1], [2], [0, 0, 0, 1, 1, 2], [0], [0]>} : vector<8x2x4xf32>, vector<8x4x2xf32>, vector<8x2x2xf32> -> vector<8x2x2xf32>
    %114 = vector.shape_cast %88 : vector<4x2xf32> to vector<1x4x2xf32>
    %115 = vector.shape_cast %114 : vector<1x4x2xf32> to vector<1x4x2xf32>
    %116 = vector.broadcast %115 : vector<1x4x2xf32> to vector<8x4x2xf32>
    %cst_58 = arith.constant dense<0.000000e+00> : vector<8x4x2xf32>
    %117 = tpu.matmul %116, %113, %cst_58 {dimension_numbers = #tpu.dot_dimension_numbers<[2], [1], [1], [2], [0, 0, 0, 1, 1, 2], [0], [0]>} : vector<8x4x2xf32>, vector<8x2x2xf32>, vector<8x4x2xf32> -> vector<8x4x2xf32>
    %118 = vector.shape_cast %89 : vector<2x4xf32> to vector<1x2x4xf32>
    %119 = vector.shape_cast %118 : vector<1x2x4xf32> to vector<1x2x4xf32>
    %120 = vector.broadcast %119 : vector<1x2x4xf32> to vector<8x2x4xf32>
    %cst_59 = arith.constant dense<0.000000e+00> : vector<8x4x4xf32>
    %121 = tpu.matmul %117, %120, %cst_59 {dimension_numbers = #tpu.dot_dimension_numbers<[2], [1], [1], [2], [0, 0, 0, 1, 1, 2], [0], [0]>} : vector<8x4x2xf32>, vector<8x2x4xf32>, vector<8x4x4xf32> -> vector<8x4x4xf32>
    %122 = arith.subf %54, %105 : vector<8x4x4xf32>
    %123 = arith.subf %68, %121 : vector<8x4x4xf32>
    %124 = arith.subf %122, %123 : vector<8x4x4xf32>
    %125 = math.absf %124 : vector<8x4x4xf32>
    %126 = vector.shape_cast %125 : vector<8x4x4xf32> to vector<1x8x4x4xf32>
    %cst_60 = arith.constant dense<0.000000e+00> : vector<1xf32>
    %127 = vector.multi_reduction <add>, %126, %cst_60 [1, 2, 3] : vector<1x8x4x4xf32> to vector<1xf32>
    %128 = vector.shape_cast %127 : vector<1xf32> to vector<1x1x1x1xf32>
    %129 = vector.extract %128[0, 0, 0, 0] : f32 from vector<1x1x1x1xf32>
    %130 = vector.broadcast %129 : f32 to vector<1x8x128xf32>
    %c0_61 = arith.constant 0 : index
    %c0_62 = arith.constant 0 : index
    %c0_63 = arith.constant 0 : index
    %131 = vector.load %arg17[%c0_61, %c0_62, %c0_63] : memref<1x8x128xf32, #tpu.memory_space<vmem>>, vector<1x8x128xf32>
    tpu.vector_store %arg17[%c0_61, %c0_62, %c0_63], %130 {strides = array<i32>} : memref<1x8x128xf32, #tpu.memory_space<vmem>>, vector<1x8x128xf32>,
    %132 = arith.subf %97, %113 : vector<8x2x2xf32>
    %133 = math.absf %132 : vector<8x2x2xf32>
    %134 = vector.shape_cast %133 : vector<8x2x2xf32> to vector<1x8x2x2xf32>
    %cst_64 = arith.constant dense<0.000000e+00> : vector<1xf32>
    %135 = vector.multi_reduction <add>, %134, %cst_64 [1, 2, 3] : vector<1x8x2x2xf32> to vector<1xf32>
    %136 = vector.shape_cast %135 : vector<1xf32> to vector<1x1x1x1xf32>
    %137 = vector.extract %136[0, 0, 0, 0] : f32 from vector<1x1x1x1xf32>
    %138 = vector.broadcast %137 : f32 to vector<1x8x128xf32>
    %c0_65 = arith.constant 0 : index
    %c0_66 = arith.constant 0 : index
    %c0_67 = arith.constant 0 : index
    %139 = vector.load %arg18[%c0_65, %c0_66, %c0_67] : memref<1x8x128xf32, #tpu.memory_space<vmem>>, vector<1x8x128xf32>
    tpu.vector_store %arg18[%c0_65, %c0_66, %c0_67], %138 {strides = array<i32>} : memref<1x8x128xf32, #tpu.memory_space<vmem>>, vector<1x8x128xf32>,
    return
  }
  func.func @transform_0(%arg0: i32) -> (i32, i32, i32) {
    %c0_i32 = arith.constant 0 : i32
    %c0_i32_0 = arith.constant 0 : i32
    %c0_i32_1 = arith.constant 0 : i32
    return %arg0, %c0_i32, %c0_i32_0 : i32, i32, i32
  }
  func.func @transform_1(%arg0: i32) -> (i32, i32, i32) {
    %c0_i32 = arith.constant 0 : i32
    %c0_i32_0 = arith.constant 0 : i32
    %c0_i32_1 = arith.constant 0 : i32
    return %arg0, %c0_i32, %c0_i32_0 : i32, i32, i32
  }
  func.func @transform_2(%arg0: i32) -> (i32, i32) {
    %c0_i32 = arith.constant 0 : i32
    %c0_i32_0 = arith.constant 0 : i32
    %c0_i32_1 = arith.constant 0 : i32
    return %c0_i32, %c0_i32_0 : i32, i32
  }
  func.func @transform_3(%arg0: i32) -> (i32, i32) {
    %c0_i32 = arith.constant 0 : i32
    %c0_i32_0 = arith.constant 0 : i32
    %c0_i32_1 = arith.constant 0 : i32
    return %c0_i32, %c0_i32_0 : i32, i32
  }
  func.func @transform_4(%arg0: i32) -> (i32, i32) {
    %c0_i32 = arith.constant 0 : i32
    %c0_i32_0 = arith.constant 0 : i32
    %c0_i32_1 = arith.constant 0 : i32
    return %c0_i32, %c0_i32_0 : i32, i32
  }
  func.func @transform_5(%arg0: i32) -> (i32, i32) {
    %c0_i32 = arith.constant 0 : i32
    %c0_i32_0 = arith.constant 0 : i32
    %c0_i32_1 = arith.constant 0 : i32
    return %c0_i32, %c0_i32_0 : i32, i32
  }
  func.func @transform_6(%arg0: i32) -> (i32, i32) {
    %c0_i32 = arith.constant 0 : i32
    %c0_i32_0 = arith.constant 0 : i32
    %c0_i32_1 = arith.constant 0 : i32
    return %c0_i32, %c0_i32_0 : i32, i32
  }
  func.func @transform_7(%arg0: i32) -> (i32, i32) {
    %c0_i32 = arith.constant 0 : i32
    %c0_i32_0 = arith.constant 0 : i32
    %c0_i32_1 = arith.constant 0 : i32
    return %c0_i32, %c0_i32_0 : i32, i32
  }
  func.func @transform_8(%arg0: i32) -> (i32, i32) {
    %c0_i32 = arith.constant 0 : i32
    %c0_i32_0 = arith.constant 0 : i32
    %c0_i32_1 = arith.constant 0 : i32
    return %c0_i32, %c0_i32_0 : i32, i32
  }
  func.func @transform_9(%arg0: i32) -> (i32, i32) {
    %c0_i32 = arith.constant 0 : i32
    %c0_i32_0 = arith.constant 0 : i32
    %c0_i32_1 = arith.constant 0 : i32
    return %c0_i32, %c0_i32_0 : i32, i32
  }
  func.func @transform_10(%arg0: i32) -> (i32, i32) {
    %c0_i32 = arith.constant 0 : i32
    %c0_i32_0 = arith.constant 0 : i32
    %c0_i32_1 = arith.constant 0 : i32
    return %c0_i32, %c0_i32_0 : i32, i32
  }
  func.func @transform_11(%arg0: i32) -> (i32, i32) {
    %c0_i32 = arith.constant 0 : i32
    %c0_i32_0 = arith.constant 0 : i32
    %c0_i32_1 = arith.constant 0 : i32
    return %c0_i32, %c0_i32_0 : i32, i32
  }
  func.func @transform_12(%arg0: i32) -> (i32, i32) {
    %c0_i32 = arith.constant 0 : i32
    %c0_i32_0 = arith.constant 0 : i32
    %c0_i32_1 = arith.constant 0 : i32
    return %c0_i32, %c0_i32_0 : i32, i32
  }
  func.func @transform_13(%arg0: i32) -> (i32, i32) {
    %c0_i32 = arith.constant 0 : i32
    %c0_i32_0 = arith.constant 0 : i32
    %c0_i32_1 = arith.constant 0 : i32
    return %c0_i32, %c0_i32_0 : i32, i32
  }
  func.func @transform_14(%arg0: i32) -> (i32, i32, i32) {
    %c0_i32 = arith.constant 0 : i32
    %c0_i32_0 = arith.constant 0 : i32
    %c0_i32_1 = arith.constant 0 : i32
    return %arg0, %c0_i32, %c0_i32_0 : i32, i32, i32
  }
  func.func @transform_15(%arg0: i32) -> (i32, i32, i32) {
    %c0_i32 = arith.constant 0 : i32
    %c0_i32_0 = arith.constant 0 : i32
    %c0_i32_1 = arith.constant 0 : i32
    return %arg0, %c0_i32, %c0_i32_0 : i32, i32, i32
  }
  func.func @transform_16(%arg0: i32) -> (i32, i32, i32) {
    %c0_i32 = arith.constant 0 : i32
    %c0_i32_0 = arith.constant 0 : i32
    %c0_i32_1 = arith.constant 0 : i32
    return %arg0, %c0_i32, %c0_i32_0 : i32, i32, i32
  }
  func.func @transform_17(%arg0: i32) -> (i32, i32, i32) {
    %c0_i32 = arith.constant 0 : i32
    %c0_i32_0 = arith.constant 0 : i32
    %c0_i32_1 = arith.constant 0 : i32
    return %arg0, %c0_i32, %c0_i32_0 : i32, i32, i32
  }
}

</mosaic_0001>

<llo_original>
// kernel: laplacian_pyramid_loss.1
$region0: #{laplacian_pyramid_loss.1}
  #allocation0 [shape = 'u32[]', space=smem, size = 0x4, offset = 0x4, fixed_abs, tag = 'smem constant byte address 0x4 - core index']
  #allocation1 [shape = 'u32[144,128]{1,0:T(1,128)}', space=vmem, size = 0x12000, scoped, tag = 'internal scratch']
  %s0 = inlined_call_operand.hbm [shape: f32[8,16,16], index: 0, kind: input, shape index: {}]
  %s1 = inlined_call_operand.hbm [shape: f32[8,16,16], index: 1, kind: input, shape index: {}]
  %s2 = inlined_call_operand.hbm [shape: f32[8,16], index: 2, kind: input, shape index: {}]
  %s3 = inlined_call_operand.vmem [shape: f32[16,8], index: 3, kind: input, shape index: {}]
  %s4 = inlined_call_operand.vmem [shape: f32[16,8], index: 4, kind: input, shape index: {}]
  %s5 = inlined_call_operand.hbm [shape: f32[8,16], index: 5, kind: input, shape index: {}]
  %s6 = inlined_call_operand.hbm [shape: f32[4,8], index: 6, kind: input, shape index: {}]
  %s7 = inlined_call_operand.vmem [shape: f32[8,4], index: 7, kind: input, shape index: {}]
  %s8 = inlined_call_operand.vmem [shape: f32[8,4], index: 8, kind: input, shape index: {}]
  %s9 = inlined_call_operand.hbm [shape: f32[4,8], index: 9, kind: input, shape index: {}]
  %s10 = inlined_call_operand.vmem [shape: f32[2,4], index: 10, kind: input, shape index: {}]
  %s11 = inlined_call_operand.vmem [shape: f32[4,2], index: 11, kind: input, shape index: {}]
  %s12 = inlined_call_operand.vmem [shape: f32[4,2], index: 12, kind: input, shape index: {}]
  %s13 = inlined_call_operand.vmem [shape: f32[2,4], index: 13, kind: input, shape index: {}]
  %s14 = inlined_call_operand.vmem [shape: f32[1,8,128], index: 14, kind: output, shape index: {0}]
  %s15 = inlined_call_operand.vmem [shape: f32[1,8,128], index: 15, kind: output, shape index: {1}]
  %s16 = inlined_call_operand.vmem [shape: f32[1,8,128], index: 16, kind: output, shape index: {2}]
  %s17 = inlined_call_operand.vmem [shape: f32[1,8,128], index: 17, kind: output, shape index: {3}]
  %18 = xla_tuple %s14, %s15, %s16, %s17
  %s19 = sld [smem:[#allocation0]]
  $region114: #{laplacian_pyramid_loss.1} parent=0
    _
  %s21 = ssub.s32 1, %s19
  %s22 = scalar_select 0, %s21, %s19
  $region1: #{laplacian_pyramid_loss.1} parent=0
    #allocation2 [shape = 'u8[65536]{0}', space=vmem, size = 0x10000, scoped, tag = 'input window, operand 0, single buffered']
    #allocation3 [shape = 's32[1]{0}', space=sflag, size = 0x4, scoped, tag = 'scoped memory for laplacian_pyramid_loss.1']
    #allocation4 [shape = 'u8[65536]{0}', space=vmem, size = 0x10000, scoped, tag = 'input window, operand 1, single buffered']
    #allocation5 [shape = 's32[1]{0}', space=sflag, size = 0x4, scoped, tag = 'scoped memory for laplacian_pyramid_loss.1']
    #allocation6 [shape = 'u8[4096]{0}', space=vmem, size = 0x1000, scoped, tag = 'input window, operand 2, single buffered']
    #allocation7 [shape = 'u8[4096]{0}', space=vmem, size = 0x1000, scoped, tag = 'input window, operand 5, single buffered']
    #allocation8 [shape = 's32[1]{0}', space=sflag, size = 0x4, scoped, tag = 'scoped memory for laplacian_pyramid_loss.1']
    #allocation9 [shape = 'u8[2048]{0}', space=vmem, size = 0x800, scoped, tag = 'input window, operand 6, single buffered']
    #allocation10 [shape = 'u8[2048]{0}', space=vmem, size = 0x800, scoped, tag = 'input window, operand 9, single buffered']
    #allocation11 [shape = 's32[1]{0}', space=sflag, size = 0x4, scoped, tag = 'scoped memory for laplacian_pyramid_loss.1']
    %23 = vsyncpa [#allocation3], 0
    %24 = vsyncpa [#allocation5], 0
    %25 = vsyncpa [#allocation8], 0
    %26 = vsyncpa [#allocation11], 0
    // Predicated region
    $region2: #{laplacian_pyramid_loss.1} parent=1 // pred_check
      _
    $region3: #{laplacian_pyramid_loss.1} parent=1 // pred_check_branch
      %28 = sbr.rel (0) target = $region5
    $region4: #{laplacian_pyramid_loss.1} parent=1 // pred_region
      %s30 = ssub.s32 2048, 2048
      %31 = vsyncadd [#allocation3], %s30
      %s32 = sshll.u32 [#allocation2], 4
      %s33 = int_to_ptr.vmem [resolvable:$true] %s32
      %38 = dma.hbm_to_vmem [thread:$0]  %s0, 2048, %s33, [#allocation3], 128, 128, 8
    $region5: #{laplacian_pyramid_loss.1} parent=1 // pred_fallthru
      _
    // Predicated region
    $region6: #{laplacian_pyramid_loss.1} parent=1 // pred_check
      _
    $region7: #{laplacian_pyramid_loss.1} parent=1 // pred_check_branch
      %40 = sbr.rel (0) target = $region9
    $region8: #{laplacian_pyramid_loss.1} parent=1 // pred_region
      %s42 = ssub.s32 2048, 2048
      %43 = vsyncadd [#allocation5], %s42
      %s44 = sshll.u32 [#allocation4], 4
      %s45 = int_to_ptr.vmem [resolvable:$true] %s44
      %50 = dma.hbm_to_vmem [thread:$0]  %s1, 2048, %s45, [#allocation5], 128, 128, 8
    $region9: #{laplacian_pyramid_loss.1} parent=1 // pred_fallthru
      _
    // Predicated region
    $region10: #{laplacian_pyramid_loss.1} parent=1 // pred_check
      _
    $region11: #{laplacian_pyramid_loss.1} parent=1 // pred_check_branch
      %52 = sbr.rel (0) target = $region13
    $region12: #{laplacian_pyramid_loss.1} parent=1 // pred_region
      %s54 = ssub.s32 128, 128
      %55 = vsyncadd [#allocation5], %s54
      %s57 = sshll.u32 [#allocation6], 4
      %s58 = int_to_ptr.vmem [resolvable:$true] %s57
      %60 = dma.hbm_to_vmem [thread:$0]  %s2, 128, %s58, [#allocation5]
    $region13: #{laplacian_pyramid_loss.1} parent=1 // pred_fallthru
      _
    // Predicated region
    $region14: #{laplacian_pyramid_loss.1} parent=1 // pred_check
      _
    $region15: #{laplacian_pyramid_loss.1} parent=1 // pred_check_branch
      %62 = sbr.rel (0) target = $region17
    $region16: #{laplacian_pyramid_loss.1} parent=1 // pred_region
      _
    $region17: #{laplacian_pyramid_loss.1} parent=1 // pred_fallthru
      _
    // Predicated region
    $region18: #{laplacian_pyramid_loss.1} parent=1 // pred_check
      _
    $region19: #{laplacian_pyramid_loss.1} parent=1 // pred_check_branch
      %64 = sbr.rel (0) target = $region21
    $region20: #{laplacian_pyramid_loss.1} parent=1 // pred_region
      _
    $region21: #{laplacian_pyramid_loss.1} parent=1 // pred_fallthru
      _
    // Predicated region
    $region22: #{laplacian_pyramid_loss.1} parent=1 // pred_check
      _
    $region23: #{laplacian_pyramid_loss.1} parent=1 // pred_check_branch
      %66 = sbr.rel (0) target = $region25
    $region24: #{laplacian_pyramid_loss.1} parent=1 // pred_region
      %s68 = ssub.s32 128, 128
      %69 = vsyncadd [#allocation8], %s68
      %s71 = sshll.u32 [#allocation7], 4
      %s72 = int_to_ptr.vmem [resolvable:$true] %s71
      %74 = dma.hbm_to_vmem [thread:$0]  %s5, 128, %s72, [#allocation8]
    $region25: #{laplacian_pyramid_loss.1} parent=1 // pred_fallthru
      _
    // Predicated region
    $region26: #{laplacian_pyramid_loss.1} parent=1 // pred_check
      _
    $region27: #{laplacian_pyramid_loss.1} parent=1 // pred_check_branch
      %76 = sbr.rel (0) target = $region29
    $region28: #{laplacian_pyramid_loss.1} parent=1 // pred_region
      %s78 = ssub.s32 64, 64
      %79 = vsyncadd [#allocation8], %s78
      %s81 = sshll.u32 [#allocation9], 4
      %s82 = int_to_ptr.vmem [resolvable:$true] %s81
      %84 = dma.hbm_to_vmem [thread:$0]  %s6, 64, %s82, [#allocation8]
    $region29: #{laplacian_pyramid_loss.1} parent=1 // pred_fallthru
      _
    // Predicated region
    $region30: #{laplacian_pyramid_loss.1} parent=1 // pred_check
      _
    $region31: #{laplacian_pyramid_loss.1} parent=1 // pred_check_branch
      %86 = sbr.rel (0) target = $region33
    $region32: #{laplacian_pyramid_loss.1} parent=1 // pred_region
      _
    $region33: #{laplacian_pyramid_loss.1} parent=1 // pred_fallthru
      _
    // Predicated region
    $region34: #{laplacian_pyramid_loss.1} parent=1 // pred_check
      _
    $region35: #{laplacian_pyramid_loss.1} parent=1 // pred_check_branch
      %88 = sbr.rel (0) target = $region37
    $region36: #{laplacian_pyramid_loss.1} parent=1 // pred_region
      _
    $region37: #{laplacian_pyramid_loss.1} parent=1 // pred_fallthru
      _
    // Predicated region
    $region38: #{laplacian_pyramid_loss.1} parent=1 // pred_check
      _
    $region39: #{laplacian_pyramid_loss.1} parent=1 // pred_check_branch
      %90 = sbr.rel (0) target = $region41
    $region40: #{laplacian_pyramid_loss.1} parent=1 // pred_region
      %s92 = ssub.s32 64, 64
      %93 = vsyncadd [#allocation11], %s92
      %s95 = sshll.u32 [#allocation10], 4
      %s96 = int_to_ptr.vmem [resolvable:$true] %s95
      %98 = dma.hbm_to_vmem [thread:$0]  %s9, 64, %s96, [#allocation11]
    $region41: #{laplacian_pyramid_loss.1} parent=1 // pred_fallthru
      _
    // Predicated region
    $region42: #{laplacian_pyramid_loss.1} parent=1 // pred_check
      _
    $region43: #{laplacian_pyramid_loss.1} parent=1 // pred_check_branch
      %100 = sbr.rel (0) target = $region45
    $region44: #{laplacian_pyramid_loss.1} parent=1 // pred_region
      _
    $region45: #{laplacian_pyramid_loss.1} parent=1 // pred_fallthru
      _
    // Predicated region
    $region46: #{laplacian_pyramid_loss.1} parent=1 // pred_check
      _
    $region47: #{laplacian_pyramid_loss.1} parent=1 // pred_check_branch
      %102 = sbr.rel (0) target = $region49
    $region48: #{laplacian_pyramid_loss.1} parent=1 // pred_region
      _
    $region49: #{laplacian_pyramid_loss.1} parent=1 // pred_fallthru
      _
    // Predicated region
    $region50: #{laplacian_pyramid_loss.1} parent=1 // pred_check
      _
    $region51: #{laplacian_pyramid_loss.1} parent=1 // pred_check_branch
      %104 = sbr.rel (0) target = $region53
    $region52: #{laplacian_pyramid_loss.1} parent=1 // pred_region
      _
    $region53: #{laplacian_pyramid_loss.1} parent=1 // pred_fallthru
      _
    // Predicated region
    $region54: #{laplacian_pyramid_loss.1} parent=1 // pred_check
      _
    $region55: #{laplacian_pyramid_loss.1} parent=1 // pred_check_branch
      %106 = sbr.rel (0) target = $region57
    $region56: #{laplacian_pyramid_loss.1} parent=1 // pred_region
      _
    $region57: #{laplacian_pyramid_loss.1} parent=1 // pred_fallthru
      _
    // Predicated region
    $region58: #{laplacian_pyramid_loss.1} parent=1 // pred_check
      _
    $region59: #{laplacian_pyramid_loss.1} parent=1 // pred_check_branch
      %108 = sbr.rel (0) target = $region61
    $region60: #{laplacian_pyramid_loss.1} parent=1 // pred_region
      %109 = dma.done [#allocation3], 2048
    $region61: #{laplacian_pyramid_loss.1} parent=1 // pred_fallthru
      _
    // Predicated region
    $region62: #{laplacian_pyramid_loss.1} parent=1 // pred_check
      _
    $region63: #{laplacian_pyramid_loss.1} parent=1 // pred_check_branch
      %111 = sbr.rel (0) target = $region65
    $region64: #{laplacian_pyramid_loss.1} parent=1 // pred_region
      %112 = dma.done [#allocation5], 2048
    $region65: #{laplacian_pyramid_loss.1} parent=1 // pred_fallthru
      _
    // Predicated region
    $region66: #{laplacian_pyramid_loss.1} parent=1 // pred_check
      _
    $region67: #{laplacian_pyramid_loss.1} parent=1 // pred_check_branch
      %114 = sbr.rel (0) target = $region69
    $region68: #{laplacian_pyramid_loss.1} parent=1 // pred_region
      %115 = dma.done [#allocation5], 128
    $region69: #{laplacian_pyramid_loss.1} parent=1 // pred_fallthru
      _
    // Predicated region
    $region70: #{laplacian_pyramid_loss.1} parent=1 // pred_check
      _
    $region71: #{laplacian_pyramid_loss.1} parent=1 // pred_check_branch
      %117 = sbr.rel (0) target = $region73
    $region72: #{laplacian_pyramid_loss.1} parent=1 // pred_region
      %118 = dma.done [#allocation8], 128
    $region73: #{laplacian_pyramid_loss.1} parent=1 // pred_fallthru
      _
    // Predicated region
    $region74: #{laplacian_pyramid_loss.1} parent=1 // pred_check
      _
    $region75: #{laplacian_pyramid_loss.1} parent=1 // pred_check_branch
      %120 = sbr.rel (0) target = $region77
    $region76: #{laplacian_pyramid_loss.1} parent=1 // pred_region
      %121 = dma.done [#allocation8], 64
    $region77: #{laplacian_pyramid_loss.1} parent=1 // pred_fallthru
      _
    // Predicated region
    $region78: #{laplacian_pyramid_loss.1} parent=1 // pred_check
      _
    $region79: #{laplacian_pyramid_loss.1} parent=1 // pred_check_branch
      %123 = sbr.rel (0) target = $region81
    $region80: #{laplacian_pyramid_loss.1} parent=1 // pred_region
      %124 = dma.done [#allocation11], 64
    $region81: #{laplacian_pyramid_loss.1} parent=1 // pred_fallthru
      _
    %v125 = vld [vmem:[#allocation2] sm:$0xff]
    %v126 = vld [vmem:[#allocation2 + $0x8] sm:$0xff]
    %v127 = vld [vmem:[#allocation2 + $0x10] sm:$0xff]
    %v128 = vld [vmem:[#allocation2 + $0x18] sm:$0xff]
    %v129 = vld [vmem:[#allocation2 + $0x20] sm:$0xff]
    %v130 = vld [vmem:[#allocation2 + $0x28] sm:$0xff]
    %v131 = vld [vmem:[#allocation2 + $0x30] sm:$0xff]
    %v132 = vld [vmem:[#allocation2 + $0x38] sm:$0xff]
    %v133 = vld [vmem:[#allocation2 + $0x40] sm:$0xff]
    %v134 = vld [vmem:[#allocation2 + $0x48] sm:$0xff]
    %v135 = vld [vmem:[#allocation2 + $0x50] sm:$0xff]
    %v136 = vld [vmem:[#allocation2 + $0x58] sm:$0xff]
    %v137 = vld [vmem:[#allocation2 + $0x60] sm:$0xff]
    %v138 = vld [vmem:[#allocation2 + $0x68] sm:$0xff]
    %v139 = vld [vmem:[#allocation2 + $0x70] sm:$0xff]
    %v140 = vld [vmem:[#allocation2 + $0x78] sm:$0xff]
    %v141 = vld [vmem:[#allocation4] sm:$0xff]
    %v142 = vld [vmem:[#allocation4 + $0x8] sm:$0xff]
    %v143 = vld [vmem:[#allocation4 + $0x10] sm:$0xff]
    %v144 = vld [vmem:[#allocation4 + $0x18] sm:$0xff]
    %v145 = vld [vmem:[#allocation4 + $0x20] sm:$0xff]
    %v146 = vld [vmem:[#allocation4 + $0x28] sm:$0xff]
    %v147 = vld [vmem:[#allocation4 + $0x30] sm:$0xff]
    %v148 = vld [vmem:[#allocation4 + $0x38] sm:$0xff]
    %v149 = vld [vmem:[#allocation4 + $0x40] sm:$0xff]
    %v150 = vld [vmem:[#allocation4 + $0x48] sm:$0xff]
    %v151 = vld [vmem:[#allocation4 + $0x50] sm:$0xff]
    %v152 = vld [vmem:[#allocation4 + $0x58] sm:$0xff]
    %v153 = vld [vmem:[#allocation4 + $0x60] sm:$0xff]
    %v154 = vld [vmem:[#allocation4 + $0x68] sm:$0xff]
    %v155 = vld [vmem:[#allocation4 + $0x70] sm:$0xff]
    %v156 = vld [vmem:[#allocation4 + $0x78] sm:$0xff]
    %v157 = vld [vmem:[#allocation6] sm:$0xff]
    %v158 = vld [vmem:[%s3] sm:$0xff]
    %v159 = vld [vmem:[%s3 + $0x8] sm:$0xff]
    %v160 = vld [vmem:[%s4] sm:$0xff]
    %v161 = vld [vmem:[%s4 + $0x8] sm:$0xff]
    %v162 = vld [vmem:[#allocation7] sm:$0xff]
    %vm163 = vcmask 130048
    %v165 = vsel %vm163, %v125, 0
    %v168 = vsel %vm163, %v126, 0
    %v171 = vsel %vm163, %v127, 0
    %v174 = vsel %vm163, %v128, 0
    %v177 = vsel %vm163, %v129, 0
    %v180 = vsel %vm163, %v130, 0
    %v183 = vsel %vm163, %v131, 0
    %v186 = vsel %vm163, %v132, 0
    %v189 = vsel %vm163, %v133, 0
    %v192 = vsel %vm163, %v134, 0
    %v195 = vsel %vm163, %v135, 0
    %v198 = vsel %vm163, %v136, 0
    %v201 = vsel %vm163, %v137, 0
    %v204 = vsel %vm163, %v138, 0
    %v207 = vsel %vm163, %v139, 0
    %v210 = vsel %vm163, %v140, 0
    %212 = vmatprep.subr.mxu0 0.0
    %213 = vmatpush1.msra.mxu0 %v158
    %214 = vmatprep.subr.mxu0 0.0
    %215 = vmatpush1.msra.mxu0 %v159
    %216 = vmatprep.subr.mxu0 0.0
    %217 = vmatpush1.msra.mxu0 0.0
    %218 = vmatprep.subr.mxu0 0.0
    %219 = vmatpush1.msra.mxu0 0.0
    %220 = vmatprep.subr.mxu0 0.0
    %221 = vmatpush1.msra.mxu0 0.0
    %222 = vmatprep.subr.mxu0 0.0
    %223 = vmatpush1.msra.mxu0 0.0
    %224 = vmatprep.subr.mxu0 0.0
    %225 = vmatpush1.msra.mxu0 0.0
    %226 = vmatprep.subr.mxu0 0.0
    %227 = vmatpush1.msra.mxu0 0.0
    %228 = vmatprep.subr.mxu0 0.0
    %229 = vmatpush1.msra.mxu0 0.0
    %230 = vmatprep.subr.mxu0 0.0
    %231 = vmatpush1.msra.mxu0 0.0
    %232 = vmatprep.subr.mxu0 0.0
    %233 = vmatpush1.msra.mxu0 0.0
    %234 = vmatprep.subr.mxu0 0.0
    %235 = vmatpush1.msra.mxu0 0.0
    %236 = vmatprep.subr.mxu0 0.0
    %237 = vmatpush1.msra.mxu0 0.0
    %238 = vmatprep.subr.mxu0 0.0
    %239 = vmatpush1.msra.mxu0 0.0
    %240 = vmatprep.subr.mxu0 0.0
    %241 = vmatpush1.msra.mxu0 0.0
    %242 = vmatprep.subr.mxu0 0.0
    %243 = vmatpush1.msra.mxu0 0.0
    %244 = vmatprep.subr.mxu0 0.0
    %245 = vmatpush1.msra.mxu0 0.0
    %246 = vmatprep.subr.mxu0 0.0
    %247 = vmatpush1.msra.mxu0 0.0
    %248 = vmatprep.subr.mxu0 0.0
    %249 = vmatpush1.msra.mxu0 0.0
    %250 = vmatprep.subr.mxu0 0.0
    %251 = vmatpush1.msra.mxu0 0.0
    %252 = vmatprep.subr.mxu0 0.0
    %253 = vmatpush1.msra.mxu0 0.0
    %254 = vmatprep.subr.mxu0 0.0
    %255 = vmatpush1.msra.mxu0 0.0
    %256 = vmatprep.subr.mxu0 0.0
    %257 = vmatpush1.msra.mxu0 0.0
    %258 = vmatprep.subr.mxu0 0.0
    %259 = vmatpush1.msra.mxu0 0.0
    %260 = vmatprep.subr.mxu0 0.0
    %261 = vmatpush1.msra.mxu0 0.0
    %262 = vmatprep.subr.mxu0 0.0
    %263 = vmatpush1.msra.mxu0 0.0
    %264 = vmatprep.subr.mxu0 0.0
    %265 = vmatpush1.msra.mxu0 0.0
    %266 = vmatprep.subr.mxu0 0.0
    %267 = vmatpush1.msra.mxu0 0.0
    %268 = vmatprep.subr.mxu0 0.0
    %269 = vmatpush1.msra.mxu0 0.0
    %270 = vmatprep.subr.mxu0 0.0
    %271 = vmatpush1.msra.mxu0 0.0
    %272 = vmatprep.subr.mxu0 0.0
    %273 = vmatpush1.msra.mxu0 0.0
    %274 = vmatprep.subr.mxu0 0.0
    %275 = vmatpush1.msra.mxu0 0.0
    %276 = vmatprep.mubr.f32.mxu0 0.0
    %277 = vmatmul.mubr.f32.gmra.mrb[0].mxu0 %v165
    %v278 = vpop.f32.mrb[0].mxu0
    %v279 = vadd.f32 0.0, %v278
    %v280 = vpop.f32.mrb[0].mxu0
    %281 = vmatprep.mubr.f32.mxu0 0.0
    %282 = vmatmul.mubr.f32.gmra.mrb[0].mxu0 %v168
    %v283 = vpop.f32.mrb[0].mxu0
    %v284 = vadd.f32 0.0, %v283
    %v285 = vpop.f32.mrb[0].mxu0
    %286 = vmatprep.mubr.f32.mxu0 0.0
    %287 = vmatmul.mubr.f32.gmra.mrb[0].mxu0 %v171
    %v288 = vpop.f32.mrb[0].mxu0
    %v289 = vadd.f32 0.0, %v288
    %v290 = vpop.f32.mrb[0].mxu0
    %291 = vmatprep.mubr.f32.mxu0 0.0
    %292 = vmatmul.mubr.f32.gmra.mrb[0].mxu0 %v174
    %v293 = vpop.f32.mrb[0].mxu0
    %v294 = vadd.f32 0.0, %v293
    %v295 = vpop.f32.mrb[0].mxu0
    %296 = vmatprep.mubr.f32.mxu0 0.0
    %297 = vmatmul.mubr.f32.gmra.mrb[0].mxu0 %v177
    %v298 = vpop.f32.mrb[0].mxu0
    %v299 = vadd.f32 0.0, %v298
    %v300 = vpop.f32.mrb[0].mxu0
    %301 = vmatprep.mubr.f32.mxu0 0.0
    %302 = vmatmul.mubr.f32.gmra.mrb[0].mxu0 %v180
    %v303 = vpop.f32.mrb[0].mxu0
    %v304 = vadd.f32 0.0, %v303
    %v305 = vpop.f32.mrb[0].mxu0
    %306 = vmatprep.mubr.f32.mxu0 0.0
    %307 = vmatmul.mubr.f32.gmra.mrb[0].mxu0 %v183
    %v308 = vpop.f32.mrb[0].mxu0
    %v309 = vadd.f32 0.0, %v308
    %v310 = vpop.f32.mrb[0].mxu0
    %311 = vmatprep.mubr.f32.mxu0 0.0
    %312 = vmatmul.mubr.f32.gmra.mrb[0].mxu0 %v186
    %v313 = vpop.f32.mrb[0].mxu0
    %v314 = vadd.f32 0.0, %v313
    %v315 = vpop.f32.mrb[0].mxu0
    %316 = vmatprep.mubr.f32.mxu0 0.0
    %317 = vmatmul.mubr.f32.gmra.mrb[0].mxu0 %v189
    %v318 = vpop.f32.mrb[0].mxu0
    %v319 = vadd.f32 0.0, %v318
    %v320 = vpop.f32.mrb[0].mxu0
    %321 = vmatprep.mubr.f32.mxu0 0.0
    %322 = vmatmul.mubr.f32.gmra.mrb[0].mxu0 %v192
    %v323 = vpop.f32.mrb[0].mxu0
    %v324 = vadd.f32 0.0, %v323
    %v325 = vpop.f32.mrb[0].mxu0
    %326 = vmatprep.mubr.f32.mxu0 0.0
    %327 = vmatmul.mubr.f32.gmra.mrb[0].mxu0 %v195
    %v328 = vpop.f32.mrb[0].mxu0
    %v329 = vadd.f32 0.0, %v328
    %v330 = vpop.f32.mrb[0].mxu0
    %331 = vmatprep.mubr.f32.mxu0 0.0
    %332 = vmatmul.mubr.f32.gmra.mrb[0].mxu0 %v198
    %v333 = vpop.f32.mrb[0].mxu0
    %v334 = vadd.f32 0.0, %v333
    %v335 = vpop.f32.mrb[0].mxu0
    %336 = vmatprep.mubr.f32.mxu0 0.0
    %337 = vmatmul.mubr.f32.gmra.mrb[0].mxu0 %v201
    %v338 = vpop.f32.mrb[0].mxu0
    %v339 = vadd.f32 0.0, %v338
    %v340 = vpop.f32.mrb[0].mxu0
    %341 = vmatprep.mubr.f32.mxu0 0.0
    %342 = vmatmul.mubr.f32.gmra.mrb[0].mxu0 %v204
    %v343 = vpop.f32.mrb[0].mxu0
    %v344 = vadd.f32 0.0, %v343
    %v345 = vpop.f32.mrb[0].mxu0
    %346 = vmatprep.mubr.f32.mxu0 0.0
    %347 = vmatmul.mubr.f32.gmra.mrb[0].mxu0 %v207
    %v348 = vpop.f32.mrb[0].mxu0
    %v349 = vadd.f32 0.0, %v348
    %v350 = vpop.f32.mrb[0].mxu0
    %351 = vmatprep.mubr.f32.mxu0 0.0
    %352 = vmatmul.mubr.f32.gmra.mrb[0].mxu0 %v210
    %v353 = vpop.f32.mrb[0].mxu0
    %v354 = vadd.f32 0.0, %v353
    %v355 = vpop.f32.mrb[0].mxu0
    %356 = vdwg.mxu0
    %v358 = vsel %vm163, %v157, 0
    %360 = vmatprep.subr.mxu0 0.0
    %361 = vmatpush1.msra.mxu0 %v279
    %362 = vmatprep.subr.mxu0 0.0
    %363 = vmatpush1.msra.mxu0 %v284
    %364 = vmatprep.subr.mxu0 0.0
    %365 = vmatpush1.msra.mxu0 0.0
    %366 = vmatprep.subr.mxu0 0.0
    %367 = vmatpush1.msra.mxu0 0.0
    %368 = vmatprep.subr.mxu0 0.0
    %369 = vmatpush1.msra.mxu0 0.0
    %370 = vmatprep.subr.mxu0 0.0
    %371 = vmatpush1.msra.mxu0 0.0
    %372 = vmatprep.subr.mxu0 0.0
    %373 = vmatpush1.msra.mxu0 0.0
    %374 = vmatprep.subr.mxu0 0.0
    %375 = vmatpush1.msra.mxu0 0.0
    %376 = vmatprep.subr.mxu0 0.0
    %377 = vmatpush1.msra.mxu0 0.0
    %378 = vmatprep.subr.mxu0 0.0
    %379 = vmatpush1.msra.mxu0 0.0
    %380 = vmatprep.subr.mxu0 0.0
    %381 = vmatpush1.msra.mxu0 0.0
    %382 = vmatprep.subr.mxu0 0.0
    %383 = vmatpush1.msra.mxu0 0.0
    %384 = vmatprep.subr.mxu0 0.0
    %385 = vmatpush1.msra.mxu0 0.0
    %386 = vmatprep.subr.mxu0 0.0
    %387 = vmatpush1.msra.mxu0 0.0
    %388 = vmatprep.subr.mxu0 0.0
    %389 = vmatpush1.msra.mxu0 0.0
    %390 = vmatprep.subr.mxu0 0.0
    %391 = vmatpush1.msra.mxu0 0.0
    %392 = vmatprep.subr.mxu0 0.0
    %393 = vmatpush1.msra.mxu0 0.0
    %394 = vmatprep.subr.mxu0 0.0
    %395 = vmatpush1.msra.mxu0 0.0
    %396 = vmatprep.subr.mxu0 0.0
    %397 = vmatpush1.msra.mxu0 0.0
    %398 = vmatprep.subr.mxu0 0.0
    %399 = vmatpush1.msra.mxu0 0.0
    %400 = vmatprep.subr.mxu0 0.0
    %401 = vmatpush1.msra.mxu0 0.0
    %402 = vmatprep.subr.mxu0 0.0
    %403 = vmatpush1.msra.mxu0 0.0
    %404 = vmatprep.subr.mxu0 0.0
    %405 = vmatpush1.msra.mxu0 0.0
    %406 = vmatprep.subr.mxu0 0.0
    %407 = vmatpush1.msra.mxu0 0.0
    %408 = vmatprep.subr.mxu0 0.0
    %409 = vmatpush1.msra.mxu0 0.0
    %410 = vmatprep.subr.mxu0 0.0
    %411 = vmatpush1.msra.mxu0 0.0
    %412 = vmatprep.subr.mxu0 0.0
    %413 = vmatpush1.msra.mxu0 0.0
    %414 = vmatprep.subr.mxu0 0.0
    %415 = vmatpush1.msra.mxu0 0.0
    %416 = vmatprep.subr.mxu0 0.0
    %417 = vmatpush1.msra.mxu0 0.0
    %418 = vmatprep.subr.mxu0 0.0
    %419 = vmatpush1.msra.mxu0 0.0
    %420 = vmatprep.subr.mxu0 0.0
    %421 = vmatpush1.msra.mxu0 0.0
    %422 = vmatprep.subr.mxu0 0.0
    %423 = vmatpush1.msra.mxu0 0.0
    %424 = vmatprep.mubr.f32.mxu0 0.0
    %425 = vmatmul.mubr.f32.gmra.mrb[0].mxu0 %v358
    %v426 = vpop.f32.mrb[0].mxu0
    %v427 = vadd.f32 0.0, %v426
    %v428 = vpop.f32.mrb[0].mxu0
    %429 = vdwg.mxu0
    %430 = vmatprep.subr.mxu0 0.0
    %431 = vmatpush1.msra.mxu0 %v289
    %432 = vmatprep.subr.mxu0 0.0
    %433 = vmatpush1.msra.mxu0 %v294
    %434 = vmatprep.subr.mxu0 0.0
    %435 = vmatpush1.msra.mxu0 0.0
    %436 = vmatprep.subr.mxu0 0.0
    %437 = vmatpush1.msra.mxu0 0.0
    %438 = vmatprep.subr.mxu0 0.0
    %439 = vmatpush1.msra.mxu0 0.0
    %440 = vmatprep.subr.mxu0 0.0
    %441 = vmatpush1.msra.mxu0 0.0
    %442 = vmatprep.subr.mxu0 0.0
    %443 = vmatpush1.msra.mxu0 0.0
    %444 = vmatprep.subr.mxu0 0.0
    %445 = vmatpush1.msra.mxu0 0.0
    %446 = vmatprep.subr.mxu0 0.0
    %447 = vmatpush1.msra.mxu0 0.0
    %448 = vmatprep.subr.mxu0 0.0
    %449 = vmatpush1.msra.mxu0 0.0
    %450 = vmatprep.subr.mxu0 0.0
    %451 = vmatpush1.msra.mxu0 0.0
    %452 = vmatprep.subr.mxu0 0.0
    %453 = vmatpush1.msra.mxu0 0.0
    %454 = vmatprep.subr.mxu0 0.0
    %455 = vmatpush1.msra.mxu0 0.0
    %456 = vmatprep.subr.mxu0 0.0
    %457 = vmatpush1.msra.mxu0 0.0
    %458 = vmatprep.subr.mxu0 0.0
    %459 = vmatpush1.msra.mxu0 0.0
    %460 = vmatprep.subr.mxu0 0.0
    %461 = vmatpush1.msra.mxu0 0.0
    %462 = vmatprep.subr.mxu0 0.0
    %463 = vmatpush1.msra.mxu0 0.0
    %464 = vmatprep.subr.mxu0 0.0
    %465 = vmatpush1.msra.mxu0 0.0
    %466 = vmatprep.subr.mxu0 0.0
    %467 = vmatpush1.msra.mxu0 0.0
    %468 = vmatprep.subr.mxu0 0.0
    %469 = vmatpush1.msra.mxu0 0.0
    %470 = vmatprep.subr.mxu0 0.0
    %471 = vmatpush1.msra.mxu0 0.0
    %472 = vmatprep.subr.mxu0 0.0
    %473 = vmatpush1.msra.mxu0 0.0
    %474 = vmatprep.subr.mxu0 0.0
    %475 = vmatpush1.msra.mxu0 0.0
    %476 = vmatprep.subr.mxu0 0.0
    %477 = vmatpush1.msra.mxu0 0.0
    %478 = vmatprep.subr.mxu0 0.0
    %479 = vmatpush1.msra.mxu0 0.0
    %480 = vmatprep.subr.mxu0 0.0
    %481 = vmatpush1.msra.mxu0 0.0
    %482 = vmatprep.subr.mxu0 0.0
    %483 = vmatpush1.msra.mxu0 0.0
    %484 = vmatprep.subr.mxu0 0.0
    %485 = vmatpush1.msra.mxu0 0.0
    %486 = vmatprep.subr.mxu0 0.0
    %487 = vmatpush1.msra.mxu0 0.0
    %488 = vmatprep.subr.mxu0 0.0
    %489 = vmatpush1.msra.mxu0 0.0
    %490 = vmatprep.subr.mxu0 0.0
    %491 = vmatpush1.msra.mxu0 0.0
    %492 = vmatprep.subr.mxu0 0.0
    %493 = vmatpush1.msra.mxu0 0.0
    %494 = vmatprep.mubr.f32.mxu0 0.0
    %495 = vmatmul.mubr.f32.gmra.mrb[0].mxu0 %v358
    %v496 = vpop.f32.mrb[0].mxu0
    %v497 = vadd.f32 0.0, %v496
    %v498 = vpop.f32.mrb[0].mxu0
    %499 = vdwg.mxu0
    %500 = vmatprep.subr.mxu0 0.0
    %501 = vmatpush1.msra.mxu0 %v299
    %502 = vmatprep.subr.mxu0 0.0
    %503 = vmatpush1.msra.mxu0 %v304
    %504 = vmatprep.subr.mxu0 0.0
    %505 = vmatpush1.msra.mxu0 0.0
    %506 = vmatprep.subr.mxu0 0.0
    %507 = vmatpush1.msra.mxu0 0.0
    %508 = vmatprep.subr.mxu0 0.0
    %509 = vmatpush1.msra.mxu0 0.0
    %510 = vmatprep.subr.mxu0 0.0
    %511 = vmatpush1.msra.mxu0 0.0
    %512 = vmatprep.subr.mxu0 0.0
    %513 = vmatpush1.msra.mxu0 0.0
    %514 = vmatprep.subr.mxu0 0.0
    %515 = vmatpush1.msra.mxu0 0.0
    %516 = vmatprep.subr.mxu0 0.0
    %517 = vmatpush1.msra.mxu0 0.0
    %518 = vmatprep.subr.mxu0 0.0
    %519 = vmatpush1.msra.mxu0 0.0
    %520 = vmatprep.subr.mxu0 0.0
    %521 = vmatpush1.msra.mxu0 0.0
    %522 = vmatprep.subr.mxu0 0.0
    %523 = vmatpush1.msra.mxu0 0.0
    %524 = vmatprep.subr.mxu0 0.0
    %525 = vmatpush1.msra.mxu0 0.0
    %526 = vmatprep.subr.mxu0 0.0
    %527 = vmatpush1.msra.mxu0 0.0
    %528 = vmatprep.subr.mxu0 0.0
    %529 = vmatpush1.msra.mxu0 0.0
    %530 = vmatprep.subr.mxu0 0.0
    %531 = vmatpush1.msra.mxu0 0.0
    %532 = vmatprep.subr.mxu0 0.0
    %533 = vmatpush1.msra.mxu0 0.0
    %534 = vmatprep.subr.mxu0 0.0
    %535 = vmatpush1.msra.mxu0 0.0
    %536 = vmatprep.subr.mxu0 0.0
    %537 = vmatpush1.msra.mxu0 0.0
    %538 = vmatprep.subr.mxu0 0.0
    %539 = vmatpush1.msra.mxu0 0.0
    %540 = vmatprep.subr.mxu0 0.0
    %541 = vmatpush1.msra.mxu0 0.0
    %542 = vmatprep.subr.mxu0 0.0
    %543 = vmatpush1.msra.mxu0 0.0
    %544 = vmatprep.subr.mxu0 0.0
    %545 = vmatpush1.msra.mxu0 0.0
    %546 = vmatprep.subr.mxu0 0.0
    %547 = vmatpush1.msra.mxu0 0.0
    %548 = vmatprep.subr.mxu0 0.0
    %549 = vmatpush1.msra.mxu0 0.0
    %550 = vmatprep.subr.mxu0 0.0
    %551 = vmatpush1.msra.mxu0 0.0
    %552 = vmatprep.subr.mxu0 0.0
    %553 = vmatpush1.msra.mxu0 0.0
    %554 = vmatprep.subr.mxu0 0.0
    %555 = vmatpush1.msra.mxu0 0.0
    %556 = vmatprep.subr.mxu0 0.0
    %557 = vmatpush1.msra.mxu0 0.0
    %558 = vmatprep.subr.mxu0 0.0
    %559 = vmatpush1.msra.mxu0 0.0
    %560 = vmatprep.subr.mxu0 0.0
    %561 = vmatpush1.msra.mxu0 0.0
    %562 = vmatprep.subr.mxu0 0.0
    %563 = vmatpush1.msra.mxu0 0.0
    %564 = vmatprep.mubr.f32.mxu0 0.0
    %565 = vmatmul.mubr.f32.gmra.mrb[0].mxu0 %v358
    %v566 = vpop.f32.mrb[0].mxu0
    %v567 = vadd.f32 0.0, %v566
    %v568 = vpop.f32.mrb[0].mxu0
    %569 = vdwg.mxu0
    %570 = vmatprep.subr.mxu0 0.0
    %571 = vmatpush1.msra.mxu0 %v309
    %572 = vmatprep.subr.mxu0 0.0
    %573 = vmatpush1.msra.mxu0 %v314
    %574 = vmatprep.subr.mxu0 0.0
    %575 = vmatpush1.msra.mxu0 0.0
    %576 = vmatprep.subr.mxu0 0.0
    %577 = vmatpush1.msra.mxu0 0.0
    %578 = vmatprep.subr.mxu0 0.0
    %579 = vmatpush1.msra.mxu0 0.0
    %580 = vmatprep.subr.mxu0 0.0
    %581 = vmatpush1.msra.mxu0 0.0
    %582 = vmatprep.subr.mxu0 0.0
    %583 = vmatpush1.msra.mxu0 0.0
    %584 = vmatprep.subr.mxu0 0.0
    %585 = vmatpush1.msra.mxu0 0.0
    %586 = vmatprep.subr.mxu0 0.0
    %587 = vmatpush1.msra.mxu0 0.0
    %588 = vmatprep.subr.mxu0 0.0
    %589 = vmatpush1.msra.mxu0 0.0
    %590 = vmatprep.subr.mxu0 0.0
    %591 = vmatpush1.msra.mxu0 0.0
    %592 = vmatprep.subr.mxu0 0.0
    %593 = vmatpush1.msra.mxu0 0.0
    %594 = vmatprep.subr.mxu0 0.0
    %595 = vmatpush1.msra.mxu0 0.0
    %596 = vmatprep.subr.mxu0 0.0
    %597 = vmatpush1.msra.mxu0 0.0
    %598 = vmatprep.subr.mxu0 0.0
    %599 = vmatpush1.msra.mxu0 0.0
    %600 = vmatprep.subr.mxu0 0.0
    %601 = vmatpush1.msra.mxu0 0.0
    %602 = vmatprep.subr.mxu0 0.0
    %603 = vmatpush1.msra.mxu0 0.0
    %604 = vmatprep.subr.mxu0 0.0
    %605 = vmatpush1.msra.mxu0 0.0
    %606 = vmatprep.subr.mxu0 0.0
    %607 = vmatpush1.msra.mxu0 0.0
    %608 = vmatprep.subr.mxu0 0.0
    %609 = vmatpush1.msra.mxu0 0.0
    %610 = vmatprep.subr.mxu0 0.0
    %611 = vmatpush1.msra.mxu0 0.0
    %612 = vmatprep.subr.mxu0 0.0
    %613 = vmatpush1.msra.mxu0 0.0
    %614 = vmatprep.subr.mxu0 0.0
    %615 = vmatpush1.msra.mxu0 0.0
    %616 = vmatprep.subr.mxu0 0.0
    %617 = vmatpush1.msra.mxu0 0.0
    %618 = vmatprep.subr.mxu0 0.0
    %619 = vmatpush1.msra.mxu0 0.0
    %620 = vmatprep.subr.mxu0 0.0
    %621 = vmatpush1.msra.mxu0 0.0
    %622 = vmatprep.subr.mxu0 0.0
    %623 = vmatpush1.msra.mxu0 0.0
    %624 = vmatprep.subr.mxu0 0.0
    %625 = vmatpush1.msra.mxu0 0.0
    %626 = vmatprep.subr.mxu0 0.0
    %627 = vmatpush1.msra.mxu0 0.0
    %628 = vmatprep.subr.mxu0 0.0
    %629 = vmatpush1.msra.mxu0 0.0
    %630 = vmatprep.subr.mxu0 0.0
    %631 = vmatpush1.msra.mxu0 0.0
    %632 = vmatprep.subr.mxu0 0.0
    %633 = vmatpush1.msra.mxu0 0.0
    %634 = vmatprep.mubr.f32.mxu0 0.0
    %635 = vmatmul.mubr.f32.gmra.mrb[0].mxu0 %v358
    %v636 = vpop.f32.mrb[0].mxu0
    %v637 = vadd.f32 0.0, %v636
    %v638 = vpop.f32.mrb[0].mxu0
    %639 = vdwg.mxu0
    %640 = vmatprep.subr.mxu0 0.0
    %641 = vmatpush1.msra.mxu0 %v319
    %642 = vmatprep.subr.mxu0 0.0
    %643 = vmatpush1.msra.mxu0 %v324
    %644 = vmatprep.subr.mxu0 0.0
    %645 = vmatpush1.msra.mxu0 0.0
    %646 = vmatprep.subr.mxu0 0.0
    %647 = vmatpush1.msra.mxu0 0.0
    %648 = vmatprep.subr.mxu0 0.0
    %649 = vmatpush1.msra.mxu0 0.0
    %650 = vmatprep.subr.mxu0 0.0
    %651 = vmatpush1.msra.mxu0 0.0
    %652 = vmatprep.subr.mxu0 0.0
    %653 = vmatpush1.msra.mxu0 0.0
    %654 = vmatprep.subr.mxu0 0.0
    %655 = vmatpush1.msra.mxu0 0.0
    %656 = vmatprep.subr.mxu0 0.0
    %657 = vmatpush1.msra.mxu0 0.0
    %658 = vmatprep.subr.mxu0 0.0
    %659 = vmatpush1.msra.mxu0 0.0
    %660 = vmatprep.subr.mxu0 0.0
    %661 = vmatpush1.msra.mxu0 0.0
    %662 = vmatprep.subr.mxu0 0.0
    %663 = vmatpush1.msra.mxu0 0.0
    %664 = vmatprep.subr.mxu0 0.0
    %665 = vmatpush1.msra.mxu0 0.0
    %666 = vmatprep.subr.mxu0 0.0
    %667 = vmatpush1.msra.mxu0 0.0
    %668 = vmatprep.subr.mxu0 0.0
    %669 = vmatpush1.msra.mxu0 0.0
    %670 = vmatprep.subr.mxu0 0.0
    %671 = vmatpush1.msra.mxu0 0.0
    %672 = vmatprep.subr.mxu0 0.0
    %673 = vmatpush1.msra.mxu0 0.0
    %674 = vmatprep.subr.mxu0 0.0
    %675 = vmatpush1.msra.mxu0 0.0
    %676 = vmatprep.subr.mxu0 0.0
    %677 = vmatpush1.msra.mxu0 0.0
    %678 = vmatprep.subr.mxu0 0.0
    %679 = vmatpush1.msra.mxu0 0.0
    %680 = vmatprep.subr.mxu0 0.0
    %681 = vmatpush1.msra.mxu0 0.0
    %682 = vmatprep.subr.mxu0 0.0
    %683 = vmatpush1.msra.mxu0 0.0
    %684 = vmatprep.subr.mxu0 0.0
    %685 = vmatpush1.msra.mxu0 0.0
    %686 = vmatprep.subr.mxu0 0.0
    %687 = vmatpush1.msra.mxu0 0.0
    %688 = vmatprep.subr.mxu0 0.0
    %689 = vmatpush1.msra.mxu0 0.0
    %690 = vmatprep.subr.mxu0 0.0
    %691 = vmatpush1.msra.mxu0 0.0
    %692 = vmatprep.subr.mxu0 0.0
    %693 = vmatpush1.msra.mxu0 0.0
    %694 = vmatprep.subr.mxu0 0.0
    %695 = vmatpush1.msra.mxu0 0.0
    %696 = vmatprep.subr.mxu0 0.0
    %697 = vmatpush1.msra.mxu0 0.0
    %698 = vmatprep.subr.mxu0 0.0
    %699 = vmatpush1.msra.mxu0 0.0
    %700 = vmatprep.subr.mxu0 0.0
    %701 = vmatpush1.msra.mxu0 0.0
    %702 = vmatprep.subr.mxu0 0.0
    %703 = vmatpush1.msra.mxu0 0.0
    %704 = vmatprep.mubr.f32.mxu0 0.0
    %705 = vmatmul.mubr.f32.gmra.mrb[0].mxu0 %v358
    %v706 = vpop.f32.mrb[0].mxu0
    %v707 = vadd.f32 0.0, %v706
    %v708 = vpop.f32.mrb[0].mxu0
    %709 = vdwg.mxu0
    %710 = vmatprep.subr.mxu0 0.0
    %711 = vmatpush1.msra.mxu0 %v329
    %712 = vmatprep.subr.mxu0 0.0
    %713 = vmatpush1.msra.mxu0 %v334
    %714 = vmatprep.subr.mxu0 0.0
    %715 = vmatpush1.msra.mxu0 0.0
    %716 = vmatprep.subr.mxu0 0.0
    %717 = vmatpush1.msra.mxu0 0.0
    %718 = vmatprep.subr.mxu0 0.0
    %719 = vmatpush1.msra.mxu0 0.0
    %720 = vmatprep.subr.mxu0 0.0
    %721 = vmatpush1.msra.mxu0 0.0
    %722 = vmatprep.subr.mxu0 0.0
    %723 = vmatpush1.msra.mxu0 0.0
    %724 = vmatprep.subr.mxu0 0.0
    %725 = vmatpush1.msra.mxu0 0.0
    %726 = vmatprep.subr.mxu0 0.0
    %727 = vmatpush1.msra.mxu0 0.0
    %728 = vmatprep.subr.mxu0 0.0
    %729 = vmatpush1.msra.mxu0 0.0
    %730 = vmatprep.subr.mxu0 0.0
    %731 = vmatpush1.msra.mxu0 0.0
    %732 = vmatprep.subr.mxu0 0.0
    %733 = vmatpush1.msra.mxu0 0.0
    %734 = vmatprep.subr.mxu0 0.0
    %735 = vmatpush1.msra.mxu0 0.0
    %736 = vmatprep.subr.mxu0 0.0
    %737 = vmatpush1.msra.mxu0 0.0
    %738 = vmatprep.subr.mxu0 0.0
    %739 = vmatpush1.msra.mxu0 0.0
    %740 = vmatprep.subr.mxu0 0.0
    %741 = vmatpush1.msra.mxu0 0.0
    %742 = vmatprep.subr.mxu0 0.0
    %743 = vmatpush1.msra.mxu0 0.0
    %744 = vmatprep.subr.mxu0 0.0
    %745 = vmatpush1.msra.mxu0 0.0
    %746 = vmatprep.subr.mxu0 0.0
    %747 = vmatpush1.msra.mxu0 0.0
    %748 = vmatprep.subr.mxu0 0.0
    %749 = vmatpush1.msra.mxu0 0.0
    %750 = vmatprep.subr.mxu0 0.0
    %751 = vmatpush1.msra.mxu0 0.0
    %752 = vmatprep.subr.mxu0 0.0
    %753 = vmatpush1.msra.mxu0 0.0
    %754 = vmatprep.subr.mxu0 0.0
    %755 = vmatpush1.msra.mxu0 0.0
    %756 = vmatprep.subr.mxu0 0.0
    %757 = vmatpush1.msra.mxu0 0.0
    %758 = vmatprep.subr.mxu0 0.0
    %759 = vmatpush1.msra.mxu0 0.0
    %760 = vmatprep.subr.mxu0 0.0
    %761 = vmatpush1.msra.mxu0 0.0
    %762 = vmatprep.subr.mxu0 0.0
    %763 = vmatpush1.msra.mxu0 0.0
    %764 = vmatprep.subr.mxu0 0.0
    %765 = vmatpush1.msra.mxu0 0.0
    %766 = vmatprep.subr.mxu0 0.0
    %767 = vmatpush1.msra.mxu0 0.0
    %768 = vmatprep.subr.mxu0 0.0
    %769 = vmatpush1.msra.mxu0 0.0
    %770 = vmatprep.subr.mxu0 0.0
    %771 = vmatpush1.msra.mxu0 0.0
    %772 = vmatprep.subr.mxu0 0.0
    %773 = vmatpush1.msra.mxu0 0.0
    %774 = vmatprep.mubr.f32.mxu0 0.0
    %775 = vmatmul.mubr.f32.gmra.mrb[0].mxu0 %v358
    %v776 = vpop.f32.mrb[0].mxu0
    %v777 = vadd.f32 0.0, %v776
    %v778 = vpop.f32.mrb[0].mxu0
    %779 = vdwg.mxu0
    %780 = vmatprep.subr.mxu0 0.0
    %781 = vmatpush1.msra.mxu0 %v339
    %782 = vmatprep.subr.mxu0 0.0
    %783 = vmatpush1.msra.mxu0 %v344
    %784 = vmatprep.subr.mxu0 0.0
    %785 = vmatpush1.msra.mxu0 0.0
    %786 = vmatprep.subr.mxu0 0.0
    %787 = vmatpush1.msra.mxu0 0.0
    %788 = vmatprep.subr.mxu0 0.0
    %789 = vmatpush1.msra.mxu0 0.0
    %790 = vmatprep.subr.mxu0 0.0
    %791 = vmatpush1.msra.mxu0 0.0
    %792 = vmatprep.subr.mxu0 0.0
    %793 = vmatpush1.msra.mxu0 0.0
    %794 = vmatprep.subr.mxu0 0.0
    %795 = vmatpush1.msra.mxu0 0.0
    %796 = vmatprep.subr.mxu0 0.0
    %797 = vmatpush1.msra.mxu0 0.0
    %798 = vmatprep.subr.mxu0 0.0
    %799 = vmatpush1.msra.mxu0 0.0
    %800 = vmatprep.subr.mxu0 0.0
    %801 = vmatpush1.msra.mxu0 0.0
    %802 = vmatprep.subr.mxu0 0.0
    %803 = vmatpush1.msra.mxu0 0.0
    %804 = vmatprep.subr.mxu0 0.0
    %805 = vmatpush1.msra.mxu0 0.0
    %806 = vmatprep.subr.mxu0 0.0
    %807 = vmatpush1.msra.mxu0 0.0
    %808 = vmatprep.subr.mxu0 0.0
    %809 = vmatpush1.msra.mxu0 0.0
    %810 = vmatprep.subr.mxu0 0.0
    %811 = vmatpush1.msra.mxu0 0.0
    %812 = vmatprep.subr.mxu0 0.0
    %813 = vmatpush1.msra.mxu0 0.0
    %814 = vmatprep.subr.mxu0 0.0
    %815 = vmatpush1.msra.mxu0 0.0
    %816 = vmatprep.subr.mxu0 0.0
    %817 = vmatpush1.msra.mxu0 0.0
    %818 = vmatprep.subr.mxu0 0.0
    %819 = vmatpush1.msra.mxu0 0.0
    %820 = vmatprep.subr.mxu0 0.0
    %821 = vmatpush1.msra.mxu0 0.0
    %822 = vmatprep.subr.mxu0 0.0
    %823 = vmatpush1.msra.mxu0 0.0
    %824 = vmatprep.subr.mxu0 0.0
    %825 = vmatpush1.msra.mxu0 0.0
    %826 = vmatprep.subr.mxu0 0.0
    %827 = vmatpush1.msra.mxu0 0.0
    %828 = vmatprep.subr.mxu0 0.0
    %829 = vmatpush1.msra.mxu0 0.0
    %830 = vmatprep.subr.mxu0 0.0
    %831 = vmatpush1.msra.mxu0 0.0
    %832 = vmatprep.subr.mxu0 0.0
    %833 = vmatpush1.msra.mxu0 0.0
    %834 = vmatprep.subr.mxu0 0.0
    %835 = vmatpush1.msra.mxu0 0.0
    %836 = vmatprep.subr.mxu0 0.0
    %837 = vmatpush1.msra.mxu0 0.0
    %838 = vmatprep.subr.mxu0 0.0
    %839 = vmatpush1.msra.mxu0 0.0
    %840 = vmatprep.subr.mxu0 0.0
    %841 = vmatpush1.msra.mxu0 0.0
    %842 = vmatprep.subr.mxu0 0.0
    %843 = vmatpush1.msra.mxu0 0.0
    %844 = vmatprep.mubr.f32.mxu0 0.0
    %845 = vmatmul.mubr.f32.gmra.mrb[0].mxu0 %v358
    %v846 = vpop.f32.mrb[0].mxu0
    %v847 = vadd.f32 0.0, %v846
    %v848 = vpop.f32.mrb[0].mxu0
    %849 = vdwg.mxu0
    %850 = vmatprep.subr.mxu0 0.0
    %851 = vmatpush1.msra.mxu0 %v349
    %852 = vmatprep.subr.mxu0 0.0
    %853 = vmatpush1.msra.mxu0 %v354
    %854 = vmatprep.subr.mxu0 0.0
    %855 = vmatpush1.msra.mxu0 0.0
    %856 = vmatprep.subr.mxu0 0.0
    %857 = vmatpush1.msra.mxu0 0.0
    %858 = vmatprep.subr.mxu0 0.0
    %859 = vmatpush1.msra.mxu0 0.0
    %860 = vmatprep.subr.mxu0 0.0
    %861 = vmatpush1.msra.mxu0 0.0
    %862 = vmatprep.subr.mxu0 0.0
    %863 = vmatpush1.msra.mxu0 0.0
    %864 = vmatprep.subr.mxu0 0.0
    %865 = vmatpush1.msra.mxu0 0.0
    %866 = vmatprep.subr.mxu0 0.0
    %867 = vmatpush1.msra.mxu0 0.0
    %868 = vmatprep.subr.mxu0 0.0
    %869 = vmatpush1.msra.mxu0 0.0
    %870 = vmatprep.subr.mxu0 0.0
    %871 = vmatpush1.msra.mxu0 0.0
    %872 = vmatprep.subr.mxu0 0.0
    %873 = vmatpush1.msra.mxu0 0.0
    %874 = vmatprep.subr.mxu0 0.0
    %875 = vmatpush1.msra.mxu0 0.0
    %876 = vmatprep.subr.mxu0 0.0
    %877 = vmatpush1.msra.mxu0 0.0
    %878 = vmatprep.subr.mxu0 0.0
    %879 = vmatpush1.msra.mxu0 0.0
    %880 = vmatprep.subr.mxu0 0.0
    %881 = vmatpush1.msra.mxu0 0.0
    %882 = vmatprep.subr.mxu0 0.0
    %883 = vmatpush1.msra.mxu0 0.0
    %884 = vmatprep.subr.mxu0 0.0
    %885 = vmatpush1.msra.mxu0 0.0
    %886 = vmatprep.subr.mxu0 0.0
    %887 = vmatpush1.msra.mxu0 0.0
    %888 = vmatprep.subr.mxu0 0.0
    %889 = vmatpush1.msra.mxu0 0.0
    %890 = vmatprep.subr.mxu0 0.0
    %891 = vmatpush1.msra.mxu0 0.0
    %892 = vmatprep.subr.mxu0 0.0
    %893 = vmatpush1.msra.mxu0 0.0
    %894 = vmatprep.subr.mxu0 0.0
    %895 = vmatpush1.msra.mxu0 0.0
    %896 = vmatprep.subr.mxu0 0.0
    %897 = vmatpush1.msra.mxu0 0.0
    %898 = vmatprep.subr.mxu0 0.0
    %899 = vmatpush1.msra.mxu0 0.0
    %900 = vmatprep.subr.mxu0 0.0
    %901 = vmatpush1.msra.mxu0 0.0
    %902 = vmatprep.subr.mxu0 0.0
    %903 = vmatpush1.msra.mxu0 0.0
    %904 = vmatprep.subr.mxu0 0.0
    %905 = vmatpush1.msra.mxu0 0.0
    %906 = vmatprep.subr.mxu0 0.0
    %907 = vmatpush1.msra.mxu0 0.0
    %908 = vmatprep.subr.mxu0 0.0
    %909 = vmatpush1.msra.mxu0 0.0
    %910 = vmatprep.subr.mxu0 0.0
    %911 = vmatpush1.msra.mxu0 0.0
    %912 = vmatprep.subr.mxu0 0.0
    %913 = vmatpush1.msra.mxu0 0.0
    %914 = vmatprep.mubr.f32.mxu0 0.0
    %915 = vmatmul.mubr.f32.gmra.mrb[0].mxu0 %v358
    %v916 = vpop.f32.mrb[0].mxu0
    %v917 = vadd.f32 0.0, %v916
    %v918 = vpop.f32.mrb[0].mxu0
    %919 = vdwg.mxu0
    %vm920 = vcmask 64512
    %v922 = vsel %vm920, %v160, 0
    %v925 = vsel %vm920, %v161, 0
    %927 = vmatprep.subr.mxu0 0.0
    %928 = vmatpush1.msra.mxu0 %v427
    %929 = vmatprep.subr.mxu0 0.0
    %930 = vmatpush1.msra.mxu0 0.0
    %931 = vmatprep.subr.mxu0 0.0
    %932 = vmatpush1.msra.mxu0 0.0
    %933 = vmatprep.subr.mxu0 0.0
    %934 = vmatpush1.msra.mxu0 0.0
    %935 = vmatprep.subr.mxu0 0.0
    %936 = vmatpush1.msra.mxu0 0.0
    %937 = vmatprep.subr.mxu0 0.0
    %938 = vmatpush1.msra.mxu0 0.0
    %939 = vmatprep.subr.mxu0 0.0
    %940 = vmatpush1.msra.mxu0 0.0
    %941 = vmatprep.subr.mxu0 0.0
    %942 = vmatpush1.msra.mxu0 0.0
    %943 = vmatprep.subr.mxu0 0.0
    %944 = vmatpush1.msra.mxu0 0.0
    %945 = vmatprep.subr.mxu0 0.0
    %946 = vmatpush1.msra.mxu0 0.0
    %947 = vmatprep.subr.mxu0 0.0
    %948 = vmatpush1.msra.mxu0 0.0
    %949 = vmatprep.subr.mxu0 0.0
    %950 = vmatpush1.msra.mxu0 0.0
    %951 = vmatprep.subr.mxu0 0.0
    %952 = vmatpush1.msra.mxu0 0.0
    %953 = vmatprep.subr.mxu0 0.0
    %954 = vmatpush1.msra.mxu0 0.0
    %955 = vmatprep.subr.mxu0 0.0
    %956 = vmatpush1.msra.mxu0 0.0
    %957 = vmatprep.subr.mxu0 0.0
    %958 = vmatpush1.msra.mxu0 0.0
    %959 = vmatprep.subr.mxu0 0.0
    %960 = vmatpush1.msra.mxu0 0.0
    %961 = vmatprep.subr.mxu0 0.0
    %962 = vmatpush1.msra.mxu0 0.0
    %963 = vmatprep.subr.mxu0 0.0
    %964 = vmatpush1.msra.mxu0 0.0
    %965 = vmatprep.subr.mxu0 0.0
    %966 = vmatpush1.msra.mxu0 0.0
    %967 = vmatprep.subr.mxu0 0.0
    %968 = vmatpush1.msra.mxu0 0.0
    %969 = vmatprep.subr.mxu0 0.0
    %970 = vmatpush1.msra.mxu0 0.0
    %971 = vmatprep.subr.mxu0 0.0
    %972 = vmatpush1.msra.mxu0 0.0
    %973 = vmatprep.subr.mxu0 0.0
    %974 = vmatpush1.msra.mxu0 0.0
    %975 = vmatprep.subr.mxu0 0.0
    %976 = vmatpush1.msra.mxu0 0.0
    %977 = vmatprep.subr.mxu0 0.0
    %978 = vmatpush1.msra.mxu0 0.0
    %979 = vmatprep.subr.mxu0 0.0
    %980 = vmatpush1.msra.mxu0 0.0
    %981 = vmatprep.subr.mxu0 0.0
    %982 = vmatpush1.msra.mxu0 0.0
    %983 = vmatprep.subr.mxu0 0.0
    %984 = vmatpush1.msra.mxu0 0.0
    %985 = vmatprep.subr.mxu0 0.0
    %986 = vmatpush1.msra.mxu0 0.0
    %987 = vmatprep.subr.mxu0 0.0
    %988 = vmatpush1.msra.mxu0 0.0
    %989 = vmatprep.subr.mxu0 0.0
    %990 = vmatpush1.msra.mxu0 0.0
    %991 = vmatprep.mubr.f32.mxu0 0.0
    %992 = vmatmul.mubr.f32.gmra.mrb[0].mxu0 %v922
    %v993 = vpop.f32.mrb[0].mxu0
    %v994 = vadd.f32 0.0, %v993
    %v995 = vpop.f32.mrb[0].mxu0
    %996 = vmatprep.mubr.f32.mxu0 0.0
    %997 = vmatmul.mubr.f32.gmra.mrb[0].mxu0 %v925
    %v998 = vpop.f32.mrb[0].mxu0
    %v999 = vadd.f32 0.0, %v998
    %v1000 = vpop.f32.mrb[0].mxu0
    %1001 = vdwg.mxu0
    %1002 = vmatprep.subr.mxu0 0.0
    %1003 = vmatpush1.msra.mxu0 %v497
    %1004 = vmatprep.subr.mxu0 0.0
    %1005 = vmatpush1.msra.mxu0 0.0
    %1006 = vmatprep.subr.mxu0 0.0
    %1007 = vmatpush1.msra.mxu0 0.0
    %1008 = vmatprep.subr.mxu0 0.0
    %1009 = vmatpush1.msra.mxu0 0.0
    %1010 = vmatprep.subr.mxu0 0.0
    %1011 = vmatpush1.msra.mxu0 0.0
    %1012 = vmatprep.subr.mxu0 0.0
    %1013 = vmatpush1.msra.mxu0 0.0
    %1014 = vmatprep.subr.mxu0 0.0
    %1015 = vmatpush1.msra.mxu0 0.0
    %1016 = vmatprep.subr.mxu0 0.0
    %1017 = vmatpush1.msra.mxu0 0.0
    %1018 = vmatprep.subr.mxu0 0.0
    %1019 = vmatpush1.msra.mxu0 0.0
    %1020 = vmatprep.subr.mxu0 0.0
    %1021 = vmatpush1.msra.mxu0 0.0
    %1022 = vmatprep.subr.mxu0 0.0
    %1023 = vmatpush1.msra.mxu0 0.0
    %1024 = vmatprep.subr.mxu0 0.0
    %1025 = vmatpush1.msra.mxu0 0.0
    %1026 = vmatprep.subr.mxu0 0.0
    %1027 = vmatpush1.msra.mxu0 0.0
    %1028 = vmatprep.subr.mxu0 0.0
    %1029 = vmatpush1.msra.mxu0 0.0
    %1030 = vmatprep.subr.mxu0 0.0
    %1031 = vmatpush1.msra.mxu0 0.0
    %1032 = vmatprep.subr.mxu0 0.0
    %1033 = vmatpush1.msra.mxu0 0.0
    %1034 = vmatprep.subr.mxu0 0.0
    %1035 = vmatpush1.msra.mxu0 0.0
    %1036 = vmatprep.subr.mxu0 0.0
    %1037 = vmatpush1.msra.mxu0 0.0
    %1038 = vmatprep.subr.mxu0 0.0
    %1039 = vmatpush1.msra.mxu0 0.0
    %1040 = vmatprep.subr.mxu0 0.0
    %1041 = vmatpush1.msra.mxu0 0.0
    %1042 = vmatprep.subr.mxu0 0.0
    %1043 = vmatpush1.msra.mxu0 0.0
    %1044 = vmatprep.subr.mxu0 0.0
    %1045 = vmatpush1.msra.mxu0 0.0
    %1046 = vmatprep.subr.mxu0 0.0
    %1047 = vmatpush1.msra.mxu0 0.0
    %1048 = vmatprep.subr.mxu0 0.0
    %1049 = vmatpush1.msra.mxu0 0.0
    %1050 = vmatprep.subr.mxu0 0.0
    %1051 = vmatpush1.msra.mxu0 0.0
    %1052 = vmatprep.subr.mxu0 0.0
    %1053 = vmatpush1.msra.mxu0 0.0
    %1054 = vmatprep.subr.mxu0 0.0
    %1055 = vmatpush1.msra.mxu0 0.0
    %1056 = vmatprep.subr.mxu0 0.0
    %1057 = vmatpush1.msra.mxu0 0.0
    %1058 = vmatprep.subr.mxu0 0.0
    %1059 = vmatpush1.msra.mxu0 0.0
    %1060 = vmatprep.subr.mxu0 0.0
    %1061 = vmatpush1.msra.mxu0 0.0
    %1062 = vmatprep.subr.mxu0 0.0
    %1063 = vmatpush1.msra.mxu0 0.0
    %1064 = vmatprep.subr.mxu0 0.0
    %1065 = vmatpush1.msra.mxu0 0.0
    %1066 = vmatprep.mubr.f32.mxu0 0.0
    %1067 = vmatmul.mubr.f32.gmra.mrb[0].mxu0 %v922
    %v1068 = vpop.f32.mrb[0].mxu0
    %v1069 = vadd.f32 0.0, %v1068
    %v1070 = vpop.f32.mrb[0].mxu0
    %1071 = vmatprep.mubr.f32.mxu0 0.0
    %1072 = vmatmul.mubr.f32.gmra.mrb[0].mxu0 %v925
    %v1073 = vpop.f32.mrb[0].mxu0
    %v1074 = vadd.f32 0.0, %v1073
    %v1075 = vpop.f32.mrb[0].mxu0
    %1076 = vdwg.mxu0
    %1077 = vmatprep.subr.mxu0 0.0
    %1078 = vmatpush1.msra.mxu0 %v567
    %1079 = vmatprep.subr.mxu0 0.0
    %1080 = vmatpush1.msra.mxu0 0.0
    %1081 = vmatprep.subr.mxu0 0.0
    %1082 = vmatpush1.msra.mxu0 0.0
    %1083 = vmatprep.subr.mxu0 0.0
    %1084 = vmatpush1.msra.mxu0 0.0
    %1085 = vmatprep.subr.mxu0 0.0
    %1086 = vmatpush1.msra.mxu0 0.0
    %1087 = vmatprep.subr.mxu0 0.0
    %1088 = vmatpush1.msra.mxu0 0.0
    %1089 = vmatprep.subr.mxu0 0.0
    %1090 = vmatpush1.msra.mxu0 0.0
    %1091 = vmatprep.subr.mxu0 0.0
    %1092 = vmatpush1.msra.mxu0 0.0
    %1093 = vmatprep.subr.mxu0 0.0
    %1094 = vmatpush1.msra.mxu0 0.0
    %1095 = vmatprep.subr.mxu0 0.0
    %1096 = vmatpush1.msra.mxu0 0.0
    %1097 = vmatprep.subr.mxu0 0.0
    %1098 = vmatpush1.msra.mxu0 0.0
    %1099 = vmatprep.subr.mxu0 0.0
    %1100 = vmatpush1.msra.mxu0 0.0
    %1101 = vmatprep.subr.mxu0 0.0
    %1102 = vmatpush1.msra.mxu0 0.0
    %1103 = vmatprep.subr.mxu0 0.0
    %1104 = vmatpush1.msra.mxu0 0.0
    %1105 = vmatprep.subr.mxu0 0.0
    %1106 = vmatpush1.msra.mxu0 0.0
    %1107 = vmatprep.subr.mxu0 0.0
    %1108 = vmatpush1.msra.mxu0 0.0
    %1109 = vmatprep.subr.mxu0 0.0
    %1110 = vmatpush1.msra.mxu0 0.0
    %1111 = vmatprep.subr.mxu0 0.0
    %1112 = vmatpush1.msra.mxu0 0.0
    %1113 = vmatprep.subr.mxu0 0.0
    %1114 = vmatpush1.msra.mxu0 0.0
    %1115 = vmatprep.subr.mxu0 0.0
    %1116 = vmatpush1.msra.mxu0 0.0
    %1117 = vmatprep.subr.mxu0 0.0
    %1118 = vmatpush1.msra.mxu0 0.0
    %1119 = vmatprep.subr.mxu0 0.0
    %1120 = vmatpush1.msra.mxu0 0.0
    %1121 = vmatprep.subr.mxu0 0.0
    %1122 = vmatpush1.msra.mxu0 0.0
    %1123 = vmatprep.subr.mxu0 0.0
    %1124 = vmatpush1.msra.mxu0 0.0
    %1125 = vmatprep.subr.mxu0 0.0
    %1126 = vmatpush1.msra.mxu0 0.0
    %1127 = vmatprep.subr.mxu0 0.0
    %1128 = vmatpush1.msra.mxu0 0.0
    %1129 = vmatprep.subr.mxu0 0.0
    %1130 = vmatpush1.msra.mxu0 0.0
    %1131 = vmatprep.subr.mxu0 0.0
    %1132 = vmatpush1.msra.mxu0 0.0
    %1133 = vmatprep.subr.mxu0 0.0
    %1134 = vmatpush1.msra.mxu0 0.0
    %1135 = vmatprep.subr.mxu0 0.0
    %1136 = vmatpush1.msra.mxu0 0.0
    %1137 = vmatprep.subr.mxu0 0.0
    %1138 = vmatpush1.msra.mxu0 0.0
    %1139 = vmatprep.subr.mxu0 0.0
    %1140 = vmatpush1.msra.mxu0 0.0
    %1141 = vmatprep.mubr.f32.mxu0 0.0
    %1142 = vmatmul.mubr.f32.gmra.mrb[0].mxu0 %v922
    %v1143 = vpop.f32.mrb[0].mxu0
    %v1144 = vadd.f32 0.0, %v1143
    %v1145 = vpop.f32.mrb[0].mxu0
    %1146 = vmatprep.mubr.f32.mxu0 0.0
    %1147 = vmatmul.mubr.f32.gmra.mrb[0].mxu0 %v925
    %v1148 = vpop.f32.mrb[0].mxu0
    %v1149 = vadd.f32 0.0, %v1148
    %v1150 = vpop.f32.mrb[0].mxu0
    %1151 = vdwg.mxu0
    %1152 = vmatprep.subr.mxu0 0.0
    %1153 = vmatpush1.msra.mxu0 %v637
    %1154 = vmatprep.subr.mxu0 0.0
    %1155 = vmatpush1.msra.mxu0 0.0
    %1156 = vmatprep.subr.mxu0 0.0
    %1157 = vmatpush1.msra.mxu0 0.0
    %1158 = vmatprep.subr.mxu0 0.0
    %1159 = vmatpush1.msra.mxu0 0.0
    %1160 = vmatprep.subr.mxu0 0.0
    %1161 = vmatpush1.msra.mxu0 0.0
    %1162 = vmatprep.subr.mxu0 0.0
    %1163 = vmatpush1.msra.mxu0 0.0
    %1164 = vmatprep.subr.mxu0 0.0
    %1165 = vmatpush1.msra.mxu0 0.0
    %1166 = vmatprep.subr.mxu0 0.0
    %1167 = vmatpush1.msra.mxu0 0.0
    %1168 = vmatprep.subr.mxu0 0.0
    %1169 = vmatpush1.msra.mxu0 0.0
    %1170 = vmatprep.subr.mxu0 0.0
    %1171 = vmatpush1.msra.mxu0 0.0
    %1172 = vmatprep.subr.mxu0 0.0
    %1173 = vmatpush1.msra.mxu0 0.0
    %1174 = vmatprep.subr.mxu0 0.0
    %1175 = vmatpush1.msra.mxu0 0.0
    %1176 = vmatprep.subr.mxu0 0.0
    %1177 = vmatpush1.msra.mxu0 0.0
    %1178 = vmatprep.subr.mxu0 0.0
    %1179 = vmatpush1.msra.mxu0 0.0
    %1180 = vmatprep.subr.mxu0 0.0
    %1181 = vmatpush1.msra.mxu0 0.0
    %1182 = vmatprep.subr.mxu0 0.0
    %1183 = vmatpush1.msra.mxu0 0.0
    %1184 = vmatprep.subr.mxu0 0.0
    %1185 = vmatpush1.msra.mxu0 0.0
    %1186 = vmatprep.subr.mxu0 0.0
    %1187 = vmatpush1.msra.mxu0 0.0
    %1188 = vmatprep.subr.mxu0 0.0
    %1189 = vmatpush1.msra.mxu0 0.0
    %1190 = vmatprep.subr.mxu0 0.0
    %1191 = vmatpush1.msra.mxu0 0.0
    %1192 = vmatprep.subr.mxu0 0.0
    %1193 = vmatpush1.msra.mxu0 0.0
    %1194 = vmatprep.subr.mxu0 0.0
    %1195 = vmatpush1.msra.mxu0 0.0
    %1196 = vmatprep.subr.mxu0 0.0
    %1197 = vmatpush1.msra.mxu0 0.0
    %1198 = vmatprep.subr.mxu0 0.0
    %1199 = vmatpush1.msra.mxu0 0.0
    %1200 = vmatprep.subr.mxu0 0.0
    %1201 = vmatpush1.msra.mxu0 0.0
    %1202 = vmatprep.subr.mxu0 0.0
    %1203 = vmatpush1.msra.mxu0 0.0
    %1204 = vmatprep.subr.mxu0 0.0
    %1205 = vmatpush1.msra.mxu0 0.0
    %1206 = vmatprep.subr.mxu0 0.0
    %1207 = vmatpush1.msra.mxu0 0.0
    %1208 = vmatprep.subr.mxu0 0.0
    %1209 = vmatpush1.msra.mxu0 0.0
    %1210 = vmatprep.subr.mxu0 0.0
    %1211 = vmatpush1.msra.mxu0 0.0
    %1212 = vmatprep.subr.mxu0 0.0
    %1213 = vmatpush1.msra.mxu0 0.0
    %1214 = vmatprep.subr.mxu0 0.0
    %1215 = vmatpush1.msra.mxu0 0.0
    %1216 = vmatprep.mubr.f32.mxu0 0.0
    %1217 = vmatmul.mubr.f32.gmra.mrb[0].mxu0 %v922
    %v1218 = vpop.f32.mrb[0].mxu0
    %v1219 = vadd.f32 0.0, %v1218
    %v1220 = vpop.f32.mrb[0].mxu0
    %1221 = vmatprep.mubr.f32.mxu0 0.0
    %1222 = vmatmul.mubr.f32.gmra.mrb[0].mxu0 %v925
    %v1223 = vpop.f32.mrb[0].mxu0
    %v1224 = vadd.f32 0.0, %v1223
    %v1225 = vpop.f32.mrb[0].mxu0
    %1226 = vdwg.mxu0
    %1227 = vmatprep.subr.mxu0 0.0
    %1228 = vmatpush1.msra.mxu0 %v707
    %1229 = vmatprep.subr.mxu0 0.0
    %1230 = vmatpush1.msra.mxu0 0.0
    %1231 = vmatprep.subr.mxu0 0.0
    %1232 = vmatpush1.msra.mxu0 0.0
    %1233 = vmatprep.subr.mxu0 0.0
    %1234 = vmatpush1.msra.mxu0 0.0
    %1235 = vmatprep.subr.mxu0 0.0
    %1236 = vmatpush1.msra.mxu0 0.0
    %1237 = vmatprep.subr.mxu0 0.0
    %1238 = vmatpush1.msra.mxu0 0.0
    %1239 = vmatprep.subr.mxu0 0.0
    %1240 = vmatpush1.msra.mxu0 0.0
    %1241 = vmatprep.subr.mxu0 0.0
    %1242 = vmatpush1.msra.mxu0 0.0
    %1243 = vmatprep.subr.mxu0 0.0
    %1244 = vmatpush1.msra.mxu0 0.0
    %1245 = vmatprep.subr.mxu0 0.0
    %1246 = vmatpush1.msra.mxu0 0.0
    %1247 = vmatprep.subr.mxu0 0.0
    %1248 = vmatpush1.msra.mxu0 0.0
    %1249 = vmatprep.subr.mxu0 0.0
    %1250 = vmatpush1.msra.mxu0 0.0
    %1251 = vmatprep.subr.mxu0 0.0
    %1252 = vmatpush1.msra.mxu0 0.0
    %1253 = vmatprep.subr.mxu0 0.0
    %1254 = vmatpush1.msra.mxu0 0.0
    %1255 = vmatprep.subr.mxu0 0.0
    %1256 = vmatpush1.msra.mxu0 0.0
    %1257 = vmatprep.subr.mxu0 0.0
    %1258 = vmatpush1.msra.mxu0 0.0
    %1259 = vmatprep.subr.mxu0 0.0
    %1260 = vmatpush1.msra.mxu0 0.0
    %1261 = vmatprep.subr.mxu0 0.0
    %1262 = vmatpush1.msra.mxu0 0.0
    %1263 = vmatprep.subr.mxu0 0.0
    %1264 = vmatpush1.msra.mxu0 0.0
    %1265 = vmatprep.subr.mxu0 0.0
    %1266 = vmatpush1.msra.mxu0 0.0
    %1267 = vmatprep.subr.mxu0 0.0
    %1268 = vmatpush1.msra.mxu0 0.0
    %1269 = vmatprep.subr.mxu0 0.0
    %1270 = vmatpush1.msra.mxu0 0.0
    %1271 = vmatprep.subr.mxu0 0.0
    %1272 = vmatpush1.msra.mxu0 0.0
    %1273 = vmatprep.subr.mxu0 0.0
    %1274 = vmatpush1.msra.mxu0 0.0
    %1275 = vmatprep.subr.mxu0 0.0
    %1276 = vmatpush1.msra.mxu0 0.0
    %1277 = vmatprep.subr.mxu0 0.0
    %1278 = vmatpush1.msra.mxu0 0.0
    %1279 = vmatprep.subr.mxu0 0.0
    %1280 = vmatpush1.msra.mxu0 0.0
    %1281 = vmatprep.subr.mxu0 0.0
    %1282 = vmatpush1.msra.mxu0 0.0
    %1283 = vmatprep.subr.mxu0 0.0
    %1284 = vmatpush1.msra.mxu0 0.0
    %1285 = vmatprep.subr.mxu0 0.0
    %1286 = vmatpush1.msra.mxu0 0.0
    %1287 = vmatprep.subr.mxu0 0.0
    %1288 = vmatpush1.msra.mxu0 0.0
    %1289 = vmatprep.subr.mxu0 0.0
    %1290 = vmatpush1.msra.mxu0 0.0
    %1291 = vmatprep.mubr.f32.mxu0 0.0
    %1292 = vmatmul.mubr.f32.gmra.mrb[0].mxu0 %v922
    %v1293 = vpop.f32.mrb[0].mxu0
    %v1294 = vadd.f32 0.0, %v1293
    %v1295 = vpop.f32.mrb[0].mxu0
    %1296 = vmatprep.mubr.f32.mxu0 0.0
    %1297 = vmatmul.mubr.f32.gmra.mrb[0].mxu0 %v925
    %v1298 = vpop.f32.mrb[0].mxu0
    %v1299 = vadd.f32 0.0, %v1298
    %v1300 = vpop.f32.mrb[0].mxu0
    %1301 = vdwg.mxu0
    %1302 = vmatprep.subr.mxu0 0.0
    %1303 = vmatpush1.msra.mxu0 %v777
    %1304 = vmatprep.subr.mxu0 0.0
    %1305 = vmatpush1.msra.mxu0 0.0
    %1306 = vmatprep.subr.mxu0 0.0
    %1307 = vmatpush1.msra.mxu0 0.0
    %1308 = vmatprep.subr.mxu0 0.0
    %1309 = vmatpush1.msra.mxu0 0.0
    %1310 = vmatprep.subr.mxu0 0.0
    %1311 = vmatpush1.msra.mxu0 0.0
    %1312 = vmatprep.subr.mxu0 0.0
    %1313 = vmatpush1.msra.mxu0 0.0
    %1314 = vmatprep.subr.mxu0 0.0
    %1315 = vmatpush1.msra.mxu0 0.0
    %1316 = vmatprep.subr.mxu0 0.0
    %1317 = vmatpush1.msra.mxu0 0.0
    %1318 = vmatprep.subr.mxu0 0.0
    %1319 = vmatpush1.msra.mxu0 0.0
    %1320 = vmatprep.subr.mxu0 0.0
    %1321 = vmatpush1.msra.mxu0 0.0
    %1322 = vmatprep.subr.mxu0 0.0
    %1323 = vmatpush1.msra.mxu0 0.0
    %1324 = vmatprep.subr.mxu0 0.0
    %1325 = vmatpush1.msra.mxu0 0.0
    %1326 = vmatprep.subr.mxu0 0.0
    %1327 = vmatpush1.msra.mxu0 0.0
    %1328 = vmatprep.subr.mxu0 0.0
    %1329 = vmatpush1.msra.mxu0 0.0
    %1330 = vmatprep.subr.mxu0 0.0
    %1331 = vmatpush1.msra.mxu0 0.0
    %1332 = vmatprep.subr.mxu0 0.0
    %1333 = vmatpush1.msra.mxu0 0.0
    %1334 = vmatprep.subr.mxu0 0.0
    %1335 = vmatpush1.msra.mxu0 0.0
    %1336 = vmatprep.subr.mxu0 0.0
    %1337 = vmatpush1.msra.mxu0 0.0
    %1338 = vmatprep.subr.mxu0 0.0
    %1339 = vmatpush1.msra.mxu0 0.0
    %1340 = vmatprep.subr.mxu0 0.0
    %1341 = vmatpush1.msra.mxu0 0.0
    %1342 = vmatprep.subr.mxu0 0.0
    %1343 = vmatpush1.msra.mxu0 0.0
    %1344 = vmatprep.subr.mxu0 0.0
    %1345 = vmatpush1.msra.mxu0 0.0
    %1346 = vmatprep.subr.mxu0 0.0
    %1347 = vmatpush1.msra.mxu0 0.0
    %1348 = vmatprep.subr.mxu0 0.0
    %1349 = vmatpush1.msra.mxu0 0.0
    %1350 = vmatprep.subr.mxu0 0.0
    %1351 = vmatpush1.msra.mxu0 0.0
    %1352 = vmatprep.subr.mxu0 0.0
    %1353 = vmatpush1.msra.mxu0 0.0
    %1354 = vmatprep.subr.mxu0 0.0
    %1355 = vmatpush1.msra.mxu0 0.0
    %1356 = vmatprep.subr.mxu0 0.0
    %1357 = vmatpush1.msra.mxu0 0.0
    %1358 = vmatprep.subr.mxu0 0.0
    %1359 = vmatpush1.msra.mxu0 0.0
    %1360 = vmatprep.subr.mxu0 0.0
    %1361 = vmatpush1.msra.mxu0 0.0
    %1362 = vmatprep.subr.mxu0 0.0
    %1363 = vmatpush1.msra.mxu0 0.0
    %1364 = vmatprep.subr.mxu0 0.0
    %1365 = vmatpush1.msra.mxu0 0.0
    %1366 = vmatprep.mubr.f32.mxu0 0.0
    %1367 = vmatmul.mubr.f32.gmra.mrb[0].mxu0 %v922
    %v1368 = vpop.f32.mrb[0].mxu0
    %v1369 = vadd.f32 0.0, %v1368
    %v1370 = vpop.f32.mrb[0].mxu0
    %1371 = vmatprep.mubr.f32.mxu0 0.0
    %1372 = vmatmul.mubr.f32.gmra.mrb[0].mxu0 %v925
    %v1373 = vpop.f32.mrb[0].mxu0
    %v1374 = vadd.f32 0.0, %v1373
    %v1375 = vpop.f32.mrb[0].mxu0
    %1376 = vdwg.mxu0
    %1377 = vmatprep.subr.mxu0 0.0
    %1378 = vmatpush1.msra.mxu0 %v847
    %1379 = vmatprep.subr.mxu0 0.0
    %1380 = vmatpush1.msra.mxu0 0.0
    %1381 = vmatprep.subr.mxu0 0.0
    %1382 = vmatpush1.msra.mxu0 0.0
    %1383 = vmatprep.subr.mxu0 0.0
    %1384 = vmatpush1.msra.mxu0 0.0
    %1385 = vmatprep.subr.mxu0 0.0
    %1386 = vmatpush1.msra.mxu0 0.0
    %1387 = vmatprep.subr.mxu0 0.0
    %1388 = vmatpush1.msra.mxu0 0.0
    %1389 = vmatprep.subr.mxu0 0.0
    %1390 = vmatpush1.msra.mxu0 0.0
    %1391 = vmatprep.subr.mxu0 0.0
    %1392 = vmatpush1.msra.mxu0 0.0
    %1393 = vmatprep.subr.mxu0 0.0
    %1394 = vmatpush1.msra.mxu0 0.0
    %1395 = vmatprep.subr.mxu0 0.0
    %1396 = vmatpush1.msra.mxu0 0.0
    %1397 = vmatprep.subr.mxu0 0.0
    %1398 = vmatpush1.msra.mxu0 0.0
    %1399 = vmatprep.subr.mxu0 0.0
    %1400 = vmatpush1.msra.mxu0 0.0
    %1401 = vmatprep.subr.mxu0 0.0
    %1402 = vmatpush1.msra.mxu0 0.0
    %1403 = vmatprep.subr.mxu0 0.0
    %1404 = vmatpush1.msra.mxu0 0.0
    %1405 = vmatprep.subr.mxu0 0.0
    %1406 = vmatpush1.msra.mxu0 0.0
    %1407 = vmatprep.subr.mxu0 0.0
    %1408 = vmatpush1.msra.mxu0 0.0
    %1409 = vmatprep.subr.mxu0 0.0
    %1410 = vmatpush1.msra.mxu0 0.0
    %1411 = vmatprep.subr.mxu0 0.0
    %1412 = vmatpush1.msra.mxu0 0.0
    %1413 = vmatprep.subr.mxu0 0.0
    %1414 = vmatpush1.msra.mxu0 0.0
    %1415 = vmatprep.subr.mxu0 0.0
    %1416 = vmatpush1.msra.mxu0 0.0
    %1417 = vmatprep.subr.mxu0 0.0
    %1418 = vmatpush1.msra.mxu0 0.0
    %1419 = vmatprep.subr.mxu0 0.0
    %1420 = vmatpush1.msra.mxu0 0.0
    %1421 = vmatprep.subr.mxu0 0.0
    %1422 = vmatpush1.msra.mxu0 0.0
    %1423 = vmatprep.subr.mxu0 0.0
    %1424 = vmatpush1.msra.mxu0 0.0
    %1425 = vmatprep.subr.mxu0 0.0
    %1426 = vmatpush1.msra.mxu0 0.0
    %1427 = vmatprep.subr.mxu0 0.0
    %1428 = vmatpush1.msra.mxu0 0.0
    %1429 = vmatprep.subr.mxu0 0.0
    %1430 = vmatpush1.msra.mxu0 0.0
    %1431 = vmatprep.subr.mxu0 0.0
    %1432 = vmatpush1.msra.mxu0 0.0
    %1433 = vmatprep.subr.mxu0 0.0
    %1434 = vmatpush1.msra.mxu0 0.0
    %1435 = vmatprep.subr.mxu0 0.0
    %1436 = vmatpush1.msra.mxu0 0.0
    %1437 = vmatprep.subr.mxu0 0.0
    %1438 = vmatpush1.msra.mxu0 0.0
    %1439 = vmatprep.subr.mxu0 0.0
    %1440 = vmatpush1.msra.mxu0 0.0
    %1441 = vmatprep.mubr.f32.mxu0 0.0
    %1442 = vmatmul.mubr.f32.gmra.mrb[0].mxu0 %v922
    %v1443 = vpop.f32.mrb[0].mxu0
    %v1444 = vadd.f32 0.0, %v1443
    %v1445 = vpop.f32.mrb[0].mxu0
    %1446 = vmatprep.mubr.f32.mxu0 0.0
    %1447 = vmatmul.mubr.f32.gmra.mrb[0].mxu0 %v925
    %v1448 = vpop.f32.mrb[0].mxu0
    %v1449 = vadd.f32 0.0, %v1448
    %v1450 = vpop.f32.mrb[0].mxu0
    %1451 = vdwg.mxu0
    %1452 = vmatprep.subr.mxu0 0.0
    %1453 = vmatpush1.msra.mxu0 %v917
    %1454 = vmatprep.subr.mxu0 0.0
    %1455 = vmatpush1.msra.mxu0 0.0
    %1456 = vmatprep.subr.mxu0 0.0
    %1457 = vmatpush1.msra.mxu0 0.0
    %1458 = vmatprep.subr.mxu0 0.0
    %1459 = vmatpush1.msra.mxu0 0.0
    %1460 = vmatprep.subr.mxu0 0.0
    %1461 = vmatpush1.msra.mxu0 0.0
    %1462 = vmatprep.subr.mxu0 0.0
    %1463 = vmatpush1.msra.mxu0 0.0
    %1464 = vmatprep.subr.mxu0 0.0
    %1465 = vmatpush1.msra.mxu0 0.0
    %1466 = vmatprep.subr.mxu0 0.0
    %1467 = vmatpush1.msra.mxu0 0.0
    %1468 = vmatprep.subr.mxu0 0.0
    %1469 = vmatpush1.msra.mxu0 0.0
    %1470 = vmatprep.subr.mxu0 0.0
    %1471 = vmatpush1.msra.mxu0 0.0
    %1472 = vmatprep.subr.mxu0 0.0
    %1473 = vmatpush1.msra.mxu0 0.0
    %1474 = vmatprep.subr.mxu0 0.0
    %1475 = vmatpush1.msra.mxu0 0.0
    %1476 = vmatprep.subr.mxu0 0.0
    %1477 = vmatpush1.msra.mxu0 0.0
    %1478 = vmatprep.subr.mxu0 0.0
    %1479 = vmatpush1.msra.mxu0 0.0
    %1480 = vmatprep.subr.mxu0 0.0
    %1481 = vmatpush1.msra.mxu0 0.0
    %1482 = vmatprep.subr.mxu0 0.0
    %1483 = vmatpush1.msra.mxu0 0.0
    %1484 = vmatprep.subr.mxu0 0.0
    %1485 = vmatpush1.msra.mxu0 0.0
    %1486 = vmatprep.subr.mxu0 0.0
    %1487 = vmatpush1.msra.mxu0 0.0
    %1488 = vmatprep.subr.mxu0 0.0
    %1489 = vmatpush1.msra.mxu0 0.0
    %1490 = vmatprep.subr.mxu0 0.0
    %1491 = vmatpush1.msra.mxu0 0.0
    %1492 = vmatprep.subr.mxu0 0.0
    %1493 = vmatpush1.msra.mxu0 0.0
    %1494 = vmatprep.subr.mxu0 0.0
    %1495 = vmatpush1.msra.mxu0 0.0
    %1496 = vmatprep.subr.mxu0 0.0
    %1497 = vmatpush1.msra.mxu0 0.0
    %1498 = vmatprep.subr.mxu0 0.0
    %1499 = vmatpush1.msra.mxu0 0.0
    %1500 = vmatprep.subr.mxu0 0.0
    %1501 = vmatpush1.msra.mxu0 0.0
    %1502 = vmatprep.subr.mxu0 0.0
    %1503 = vmatpush1.msra.mxu0 0.0
    %1504 = vmatprep.subr.mxu0 0.0
    %1505 = vmatpush1.msra.mxu0 0.0
    %1506 = vmatprep.subr.mxu0 0.0
    %1507 = vmatpush1.msra.mxu0 0.0
    %1508 = vmatprep.subr.mxu0 0.0
    %1509 = vmatpush1.msra.mxu0 0.0
    %1510 = vmatprep.subr.mxu0 0.0
    %1511 = vmatpush1.msra.mxu0 0.0
    %1512 = vmatprep.subr.mxu0 0.0
    %1513 = vmatpush1.msra.mxu0 0.0
    %1514 = vmatprep.subr.mxu0 0.0
    %1515 = vmatpush1.msra.mxu0 0.0
    %1516 = vmatprep.mubr.f32.mxu0 0.0
    %1517 = vmatmul.mubr.f32.gmra.mrb[0].mxu0 %v922
    %v1518 = vpop.f32.mrb[0].mxu0
    %v1519 = vadd.f32 0.0, %v1518
    %v1520 = vpop.f32.mrb[0].mxu0
    %1521 = vmatprep.mubr.f32.mxu0 0.0
    %1522 = vmatmul.mubr.f32.gmra.mrb[0].mxu0 %v925
    %v1523 = vpop.f32.mrb[0].mxu0
    %v1524 = vadd.f32 0.0, %v1523
    %v1525 = vpop.f32.mrb[0].mxu0
    %1526 = vdwg.mxu0
    %v1528 = vsel %vm920, %v994, 0
    %v1531 = vsel %vm920, %v999, 0
    %v1534 = vsel %vm920, %v1069, 0
    %v1537 = vsel %vm920, %v1074, 0
    %v1540 = vsel %vm920, %v1144, 0
    %v1543 = vsel %vm920, %v1149, 0
    %v1546 = vsel %vm920, %v1219, 0
    %v1549 = vsel %vm920, %v1224, 0
    %v1552 = vsel %vm920, %v1294, 0
    %v1555 = vsel %vm920, %v1299, 0
    %v1558 = vsel %vm920, %v1369, 0
    %v1561 = vsel %vm920, %v1374, 0
    %v1564 = vsel %vm920, %v1444, 0
    %v1567 = vsel %vm920, %v1449, 0
    %v1570 = vsel %vm920, %v1519, 0
    %v1573 = vsel %vm920, %v1524, 0
    %1575 = vmatprep.subr.mxu0 0.0
    %1576 = vmatpush1.msra.mxu0 %v162
    %1577 = vmatprep.subr.mxu0 0.0
    %1578 = vmatpush1.msra.mxu0 0.0
    %1579 = vmatprep.subr.mxu0 0.0
    %1580 = vmatpush1.msra.mxu0 0.0
    %1581 = vmatprep.subr.mxu0 0.0
    %1582 = vmatpush1.msra.mxu0 0.0
    %1583 = vmatprep.subr.mxu0 0.0
    %1584 = vmatpush1.msra.mxu0 0.0
    %1585 = vmatprep.subr.mxu0 0.0
    %1586 = vmatpush1.msra.mxu0 0.0
    %1587 = vmatprep.subr.mxu0 0.0
    %1588 = vmatpush1.msra.mxu0 0.0
    %1589 = vmatprep.subr.mxu0 0.0
    %1590 = vmatpush1.msra.mxu0 0.0
    %1591 = vmatprep.subr.mxu0 0.0
    %1592 = vmatpush1.msra.mxu0 0.0
    %1593 = vmatprep.subr.mxu0 0.0
    %1594 = vmatpush1.msra.mxu0 0.0
    %1595 = vmatprep.subr.mxu0 0.0
    %1596 = vmatpush1.msra.mxu0 0.0
    %1597 = vmatprep.subr.mxu0 0.0
    %1598 = vmatpush1.msra.mxu0 0.0
    %1599 = vmatprep.subr.mxu0 0.0
    %1600 = vmatpush1.msra.mxu0 0.0
    %1601 = vmatprep.subr.mxu0 0.0
    %1602 = vmatpush1.msra.mxu0 0.0
    %1603 = vmatprep.subr.mxu0 0.0
    %1604 = vmatpush1.msra.mxu0 0.0
    %1605 = vmatprep.subr.mxu0 0.0
    %1606 = vmatpush1.msra.mxu0 0.0
    %1607 = vmatprep.subr.mxu0 0.0
    %1608 = vmatpush1.msra.mxu0 0.0
    %1609 = vmatprep.subr.mxu0 0.0
    %1610 = vmatpush1.msra.mxu0 0.0
    %1611 = vmatprep.subr.mxu0 0.0
    %1612 = vmatpush1.msra.mxu0 0.0
    %1613 = vmatprep.subr.mxu0 0.0
    %1614 = vmatpush1.msra.mxu0 0.0
    %1615 = vmatprep.subr.mxu0 0.0
    %1616 = vmatpush1.msra.mxu0 0.0
    %1617 = vmatprep.subr.mxu0 0.0
    %1618 = vmatpush1.msra.mxu0 0.0
    %1619 = vmatprep.subr.mxu0 0.0
    %1620 = vmatpush1.msra.mxu0 0.0
    %1621 = vmatprep.subr.mxu0 0.0
    %1622 = vmatpush1.msra.mxu0 0.0
    %1623 = vmatprep.subr.mxu0 0.0
    %1624 = vmatpush1.msra.mxu0 0.0
    %1625 = vmatprep.subr.mxu0 0.0
    %1626 = vmatpush1.msra.mxu0 0.0
    %1627 = vmatprep.subr.mxu0 0.0
    %1628 = vmatpush1.msra.mxu0 0.0
    %1629 = vmatprep.subr.mxu0 0.0
    %1630 = vmatpush1.msra.mxu0 0.0
    %1631 = vmatprep.subr.mxu0 0.0
    %1632 = vmatpush1.msra.mxu0 0.0
    %1633 = vmatprep.subr.mxu0 0.0
    %1634 = vmatpush1.msra.mxu0 0.0
    %1635 = vmatprep.subr.mxu0 0.0
    %1636 = vmatpush1.msra.mxu0 0.0
    %1637 = vmatprep.subr.mxu0 0.0
    %1638 = vmatpush1.msra.mxu0 0.0
    %1639 = vmatprep.mubr.f32.mxu0 0.0
    %1640 = vmatmul.mubr.f32.gmra.mrb[0].mxu0 %v1528
    %v1641 = vpop.f32.mrb[0].mxu0
    %v1642 = vadd.f32 0.0, %v1641
    %v1643 = vpop.f32.mrb[0].mxu0
    %1644 = vmatprep.mubr.f32.mxu0 0.0
    %1645 = vmatmul.mubr.f32.gmra.mrb[0].mxu0 %v1531
    %v1646 = vpop.f32.mrb[0].mxu0
    %v1647 = vadd.f32 0.0, %v1646
    %v1648 = vpop.f32.mrb[0].mxu0
    %1649 = vmatprep.mubr.f32.mxu0 0.0
    %1650 = vmatmul.mubr.f32.gmra.mrb[0].mxu0 %v1534
    %v1651 = vpop.f32.mrb[0].mxu0
    %v1652 = vadd.f32 0.0, %v1651
    %v1653 = vpop.f32.mrb[0].mxu0
    %1654 = vmatprep.mubr.f32.mxu0 0.0
    %1655 = vmatmul.mubr.f32.gmra.mrb[0].mxu0 %v1537
    %v1656 = vpop.f32.mrb[0].mxu0
    %v1657 = vadd.f32 0.0, %v1656
    %v1658 = vpop.f32.mrb[0].mxu0
    %1659 = vmatprep.mubr.f32.mxu0 0.0
    %1660 = vmatmul.mubr.f32.gmra.mrb[0].mxu0 %v1540
    %v1661 = vpop.f32.mrb[0].mxu0
    %v1662 = vadd.f32 0.0, %v1661
    %v1663 = vpop.f32.mrb[0].mxu0
    %1664 = vmatprep.mubr.f32.mxu0 0.0
    %1665 = vmatmul.mubr.f32.gmra.mrb[0].mxu0 %v1543
    %v1666 = vpop.f32.mrb[0].mxu0
    %v1667 = vadd.f32 0.0, %v1666
    %v1668 = vpop.f32.mrb[0].mxu0
    %1669 = vmatprep.mubr.f32.mxu0 0.0
    %1670 = vmatmul.mubr.f32.gmra.mrb[0].mxu0 %v1546
    %v1671 = vpop.f32.mrb[0].mxu0
    %v1672 = vadd.f32 0.0, %v1671
    %v1673 = vpop.f32.mrb[0].mxu0
    %1674 = vmatprep.mubr.f32.mxu0 0.0
    %1675 = vmatmul.mubr.f32.gmra.mrb[0].mxu0 %v1549
    %v1676 = vpop.f32.mrb[0].mxu0
    %v1677 = vadd.f32 0.0, %v1676
    %v1678 = vpop.f32.mrb[0].mxu0
    %1679 = vmatprep.mubr.f32.mxu0 0.0
    %1680 = vmatmul.mubr.f32.gmra.mrb[0].mxu0 %v1552
    %v1681 = vpop.f32.mrb[0].mxu0
    %v1682 = vadd.f32 0.0, %v1681
    %v1683 = vpop.f32.mrb[0].mxu0
    %1684 = vmatprep.mubr.f32.mxu0 0.0
    %1685 = vmatmul.mubr.f32.gmra.mrb[0].mxu0 %v1555
    %v1686 = vpop.f32.mrb[0].mxu0
    %v1687 = vadd.f32 0.0, %v1686
    %v1688 = vpop.f32.mrb[0].mxu0
    %1689 = vmatprep.mubr.f32.mxu0 0.0
    %1690 = vmatmul.mubr.f32.gmra.mrb[0].mxu0 %v1558
    %v1691 = vpop.f32.mrb[0].mxu0
    %v1692 = vadd.f32 0.0, %v1691
    %v1693 = vpop.f32.mrb[0].mxu0
    %1694 = vmatprep.mubr.f32.mxu0 0.0
    %1695 = vmatmul.mubr.f32.gmra.mrb[0].mxu0 %v1561
    %v1696 = vpop.f32.mrb[0].mxu0
    %v1697 = vadd.f32 0.0, %v1696
    %v1698 = vpop.f32.mrb[0].mxu0
    %1699 = vmatprep.mubr.f32.mxu0 0.0
    %1700 = vmatmul.mubr.f32.gmra.mrb[0].mxu0 %v1564
    %v1701 = vpop.f32.mrb[0].mxu0
    %v1702 = vadd.f32 0.0, %v1701
    %v1703 = vpop.f32.mrb[0].mxu0
    %1704 = vmatprep.mubr.f32.mxu0 0.0
    %1705 = vmatmul.mubr.f32.gmra.mrb[0].mxu0 %v1567
    %v1706 = vpop.f32.mrb[0].mxu0
    %v1707 = vadd.f32 0.0, %v1706
    %v1708 = vpop.f32.mrb[0].mxu0
    %1709 = vmatprep.mubr.f32.mxu0 0.0
    %1710 = vmatmul.mubr.f32.gmra.mrb[0].mxu0 %v1570
    %v1711 = vpop.f32.mrb[0].mxu0
    %v1712 = vadd.f32 0.0, %v1711
    %v1713 = vpop.f32.mrb[0].mxu0
    %1714 = vmatprep.mubr.f32.mxu0 0.0
    %1715 = vmatmul.mubr.f32.gmra.mrb[0].mxu0 %v1573
    %v1716 = vpop.f32.mrb[0].mxu0
    %v1717 = vadd.f32 0.0, %v1716
    %v1718 = vpop.f32.mrb[0].mxu0
    %1719 = vdwg.mxu0
    %v1721 = vsel %vm163, %v141, 0
    %v1724 = vsel %vm163, %v142, 0
    %v1727 = vsel %vm163, %v143, 0
    %v1730 = vsel %vm163, %v144, 0
    %v1733 = vsel %vm163, %v145, 0
    %v1736 = vsel %vm163, %v146, 0
    %v1739 = vsel %vm163, %v147, 0
    %v1742 = vsel %vm163, %v148, 0
    %v1745 = vsel %vm163, %v149, 0
    %v1748 = vsel %vm163, %v150, 0
    %v1751 = vsel %vm163, %v151, 0
    %v1754 = vsel %vm163, %v152, 0
    %v1757 = vsel %vm163, %v153, 0
    %v1760 = vsel %vm163, %v154, 0
    %v1763 = vsel %vm163, %v155, 0
    %v1766 = vsel %vm163, %v156, 0
    %1768 = vmatprep.subr.mxu0 0.0
    %1769 = vmatpush1.msra.mxu0 %v158
    %1770 = vmatprep.subr.mxu0 0.0
    %1771 = vmatpush1.msra.mxu0 %v159
    %1772 = vmatprep.subr.mxu0 0.0
    %1773 = vmatpush1.msra.mxu0 0.0
    %1774 = vmatprep.subr.mxu0 0.0
    %1775 = vmatpush1.msra.mxu0 0.0
    %1776 = vmatprep.subr.mxu0 0.0
    %1777 = vmatpush1.msra.mxu0 0.0
    %1778 = vmatprep.subr.mxu0 0.0
    %1779 = vmatpush1.msra.mxu0 0.0
    %1780 = vmatprep.subr.mxu0 0.0
    %1781 = vmatpush1.msra.mxu0 0.0
    %1782 = vmatprep.subr.mxu0 0.0
    %1783 = vmatpush1.msra.mxu0 0.0
    %1784 = vmatprep.subr.mxu0 0.0
    %1785 = vmatpush1.msra.mxu0 0.0
    %1786 = vmatprep.subr.mxu0 0.0
    %1787 = vmatpush1.msra.mxu0 0.0
    %1788 = vmatprep.subr.mxu0 0.0
    %1789 = vmatpush1.msra.mxu0 0.0
    %1790 = vmatprep.subr.mxu0 0.0
    %1791 = vmatpush1.msra.mxu0 0.0
    %1792 = vmatprep.subr.mxu0 0.0
    %1793 = vmatpush1.msra.mxu0 0.0
    %1794 = vmatprep.subr.mxu0 0.0
    %1795 = vmatpush1.msra.mxu0 0.0
    %1796 = vmatprep.subr.mxu0 0.0
    %1797 = vmatpush1.msra.mxu0 0.0
    %1798 = vmatprep.subr.mxu0 0.0
    %1799 = vmatpush1.msra.mxu0 0.0
    %1800 = vmatprep.subr.mxu0 0.0
    %1801 = vmatpush1.msra.mxu0 0.0
    %1802 = vmatprep.subr.mxu0 0.0
    %1803 = vmatpush1.msra.mxu0 0.0
    %1804 = vmatprep.subr.mxu0 0.0
    %1805 = vmatpush1.msra.mxu0 0.0
    %1806 = vmatprep.subr.mxu0 0.0
    %1807 = vmatpush1.msra.mxu0 0.0
    %1808 = vmatprep.subr.mxu0 0.0
    %1809 = vmatpush1.msra.mxu0 0.0
    %1810 = vmatprep.subr.mxu0 0.0
    %1811 = vmatpush1.msra.mxu0 0.0
    %1812 = vmatprep.subr.mxu0 0.0
    %1813 = vmatpush1.msra.mxu0 0.0
    %1814 = vmatprep.subr.mxu0 0.0
    %1815 = vmatpush1.msra.mxu0 0.0
    %1816 = vmatprep.subr.mxu0 0.0
    %1817 = vmatpush1.msra.mxu0 0.0
    %1818 = vmatprep.subr.mxu0 0.0
    %1819 = vmatpush1.msra.mxu0 0.0
    %1820 = vmatprep.subr.mxu0 0.0
    %1821 = vmatpush1.msra.mxu0 0.0
    %1822 = vmatprep.subr.mxu0 0.0
    %1823 = vmatpush1.msra.mxu0 0.0
    %1824 = vmatprep.subr.mxu0 0.0
    %1825 = vmatpush1.msra.mxu0 0.0
    %1826 = vmatprep.subr.mxu0 0.0
    %1827 = vmatpush1.msra.mxu0 0.0
    %1828 = vmatprep.subr.mxu0 0.0
    %1829 = vmatpush1.msra.mxu0 0.0
    %1830 = vmatprep.subr.mxu0 0.0
    %1831 = vmatpush1.msra.mxu0 0.0
    %1832 = vmatprep.mubr.f32.mxu0 0.0
    %1833 = vmatmul.mubr.f32.gmra.mrb[0].mxu0 %v1721
    %v1834 = vpop.f32.mrb[0].mxu0
    %v1835 = vadd.f32 0.0, %v1834
    %v1836 = vpop.f32.mrb[0].mxu0
    %1837 = vmatprep.mubr.f32.mxu0 0.0
    %1838 = vmatmul.mubr.f32.gmra.mrb[0].mxu0 %v1724
    %v1839 = vpop.f32.mrb[0].mxu0
    %v1840 = vadd.f32 0.0, %v1839
    %v1841 = vpop.f32.mrb[0].mxu0
    %1842 = vmatprep.mubr.f32.mxu0 0.0
    %1843 = vmatmul.mubr.f32.gmra.mrb[0].mxu0 %v1727
    %v1844 = vpop.f32.mrb[0].mxu0
    %v1845 = vadd.f32 0.0, %v1844
    %v1846 = vpop.f32.mrb[0].mxu0
    %1847 = vmatprep.mubr.f32.mxu0 0.0
    %1848 = vmatmul.mubr.f32.gmra.mrb[0].mxu0 %v1730
    %v1849 = vpop.f32.mrb[0].mxu0
    %v1850 = vadd.f32 0.0, %v1849
    %v1851 = vpop.f32.mrb[0].mxu0
    %1852 = vmatprep.mubr.f32.mxu0 0.0
    %1853 = vmatmul.mubr.f32.gmra.mrb[0].mxu0 %v1733
    %v1854 = vpop.f32.mrb[0].mxu0
    %v1855 = vadd.f32 0.0, %v1854
    %v1856 = vpop.f32.mrb[0].mxu0
    %1857 = vmatprep.mubr.f32.mxu0 0.0
    %1858 = vmatmul.mubr.f32.gmra.mrb[0].mxu0 %v1736
    %v1859 = vpop.f32.mrb[0].mxu0
    %v1860 = vadd.f32 0.0, %v1859
    %v1861 = vpop.f32.mrb[0].mxu0
    %1862 = vmatprep.mubr.f32.mxu0 0.0
    %1863 = vmatmul.mubr.f32.gmra.mrb[0].mxu0 %v1739
    %v1864 = vpop.f32.mrb[0].mxu0
    %v1865 = vadd.f32 0.0, %v1864
    %v1866 = vpop.f32.mrb[0].mxu0
    %1867 = vmatprep.mubr.f32.mxu0 0.0
    %1868 = vmatmul.mubr.f32.gmra.mrb[0].mxu0 %v1742
    %v1869 = vpop.f32.mrb[0].mxu0
    %v1870 = vadd.f32 0.0, %v1869
    %v1871 = vpop.f32.mrb[0].mxu0
    %1872 = vmatprep.mubr.f32.mxu0 0.0
    %1873 = vmatmul.mubr.f32.gmra.mrb[0].mxu0 %v1745
    %v1874 = vpop.f32.mrb[0].mxu0
    %v1875 = vadd.f32 0.0, %v1874
    %v1876 = vpop.f32.mrb[0].mxu0
    %1877 = vmatprep.mubr.f32.mxu0 0.0
    %1878 = vmatmul.mubr.f32.gmra.mrb[0].mxu0 %v1748
    %v1879 = vpop.f32.mrb[0].mxu0
    %v1880 = vadd.f32 0.0, %v1879
    %v1881 = vpop.f32.mrb[0].mxu0
    %1882 = vmatprep.mubr.f32.mxu0 0.0
    %1883 = vmatmul.mubr.f32.gmra.mrb[0].mxu0 %v1751
    %v1884 = vpop.f32.mrb[0].mxu0
    %v1885 = vadd.f32 0.0, %v1884
    %v1886 = vpop.f32.mrb[0].mxu0
    %1887 = vmatprep.mubr.f32.mxu0 0.0
    %1888 = vmatmul.mubr.f32.gmra.mrb[0].mxu0 %v1754
    %v1889 = vpop.f32.mrb[0].mxu0
    %v1890 = vadd.f32 0.0, %v1889
    %v1891 = vpop.f32.mrb[0].mxu0
    %1892 = vmatprep.mubr.f32.mxu0 0.0
    %1893 = vmatmul.mubr.f32.gmra.mrb[0].mxu0 %v1757
    %v1894 = vpop.f32.mrb[0].mxu0
    %v1895 = vadd.f32 0.0, %v1894
    %v1896 = vpop.f32.mrb[0].mxu0
    %1897 = vmatprep.mubr.f32.mxu0 0.0
    %1898 = vmatmul.mubr.f32.gmra.mrb[0].mxu0 %v1760
    %v1899 = vpop.f32.mrb[0].mxu0
    %v1900 = vadd.f32 0.0, %v1899
    %v1901 = vpop.f32.mrb[0].mxu0
    %1902 = vmatprep.mubr.f32.mxu0 0.0
    %1903 = vmatmul.mubr.f32.gmra.mrb[0].mxu0 %v1763
    %v1904 = vpop.f32.mrb[0].mxu0
    %v1905 = vadd.f32 0.0, %v1904
    %v1906 = vpop.f32.mrb[0].mxu0
    %1907 = vmatprep.mubr.f32.mxu0 0.0
    %1908 = vmatmul.mubr.f32.gmra.mrb[0].mxu0 %v1766
    %v1909 = vpop.f32.mrb[0].mxu0
    %v1910 = vadd.f32 0.0, %v1909
    %v1911 = vpop.f32.mrb[0].mxu0
    %1912 = vdwg.mxu0
    %1913 = vmatprep.subr.mxu0 0.0
    %1914 = vmatpush1.msra.mxu0 %v1835
    %1915 = vmatprep.subr.mxu0 0.0
    %1916 = vmatpush1.msra.mxu0 %v1840
    %1917 = vmatprep.subr.mxu0 0.0
    %1918 = vmatpush1.msra.mxu0 0.0
    %1919 = vmatprep.subr.mxu0 0.0
    %1920 = vmatpush1.msra.mxu0 0.0
    %1921 = vmatprep.subr.mxu0 0.0
    %1922 = vmatpush1.msra.mxu0 0.0
    %1923 = vmatprep.subr.mxu0 0.0
    %1924 = vmatpush1.msra.mxu0 0.0
    %1925 = vmatprep.subr.mxu0 0.0
    %1926 = vmatpush1.msra.mxu0 0.0
    %1927 = vmatprep.subr.mxu0 0.0
    %1928 = vmatpush1.msra.mxu0 0.0
    %1929 = vmatprep.subr.mxu0 0.0
    %1930 = vmatpush1.msra.mxu0 0.0
    %1931 = vmatprep.subr.mxu0 0.0
    %1932 = vmatpush1.msra.mxu0 0.0
    %1933 = vmatprep.subr.mxu0 0.0
    %1934 = vmatpush1.msra.mxu0 0.0
    %1935 = vmatprep.subr.mxu0 0.0
    %1936 = vmatpush1.msra.mxu0 0.0
    %1937 = vmatprep.subr.mxu0 0.0
    %1938 = vmatpush1.msra.mxu0 0.0
    %1939 = vmatprep.subr.mxu0 0.0
    %1940 = vmatpush1.msra.mxu0 0.0
    %1941 = vmatprep.subr.mxu0 0.0
    %1942 = vmatpush1.msra.mxu0 0.0
    %1943 = vmatprep.subr.mxu0 0.0
    %1944 = vmatpush1.msra.mxu0 0.0
    %1945 = vmatprep.subr.mxu0 0.0
    %1946 = vmatpush1.msra.mxu0 0.0
    %1947 = vmatprep.subr.mxu0 0.0
    %1948 = vmatpush1.msra.mxu0 0.0
    %1949 = vmatprep.subr.mxu0 0.0
    %1950 = vmatpush1.msra.mxu0 0.0
    %1951 = vmatprep.subr.mxu0 0.0
    %1952 = vmatpush1.msra.mxu0 0.0
    %1953 = vmatprep.subr.mxu0 0.0
    %1954 = vmatpush1.msra.mxu0 0.0
    %1955 = vmatprep.subr.mxu0 0.0
    %1956 = vmatpush1.msra.mxu0 0.0
    %1957 = vmatprep.subr.mxu0 0.0
    %1958 = vmatpush1.msra.mxu0 0.0
    %1959 = vmatprep.subr.mxu0 0.0
    %1960 = vmatpush1.msra.mxu0 0.0
    %1961 = vmatprep.subr.mxu0 0.0
    %1962 = vmatpush1.msra.mxu0 0.0
    %1963 = vmatprep.subr.mxu0 0.0
    %1964 = vmatpush1.msra.mxu0 0.0
    %1965 = vmatprep.subr.mxu0 0.0
    %1966 = vmatpush1.msra.mxu0 0.0
    %1967 = vmatprep.subr.mxu0 0.0
    %1968 = vmatpush1.msra.mxu0 0.0
    %1969 = vmatprep.subr.mxu0 0.0
    %1970 = vmatpush1.msra.mxu0 0.0
    %1971 = vmatprep.subr.mxu0 0.0
    %1972 = vmatpush1.msra.mxu0 0.0
    %1973 = vmatprep.subr.mxu0 0.0
    %1974 = vmatpush1.msra.mxu0 0.0
    %1975 = vmatprep.subr.mxu0 0.0
    %1976 = vmatpush1.msra.mxu0 0.0
    %1977 = vmatprep.mubr.f32.mxu0 0.0
    %1978 = vmatmul.mubr.f32.gmra.mrb[0].mxu0 %v358
    %v1979 = vpop.f32.mrb[0].mxu0
    %v1980 = vadd.f32 0.0, %v1979
    %v1981 = vpop.f32.mrb[0].mxu0
    %1982 = vdwg.mxu0
    %1983 = vmatprep.subr.mxu0 0.0
    %1984 = vmatpush1.msra.mxu0 %v1845
    %1985 = vmatprep.subr.mxu0 0.0
    %1986 = vmatpush1.msra.mxu0 %v1850
    %1987 = vmatprep.subr.mxu0 0.0
    %1988 = vmatpush1.msra.mxu0 0.0
    %1989 = vmatprep.subr.mxu0 0.0
    %1990 = vmatpush1.msra.mxu0 0.0
    %1991 = vmatprep.subr.mxu0 0.0
    %1992 = vmatpush1.msra.mxu0 0.0
    %1993 = vmatprep.subr.mxu0 0.0
    %1994 = vmatpush1.msra.mxu0 0.0
    %1995 = vmatprep.subr.mxu0 0.0
    %1996 = vmatpush1.msra.mxu0 0.0
    %1997 = vmatprep.subr.mxu0 0.0
    %1998 = vmatpush1.msra.mxu0 0.0
    %1999 = vmatprep.subr.mxu0 0.0
    %2000 = vmatpush1.msra.mxu0 0.0
    %2001 = vmatprep.subr.mxu0 0.0
    %2002 = vmatpush1.msra.mxu0 0.0
    %2003 = vmatprep.subr.mxu0 0.0
    %2004 = vmatpush1.msra.mxu0 0.0
    %2005 = vmatprep.subr.mxu0 0.0
    %2006 = vmatpush1.msra.mxu0 0.0
    %2007 = vmatprep.subr.mxu0 0.0
    %2008 = vmatpush1.msra.mxu0 0.0
    %2009 = vmatprep.subr.mxu0 0.0
    %2010 = vmatpush1.msra.mxu0 0.0
    %2011 = vmatprep.subr.mxu0 0.0
    %2012 = vmatpush1.msra.mxu0 0.0
    %2013 = vmatprep.subr.mxu0 0.0
    %2014 = vmatpush1.msra.mxu0 0.0
    %2015 = vmatprep.subr.mxu0 0.0
    %2016 = vmatpush1.msra.mxu0 0.0
    %2017 = vmatprep.subr.mxu0 0.0
    %2018 = vmatpush1.msra.mxu0 0.0
    %2019 = vmatprep.subr.mxu0 0.0
    %2020 = vmatpush1.msra.mxu0 0.0
    %2021 = vmatprep.subr.mxu0 0.0
    %2022 = vmatpush1.msra.mxu0 0.0
    %2023 = vmatprep.subr.mxu0 0.0
    %2024 = vmatpush1.msra.mxu0 0.0
    %2025 = vmatprep.subr.mxu0 0.0
    %2026 = vmatpush1.msra.mxu0 0.0
    %2027 = vmatprep.subr.mxu0 0.0
    %2028 = vmatpush1.msra.mxu0 0.0
    %2029 = vmatprep.subr.mxu0 0.0
    %2030 = vmatpush1.msra.mxu0 0.0
    %2031 = vmatprep.subr.mxu0 0.0
    %2032 = vmatpush1.msra.mxu0 0.0
    %2033 = vmatprep.subr.mxu0 0.0
    %2034 = vmatpush1.msra.mxu0 0.0
    %2035 = vmatprep.subr.mxu0 0.0
    %2036 = vmatpush1.msra.mxu0 0.0
    %2037 = vmatprep.subr.mxu0 0.0
    %2038 = vmatpush1.msra.mxu0 0.0
    %2039 = vmatprep.subr.mxu0 0.0
    %2040 = vmatpush1.msra.mxu0 0.0
    %2041 = vmatprep.subr.mxu0 0.0
    %2042 = vmatpush1.msra.mxu0 0.0
    %2043 = vmatprep.subr.mxu0 0.0
    %2044 = vmatpush1.msra.mxu0 0.0
    %2045 = vmatprep.subr.mxu0 0.0
    %2046 = vmatpush1.msra.mxu0 0.0
    %2047 = vmatprep.mubr.f32.mxu0 0.0
    %2048 = vmatmul.mubr.f32.gmra.mrb[0].mxu0 %v358
    %v2049 = vpop.f32.mrb[0].mxu0
    %v2050 = vadd.f32 0.0, %v2049
    %v2051 = vpop.f32.mrb[0].mxu0
    %2052 = vdwg.mxu0
    %2053 = vmatprep.subr.mxu0 0.0
    %2054 = vmatpush1.msra.mxu0 %v1855
    %2055 = vmatprep.subr.mxu0 0.0
    %2056 = vmatpush1.msra.mxu0 %v1860
    %2057 = vmatprep.subr.mxu0 0.0
    %2058 = vmatpush1.msra.mxu0 0.0
    %2059 = vmatprep.subr.mxu0 0.0
    %2060 = vmatpush1.msra.mxu0 0.0
    %2061 = vmatprep.subr.mxu0 0.0
    %2062 = vmatpush1.msra.mxu0 0.0
    %2063 = vmatprep.subr.mxu0 0.0
    %2064 = vmatpush1.msra.mxu0 0.0
    %2065 = vmatprep.subr.mxu0 0.0
    %2066 = vmatpush1.msra.mxu0 0.0
    %2067 = vmatprep.subr.mxu0 0.0
    %2068 = vmatpush1.msra.mxu0 0.0
    %2069 = vmatprep.subr.mxu0 0.0
    %2070 = vmatpush1.msra.mxu0 0.0
    %2071 = vmatprep.subr.mxu0 0.0
    %2072 = vmatpush1.msra.mxu0 0.0
    %2073 = vmatprep.subr.mxu0 0.0
    %2074 = vmatpush1.msra.mxu0 0.0
    %2075 = vmatprep.subr.mxu0 0.0
    %2076 = vmatpush1.msra.mxu0 0.0
    %2077 = vmatprep.subr.mxu0 0.0
    %2078 = vmatpush1.msra.mxu0 0.0
    %2079 = vmatprep.subr.mxu0 0.0
    %2080 = vmatpush1.msra.mxu0 0.0
    %2081 = vmatprep.subr.mxu0 0.0
    %2082 = vmatpush1.msra.mxu0 0.0
    %2083 = vmatprep.subr.mxu0 0.0
    %2084 = vmatpush1.msra.mxu0 0.0
    %2085 = vmatprep.subr.mxu0 0.0
    %2086 = vmatpush1.msra.mxu0 0.0
    %2087 = vmatprep.subr.mxu0 0.0
    %2088 = vmatpush1.msra.mxu0 0.0
    %2089 = vmatprep.subr.mxu0 0.0
    %2090 = vmatpush1.msra.mxu0 0.0
    %2091 = vmatprep.subr.mxu0 0.0
    %2092 = vmatpush1.msra.mxu0 0.0
    %2093 = vmatprep.subr.mxu0 0.0
    %2094 = vmatpush1.msra.mxu0 0.0
    %2095 = vmatprep.subr.mxu0 0.0
    %2096 = vmatpush1.msra.mxu0 0.0
    %2097 = vmatprep.subr.mxu0 0.0
    %2098 = vmatpush1.msra.mxu0 0.0
    %2099 = vmatprep.subr.mxu0 0.0
    %2100 = vmatpush1.msra.mxu0 0.0
    %2101 = vmatprep.subr.mxu0 0.0
    %2102 = vmatpush1.msra.mxu0 0.0
    %2103 = vmatprep.subr.mxu0 0.0
    %2104 = vmatpush1.msra.mxu0 0.0
    %2105 = vmatprep.subr.mxu0 0.0
    %2106 = vmatpush1.msra.mxu0 0.0
    %2107 = vmatprep.subr.mxu0 0.0
    %2108 = vmatpush1.msra.mxu0 0.0
    %2109 = vmatprep.subr.mxu0 0.0
    %2110 = vmatpush1.msra.mxu0 0.0
    %2111 = vmatprep.subr.mxu0 0.0
    %2112 = vmatpush1.msra.mxu0 0.0
    %2113 = vmatprep.subr.mxu0 0.0
    %2114 = vmatpush1.msra.mxu0 0.0
    %2115 = vmatprep.subr.mxu0 0.0
    %2116 = vmatpush1.msra.mxu0 0.0
    %2117 = vmatprep.mubr.f32.mxu0 0.0
    %2118 = vmatmul.mubr.f32.gmra.mrb[0].mxu0 %v358
    %v2119 = vpop.f32.mrb[0].mxu0
    %v2120 = vadd.f32 0.0, %v2119
    %v2121 = vpop.f32.mrb[0].mxu0
    %2122 = vdwg.mxu0
    %2123 = vmatprep.subr.mxu0 0.0
    %2124 = vmatpush1.msra.mxu0 %v1865
    %2125 = vmatprep.subr.mxu0 0.0
    %2126 = vmatpush1.msra.mxu0 %v1870
    %2127 = vmatprep.subr.mxu0 0.0
    %2128 = vmatpush1.msra.mxu0 0.0
    %2129 = vmatprep.subr.mxu0 0.0
    %2130 = vmatpush1.msra.mxu0 0.0
    %2131 = vmatprep.subr.mxu0 0.0
    %2132 = vmatpush1.msra.mxu0 0.0
    %2133 = vmatprep.subr.mxu0 0.0
    %2134 = vmatpush1.msra.mxu0 0.0
    %2135 = vmatprep.subr.mxu0 0.0
    %2136 = vmatpush1.msra.mxu0 0.0
    %2137 = vmatprep.subr.mxu0 0.0
    %2138 = vmatpush1.msra.mxu0 0.0
    %2139 = vmatprep.subr.mxu0 0.0
    %2140 = vmatpush1.msra.mxu0 0.0
    %2141 = vmatprep.subr.mxu0 0.0
    %2142 = vmatpush1.msra.mxu0 0.0
    %2143 = vmatprep.subr.mxu0 0.0
    %2144 = vmatpush1.msra.mxu0 0.0
    %2145 = vmatprep.subr.mxu0 0.0
    %2146 = vmatpush1.msra.mxu0 0.0
    %2147 = vmatprep.subr.mxu0 0.0
    %2148 = vmatpush1.msra.mxu0 0.0
    %2149 = vmatprep.subr.mxu0 0.0
    %2150 = vmatpush1.msra.mxu0 0.0
    %2151 = vmatprep.subr.mxu0 0.0
    %2152 = vmatpush1.msra.mxu0 0.0
    %2153 = vmatprep.subr.mxu0 0.0
    %2154 = vmatpush1.msra.mxu0 0.0
    %2155 = vmatprep.subr.mxu0 0.0
    %2156 = vmatpush1.msra.mxu0 0.0
    %2157 = vmatprep.subr.mxu0 0.0
    %2158 = vmatpush1.msra.mxu0 0.0
    %2159 = vmatprep.subr.mxu0 0.0
    %2160 = vmatpush1.msra.mxu0 0.0
    %2161 = vmatprep.subr.mxu0 0.0
    %2162 = vmatpush1.msra.mxu0 0.0
    %2163 = vmatprep.subr.mxu0 0.0
    %2164 = vmatpush1.msra.mxu0 0.0
    %2165 = vmatprep.subr.mxu0 0.0
    %2166 = vmatpush1.msra.mxu0 0.0
    %2167 = vmatprep.subr.mxu0 0.0
    %2168 = vmatpush1.msra.mxu0 0.0
    %2169 = vmatprep.subr.mxu0 0.0
    %2170 = vmatpush1.msra.mxu0 0.0
    %2171 = vmatprep.subr.mxu0 0.0
    %2172 = vmatpush1.msra.mxu0 0.0
    %2173 = vmatprep.subr.mxu0 0.0
    %2174 = vmatpush1.msra.mxu0 0.0
    %2175 = vmatprep.subr.mxu0 0.0
    %2176 = vmatpush1.msra.mxu0 0.0
    %2177 = vmatprep.subr.mxu0 0.0
    %2178 = vmatpush1.msra.mxu0 0.0
    %2179 = vmatprep.subr.mxu0 0.0
    %2180 = vmatpush1.msra.mxu0 0.0
    %2181 = vmatprep.subr.mxu0 0.0
    %2182 = vmatpush1.msra.mxu0 0.0
    %2183 = vmatprep.subr.mxu0 0.0
    %2184 = vmatpush1.msra.mxu0 0.0
    %2185 = vmatprep.subr.mxu0 0.0
    %2186 = vmatpush1.msra.mxu0 0.0
    %2187 = vmatprep.mubr.f32.mxu0 0.0
    %2188 = vmatmul.mubr.f32.gmra.mrb[0].mxu0 %v358
    %v2189 = vpop.f32.mrb[0].mxu0
    %v2190 = vadd.f32 0.0, %v2189
    %v2191 = vpop.f32.mrb[0].mxu0
    %2192 = vdwg.mxu0
    %2193 = vmatprep.subr.mxu0 0.0
    %2194 = vmatpush1.msra.mxu0 %v1875
    %2195 = vmatprep.subr.mxu0 0.0
    %2196 = vmatpush1.msra.mxu0 %v1880
    %2197 = vmatprep.subr.mxu0 0.0
    %2198 = vmatpush1.msra.mxu0 0.0
    %2199 = vmatprep.subr.mxu0 0.0
    %2200 = vmatpush1.msra.mxu0 0.0
    %2201 = vmatprep.subr.mxu0 0.0
    %2202 = vmatpush1.msra.mxu0 0.0
    %2203 = vmatprep.subr.mxu0 0.0
    %2204 = vmatpush1.msra.mxu0 0.0
    %2205 = vmatprep.subr.mxu0 0.0
    %2206 = vmatpush1.msra.mxu0 0.0
    %2207 = vmatprep.subr.mxu0 0.0
    %2208 = vmatpush1.msra.mxu0 0.0
    %2209 = vmatprep.subr.mxu0 0.0
    %2210 = vmatpush1.msra.mxu0 0.0
    %2211 = vmatprep.subr.mxu0 0.0
    %2212 = vmatpush1.msra.mxu0 0.0
    %2213 = vmatprep.subr.mxu0 0.0
    %2214 = vmatpush1.msra.mxu0 0.0
    %2215 = vmatprep.subr.mxu0 0.0
    %2216 = vmatpush1.msra.mxu0 0.0
    %2217 = vmatprep.subr.mxu0 0.0
    %2218 = vmatpush1.msra.mxu0 0.0
    %2219 = vmatprep.subr.mxu0 0.0
    %2220 = vmatpush1.msra.mxu0 0.0
    %2221 = vmatprep.subr.mxu0 0.0
    %2222 = vmatpush1.msra.mxu0 0.0
    %2223 = vmatprep.subr.mxu0 0.0
    %2224 = vmatpush1.msra.mxu0 0.0
    %2225 = vmatprep.subr.mxu0 0.0
    %2226 = vmatpush1.msra.mxu0 0.0
    %2227 = vmatprep.subr.mxu0 0.0
    %2228 = vmatpush1.msra.mxu0 0.0
    %2229 = vmatprep.subr.mxu0 0.0
    %2230 = vmatpush1.msra.mxu0 0.0
    %2231 = vmatprep.subr.mxu0 0.0
    %2232 = vmatpush1.msra.mxu0 0.0
    %2233 = vmatprep.subr.mxu0 0.0
    %2234 = vmatpush1.msra.mxu0 0.0
    %2235 = vmatprep.subr.mxu0 0.0
    %2236 = vmatpush1.msra.mxu0 0.0
    %2237 = vmatprep.subr.mxu0 0.0
    %2238 = vmatpush1.msra.mxu0 0.0
    %2239 = vmatprep.subr.mxu0 0.0
    %2240 = vmatpush1.msra.mxu0 0.0
    %2241 = vmatprep.subr.mxu0 0.0
    %2242 = vmatpush1.msra.mxu0 0.0
    %2243 = vmatprep.subr.mxu0 0.0
    %2244 = vmatpush1.msra.mxu0 0.0
    %2245 = vmatprep.subr.mxu0 0.0
    %2246 = vmatpush1.msra.mxu0 0.0
    %2247 = vmatprep.subr.mxu0 0.0
    %2248 = vmatpush1.msra.mxu0 0.0
    %2249 = vmatprep.subr.mxu0 0.0
    %2250 = vmatpush1.msra.mxu0 0.0
    %2251 = vmatprep.subr.mxu0 0.0
    %2252 = vmatpush1.msra.mxu0 0.0
    %2253 = vmatprep.subr.mxu0 0.0
    %2254 = vmatpush1.msra.mxu0 0.0
    %2255 = vmatprep.subr.mxu0 0.0
    %2256 = vmatpush1.msra.mxu0 0.0
    %2257 = vmatprep.mubr.f32.mxu0 0.0
    %2258 = vmatmul.mubr.f32.gmra.mrb[0].mxu0 %v358
    %v2259 = vpop.f32.mrb[0].mxu0
    %v2260 = vadd.f32 0.0, %v2259
    %v2261 = vpop.f32.mrb[0].mxu0
    %2262 = vdwg.mxu0
    %2263 = vmatprep.subr.mxu0 0.0
    %2264 = vmatpush1.msra.mxu0 %v1885
    %2265 = vmatprep.subr.mxu0 0.0
    %2266 = vmatpush1.msra.mxu0 %v1890
    %2267 = vmatprep.subr.mxu0 0.0
    %2268 = vmatpush1.msra.mxu0 0.0
    %2269 = vmatprep.subr.mxu0 0.0
    %2270 = vmatpush1.msra.mxu0 0.0
    %2271 = vmatprep.subr.mxu0 0.0
    %2272 = vmatpush1.msra.mxu0 0.0
    %2273 = vmatprep.subr.mxu0 0.0
    %2274 = vmatpush1.msra.mxu0 0.0
    %2275 = vmatprep.subr.mxu0 0.0
    %2276 = vmatpush1.msra.mxu0 0.0
    %2277 = vmatprep.subr.mxu0 0.0
    %2278 = vmatpush1.msra.mxu0 0.0
    %2279 = vmatprep.subr.mxu0 0.0
    %2280 = vmatpush1.msra.mxu0 0.0
    %2281 = vmatprep.subr.mxu0 0.0
    %2282 = vmatpush1.msra.mxu0 0.0
    %2283 = vmatprep.subr.mxu0 0.0
    %2284 = vmatpush1.msra.mxu0 0.0
    %2285 = vmatprep.subr.mxu0 0.0
    %2286 = vmatpush1.msra.mxu0 0.0
    %2287 = vmatprep.subr.mxu0 0.0
    %2288 = vmatpush1.msra.mxu0 0.0
    %2289 = vmatprep.subr.mxu0 0.0
    %2290 = vmatpush1.msra.mxu0 0.0
    %2291 = vmatprep.subr.mxu0 0.0
    %2292 = vmatpush1.msra.mxu0 0.0
    %2293 = vmatprep.subr.mxu0 0.0
    %2294 = vmatpush1.msra.mxu0 0.0
    %2295 = vmatprep.subr.mxu0 0.0
    %2296 = vmatpush1.msra.mxu0 0.0
    %2297 = vmatprep.subr.mxu0 0.0
    %2298 = vmatpush1.msra.mxu0 0.0
    %2299 = vmatprep.subr.mxu0 0.0
    %2300 = vmatpush1.msra.mxu0 0.0
    %2301 = vmatprep.subr.mxu0 0.0
    %2302 = vmatpush1.msra.mxu0 0.0
    %2303 = vmatprep.subr.mxu0 0.0
    %2304 = vmatpush1.msra.mxu0 0.0
    %2305 = vmatprep.subr.mxu0 0.0
    %2306 = vmatpush1.msra.mxu0 0.0
    %2307 = vmatprep.subr.mxu0 0.0
    %2308 = vmatpush1.msra.mxu0 0.0
    %2309 = vmatprep.subr.mxu0 0.0
    %2310 = vmatpush1.msra.mxu0 0.0
    %2311 = vmatprep.subr.mxu0 0.0
    %2312 = vmatpush1.msra.mxu0 0.0
    %2313 = vmatprep.subr.mxu0 0.0
    %2314 = vmatpush1.msra.mxu0 0.0
    %2315 = vmatprep.subr.mxu0 0.0
    %2316 = vmatpush1.msra.mxu0 0.0
    %2317 = vmatprep.subr.mxu0 0.0
    %2318 = vmatpush1.msra.mxu0 0.0
    %2319 = vmatprep.subr.mxu0 0.0
    %2320 = vmatpush1.msra.mxu0 0.0
    %2321 = vmatprep.subr.mxu0 0.0
    %2322 = vmatpush1.msra.mxu0 0.0
    %2323 = vmatprep.subr.mxu0 0.0
    %2324 = vmatpush1.msra.mxu0 0.0
    %2325 = vmatprep.subr.mxu0 0.0
    %2326 = vmatpush1.msra.mxu0 0.0
    %2327 = vmatprep.mubr.f32.mxu0 0.0
    %2328 = vmatmul.mubr.f32.gmra.mrb[0].mxu0 %v358
    %v2329 = vpop.f32.mrb[0].mxu0
    %v2330 = vadd.f32 0.0, %v2329
    %v2331 = vpop.f32.mrb[0].mxu0
    %2332 = vdwg.mxu0
    %2333 = vmatprep.subr.mxu0 0.0
    %2334 = vmatpush1.msra.mxu0 %v1895
    %2335 = vmatprep.subr.mxu0 0.0
    %2336 = vmatpush1.msra.mxu0 %v1900
    %2337 = vmatprep.subr.mxu0 0.0
    %2338 = vmatpush1.msra.mxu0 0.0
    %2339 = vmatprep.subr.mxu0 0.0
    %2340 = vmatpush1.msra.mxu0 0.0
    %2341 = vmatprep.subr.mxu0 0.0
    %2342 = vmatpush1.msra.mxu0 0.0
    %2343 = vmatprep.subr.mxu0 0.0
    %2344 = vmatpush1.msra.mxu0 0.0
    %2345 = vmatprep.subr.mxu0 0.0
    %2346 = vmatpush1.msra.mxu0 0.0
    %2347 = vmatprep.subr.mxu0 0.0
    %2348 = vmatpush1.msra.mxu0 0.0
    %2349 = vmatprep.subr.mxu0 0.0
    %2350 = vmatpush1.msra.mxu0 0.0
    %2351 = vmatprep.subr.mxu0 0.0
    %2352 = vmatpush1.msra.mxu0 0.0
    %2353 = vmatprep.subr.mxu0 0.0
    %2354 = vmatpush1.msra.mxu0 0.0
    %2355 = vmatprep.subr.mxu0 0.0
    %2356 = vmatpush1.msra.mxu0 0.0
    %2357 = vmatprep.subr.mxu0 0.0
    %2358 = vmatpush1.msra.mxu0 0.0
    %2359 = vmatprep.subr.mxu0 0.0
    %2360 = vmatpush1.msra.mxu0 0.0
    %2361 = vmatprep.subr.mxu0 0.0
    %2362 = vmatpush1.msra.mxu0 0.0
    %2363 = vmatprep.subr.mxu0 0.0
    %2364 = vmatpush1.msra.mxu0 0.0
    %2365 = vmatprep.subr.mxu0 0.0
    %2366 = vmatpush1.msra.mxu0 0.0
    %2367 = vmatprep.subr.mxu0 0.0
    %2368 = vmatpush1.msra.mxu0 0.0
    %2369 = vmatprep.subr.mxu0 0.0
    %2370 = vmatpush1.msra.mxu0 0.0
    %2371 = vmatprep.subr.mxu0 0.0
    %2372 = vmatpush1.msra.mxu0 0.0
    %2373 = vmatprep.subr.mxu0 0.0
    %2374 = vmatpush1.msra.mxu0 0.0
    %2375 = vmatprep.subr.mxu0 0.0
    %2376 = vmatpush1.msra.mxu0 0.0
    %2377 = vmatprep.subr.mxu0 0.0
    %2378 = vmatpush1.msra.mxu0 0.0
    %2379 = vmatprep.subr.mxu0 0.0
    %2380 = vmatpush1.msra.mxu0 0.0
    %2381 = vmatprep.subr.mxu0 0.0
    %2382 = vmatpush1.msra.mxu0 0.0
    %2383 = vmatprep.subr.mxu0 0.0
    %2384 = vmatpush1.msra.mxu0 0.0
    %2385 = vmatprep.subr.mxu0 0.0
    %2386 = vmatpush1.msra.mxu0 0.0
    %2387 = vmatprep.subr.mxu0 0.0
    %2388 = vmatpush1.msra.mxu0 0.0
    %2389 = vmatprep.subr.mxu0 0.0
    %2390 = vmatpush1.msra.mxu0 0.0
    %2391 = vmatprep.subr.mxu0 0.0
    %2392 = vmatpush1.msra.mxu0 0.0
    %2393 = vmatprep.subr.mxu0 0.0
    %2394 = vmatpush1.msra.mxu0 0.0
    %2395 = vmatprep.subr.mxu0 0.0
    %2396 = vmatpush1.msra.mxu0 0.0
    %2397 = vmatprep.mubr.f32.mxu0 0.0
    %2398 = vmatmul.mubr.f32.gmra.mrb[0].mxu0 %v358
    %v2399 = vpop.f32.mrb[0].mxu0
    %v2400 = vadd.f32 0.0, %v2399
    %v2401 = vpop.f32.mrb[0].mxu0
    %2402 = vdwg.mxu0
    %2403 = vmatprep.subr.mxu0 0.0
    %2404 = vmatpush1.msra.mxu0 %v1905
    %2405 = vmatprep.subr.mxu0 0.0
    %2406 = vmatpush1.msra.mxu0 %v1910
    %2407 = vmatprep.subr.mxu0 0.0
    %2408 = vmatpush1.msra.mxu0 0.0
    %2409 = vmatprep.subr.mxu0 0.0
    %2410 = vmatpush1.msra.mxu0 0.0
    %2411 = vmatprep.subr.mxu0 0.0
    %2412 = vmatpush1.msra.mxu0 0.0
    %2413 = vmatprep.subr.mxu0 0.0
    %2414 = vmatpush1.msra.mxu0 0.0
    %2415 = vmatprep.subr.mxu0 0.0
    %2416 = vmatpush1.msra.mxu0 0.0
    %2417 = vmatprep.subr.mxu0 0.0
    %2418 = vmatpush1.msra.mxu0 0.0
    %2419 = vmatprep.subr.mxu0 0.0
    %2420 = vmatpush1.msra.mxu0 0.0
    %2421 = vmatprep.subr.mxu0 0.0
    %2422 = vmatpush1.msra.mxu0 0.0
    %2423 = vmatprep.subr.mxu0 0.0
    %2424 = vmatpush1.msra.mxu0 0.0
    %2425 = vmatprep.subr.mxu0 0.0
    %2426 = vmatpush1.msra.mxu0 0.0
    %2427 = vmatprep.subr.mxu0 0.0
    %2428 = vmatpush1.msra.mxu0 0.0
    %2429 = vmatprep.subr.mxu0 0.0
    %2430 = vmatpush1.msra.mxu0 0.0
    %2431 = vmatprep.subr.mxu0 0.0
    %2432 = vmatpush1.msra.mxu0 0.0
    %2433 = vmatprep.subr.mxu0 0.0
    %2434 = vmatpush1.msra.mxu0 0.0
    %2435 = vmatprep.subr.mxu0 0.0
    %2436 = vmatpush1.msra.mxu0 0.0
    %2437 = vmatprep.subr.mxu0 0.0
    %2438 = vmatpush1.msra.mxu0 0.0
    %2439 = vmatprep.subr.mxu0 0.0
    %2440 = vmatpush1.msra.mxu0 0.0
    %2441 = vmatprep.subr.mxu0 0.0
    %2442 = vmatpush1.msra.mxu0 0.0
    %2443 = vmatprep.subr.mxu0 0.0
    %2444 = vmatpush1.msra.mxu0 0.0
    %2445 = vmatprep.subr.mxu0 0.0
    %2446 = vmatpush1.msra.mxu0 0.0
    %2447 = vmatprep.subr.mxu0 0.0
    %2448 = vmatpush1.msra.mxu0 0.0
    %2449 = vmatprep.subr.mxu0 0.0
    %2450 = vmatpush1.msra.mxu0 0.0
    %2451 = vmatprep.subr.mxu0 0.0
    %2452 = vmatpush1.msra.mxu0 0.0
    %2453 = vmatprep.subr.mxu0 0.0
    %2454 = vmatpush1.msra.mxu0 0.0
    %2455 = vmatprep.subr.mxu0 0.0
    %2456 = vmatpush1.msra.mxu0 0.0
    %2457 = vmatprep.subr.mxu0 0.0
    %2458 = vmatpush1.msra.mxu0 0.0
    %2459 = vmatprep.subr.mxu0 0.0
    %2460 = vmatpush1.msra.mxu0 0.0
    %2461 = vmatprep.subr.mxu0 0.0
    %2462 = vmatpush1.msra.mxu0 0.0
    %2463 = vmatprep.subr.mxu0 0.0
    %2464 = vmatpush1.msra.mxu0 0.0
    %2465 = vmatprep.subr.mxu0 0.0
    %2466 = vmatpush1.msra.mxu0 0.0
    %2467 = vmatprep.mubr.f32.mxu0 0.0
    %2468 = vmatmul.mubr.f32.gmra.mrb[0].mxu0 %v358
    %v2469 = vpop.f32.mrb[0].mxu0
    %v2470 = vadd.f32 0.0, %v2469
    %v2471 = vpop.f32.mrb[0].mxu0
    %2472 = vdwg.mxu0
    %2473 = vmatprep.subr.mxu0 0.0
    %2474 = vmatpush1.msra.mxu0 %v1980
    %2475 = vmatprep.subr.mxu0 0.0
    %2476 = vmatpush1.msra.mxu0 0.0
    %2477 = vmatprep.subr.mxu0 0.0
    %2478 = vmatpush1.msra.mxu0 0.0
    %2479 = vmatprep.subr.mxu0 0.0
    %2480 = vmatpush1.msra.mxu0 0.0
    %2481 = vmatprep.subr.mxu0 0.0
    %2482 = vmatpush1.msra.mxu0 0.0
    %2483 = vmatprep.subr.mxu0 0.0
    %2484 = vmatpush1.msra.mxu0 0.0
    %2485 = vmatprep.subr.mxu0 0.0
    %2486 = vmatpush1.msra.mxu0 0.0
    %2487 = vmatprep.subr.mxu0 0.0
    %2488 = vmatpush1.msra.mxu0 0.0
    %2489 = vmatprep.subr.mxu0 0.0
    %2490 = vmatpush1.msra.mxu0 0.0
    %2491 = vmatprep.subr.mxu0 0.0
    %2492 = vmatpush1.msra.mxu0 0.0
    %2493 = vmatprep.subr.mxu0 0.0
    %2494 = vmatpush1.msra.mxu0 0.0
    %2495 = vmatprep.subr.mxu0 0.0
    %2496 = vmatpush1.msra.mxu0 0.0
    %2497 = vmatprep.subr.mxu0 0.0
    %2498 = vmatpush1.msra.mxu0 0.0
    %2499 = vmatprep.subr.mxu0 0.0
    %2500 = vmatpush1.msra.mxu0 0.0
    %2501 = vmatprep.subr.mxu0 0.0
    %2502 = vmatpush1.msra.mxu0 0.0
    %2503 = vmatprep.subr.mxu0 0.0
    %2504 = vmatpush1.msra.mxu0 0.0
    %2505 = vmatprep.subr.mxu0 0.0
    %2506 = vmatpush1.msra.mxu0 0.0
    %2507 = vmatprep.subr.mxu0 0.0
    %2508 = vmatpush1.msra.mxu0 0.0
    %2509 = vmatprep.subr.mxu0 0.0
    %2510 = vmatpush1.msra.mxu0 0.0
    %2511 = vmatprep.subr.mxu0 0.0
    %2512 = vmatpush1.msra.mxu0 0.0
    %2513 = vmatprep.subr.mxu0 0.0
    %2514 = vmatpush1.msra.mxu0 0.0
    %2515 = vmatprep.subr.mxu0 0.0
    %2516 = vmatpush1.msra.mxu0 0.0
    %2517 = vmatprep.subr.mxu0 0.0
    %2518 = vmatpush1.msra.mxu0 0.0
    %2519 = vmatprep.subr.mxu0 0.0
    %2520 = vmatpush1.msra.mxu0 0.0
    %2521 = vmatprep.subr.mxu0 0.0
    %2522 = vmatpush1.msra.mxu0 0.0
    %2523 = vmatprep.subr.mxu0 0.0
    %2524 = vmatpush1.msra.mxu0 0.0
    %2525 = vmatprep.subr.mxu0 0.0
    %2526 = vmatpush1.msra.mxu0 0.0
    %2527 = vmatprep.subr.mxu0 0.0
    %2528 = vmatpush1.msra.mxu0 0.0
    %2529 = vmatprep.subr.mxu0 0.0
    %2530 = vmatpush1.msra.mxu0 0.0
    %2531 = vmatprep.subr.mxu0 0.0
    %2532 = vmatpush1.msra.mxu0 0.0
    %2533 = vmatprep.subr.mxu0 0.0
    %2534 = vmatpush1.msra.mxu0 0.0
    %2535 = vmatprep.subr.mxu0 0.0
    %2536 = vmatpush1.msra.mxu0 0.0
    %2537 = vmatprep.mubr.f32.mxu0 0.0
    %2538 = vmatmul.mubr.f32.gmra.mrb[0].mxu0 %v922
    %v2539 = vpop.f32.mrb[0].mxu0
    %v2540 = vadd.f32 0.0, %v2539
    %v2541 = vpop.f32.mrb[0].mxu0
    %2542 = vmatprep.mubr.f32.mxu0 0.0
    %2543 = vmatmul.mubr.f32.gmra.mrb[0].mxu0 %v925
    %v2544 = vpop.f32.mrb[0].mxu0
    %v2545 = vadd.f32 0.0, %v2544
    %v2546 = vpop.f32.mrb[0].mxu0
    %2547 = vdwg.mxu0
    %2548 = vmatprep.subr.mxu0 0.0
    %2549 = vmatpush1.msra.mxu0 %v2050
    %2550 = vmatprep.subr.mxu0 0.0
    %2551 = vmatpush1.msra.mxu0 0.0
    %2552 = vmatprep.subr.mxu0 0.0
    %2553 = vmatpush1.msra.mxu0 0.0
    %2554 = vmatprep.subr.mxu0 0.0
    %2555 = vmatpush1.msra.mxu0 0.0
    %2556 = vmatprep.subr.mxu0 0.0
    %2557 = vmatpush1.msra.mxu0 0.0
    %2558 = vmatprep.subr.mxu0 0.0
    %2559 = vmatpush1.msra.mxu0 0.0
    %2560 = vmatprep.subr.mxu0 0.0
    %2561 = vmatpush1.msra.mxu0 0.0
    %2562 = vmatprep.subr.mxu0 0.0
    %2563 = vmatpush1.msra.mxu0 0.0
    %2564 = vmatprep.subr.mxu0 0.0
    %2565 = vmatpush1.msra.mxu0 0.0
    %2566 = vmatprep.subr.mxu0 0.0
    %2567 = vmatpush1.msra.mxu0 0.0
    %2568 = vmatprep.subr.mxu0 0.0
    %2569 = vmatpush1.msra.mxu0 0.0
    %2570 = vmatprep.subr.mxu0 0.0
    %2571 = vmatpush1.msra.mxu0 0.0
    %2572 = vmatprep.subr.mxu0 0.0
    %2573 = vmatpush1.msra.mxu0 0.0
    %2574 = vmatprep.subr.mxu0 0.0
    %2575 = vmatpush1.msra.mxu0 0.0
    %2576 = vmatprep.subr.mxu0 0.0
    %2577 = vmatpush1.msra.mxu0 0.0
    %2578 = vmatprep.subr.mxu0 0.0
    %2579 = vmatpush1.msra.mxu0 0.0
    %2580 = vmatprep.subr.mxu0 0.0
    %2581 = vmatpush1.msra.mxu0 0.0
    %2582 = vmatprep.subr.mxu0 0.0
    %2583 = vmatpush1.msra.mxu0 0.0
    %2584 = vmatprep.subr.mxu0 0.0
    %2585 = vmatpush1.msra.mxu0 0.0
    %2586 = vmatprep.subr.mxu0 0.0
    %2587 = vmatpush1.msra.mxu0 0.0
    %2588 = vmatprep.subr.mxu0 0.0
    %2589 = vmatpush1.msra.mxu0 0.0
    %2590 = vmatprep.subr.mxu0 0.0
    %2591 = vmatpush1.msra.mxu0 0.0
    %2592 = vmatprep.subr.mxu0 0.0
    %2593 = vmatpush1.msra.mxu0 0.0
    %2594 = vmatprep.subr.mxu0 0.0
    %2595 = vmatpush1.msra.mxu0 0.0
    %2596 = vmatprep.subr.mxu0 0.0
    %2597 = vmatpush1.msra.mxu0 0.0
    %2598 = vmatprep.subr.mxu0 0.0
    %2599 = vmatpush1.msra.mxu0 0.0
    %2600 = vmatprep.subr.mxu0 0.0
    %2601 = vmatpush1.msra.mxu0 0.0
    %2602 = vmatprep.subr.mxu0 0.0
    %2603 = vmatpush1.msra.mxu0 0.0
    %2604 = vmatprep.subr.mxu0 0.0
    %2605 = vmatpush1.msra.mxu0 0.0
    %2606 = vmatprep.subr.mxu0 0.0
    %2607 = vmatpush1.msra.mxu0 0.0
    %2608 = vmatprep.subr.mxu0 0.0
    %2609 = vmatpush1.msra.mxu0 0.0
    %2610 = vmatprep.subr.mxu0 0.0
    %2611 = vmatpush1.msra.mxu0 0.0
    %2612 = vmatprep.mubr.f32.mxu0 0.0
    %2613 = vmatmul.mubr.f32.gmra.mrb[0].mxu0 %v922
    %v2614 = vpop.f32.mrb[0].mxu0
    %v2615 = vadd.f32 0.0, %v2614
    %v2616 = vpop.f32.mrb[0].mxu0
    %2617 = vmatprep.mubr.f32.mxu0 0.0
    %2618 = vmatmul.mubr.f32.gmra.mrb[0].mxu0 %v925
    %v2619 = vpop.f32.mrb[0].mxu0
    %v2620 = vadd.f32 0.0, %v2619
    %v2621 = vpop.f32.mrb[0].mxu0
    %2622 = vdwg.mxu0
    %2623 = vmatprep.subr.mxu0 0.0
    %2624 = vmatpush1.msra.mxu0 %v2120
    %2625 = vmatprep.subr.mxu0 0.0
    %2626 = vmatpush1.msra.mxu0 0.0
    %2627 = vmatprep.subr.mxu0 0.0
    %2628 = vmatpush1.msra.mxu0 0.0
    %2629 = vmatprep.subr.mxu0 0.0
    %2630 = vmatpush1.msra.mxu0 0.0
    %2631 = vmatprep.subr.mxu0 0.0
    %2632 = vmatpush1.msra.mxu0 0.0
    %2633 = vmatprep.subr.mxu0 0.0
    %2634 = vmatpush1.msra.mxu0 0.0
    %2635 = vmatprep.subr.mxu0 0.0
    %2636 = vmatpush1.msra.mxu0 0.0
    %2637 = vmatprep.subr.mxu0 0.0
    %2638 = vmatpush1.msra.mxu0 0.0
    %2639 = vmatprep.subr.mxu0 0.0
    %2640 = vmatpush1.msra.mxu0 0.0
    %2641 = vmatprep.subr.mxu0 0.0
    %2642 = vmatpush1.msra.mxu0 0.0
    %2643 = vmatprep.subr.mxu0 0.0
    %2644 = vmatpush1.msra.mxu0 0.0
    %2645 = vmatprep.subr.mxu0 0.0
    %2646 = vmatpush1.msra.mxu0 0.0
    %2647 = vmatprep.subr.mxu0 0.0
    %2648 = vmatpush1.msra.mxu0 0.0
    %2649 = vmatprep.subr.mxu0 0.0
    %2650 = vmatpush1.msra.mxu0 0.0
    %2651 = vmatprep.subr.mxu0 0.0
    %2652 = vmatpush1.msra.mxu0 0.0
    %2653 = vmatprep.subr.mxu0 0.0
    %2654 = vmatpush1.msra.mxu0 0.0
    %2655 = vmatprep.subr.mxu0 0.0
    %2656 = vmatpush1.msra.mxu0 0.0
    %2657 = vmatprep.subr.mxu0 0.0
    %2658 = vmatpush1.msra.mxu0 0.0
    %2659 = vmatprep.subr.mxu0 0.0
    %2660 = vmatpush1.msra.mxu0 0.0
    %2661 = vmatprep.subr.mxu0 0.0
    %2662 = vmatpush1.msra.mxu0 0.0
    %2663 = vmatprep.subr.mxu0 0.0
    %2664 = vmatpush1.msra.mxu0 0.0
    %2665 = vmatprep.subr.mxu0 0.0
    %2666 = vmatpush1.msra.mxu0 0.0
    %2667 = vmatprep.subr.mxu0 0.0
    %2668 = vmatpush1.msra.mxu0 0.0
    %2669 = vmatprep.subr.mxu0 0.0
    %2670 = vmatpush1.msra.mxu0 0.0
    %2671 = vmatprep.subr.mxu0 0.0
    %2672 = vmatpush1.msra.mxu0 0.0
    %2673 = vmatprep.subr.mxu0 0.0
    %2674 = vmatpush1.msra.mxu0 0.0
    %2675 = vmatprep.subr.mxu0 0.0
    %2676 = vmatpush1.msra.mxu0 0.0
    %2677 = vmatprep.subr.mxu0 0.0
    %2678 = vmatpush1.msra.mxu0 0.0
    %2679 = vmatprep.subr.mxu0 0.0
    %2680 = vmatpush1.msra.mxu0 0.0
    %2681 = vmatprep.subr.mxu0 0.0
    %2682 = vmatpush1.msra.mxu0 0.0
    %2683 = vmatprep.subr.mxu0 0.0
    %2684 = vmatpush1.msra.mxu0 0.0
    %2685 = vmatprep.subr.mxu0 0.0
    %2686 = vmatpush1.msra.mxu0 0.0
    %2687 = vmatprep.mubr.f32.mxu0 0.0
    %2688 = vmatmul.mubr.f32.gmra.mrb[0].mxu0 %v922
    %v2689 = vpop.f32.mrb[0].mxu0
    %v2690 = vadd.f32 0.0, %v2689
    %v2691 = vpop.f32.mrb[0].mxu0
    %2692 = vmatprep.mubr.f32.mxu0 0.0
    %2693 = vmatmul.mubr.f32.gmra.mrb[0].mxu0 %v925
    %v2694 = vpop.f32.mrb[0].mxu0
    %v2695 = vadd.f32 0.0, %v2694
    %v2696 = vpop.f32.mrb[0].mxu0
    %2697 = vdwg.mxu0
    %2698 = vmatprep.subr.mxu0 0.0
    %2699 = vmatpush1.msra.mxu0 %v2190
    %2700 = vmatprep.subr.mxu0 0.0
    %2701 = vmatpush1.msra.mxu0 0.0
    %2702 = vmatprep.subr.mxu0 0.0
    %2703 = vmatpush1.msra.mxu0 0.0
    %2704 = vmatprep.subr.mxu0 0.0
    %2705 = vmatpush1.msra.mxu0 0.0
    %2706 = vmatprep.subr.mxu0 0.0
    %2707 = vmatpush1.msra.mxu0 0.0
    %2708 = vmatprep.subr.mxu0 0.0
    %2709 = vmatpush1.msra.mxu0 0.0
    %2710 = vmatprep.subr.mxu0 0.0
    %2711 = vmatpush1.msra.mxu0 0.0
    %2712 = vmatprep.subr.mxu0 0.0
    %2713 = vmatpush1.msra.mxu0 0.0
    %2714 = vmatprep.subr.mxu0 0.0
    %2715 = vmatpush1.msra.mxu0 0.0
    %2716 = vmatprep.subr.mxu0 0.0
    %2717 = vmatpush1.msra.mxu0 0.0
    %2718 = vmatprep.subr.mxu0 0.0
    %2719 = vmatpush1.msra.mxu0 0.0
    %2720 = vmatprep.subr.mxu0 0.0
    %2721 = vmatpush1.msra.mxu0 0.0
    %2722 = vmatprep.subr.mxu0 0.0
    %2723 = vmatpush1.msra.mxu0 0.0
    %2724 = vmatprep.subr.mxu0 0.0
    %2725 = vmatpush1.msra.mxu0 0.0
    %2726 = vmatprep.subr.mxu0 0.0
    %2727 = vmatpush1.msra.mxu0 0.0
    %2728 = vmatprep.subr.mxu0 0.0
    %2729 = vmatpush1.msra.mxu0 0.0
    %2730 = vmatprep.subr.mxu0 0.0
    %2731 = vmatpush1.msra.mxu0 0.0
    %2732 = vmatprep.subr.mxu0 0.0
    %2733 = vmatpush1.msra.mxu0 0.0
    %2734 = vmatprep.subr.mxu0 0.0
    %2735 = vmatpush1.msra.mxu0 0.0
    %2736 = vmatprep.subr.mxu0 0.0
    %2737 = vmatpush1.msra.mxu0 0.0
    %2738 = vmatprep.subr.mxu0 0.0
    %2739 = vmatpush1.msra.mxu0 0.0
    %2740 = vmatprep.subr.mxu0 0.0
    %2741 = vmatpush1.msra.mxu0 0.0
    %2742 = vmatprep.subr.mxu0 0.0
    %2743 = vmatpush1.msra.mxu0 0.0
    %2744 = vmatprep.subr.mxu0 0.0
    %2745 = vmatpush1.msra.mxu0 0.0
    %2746 = vmatprep.subr.mxu0 0.0
    %2747 = vmatpush1.msra.mxu0 0.0
    %2748 = vmatprep.subr.mxu0 0.0
    %2749 = vmatpush1.msra.mxu0 0.0
    %2750 = vmatprep.subr.mxu0 0.0
    %2751 = vmatpush1.msra.mxu0 0.0
    %2752 = vmatprep.subr.mxu0 0.0
    %2753 = vmatpush1.msra.mxu0 0.0
    %2754 = vmatprep.subr.mxu0 0.0
    %2755 = vmatpush1.msra.mxu0 0.0
    %2756 = vmatprep.subr.mxu0 0.0
    %2757 = vmatpush1.msra.mxu0 0.0
    %2758 = vmatprep.subr.mxu0 0.0
    %2759 = vmatpush1.msra.mxu0 0.0
    %2760 = vmatprep.subr.mxu0 0.0
    %2761 = vmatpush1.msra.mxu0 0.0
    %2762 = vmatprep.mubr.f32.mxu0 0.0
    %2763 = vmatmul.mubr.f32.gmra.mrb[0].mxu0 %v922
    %v2764 = vpop.f32.mrb[0].mxu0
    %v2765 = vadd.f32 0.0, %v2764
    %v2766 = vpop.f32.mrb[0].mxu0
    %2767 = vmatprep.mubr.f32.mxu0 0.0
    %2768 = vmatmul.mubr.f32.gmra.mrb[0].mxu0 %v925
    %v2769 = vpop.f32.mrb[0].mxu0
    %v2770 = vadd.f32 0.0, %v2769
    %v2771 = vpop.f32.mrb[0].mxu0
    %2772 = vdwg.mxu0
    %2773 = vmatprep.subr.mxu0 0.0
    %2774 = vmatpush1.msra.mxu0 %v2260
    %2775 = vmatprep.subr.mxu0 0.0
    %2776 = vmatpush1.msra.mxu0 0.0
    %2777 = vmatprep.subr.mxu0 0.0
    %2778 = vmatpush1.msra.mxu0 0.0
    %2779 = vmatprep.subr.mxu0 0.0
    %2780 = vmatpush1.msra.mxu0 0.0
    %2781 = vmatprep.subr.mxu0 0.0
    %2782 = vmatpush1.msra.mxu0 0.0
    %2783 = vmatprep.subr.mxu0 0.0
    %2784 = vmatpush1.msra.mxu0 0.0
    %2785 = vmatprep.subr.mxu0 0.0
    %2786 = vmatpush1.msra.mxu0 0.0
    %2787 = vmatprep.subr.mxu0 0.0
    %2788 = vmatpush1.msra.mxu0 0.0
    %2789 = vmatprep.subr.mxu0 0.0
    %2790 = vmatpush1.msra.mxu0 0.0
    %2791 = vmatprep.subr.mxu0 0.0
    %2792 = vmatpush1.msra.mxu0 0.0
    %2793 = vmatprep.subr.mxu0 0.0
    %2794 = vmatpush1.msra.mxu0 0.0
    %2795 = vmatprep.subr.mxu0 0.0
    %2796 = vmatpush1.msra.mxu0 0.0
    %2797 = vmatprep.subr.mxu0 0.0
    %2798 = vmatpush1.msra.mxu0 0.0
    %2799 = vmatprep.subr.mxu0 0.0
    %2800 = vmatpush1.msra.mxu0 0.0
    %2801 = vmatprep.subr.mxu0 0.0
    %2802 = vmatpush1.msra.mxu0 0.0
    %2803 = vmatprep.subr.mxu0 0.0
    %2804 = vmatpush1.msra.mxu0 0.0
    %2805 = vmatprep.subr.mxu0 0.0
    %2806 = vmatpush1.msra.mxu0 0.0
    %2807 = vmatprep.subr.mxu0 0.0
    %2808 = vmatpush1.msra.mxu0 0.0
    %2809 = vmatprep.subr.mxu0 0.0
    %2810 = vmatpush1.msra.mxu0 0.0
    %2811 = vmatprep.subr.mxu0 0.0
    %2812 = vmatpush1.msra.mxu0 0.0
    %2813 = vmatprep.subr.mxu0 0.0
    %2814 = vmatpush1.msra.mxu0 0.0
    %2815 = vmatprep.subr.mxu0 0.0
    %2816 = vmatpush1.msra.mxu0 0.0
    %2817 = vmatprep.subr.mxu0 0.0
    %2818 = vmatpush1.msra.mxu0 0.0
    %2819 = vmatprep.subr.mxu0 0.0
    %2820 = vmatpush1.msra.mxu0 0.0
    %2821 = vmatprep.subr.mxu0 0.0
    %2822 = vmatpush1.msra.mxu0 0.0
    %2823 = vmatprep.subr.mxu0 0.0
    %2824 = vmatpush1.msra.mxu0 0.0
    %2825 = vmatprep.subr.mxu0 0.0
    %2826 = vmatpush1.msra.mxu0 0.0
    %2827 = vmatprep.subr.mxu0 0.0
    %2828 = vmatpush1.msra.mxu0 0.0
    %2829 = vmatprep.subr.mxu0 0.0
    %2830 = vmatpush1.msra.mxu0 0.0
    %2831 = vmatprep.subr.mxu0 0.0
    %2832 = vmatpush1.msra.mxu0 0.0
    %2833 = vmatprep.subr.mxu0 0.0
    %2834 = vmatpush1.msra.mxu0 0.0
    %2835 = vmatprep.subr.mxu0 0.0
    %2836 = vmatpush1.msra.mxu0 0.0
    %2837 = vmatprep.mubr.f32.mxu0 0.0
    %2838 = vmatmul.mubr.f32.gmra.mrb[0].mxu0 %v922
    %v2839 = vpop.f32.mrb[0].mxu0
    %v2840 = vadd.f32 0.0, %v2839
    %v2841 = vpop.f32.mrb[0].mxu0
    %2842 = vmatprep.mubr.f32.mxu0 0.0
    %2843 = vmatmul.mubr.f32.gmra.mrb[0].mxu0 %v925
    %v2844 = vpop.f32.mrb[0].mxu0
    %v2845 = vadd.f32 0.0, %v2844
    %v2846 = vpop.f32.mrb[0].mxu0
    %2847 = vdwg.mxu0
    %2848 = vmatprep.subr.mxu0 0.0
    %2849 = vmatpush1.msra.mxu0 %v2330
    %2850 = vmatprep.subr.mxu0 0.0
    %2851 = vmatpush1.msra.mxu0 0.0
    %2852 = vmatprep.subr.mxu0 0.0
    %2853 = vmatpush1.msra.mxu0 0.0
    %2854 = vmatprep.subr.mxu0 0.0
    %2855 = vmatpush1.msra.mxu0 0.0
    %2856 = vmatprep.subr.mxu0 0.0
    %2857 = vmatpush1.msra.mxu0 0.0
    %2858 = vmatprep.subr.mxu0 0.0
    %2859 = vmatpush1.msra.mxu0 0.0
    %2860 = vmatprep.subr.mxu0 0.0
    %2861 = vmatpush1.msra.mxu0 0.0
    %2862 = vmatprep.subr.mxu0 0.0
    %2863 = vmatpush1.msra.mxu0 0.0
    %2864 = vmatprep.subr.mxu0 0.0
    %2865 = vmatpush1.msra.mxu0 0.0
    %2866 = vmatprep.subr.mxu0 0.0
    %2867 = vmatpush1.msra.mxu0 0.0
    %2868 = vmatprep.subr.mxu0 0.0
    %2869 = vmatpush1.msra.mxu0 0.0
    %2870 = vmatprep.subr.mxu0 0.0
    %2871 = vmatpush1.msra.mxu0 0.0
    %2872 = vmatprep.subr.mxu0 0.0
    %2873 = vmatpush1.msra.mxu0 0.0
    %2874 = vmatprep.subr.mxu0 0.0
    %2875 = vmatpush1.msra.mxu0 0.0
    %2876 = vmatprep.subr.mxu0 0.0
    %2877 = vmatpush1.msra.mxu0 0.0
    %2878 = vmatprep.subr.mxu0 0.0
    %2879 = vmatpush1.msra.mxu0 0.0
    %2880 = vmatprep.subr.mxu0 0.0
    %2881 = vmatpush1.msra.mxu0 0.0
    %2882 = vmatprep.subr.mxu0 0.0
    %2883 = vmatpush1.msra.mxu0 0.0
    %2884 = vmatprep.subr.mxu0 0.0
    %2885 = vmatpush1.msra.mxu0 0.0
    %2886 = vmatprep.subr.mxu0 0.0
    %2887 = vmatpush1.msra.mxu0 0.0
    %2888 = vmatprep.subr.mxu0 0.0
    %2889 = vmatpush1.msra.mxu0 0.0
    %2890 = vmatprep.subr.mxu0 0.0
    %2891 = vmatpush1.msra.mxu0 0.0
    %2892 = vmatprep.subr.mxu0 0.0
    %2893 = vmatpush1.msra.mxu0 0.0
    %2894 = vmatprep.subr.mxu0 0.0
    %2895 = vmatpush1.msra.mxu0 0.0
    %2896 = vmatprep.subr.mxu0 0.0
    %2897 = vmatpush1.msra.mxu0 0.0
    %2898 = vmatprep.subr.mxu0 0.0
    %2899 = vmatpush1.msra.mxu0 0.0
    %2900 = vmatprep.subr.mxu0 0.0
    %2901 = vmatpush1.msra.mxu0 0.0
    %2902 = vmatprep.subr.mxu0 0.0
    %2903 = vmatpush1.msra.mxu0 0.0
    %2904 = vmatprep.subr.mxu0 0.0
    %2905 = vmatpush1.msra.mxu0 0.0
    %2906 = vmatprep.subr.mxu0 0.0
    %2907 = vmatpush1.msra.mxu0 0.0
    %2908 = vmatprep.subr.mxu0 0.0
    %2909 = vmatpush1.msra.mxu0 0.0
    %2910 = vmatprep.subr.mxu0 0.0
    %2911 = vmatpush1.msra.mxu0 0.0
    %2912 = vmatprep.mubr.f32.mxu0 0.0
    %2913 = vmatmul.mubr.f32.gmra.mrb[0].mxu0 %v922
    %v2914 = vpop.f32.mrb[0].mxu0
    %v2915 = vadd.f32 0.0, %v2914
    %v2916 = vpop.f32.mrb[0].mxu0
    %2917 = vmatprep.mubr.f32.mxu0 0.0
    %2918 = vmatmul.mubr.f32.gmra.mrb[0].mxu0 %v925
    %v2919 = vpop.f32.mrb[0].mxu0
    %v2920 = vadd.f32 0.0, %v2919
    %v2921 = vpop.f32.mrb[0].mxu0
    %2922 = vdwg.mxu0
    %2923 = vmatprep.subr.mxu0 0.0
    %2924 = vmatpush1.msra.mxu0 %v2400
    %2925 = vmatprep.subr.mxu0 0.0
    %2926 = vmatpush1.msra.mxu0 0.0
    %2927 = vmatprep.subr.mxu0 0.0
    %2928 = vmatpush1.msra.mxu0 0.0
    %2929 = vmatprep.subr.mxu0 0.0
    %2930 = vmatpush1.msra.mxu0 0.0
    %2931 = vmatprep.subr.mxu0 0.0
    %2932 = vmatpush1.msra.mxu0 0.0
    %2933 = vmatprep.subr.mxu0 0.0
    %2934 = vmatpush1.msra.mxu0 0.0
    %2935 = vmatprep.subr.mxu0 0.0
    %2936 = vmatpush1.msra.mxu0 0.0
    %2937 = vmatprep.subr.mxu0 0.0
    %2938 = vmatpush1.msra.mxu0 0.0
    %2939 = vmatprep.subr.mxu0 0.0
    %2940 = vmatpush1.msra.mxu0 0.0
    %2941 = vmatprep.subr.mxu0 0.0
    %2942 = vmatpush1.msra.mxu0 0.0
    %2943 = vmatprep.subr.mxu0 0.0
    %2944 = vmatpush1.msra.mxu0 0.0
    %2945 = vmatprep.subr.mxu0 0.0
    %2946 = vmatpush1.msra.mxu0 0.0
    %2947 = vmatprep.subr.mxu0 0.0
    %2948 = vmatpush1.msra.mxu0 0.0
    %2949 = vmatprep.subr.mxu0 0.0
    %2950 = vmatpush1.msra.mxu0 0.0
    %2951 = vmatprep.subr.mxu0 0.0
    %2952 = vmatpush1.msra.mxu0 0.0
    %2953 = vmatprep.subr.mxu0 0.0
    %2954 = vmatpush1.msra.mxu0 0.0
    %2955 = vmatprep.subr.mxu0 0.0
    %2956 = vmatpush1.msra.mxu0 0.0
    %2957 = vmatprep.subr.mxu0 0.0
    %2958 = vmatpush1.msra.mxu0 0.0
    %2959 = vmatprep.subr.mxu0 0.0
    %2960 = vmatpush1.msra.mxu0 0.0
    %2961 = vmatprep.subr.mxu0 0.0
    %2962 = vmatpush1.msra.mxu0 0.0
    %2963 = vmatprep.subr.mxu0 0.0
    %2964 = vmatpush1.msra.mxu0 0.0
    %2965 = vmatprep.subr.mxu0 0.0
    %2966 = vmatpush1.msra.mxu0 0.0
    %2967 = vmatprep.subr.mxu0 0.0
    %2968 = vmatpush1.msra.mxu0 0.0
    %2969 = vmatprep.subr.mxu0 0.0
    %2970 = vmatpush1.msra.mxu0 0.0
    %2971 = vmatprep.subr.mxu0 0.0
    %2972 = vmatpush1.msra.mxu0 0.0
    %2973 = vmatprep.subr.mxu0 0.0
    %2974 = vmatpush1.msra.mxu0 0.0
    %2975 = vmatprep.subr.mxu0 0.0
    %2976 = vmatpush1.msra.mxu0 0.0
    %2977 = vmatprep.subr.mxu0 0.0
    %2978 = vmatpush1.msra.mxu0 0.0
    %2979 = vmatprep.subr.mxu0 0.0
    %2980 = vmatpush1.msra.mxu0 0.0
    %2981 = vmatprep.subr.mxu0 0.0
    %2982 = vmatpush1.msra.mxu0 0.0
    %2983 = vmatprep.subr.mxu0 0.0
    %2984 = vmatpush1.msra.mxu0 0.0
    %2985 = vmatprep.subr.mxu0 0.0
    %2986 = vmatpush1.msra.mxu0 0.0
    %2987 = vmatprep.mubr.f32.mxu0 0.0
    %2988 = vmatmul.mubr.f32.gmra.mrb[0].mxu0 %v922
    %v2989 = vpop.f32.mrb[0].mxu0
    %v2990 = vadd.f32 0.0, %v2989
    %v2991 = vpop.f32.mrb[0].mxu0
    %2992 = vmatprep.mubr.f32.mxu0 0.0
    %2993 = vmatmul.mubr.f32.gmra.mrb[0].mxu0 %v925
    %v2994 = vpop.f32.mrb[0].mxu0
    %v2995 = vadd.f32 0.0, %v2994
    %v2996 = vpop.f32.mrb[0].mxu0
    %2997 = vdwg.mxu0
    %2998 = vmatprep.subr.mxu0 0.0
    %2999 = vmatpush1.msra.mxu0 %v2470
    %3000 = vmatprep.subr.mxu0 0.0
    %3001 = vmatpush1.msra.mxu0 0.0
    %3002 = vmatprep.subr.mxu0 0.0
    %3003 = vmatpush1.msra.mxu0 0.0
    %3004 = vmatprep.subr.mxu0 0.0
    %3005 = vmatpush1.msra.mxu0 0.0
    %3006 = vmatprep.subr.mxu0 0.0
    %3007 = vmatpush1.msra.mxu0 0.0
    %3008 = vmatprep.subr.mxu0 0.0
    %3009 = vmatpush1.msra.mxu0 0.0
    %3010 = vmatprep.subr.mxu0 0.0
    %3011 = vmatpush1.msra.mxu0 0.0
    %3012 = vmatprep.subr.mxu0 0.0
    %3013 = vmatpush1.msra.mxu0 0.0
    %3014 = vmatprep.subr.mxu0 0.0
    %3015 = vmatpush1.msra.mxu0 0.0
    %3016 = vmatprep.subr.mxu0 0.0
    %3017 = vmatpush1.msra.mxu0 0.0
    %3018 = vmatprep.subr.mxu0 0.0
    %3019 = vmatpush1.msra.mxu0 0.0
    %3020 = vmatprep.subr.mxu0 0.0
    %3021 = vmatpush1.msra.mxu0 0.0
    %3022 = vmatprep.subr.mxu0 0.0
    %3023 = vmatpush1.msra.mxu0 0.0
    %3024 = vmatprep.subr.mxu0 0.0
    %3025 = vmatpush1.msra.mxu0 0.0
    %3026 = vmatprep.subr.mxu0 0.0
    %3027 = vmatpush1.msra.mxu0 0.0
    %3028 = vmatprep.subr.mxu0 0.0
    %3029 = vmatpush1.msra.mxu0 0.0
    %3030 = vmatprep.subr.mxu0 0.0
    %3031 = vmatpush1.msra.mxu0 0.0
    %3032 = vmatprep.subr.mxu0 0.0
    %3033 = vmatpush1.msra.mxu0 0.0
    %3034 = vmatprep.subr.mxu0 0.0
    %3035 = vmatpush1.msra.mxu0 0.0
    %3036 = vmatprep.subr.mxu0 0.0
    %3037 = vmatpush1.msra.mxu0 0.0
    %3038 = vmatprep.subr.mxu0 0.0
    %3039 = vmatpush1.msra.mxu0 0.0
    %3040 = vmatprep.subr.mxu0 0.0
    %3041 = vmatpush1.msra.mxu0 0.0
    %3042 = vmatprep.subr.mxu0 0.0
    %3043 = vmatpush1.msra.mxu0 0.0
    %3044 = vmatprep.subr.mxu0 0.0
    %3045 = vmatpush1.msra.mxu0 0.0
    %3046 = vmatprep.subr.mxu0 0.0
    %3047 = vmatpush1.msra.mxu0 0.0
    %3048 = vmatprep.subr.mxu0 0.0
    %3049 = vmatpush1.msra.mxu0 0.0
    %3050 = vmatprep.subr.mxu0 0.0
    %3051 = vmatpush1.msra.mxu0 0.0
    %3052 = vmatprep.subr.mxu0 0.0
    %3053 = vmatpush1.msra.mxu0 0.0
    %3054 = vmatprep.subr.mxu0 0.0
    %3055 = vmatpush1.msra.mxu0 0.0
    %3056 = vmatprep.subr.mxu0 0.0
    %3057 = vmatpush1.msra.mxu0 0.0
    %3058 = vmatprep.subr.mxu0 0.0
    %3059 = vmatpush1.msra.mxu0 0.0
    %3060 = vmatprep.subr.mxu0 0.0
    %3061 = vmatpush1.msra.mxu0 0.0
    %3062 = vmatprep.mubr.f32.mxu0 0.0
    %3063 = vmatmul.mubr.f32.gmra.mrb[0].mxu0 %v922
    %v3064 = vpop.f32.mrb[0].mxu0
    %v3065 = vadd.f32 0.0, %v3064
    %v3066 = vpop.f32.mrb[0].mxu0
    %3067 = vmatprep.mubr.f32.mxu0 0.0
    %3068 = vmatmul.mubr.f32.gmra.mrb[0].mxu0 %v925
    %v3069 = vpop.f32.mrb[0].mxu0
    %v3070 = vadd.f32 0.0, %v3069
    %v3071 = vpop.f32.mrb[0].mxu0
    %3072 = vdwg.mxu0
    %v3074 = vsel %vm920, %v2540, 0
    %v3077 = vsel %vm920, %v2545, 0
    %v3080 = vsel %vm920, %v2615, 0
    %v3083 = vsel %vm920, %v2620, 0
    %v3086 = vsel %vm920, %v2690, 0
    %v3089 = vsel %vm920, %v2695, 0
    %v3092 = vsel %vm920, %v2765, 0
    %v3095 = vsel %vm920, %v2770, 0
    %v3098 = vsel %vm920, %v2840, 0
    %v3101 = vsel %vm920, %v2845, 0
    %v3104 = vsel %vm920, %v2915, 0
    %v3107 = vsel %vm920, %v2920, 0
    %v3110 = vsel %vm920, %v2990, 0
    %v3113 = vsel %vm920, %v2995, 0
    %v3116 = vsel %vm920, %v3065, 0
    %v3119 = vsel %vm920, %v3070, 0
    %3121 = vmatprep.subr.mxu0 0.0
    %3122 = vmatpush1.msra.mxu0 %v162
    %3123 = vmatprep.subr.mxu0 0.0
    %3124 = vmatpush1.msra.mxu0 0.0
    %3125 = vmatprep.subr.mxu0 0.0
    %3126 = vmatpush1.msra.mxu0 0.0
    %3127 = vmatprep.subr.mxu0 0.0
    %3128 = vmatpush1.msra.mxu0 0.0
    %3129 = vmatprep.subr.mxu0 0.0
    %3130 = vmatpush1.msra.mxu0 0.0
    %3131 = vmatprep.subr.mxu0 0.0
    %3132 = vmatpush1.msra.mxu0 0.0
    %3133 = vmatprep.subr.mxu0 0.0
    %3134 = vmatpush1.msra.mxu0 0.0
    %3135 = vmatprep.subr.mxu0 0.0
    %3136 = vmatpush1.msra.mxu0 0.0
    %3137 = vmatprep.subr.mxu0 0.0
    %3138 = vmatpush1.msra.mxu0 0.0
    %3139 = vmatprep.subr.mxu0 0.0
    %3140 = vmatpush1.msra.mxu0 0.0
    %3141 = vmatprep.subr.mxu0 0.0
    %3142 = vmatpush1.msra.mxu0 0.0
    %3143 = vmatprep.subr.mxu0 0.0
    %3144 = vmatpush1.msra.mxu0 0.0
    %3145 = vmatprep.subr.mxu0 0.0
    %3146 = vmatpush1.msra.mxu0 0.0
    %3147 = vmatprep.subr.mxu0 0.0
    %3148 = vmatpush1.msra.mxu0 0.0
    %3149 = vmatprep.subr.mxu0 0.0
    %3150 = vmatpush1.msra.mxu0 0.0
    %3151 = vmatprep.subr.mxu0 0.0
    %3152 = vmatpush1.msra.mxu0 0.0
    %3153 = vmatprep.subr.mxu0 0.0
    %3154 = vmatpush1.msra.mxu0 0.0
    %3155 = vmatprep.subr.mxu0 0.0
    %3156 = vmatpush1.msra.mxu0 0.0
    %3157 = vmatprep.subr.mxu0 0.0
    %3158 = vmatpush1.msra.mxu0 0.0
    %3159 = vmatprep.subr.mxu0 0.0
    %3160 = vmatpush1.msra.mxu0 0.0
    %3161 = vmatprep.subr.mxu0 0.0
    %3162 = vmatpush1.msra.mxu0 0.0
    %3163 = vmatprep.subr.mxu0 0.0
    %3164 = vmatpush1.msra.mxu0 0.0
    %3165 = vmatprep.subr.mxu0 0.0
    %3166 = vmatpush1.msra.mxu0 0.0
    %3167 = vmatprep.subr.mxu0 0.0
    %3168 = vmatpush1.msra.mxu0 0.0
    %3169 = vmatprep.subr.mxu0 0.0
    %3170 = vmatpush1.msra.mxu0 0.0
    %3171 = vmatprep.subr.mxu0 0.0
    %3172 = vmatpush1.msra.mxu0 0.0
    %3173 = vmatprep.subr.mxu0 0.0
    %3174 = vmatpush1.msra.mxu0 0.0
    %3175 = vmatprep.subr.mxu0 0.0
    %3176 = vmatpush1.msra.mxu0 0.0
    %3177 = vmatprep.subr.mxu0 0.0
    %3178 = vmatpush1.msra.mxu0 0.0
    %3179 = vmatprep.subr.mxu0 0.0
    %3180 = vmatpush1.msra.mxu0 0.0
    %3181 = vmatprep.subr.mxu0 0.0
    %3182 = vmatpush1.msra.mxu0 0.0
    %3183 = vmatprep.subr.mxu0 0.0
    %3184 = vmatpush1.msra.mxu0 0.0
    %3185 = vmatprep.mubr.f32.mxu0 0.0
    %3186 = vmatmul.mubr.f32.gmra.mrb[0].mxu0 %v3074
    %v3187 = vpop.f32.mrb[0].mxu0
    %v3188 = vadd.f32 0.0, %v3187
    %v3189 = vpop.f32.mrb[0].mxu0
    %3190 = vmatprep.mubr.f32.mxu0 0.0
    %3191 = vmatmul.mubr.f32.gmra.mrb[0].mxu0 %v3077
    %v3192 = vpop.f32.mrb[0].mxu0
    %v3193 = vadd.f32 0.0, %v3192
    %v3194 = vpop.f32.mrb[0].mxu0
    %3195 = vmatprep.mubr.f32.mxu0 0.0
    %3196 = vmatmul.mubr.f32.gmra.mrb[0].mxu0 %v3080
    %v3197 = vpop.f32.mrb[0].mxu0
    %v3198 = vadd.f32 0.0, %v3197
    %v3199 = vpop.f32.mrb[0].mxu0
    %3200 = vmatprep.mubr.f32.mxu0 0.0
    %3201 = vmatmul.mubr.f32.gmra.mrb[0].mxu0 %v3083
    %v3202 = vpop.f32.mrb[0].mxu0
    %v3203 = vadd.f32 0.0, %v3202
    %v3204 = vpop.f32.mrb[0].mxu0
    %3205 = vmatprep.mubr.f32.mxu0 0.0
    %3206 = vmatmul.mubr.f32.gmra.mrb[0].mxu0 %v3086
    %v3207 = vpop.f32.mrb[0].mxu0
    %v3208 = vadd.f32 0.0, %v3207
    %v3209 = vpop.f32.mrb[0].mxu0
    %3210 = vmatprep.mubr.f32.mxu0 0.0
    %3211 = vmatmul.mubr.f32.gmra.mrb[0].mxu0 %v3089
    %v3212 = vpop.f32.mrb[0].mxu0
    %v3213 = vadd.f32 0.0, %v3212
    %v3214 = vpop.f32.mrb[0].mxu0
    %3215 = vmatprep.mubr.f32.mxu0 0.0
    %3216 = vmatmul.mubr.f32.gmra.mrb[0].mxu0 %v3092
    %v3217 = vpop.f32.mrb[0].mxu0
    %v3218 = vadd.f32 0.0, %v3217
    %v3219 = vpop.f32.mrb[0].mxu0
    %3220 = vmatprep.mubr.f32.mxu0 0.0
    %3221 = vmatmul.mubr.f32.gmra.mrb[0].mxu0 %v3095
    %v3222 = vpop.f32.mrb[0].mxu0
    %v3223 = vadd.f32 0.0, %v3222
    %v3224 = vpop.f32.mrb[0].mxu0
    %3225 = vmatprep.mubr.f32.mxu0 0.0
    %3226 = vmatmul.mubr.f32.gmra.mrb[0].mxu0 %v3098
    %v3227 = vpop.f32.mrb[0].mxu0
    %v3228 = vadd.f32 0.0, %v3227
    %v3229 = vpop.f32.mrb[0].mxu0
    %3230 = vmatprep.mubr.f32.mxu0 0.0
    %3231 = vmatmul.mubr.f32.gmra.mrb[0].mxu0 %v3101
    %v3232 = vpop.f32.mrb[0].mxu0
    %v3233 = vadd.f32 0.0, %v3232
    %v3234 = vpop.f32.mrb[0].mxu0
    %3235 = vmatprep.mubr.f32.mxu0 0.0
    %3236 = vmatmul.mubr.f32.gmra.mrb[0].mxu0 %v3104
    %v3237 = vpop.f32.mrb[0].mxu0
    %v3238 = vadd.f32 0.0, %v3237
    %v3239 = vpop.f32.mrb[0].mxu0
    %3240 = vmatprep.mubr.f32.mxu0 0.0
    %3241 = vmatmul.mubr.f32.gmra.mrb[0].mxu0 %v3107
    %v3242 = vpop.f32.mrb[0].mxu0
    %v3243 = vadd.f32 0.0, %v3242
    %v3244 = vpop.f32.mrb[0].mxu0
    %3245 = vmatprep.mubr.f32.mxu0 0.0
    %3246 = vmatmul.mubr.f32.gmra.mrb[0].mxu0 %v3110
    %v3247 = vpop.f32.mrb[0].mxu0
    %v3248 = vadd.f32 0.0, %v3247
    %v3249 = vpop.f32.mrb[0].mxu0
    %3250 = vmatprep.mubr.f32.mxu0 0.0
    %3251 = vmatmul.mubr.f32.gmra.mrb[0].mxu0 %v3113
    %v3252 = vpop.f32.mrb[0].mxu0
    %v3253 = vadd.f32 0.0, %v3252
    %v3254 = vpop.f32.mrb[0].mxu0
    %3255 = vmatprep.mubr.f32.mxu0 0.0
    %3256 = vmatmul.mubr.f32.gmra.mrb[0].mxu0 %v3116
    %v3257 = vpop.f32.mrb[0].mxu0
    %v3258 = vadd.f32 0.0, %v3257
    %v3259 = vpop.f32.mrb[0].mxu0
    %3260 = vmatprep.mubr.f32.mxu0 0.0
    %3261 = vmatmul.mubr.f32.gmra.mrb[0].mxu0 %v3119
    %v3262 = vpop.f32.mrb[0].mxu0
    %v3263 = vadd.f32 0.0, %v3262
    %v3264 = vpop.f32.mrb[0].mxu0
    %3265 = vdwg.mxu0
    %v3266 = vsub.f32 %v125, %v1642
    %v3267 = vsub.f32 %v126, %v1647
    %v3268 = vsub.f32 %v127, %v1652
    %v3269 = vsub.f32 %v128, %v1657
    %v3270 = vsub.f32 %v129, %v1662
    %v3271 = vsub.f32 %v130, %v1667
    %v3272 = vsub.f32 %v131, %v1672
    %v3273 = vsub.f32 %v132, %v1677
    %v3274 = vsub.f32 %v133, %v1682
    %v3275 = vsub.f32 %v134, %v1687
    %v3276 = vsub.f32 %v135, %v1692
    %v3277 = vsub.f32 %v136, %v1697
    %v3278 = vsub.f32 %v137, %v1702
    %v3279 = vsub.f32 %v138, %v1707
    %v3280 = vsub.f32 %v139, %v1712
    %v3281 = vsub.f32 %v140, %v1717
    %v3282 = vsub.f32 %v141, %v3188
    %v3283 = vsub.f32 %v142, %v3193
    %v3284 = vsub.f32 %v143, %v3198
    %v3285 = vsub.f32 %v144, %v3203
    %v3286 = vsub.f32 %v145, %v3208
    %v3287 = vsub.f32 %v146, %v3213
    %v3288 = vsub.f32 %v147, %v3218
    %v3289 = vsub.f32 %v148, %v3223
    %v3290 = vsub.f32 %v149, %v3228
    %v3291 = vsub.f32 %v150, %v3233
    %v3292 = vsub.f32 %v151, %v3238
    %v3293 = vsub.f32 %v152, %v3243
    %v3294 = vsub.f32 %v153, %v3248
    %v3295 = vsub.f32 %v154, %v3253
    %v3296 = vsub.f32 %v155, %v3258
    %v3297 = vsub.f32 %v156, %v3263
    %v3298 = vsub.f32 %v3266, %v3282
    %v3299 = vsub.f32 %v3267, %v3283
    %v3300 = vsub.f32 %v3268, %v3284
    %v3301 = vsub.f32 %v3269, %v3285
    %v3302 = vsub.f32 %v3270, %v3286
    %v3303 = vsub.f32 %v3271, %v3287
    %v3304 = vsub.f32 %v3272, %v3288
    %v3305 = vsub.f32 %v3273, %v3289
    %v3306 = vsub.f32 %v3274, %v3290
    %v3307 = vsub.f32 %v3275, %v3291
    %v3308 = vsub.f32 %v3276, %v3292
    %v3309 = vsub.f32 %v3277, %v3293
    %v3310 = vsub.f32 %v3278, %v3294
    %v3311 = vsub.f32 %v3279, %v3295
    %v3312 = vsub.f32 %v3280, %v3296
    %v3313 = vsub.f32 %v3281, %v3297
    %v3314 = vand.u32 2147483647, %v3298
    %v3315 = vand.u32 2147483647, %v3299
    %v3316 = vand.u32 2147483647, %v3300
    %v3317 = vand.u32 2147483647, %v3301
    %v3318 = vand.u32 2147483647, %v3302
    %v3319 = vand.u32 2147483647, %v3303
    %v3320 = vand.u32 2147483647, %v3304
    %v3321 = vand.u32 2147483647, %v3305
    %v3322 = vand.u32 2147483647, %v3306
    %v3323 = vand.u32 2147483647, %v3307
    %v3324 = vand.u32 2147483647, %v3308
    %v3325 = vand.u32 2147483647, %v3309
    %v3326 = vand.u32 2147483647, %v3310
    %v3327 = vand.u32 2147483647, %v3311
    %v3328 = vand.u32 2147483647, %v3312
    %v3329 = vand.u32 2147483647, %v3313
    %v3330 = vsel %vm163, %v3314, 0.0
    %v3331 = vsel %vm163, %v3315, 0.0
    %v3332 = vadd.f32 %v3330, %v3331
    %v3333 = vsel %vm163, %v3316, 0.0
    %v3334 = vadd.f32 %v3332, %v3333
    %v3335 = vsel %vm163, %v3317, 0.0
    %v3336 = vadd.f32 %v3334, %v3335
    %v3337 = vsel %vm163, %v3318, 0.0
    %v3338 = vadd.f32 %v3336, %v3337
    %v3339 = vsel %vm163, %v3319, 0.0
    %v3340 = vadd.f32 %v3338, %v3339
    %v3341 = vsel %vm163, %v3320, 0.0
    %v3342 = vadd.f32 %v3340, %v3341
    %v3343 = vsel %vm163, %v3321, 0.0
    %v3344 = vadd.f32 %v3342, %v3343
    %v3345 = vsel %vm163, %v3322, 0.0
    %v3346 = vadd.f32 %v3344, %v3345
    %v3347 = vsel %vm163, %v3323, 0.0
    %v3348 = vadd.f32 %v3346, %v3347
    %v3349 = vsel %vm163, %v3324, 0.0
    %v3350 = vadd.f32 %v3348, %v3349
    %v3351 = vsel %vm163, %v3325, 0.0
    %v3352 = vadd.f32 %v3350, %v3351
    %v3353 = vsel %vm163, %v3326, 0.0
    %v3354 = vadd.f32 %v3352, %v3353
    %v3355 = vsel %vm163, %v3327, 0.0
    %v3356 = vadd.f32 %v3354, %v3355
    %v3357 = vsel %vm163, %v3328, 0.0
    %v3358 = vadd.f32 %v3356, %v3357
    %v3359 = vsel %vm163, %v3329, 0.0
    %v3360 = vadd.f32 %v3358, %v3359
    %3361 = vadd.xlane.f32.xlu0 %v3360
    %v3362 = vpop.xlane.xlu0 %3361
    %v3363 = vrot.slane %v3362, 4
    %v3364 = vadd.f32 %v3362, %v3363
    %v3365 = vrot.slane %v3364, 2
    %v3366 = vadd.f32 %v3364, %v3365
    %v3367 = vrot.slane %v3366, 1
    %v3368 = vadd.f32 %v3366, %v3367
    %s3369 = vtos %v3368
    %v3370 = vstv %s3369
    %3371 = vst [vmem:[%s14] sm:$0xff] %v3370
    %v3372 = vld [vmem:[#allocation9] sm:$0xf]
    %v3373 = vld [vmem:[%s7] sm:$0xff]
    %v3374 = vld [vmem:[%s8] sm:$0xff]
    %v3375 = vld [vmem:[#allocation10] sm:$0xf]
    %v3377 = vsel %vm920, %v427, 0
    %v3380 = vsel %vm920, %v497, 0
    %v3383 = vsel %vm920, %v567, 0
    %v3386 = vsel %vm920, %v637, 0
    %v3389 = vsel %vm920, %v707, 0
    %v3392 = vsel %vm920, %v777, 0
    %v3395 = vsel %vm920, %v847, 0
    %v3398 = vsel %vm920, %v917, 0
    %3400 = vmatprep.subr.mxu0 0.0
    %3401 = vmatpush1.msra.mxu0 %v3373
    %3402 = vmatprep.subr.mxu0 0.0
    %3403 = vmatpush1.msra.mxu0 0.0
    %3404 = vmatprep.subr.mxu0 0.0
    %3405 = vmatpush1.msra.mxu0 0.0
    %3406 = vmatprep.subr.mxu0 0.0
    %3407 = vmatpush1.msra.mxu0 0.0
    %3408 = vmatprep.subr.mxu0 0.0
    %3409 = vmatpush1.msra.mxu0 0.0
    %3410 = vmatprep.subr.mxu0 0.0
    %3411 = vmatpush1.msra.mxu0 0.0
    %3412 = vmatprep.subr.mxu0 0.0
    %3413 = vmatpush1.msra.mxu0 0.0
    %3414 = vmatprep.subr.mxu0 0.0
    %3415 = vmatpush1.msra.mxu0 0.0
    %3416 = vmatprep.subr.mxu0 0.0
    %3417 = vmatpush1.msra.mxu0 0.0
    %3418 = vmatprep.subr.mxu0 0.0
    %3419 = vmatpush1.msra.mxu0 0.0
    %3420 = vmatprep.subr.mxu0 0.0
    %3421 = vmatpush1.msra.mxu0 0.0
    %3422 = vmatprep.subr.mxu0 0.0
    %3423 = vmatpush1.msra.mxu0 0.0
    %3424 = vmatprep.subr.mxu0 0.0
    %3425 = vmatpush1.msra.mxu0 0.0
    %3426 = vmatprep.subr.mxu0 0.0
    %3427 = vmatpush1.msra.mxu0 0.0
    %3428 = vmatprep.subr.mxu0 0.0
    %3429 = vmatpush1.msra.mxu0 0.0
    %3430 = vmatprep.subr.mxu0 0.0
    %3431 = vmatpush1.msra.mxu0 0.0
    %3432 = vmatprep.subr.mxu0 0.0
    %3433 = vmatpush1.msra.mxu0 0.0
    %3434 = vmatprep.subr.mxu0 0.0
    %3435 = vmatpush1.msra.mxu0 0.0
    %3436 = vmatprep.subr.mxu0 0.0
    %3437 = vmatpush1.msra.mxu0 0.0
    %3438 = vmatprep.subr.mxu0 0.0
    %3439 = vmatpush1.msra.mxu0 0.0
    %3440 = vmatprep.subr.mxu0 0.0
    %3441 = vmatpush1.msra.mxu0 0.0
    %3442 = vmatprep.subr.mxu0 0.0
    %3443 = vmatpush1.msra.mxu0 0.0
    %3444 = vmatprep.subr.mxu0 0.0
    %3445 = vmatpush1.msra.mxu0 0.0
    %3446 = vmatprep.subr.mxu0 0.0
    %3447 = vmatpush1.msra.mxu0 0.0
    %3448 = vmatprep.subr.mxu0 0.0
    %3449 = vmatpush1.msra.mxu0 0.0
    %3450 = vmatprep.subr.mxu0 0.0
    %3451 = vmatpush1.msra.mxu0 0.0
    %3452 = vmatprep.subr.mxu0 0.0
    %3453 = vmatpush1.msra.mxu0 0.0
    %3454 = vmatprep.subr.mxu0 0.0
    %3455 = vmatpush1.msra.mxu0 0.0
    %3456 = vmatprep.subr.mxu0 0.0
    %3457 = vmatpush1.msra.mxu0 0.0
    %3458 = vmatprep.subr.mxu0 0.0
    %3459 = vmatpush1.msra.mxu0 0.0
    %3460 = vmatprep.subr.mxu0 0.0
    %3461 = vmatpush1.msra.mxu0 0.0
    %3462 = vmatprep.subr.mxu0 0.0
    %3463 = vmatpush1.msra.mxu0 0.0
    %3464 = vmatprep.mubr.f32.mxu0 0.0
    %3465 = vmatmul.mubr.f32.gmra.mrb[0].mxu0 %v3377
    %v3466 = vpop.f32.mrb[0].mxu0
    %v3467 = vadd.f32 0.0, %v3466
    %v3468 = vpop.f32.mrb[0].mxu0
    %3469 = vmatprep.mubr.f32.mxu0 0.0
    %3470 = vmatmul.mubr.f32.gmra.mrb[0].mxu0 %v3380
    %v3471 = vpop.f32.mrb[0].mxu0
    %v3472 = vadd.f32 0.0, %v3471
    %v3473 = vpop.f32.mrb[0].mxu0
    %3474 = vmatprep.mubr.f32.mxu0 0.0
    %3475 = vmatmul.mubr.f32.gmra.mrb[0].mxu0 %v3383
    %v3476 = vpop.f32.mrb[0].mxu0
    %v3477 = vadd.f32 0.0, %v3476
    %v3478 = vpop.f32.mrb[0].mxu0
    %3479 = vmatprep.mubr.f32.mxu0 0.0
    %3480 = vmatmul.mubr.f32.gmra.mrb[0].mxu0 %v3386
    %v3481 = vpop.f32.mrb[0].mxu0
    %v3482 = vadd.f32 0.0, %v3481
    %v3483 = vpop.f32.mrb[0].mxu0
    %3484 = vmatprep.mubr.f32.mxu0 0.0
    %3485 = vmatmul.mubr.f32.gmra.mrb[0].mxu0 %v3389
    %v3486 = vpop.f32.mrb[0].mxu0
    %v3487 = vadd.f32 0.0, %v3486
    %v3488 = vpop.f32.mrb[0].mxu0
    %3489 = vmatprep.mubr.f32.mxu0 0.0
    %3490 = vmatmul.mubr.f32.gmra.mrb[0].mxu0 %v3392
    %v3491 = vpop.f32.mrb[0].mxu0
    %v3492 = vadd.f32 0.0, %v3491
    %v3493 = vpop.f32.mrb[0].mxu0
    %3494 = vmatprep.mubr.f32.mxu0 0.0
    %3495 = vmatmul.mubr.f32.gmra.mrb[0].mxu0 %v3395
    %v3496 = vpop.f32.mrb[0].mxu0
    %v3497 = vadd.f32 0.0, %v3496
    %v3498 = vpop.f32.mrb[0].mxu0
    %3499 = vmatprep.mubr.f32.mxu0 0.0
    %3500 = vmatmul.mubr.f32.gmra.mrb[0].mxu0 %v3398
    %v3501 = vpop.f32.mrb[0].mxu0
    %v3502 = vadd.f32 0.0, %v3501
    %v3503 = vpop.f32.mrb[0].mxu0
    %3504 = vdwg.mxu0
    %v3506 = vsel %vm920, %v3372, 0
    %3508 = vmatprep.subr.mxu0 0.0
    %3509 = vmatpush1.msra.mxu0 %v3467
    %3510 = vmatprep.subr.mxu0 0.0
    %3511 = vmatpush1.msra.mxu0 0.0
    %3512 = vmatprep.subr.mxu0 0.0
    %3513 = vmatpush1.msra.mxu0 0.0
    %3514 = vmatprep.subr.mxu0 0.0
    %3515 = vmatpush1.msra.mxu0 0.0
    %3516 = vmatprep.subr.mxu0 0.0
    %3517 = vmatpush1.msra.mxu0 0.0
    %3518 = vmatprep.subr.mxu0 0.0
    %3519 = vmatpush1.msra.mxu0 0.0
    %3520 = vmatprep.subr.mxu0 0.0
    %3521 = vmatpush1.msra.mxu0 0.0
    %3522 = vmatprep.subr.mxu0 0.0
    %3523 = vmatpush1.msra.mxu0 0.0
    %3524 = vmatprep.subr.mxu0 0.0
    %3525 = vmatpush1.msra.mxu0 0.0
    %3526 = vmatprep.subr.mxu0 0.0
    %3527 = vmatpush1.msra.mxu0 0.0
    %3528 = vmatprep.subr.mxu0 0.0
    %3529 = vmatpush1.msra.mxu0 0.0
    %3530 = vmatprep.subr.mxu0 0.0
    %3531 = vmatpush1.msra.mxu0 0.0
    %3532 = vmatprep.subr.mxu0 0.0
    %3533 = vmatpush1.msra.mxu0 0.0
    %3534 = vmatprep.subr.mxu0 0.0
    %3535 = vmatpush1.msra.mxu0 0.0
    %3536 = vmatprep.subr.mxu0 0.0
    %3537 = vmatpush1.msra.mxu0 0.0
    %3538 = vmatprep.subr.mxu0 0.0
    %3539 = vmatpush1.msra.mxu0 0.0
    %3540 = vmatprep.subr.mxu0 0.0
    %3541 = vmatpush1.msra.mxu0 0.0
    %3542 = vmatprep.subr.mxu0 0.0
    %3543 = vmatpush1.msra.mxu0 0.0
    %3544 = vmatprep.subr.mxu0 0.0
    %3545 = vmatpush1.msra.mxu0 0.0
    %3546 = vmatprep.subr.mxu0 0.0
    %3547 = vmatpush1.msra.mxu0 0.0
    %3548 = vmatprep.subr.mxu0 0.0
    %3549 = vmatpush1.msra.mxu0 0.0
    %3550 = vmatprep.subr.mxu0 0.0
    %3551 = vmatpush1.msra.mxu0 0.0
    %3552 = vmatprep.subr.mxu0 0.0
    %3553 = vmatpush1.msra.mxu0 0.0
    %3554 = vmatprep.subr.mxu0 0.0
    %3555 = vmatpush1.msra.mxu0 0.0
    %3556 = vmatprep.subr.mxu0 0.0
    %3557 = vmatpush1.msra.mxu0 0.0
    %3558 = vmatprep.subr.mxu0 0.0
    %3559 = vmatpush1.msra.mxu0 0.0
    %3560 = vmatprep.subr.mxu0 0.0
    %3561 = vmatpush1.msra.mxu0 0.0
    %3562 = vmatprep.subr.mxu0 0.0
    %3563 = vmatpush1.msra.mxu0 0.0
    %3564 = vmatprep.subr.mxu0 0.0
    %3565 = vmatpush1.msra.mxu0 0.0
    %3566 = vmatprep.subr.mxu0 0.0
    %3567 = vmatpush1.msra.mxu0 0.0
    %3568 = vmatprep.subr.mxu0 0.0
    %3569 = vmatpush1.msra.mxu0 0.0
    %3570 = vmatprep.subr.mxu0 0.0
    %3571 = vmatpush1.msra.mxu0 0.0
    %3572 = vmatprep.mubr.f32.mxu0 0.0
    %3573 = vmatmul.mubr.f32.gmra.mrb[0].mxu0 %v3506
    %v3574 = vpop.f32.mrb[0].mxu0
    %v3575 = vadd.f32 0.0, %v3574
    %v3576 = vpop.f32.mrb[0].mxu0
    %3577 = vdwg.mxu0
    %3578 = vmatprep.subr.mxu0 0.0
    %3579 = vmatpush1.msra.mxu0 %v3472
    %3580 = vmatprep.subr.mxu0 0.0
    %3581 = vmatpush1.msra.mxu0 0.0
    %3582 = vmatprep.subr.mxu0 0.0
    %3583 = vmatpush1.msra.mxu0 0.0
    %3584 = vmatprep.subr.mxu0 0.0
    %3585 = vmatpush1.msra.mxu0 0.0
    %3586 = vmatprep.subr.mxu0 0.0
    %3587 = vmatpush1.msra.mxu0 0.0
    %3588 = vmatprep.subr.mxu0 0.0
    %3589 = vmatpush1.msra.mxu0 0.0
    %3590 = vmatprep.subr.mxu0 0.0
    %3591 = vmatpush1.msra.mxu0 0.0
    %3592 = vmatprep.subr.mxu0 0.0
    %3593 = vmatpush1.msra.mxu0 0.0
    %3594 = vmatprep.subr.mxu0 0.0
    %3595 = vmatpush1.msra.mxu0 0.0
    %3596 = vmatprep.subr.mxu0 0.0
    %3597 = vmatpush1.msra.mxu0 0.0
    %3598 = vmatprep.subr.mxu0 0.0
    %3599 = vmatpush1.msra.mxu0 0.0
    %3600 = vmatprep.subr.mxu0 0.0
    %3601 = vmatpush1.msra.mxu0 0.0
    %3602 = vmatprep.subr.mxu0 0.0
    %3603 = vmatpush1.msra.mxu0 0.0
    %3604 = vmatprep.subr.mxu0 0.0
    %3605 = vmatpush1.msra.mxu0 0.0
    %3606 = vmatprep.subr.mxu0 0.0
    %3607 = vmatpush1.msra.mxu0 0.0
    %3608 = vmatprep.subr.mxu0 0.0
    %3609 = vmatpush1.msra.mxu0 0.0
    %3610 = vmatprep.subr.mxu0 0.0
    %3611 = vmatpush1.msra.mxu0 0.0
    %3612 = vmatprep.subr.mxu0 0.0
    %3613 = vmatpush1.msra.mxu0 0.0
    %3614 = vmatprep.subr.mxu0 0.0
    %3615 = vmatpush1.msra.mxu0 0.0
    %3616 = vmatprep.subr.mxu0 0.0
    %3617 = vmatpush1.msra.mxu0 0.0
    %3618 = vmatprep.subr.mxu0 0.0
    %3619 = vmatpush1.msra.mxu0 0.0
    %3620 = vmatprep.subr.mxu0 0.0
    %3621 = vmatpush1.msra.mxu0 0.0
    %3622 = vmatprep.subr.mxu0 0.0
    %3623 = vmatpush1.msra.mxu0 0.0
    %3624 = vmatprep.subr.mxu0 0.0
    %3625 = vmatpush1.msra.mxu0 0.0
    %3626 = vmatprep.subr.mxu0 0.0
    %3627 = vmatpush1.msra.mxu0 0.0
    %3628 = vmatprep.subr.mxu0 0.0
    %3629 = vmatpush1.msra.mxu0 0.0
    %3630 = vmatprep.subr.mxu0 0.0
    %3631 = vmatpush1.msra.mxu0 0.0
    %3632 = vmatprep.subr.mxu0 0.0
    %3633 = vmatpush1.msra.mxu0 0.0
    %3634 = vmatprep.subr.mxu0 0.0
    %3635 = vmatpush1.msra.mxu0 0.0
    %3636 = vmatprep.subr.mxu0 0.0
    %3637 = vmatpush1.msra.mxu0 0.0
    %3638 = vmatprep.subr.mxu0 0.0
    %3639 = vmatpush1.msra.mxu0 0.0
    %3640 = vmatprep.subr.mxu0 0.0
    %3641 = vmatpush1.msra.mxu0 0.0
    %3642 = vmatprep.mubr.f32.mxu0 0.0
    %3643 = vmatmul.mubr.f32.gmra.mrb[0].mxu0 %v3506
    %v3644 = vpop.f32.mrb[0].mxu0
    %v3645 = vadd.f32 0.0, %v3644
    %v3646 = vpop.f32.mrb[0].mxu0
    %3647 = vdwg.mxu0
    %3648 = vmatprep.subr.mxu0 0.0
    %3649 = vmatpush1.msra.mxu0 %v3477
    %3650 = vmatprep.subr.mxu0 0.0
    %3651 = vmatpush1.msra.mxu0 0.0
    %3652 = vmatprep.subr.mxu0 0.0
    %3653 = vmatpush1.msra.mxu0 0.0
    %3654 = vmatprep.subr.mxu0 0.0
    %3655 = vmatpush1.msra.mxu0 0.0
    %3656 = vmatprep.subr.mxu0 0.0
    %3657 = vmatpush1.msra.mxu0 0.0
    %3658 = vmatprep.subr.mxu0 0.0
    %3659 = vmatpush1.msra.mxu0 0.0
    %3660 = vmatprep.subr.mxu0 0.0
    %3661 = vmatpush1.msra.mxu0 0.0
    %3662 = vmatprep.subr.mxu0 0.0
    %3663 = vmatpush1.msra.mxu0 0.0
    %3664 = vmatprep.subr.mxu0 0.0
    %3665 = vmatpush1.msra.mxu0 0.0
    %3666 = vmatprep.subr.mxu0 0.0
    %3667 = vmatpush1.msra.mxu0 0.0
    %3668 = vmatprep.subr.mxu0 0.0
    %3669 = vmatpush1.msra.mxu0 0.0
    %3670 = vmatprep.subr.mxu0 0.0
    %3671 = vmatpush1.msra.mxu0 0.0
    %3672 = vmatprep.subr.mxu0 0.0
    %3673 = vmatpush1.msra.mxu0 0.0
    %3674 = vmatprep.subr.mxu0 0.0
    %3675 = vmatpush1.msra.mxu0 0.0
    %3676 = vmatprep.subr.mxu0 0.0
    %3677 = vmatpush1.msra.mxu0 0.0
    %3678 = vmatprep.subr.mxu0 0.0
    %3679 = vmatpush1.msra.mxu0 0.0
    %3680 = vmatprep.subr.mxu0 0.0
    %3681 = vmatpush1.msra.mxu0 0.0
    %3682 = vmatprep.subr.mxu0 0.0
    %3683 = vmatpush1.msra.mxu0 0.0
    %3684 = vmatprep.subr.mxu0 0.0
    %3685 = vmatpush1.msra.mxu0 0.0
    %3686 = vmatprep.subr.mxu0 0.0
    %3687 = vmatpush1.msra.mxu0 0.0
    %3688 = vmatprep.subr.mxu0 0.0
    %3689 = vmatpush1.msra.mxu0 0.0
    %3690 = vmatprep.subr.mxu0 0.0
    %3691 = vmatpush1.msra.mxu0 0.0
    %3692 = vmatprep.subr.mxu0 0.0
    %3693 = vmatpush1.msra.mxu0 0.0
    %3694 = vmatprep.subr.mxu0 0.0
    %3695 = vmatpush1.msra.mxu0 0.0
    %3696 = vmatprep.subr.mxu0 0.0
    %3697 = vmatpush1.msra.mxu0 0.0
    %3698 = vmatprep.subr.mxu0 0.0
    %3699 = vmatpush1.msra.mxu0 0.0
    %3700 = vmatprep.subr.mxu0 0.0
    %3701 = vmatpush1.msra.mxu0 0.0
    %3702 = vmatprep.subr.mxu0 0.0
    %3703 = vmatpush1.msra.mxu0 0.0
    %3704 = vmatprep.subr.mxu0 0.0
    %3705 = vmatpush1.msra.mxu0 0.0
    %3706 = vmatprep.subr.mxu0 0.0
    %3707 = vmatpush1.msra.mxu0 0.0
    %3708 = vmatprep.subr.mxu0 0.0
    %3709 = vmatpush1.msra.mxu0 0.0
    %3710 = vmatprep.subr.mxu0 0.0
    %3711 = vmatpush1.msra.mxu0 0.0
    %3712 = vmatprep.mubr.f32.mxu0 0.0
    %3713 = vmatmul.mubr.f32.gmra.mrb[0].mxu0 %v3506
    %v3714 = vpop.f32.mrb[0].mxu0
    %v3715 = vadd.f32 0.0, %v3714
    %v3716 = vpop.f32.mrb[0].mxu0
    %3717 = vdwg.mxu0
    %3718 = vmatprep.subr.mxu0 0.0
    %3719 = vmatpush1.msra.mxu0 %v3482
    %3720 = vmatprep.subr.mxu0 0.0
    %3721 = vmatpush1.msra.mxu0 0.0
    %3722 = vmatprep.subr.mxu0 0.0
    %3723 = vmatpush1.msra.mxu0 0.0
    %3724 = vmatprep.subr.mxu0 0.0
    %3725 = vmatpush1.msra.mxu0 0.0
    %3726 = vmatprep.subr.mxu0 0.0
    %3727 = vmatpush1.msra.mxu0 0.0
    %3728 = vmatprep.subr.mxu0 0.0
    %3729 = vmatpush1.msra.mxu0 0.0
    %3730 = vmatprep.subr.mxu0 0.0
    %3731 = vmatpush1.msra.mxu0 0.0
    %3732 = vmatprep.subr.mxu0 0.0
    %3733 = vmatpush1.msra.mxu0 0.0
    %3734 = vmatprep.subr.mxu0 0.0
    %3735 = vmatpush1.msra.mxu0 0.0
    %3736 = vmatprep.subr.mxu0 0.0
    %3737 = vmatpush1.msra.mxu0 0.0
    %3738 = vmatprep.subr.mxu0 0.0
    %3739 = vmatpush1.msra.mxu0 0.0
    %3740 = vmatprep.subr.mxu0 0.0
    %3741 = vmatpush1.msra.mxu0 0.0
    %3742 = vmatprep.subr.mxu0 0.0
    %3743 = vmatpush1.msra.mxu0 0.0
    %3744 = vmatprep.subr.mxu0 0.0
    %3745 = vmatpush1.msra.mxu0 0.0
    %3746 = vmatprep.subr.mxu0 0.0
    %3747 = vmatpush1.msra.mxu0 0.0
    %3748 = vmatprep.subr.mxu0 0.0
    %3749 = vmatpush1.msra.mxu0 0.0
    %3750 = vmatprep.subr.mxu0 0.0
    %3751 = vmatpush1.msra.mxu0 0.0
    %3752 = vmatprep.subr.mxu0 0.0
    %3753 = vmatpush1.msra.mxu0 0.0
    %3754 = vmatprep.subr.mxu0 0.0
    %3755 = vmatpush1.msra.mxu0 0.0
    %3756 = vmatprep.subr.mxu0 0.0
    %3757 = vmatpush1.msra.mxu0 0.0
    %3758 = vmatprep.subr.mxu0 0.0
    %3759 = vmatpush1.msra.mxu0 0.0
    %3760 = vmatprep.subr.mxu0 0.0
    %3761 = vmatpush1.msra.mxu0 0.0
    %3762 = vmatprep.subr.mxu0 0.0
    %3763 = vmatpush1.msra.mxu0 0.0
    %3764 = vmatprep.subr.mxu0 0.0
    %3765 = vmatpush1.msra.mxu0 0.0
    %3766 = vmatprep.subr.mxu0 0.0
    %3767 = vmatpush1.msra.mxu0 0.0
    %3768 = vmatprep.subr.mxu0 0.0
    %3769 = vmatpush1.msra.mxu0 0.0
    %3770 = vmatprep.subr.mxu0 0.0
    %3771 = vmatpush1.msra.mxu0 0.0
    %3772 = vmatprep.subr.mxu0 0.0
    %3773 = vmatpush1.msra.mxu0 0.0
    %3774 = vmatprep.subr.mxu0 0.0
    %3775 = vmatpush1.msra.mxu0 0.0
    %3776 = vmatprep.subr.mxu0 0.0
    %3777 = vmatpush1.msra.mxu0 0.0
    %3778 = vmatprep.subr.mxu0 0.0
    %3779 = vmatpush1.msra.mxu0 0.0
    %3780 = vmatprep.subr.mxu0 0.0
    %3781 = vmatpush1.msra.mxu0 0.0
    %3782 = vmatprep.mubr.f32.mxu0 0.0
    %3783 = vmatmul.mubr.f32.gmra.mrb[0].mxu0 %v3506
    %v3784 = vpop.f32.mrb[0].mxu0
    %v3785 = vadd.f32 0.0, %v3784
    %v3786 = vpop.f32.mrb[0].mxu0
    %3787 = vdwg.mxu0
    %3788 = vmatprep.subr.mxu0 0.0
    %3789 = vmatpush1.msra.mxu0 %v3487
    %3790 = vmatprep.subr.mxu0 0.0
    %3791 = vmatpush1.msra.mxu0 0.0
    %3792 = vmatprep.subr.mxu0 0.0
    %3793 = vmatpush1.msra.mxu0 0.0
    %3794 = vmatprep.subr.mxu0 0.0
    %3795 = vmatpush1.msra.mxu0 0.0
    %3796 = vmatprep.subr.mxu0 0.0
    %3797 = vmatpush1.msra.mxu0 0.0
    %3798 = vmatprep.subr.mxu0 0.0
    %3799 = vmatpush1.msra.mxu0 0.0
    %3800 = vmatprep.subr.mxu0 0.0
    %3801 = vmatpush1.msra.mxu0 0.0
    %3802 = vmatprep.subr.mxu0 0.0
    %3803 = vmatpush1.msra.mxu0 0.0
    %3804 = vmatprep.subr.mxu0 0.0
    %3805 = vmatpush1.msra.mxu0 0.0
    %3806 = vmatprep.subr.mxu0 0.0
    %3807 = vmatpush1.msra.mxu0 0.0
    %3808 = vmatprep.subr.mxu0 0.0
    %3809 = vmatpush1.msra.mxu0 0.0
    %3810 = vmatprep.subr.mxu0 0.0
    %3811 = vmatpush1.msra.mxu0 0.0
    %3812 = vmatprep.subr.mxu0 0.0
    %3813 = vmatpush1.msra.mxu0 0.0
    %3814 = vmatprep.subr.mxu0 0.0
    %3815 = vmatpush1.msra.mxu0 0.0
    %3816 = vmatprep.subr.mxu0 0.0
    %3817 = vmatpush1.msra.mxu0 0.0
    %3818 = vmatprep.subr.mxu0 0.0
    %3819 = vmatpush1.msra.mxu0 0.0
    %3820 = vmatprep.subr.mxu0 0.0
    %3821 = vmatpush1.msra.mxu0 0.0
    %3822 = vmatprep.subr.mxu0 0.0
    %3823 = vmatpush1.msra.mxu0 0.0
    %3824 = vmatprep.subr.mxu0 0.0
    %3825 = vmatpush1.msra.mxu0 0.0
    %3826 = vmatprep.subr.mxu0 0.0
    %3827 = vmatpush1.msra.mxu0 0.0
    %3828 = vmatprep.subr.mxu0 0.0
    %3829 = vmatpush1.msra.mxu0 0.0
    %3830 = vmatprep.subr.mxu0 0.0
    %3831 = vmatpush1.msra.mxu0 0.0
    %3832 = vmatprep.subr.mxu0 0.0
    %3833 = vmatpush1.msra.mxu0 0.0
    %3834 = vmatprep.subr.mxu0 0.0
    %3835 = vmatpush1.msra.mxu0 0.0
    %3836 = vmatprep.subr.mxu0 0.0
    %3837 = vmatpush1.msra.mxu0 0.0
    %3838 = vmatprep.subr.mxu0 0.0
    %3839 = vmatpush1.msra.mxu0 0.0
    %3840 = vmatprep.subr.mxu0 0.0
    %3841 = vmatpush1.msra.mxu0 0.0
    %3842 = vmatprep.subr.mxu0 0.0
    %3843 = vmatpush1.msra.mxu0 0.0
    %3844 = vmatprep.subr.mxu0 0.0
    %3845 = vmatpush1.msra.mxu0 0.0
    %3846 = vmatprep.subr.mxu0 0.0
    %3847 = vmatpush1.msra.mxu0 0.0
    %3848 = vmatprep.subr.mxu0 0.0
    %3849 = vmatpush1.msra.mxu0 0.0
    %3850 = vmatprep.subr.mxu0 0.0
    %3851 = vmatpush1.msra.mxu0 0.0
    %3852 = vmatprep.mubr.f32.mxu0 0.0
    %3853 = vmatmul.mubr.f32.gmra.mrb[0].mxu0 %v3506
    %v3854 = vpop.f32.mrb[0].mxu0
    %v3855 = vadd.f32 0.0, %v3854
    %v3856 = vpop.f32.mrb[0].mxu0
    %3857 = vdwg.mxu0
    %3858 = vmatprep.subr.mxu0 0.0
    %3859 = vmatpush1.msra.mxu0 %v3492
    %3860 = vmatprep.subr.mxu0 0.0
    %3861 = vmatpush1.msra.mxu0 0.0
    %3862 = vmatprep.subr.mxu0 0.0
    %3863 = vmatpush1.msra.mxu0 0.0
    %3864 = vmatprep.subr.mxu0 0.0
    %3865 = vmatpush1.msra.mxu0 0.0
    %3866 = vmatprep.subr.mxu0 0.0
    %3867 = vmatpush1.msra.mxu0 0.0
    %3868 = vmatprep.subr.mxu0 0.0
    %3869 = vmatpush1.msra.mxu0 0.0
    %3870 = vmatprep.subr.mxu0 0.0
    %3871 = vmatpush1.msra.mxu0 0.0
    %3872 = vmatprep.subr.mxu0 0.0
    %3873 = vmatpush1.msra.mxu0 0.0
    %3874 = vmatprep.subr.mxu0 0.0
    %3875 = vmatpush1.msra.mxu0 0.0
    %3876 = vmatprep.subr.mxu0 0.0
    %3877 = vmatpush1.msra.mxu0 0.0
    %3878 = vmatprep.subr.mxu0 0.0
    %3879 = vmatpush1.msra.mxu0 0.0
    %3880 = vmatprep.subr.mxu0 0.0
    %3881 = vmatpush1.msra.mxu0 0.0
    %3882 = vmatprep.subr.mxu0 0.0
    %3883 = vmatpush1.msra.mxu0 0.0
    %3884 = vmatprep.subr.mxu0 0.0
    %3885 = vmatpush1.msra.mxu0 0.0
    %3886 = vmatprep.subr.mxu0 0.0
    %3887 = vmatpush1.msra.mxu0 0.0
    %3888 = vmatprep.subr.mxu0 0.0
    %3889 = vmatpush1.msra.mxu0 0.0
    %3890 = vmatprep.subr.mxu0 0.0
    %3891 = vmatpush1.msra.mxu0 0.0
    %3892 = vmatprep.subr.mxu0 0.0
    %3893 = vmatpush1.msra.mxu0 0.0
    %3894 = vmatprep.subr.mxu0 0.0
    %3895 = vmatpush1.msra.mxu0 0.0
    %3896 = vmatprep.subr.mxu0 0.0
    %3897 = vmatpush1.msra.mxu0 0.0
    %3898 = vmatprep.subr.mxu0 0.0
    %3899 = vmatpush1.msra.mxu0 0.0
    %3900 = vmatprep.subr.mxu0 0.0
    %3901 = vmatpush1.msra.mxu0 0.0
    %3902 = vmatprep.subr.mxu0 0.0
    %3903 = vmatpush1.msra.mxu0 0.0
    %3904 = vmatprep.subr.mxu0 0.0
    %3905 = vmatpush1.msra.mxu0 0.0
    %3906 = vmatprep.subr.mxu0 0.0
    %3907 = vmatpush1.msra.mxu0 0.0
    %3908 = vmatprep.subr.mxu0 0.0
    %3909 = vmatpush1.msra.mxu0 0.0
    %3910 = vmatprep.subr.mxu0 0.0
    %3911 = vmatpush1.msra.mxu0 0.0
    %3912 = vmatprep.subr.mxu0 0.0
    %3913 = vmatpush1.msra.mxu0 0.0
    %3914 = vmatprep.subr.mxu0 0.0
    %3915 = vmatpush1.msra.mxu0 0.0
    %3916 = vmatprep.subr.mxu0 0.0
    %3917 = vmatpush1.msra.mxu0 0.0
    %3918 = vmatprep.subr.mxu0 0.0
    %3919 = vmatpush1.msra.mxu0 0.0
    %3920 = vmatprep.subr.mxu0 0.0
    %3921 = vmatpush1.msra.mxu0 0.0
    %3922 = vmatprep.mubr.f32.mxu0 0.0
    %3923 = vmatmul.mubr.f32.gmra.mrb[0].mxu0 %v3506
    %v3924 = vpop.f32.mrb[0].mxu0
    %v3925 = vadd.f32 0.0, %v3924
    %v3926 = vpop.f32.mrb[0].mxu0
    %3927 = vdwg.mxu0
    %3928 = vmatprep.subr.mxu0 0.0
    %3929 = vmatpush1.msra.mxu0 %v3497
    %3930 = vmatprep.subr.mxu0 0.0
    %3931 = vmatpush1.msra.mxu0 0.0
    %3932 = vmatprep.subr.mxu0 0.0
    %3933 = vmatpush1.msra.mxu0 0.0
    %3934 = vmatprep.subr.mxu0 0.0
    %3935 = vmatpush1.msra.mxu0 0.0
    %3936 = vmatprep.subr.mxu0 0.0
    %3937 = vmatpush1.msra.mxu0 0.0
    %3938 = vmatprep.subr.mxu0 0.0
    %3939 = vmatpush1.msra.mxu0 0.0
    %3940 = vmatprep.subr.mxu0 0.0
    %3941 = vmatpush1.msra.mxu0 0.0
    %3942 = vmatprep.subr.mxu0 0.0
    %3943 = vmatpush1.msra.mxu0 0.0
    %3944 = vmatprep.subr.mxu0 0.0
    %3945 = vmatpush1.msra.mxu0 0.0
    %3946 = vmatprep.subr.mxu0 0.0
    %3947 = vmatpush1.msra.mxu0 0.0
    %3948 = vmatprep.subr.mxu0 0.0
    %3949 = vmatpush1.msra.mxu0 0.0
    %3950 = vmatprep.subr.mxu0 0.0
    %3951 = vmatpush1.msra.mxu0 0.0
    %3952 = vmatprep.subr.mxu0 0.0
    %3953 = vmatpush1.msra.mxu0 0.0
    %3954 = vmatprep.subr.mxu0 0.0
    %3955 = vmatpush1.msra.mxu0 0.0
    %3956 = vmatprep.subr.mxu0 0.0
    %3957 = vmatpush1.msra.mxu0 0.0
    %3958 = vmatprep.subr.mxu0 0.0
    %3959 = vmatpush1.msra.mxu0 0.0
    %3960 = vmatprep.subr.mxu0 0.0
    %3961 = vmatpush1.msra.mxu0 0.0
    %3962 = vmatprep.subr.mxu0 0.0
    %3963 = vmatpush1.msra.mxu0 0.0
    %3964 = vmatprep.subr.mxu0 0.0
    %3965 = vmatpush1.msra.mxu0 0.0
    %3966 = vmatprep.subr.mxu0 0.0
    %3967 = vmatpush1.msra.mxu0 0.0
    %3968 = vmatprep.subr.mxu0 0.0
    %3969 = vmatpush1.msra.mxu0 0.0
    %3970 = vmatprep.subr.mxu0 0.0
    %3971 = vmatpush1.msra.mxu0 0.0
    %3972 = vmatprep.subr.mxu0 0.0
    %3973 = vmatpush1.msra.mxu0 0.0
    %3974 = vmatprep.subr.mxu0 0.0
    %3975 = vmatpush1.msra.mxu0 0.0
    %3976 = vmatprep.subr.mxu0 0.0
    %3977 = vmatpush1.msra.mxu0 0.0
    %3978 = vmatprep.subr.mxu0 0.0
    %3979 = vmatpush1.msra.mxu0 0.0
    %3980 = vmatprep.subr.mxu0 0.0
    %3981 = vmatpush1.msra.mxu0 0.0
    %3982 = vmatprep.subr.mxu0 0.0
    %3983 = vmatpush1.msra.mxu0 0.0
    %3984 = vmatprep.subr.mxu0 0.0
    %3985 = vmatpush1.msra.mxu0 0.0
    %3986 = vmatprep.subr.mxu0 0.0
    %3987 = vmatpush1.msra.mxu0 0.0
    %3988 = vmatprep.subr.mxu0 0.0
    %3989 = vmatpush1.msra.mxu0 0.0
    %3990 = vmatprep.subr.mxu0 0.0
    %3991 = vmatpush1.msra.mxu0 0.0
    %3992 = vmatprep.mubr.f32.mxu0 0.0
    %3993 = vmatmul.mubr.f32.gmra.mrb[0].mxu0 %v3506
    %v3994 = vpop.f32.mrb[0].mxu0
    %v3995 = vadd.f32 0.0, %v3994
    %v3996 = vpop.f32.mrb[0].mxu0
    %3997 = vdwg.mxu0
    %3998 = vmatprep.subr.mxu0 0.0
    %3999 = vmatpush1.msra.mxu0 %v3502
    %4000 = vmatprep.subr.mxu0 0.0
    %4001 = vmatpush1.msra.mxu0 0.0
    %4002 = vmatprep.subr.mxu0 0.0
    %4003 = vmatpush1.msra.mxu0 0.0
    %4004 = vmatprep.subr.mxu0 0.0
    %4005 = vmatpush1.msra.mxu0 0.0
    %4006 = vmatprep.subr.mxu0 0.0
    %4007 = vmatpush1.msra.mxu0 0.0
    %4008 = vmatprep.subr.mxu0 0.0
    %4009 = vmatpush1.msra.mxu0 0.0
    %4010 = vmatprep.subr.mxu0 0.0
    %4011 = vmatpush1.msra.mxu0 0.0
    %4012 = vmatprep.subr.mxu0 0.0
    %4013 = vmatpush1.msra.mxu0 0.0
    %4014 = vmatprep.subr.mxu0 0.0
    %4015 = vmatpush1.msra.mxu0 0.0
    %4016 = vmatprep.subr.mxu0 0.0
    %4017 = vmatpush1.msra.mxu0 0.0
    %4018 = vmatprep.subr.mxu0 0.0
    %4019 = vmatpush1.msra.mxu0 0.0
    %4020 = vmatprep.subr.mxu0 0.0
    %4021 = vmatpush1.msra.mxu0 0.0
    %4022 = vmatprep.subr.mxu0 0.0
    %4023 = vmatpush1.msra.mxu0 0.0
    %4024 = vmatprep.subr.mxu0 0.0
    %4025 = vmatpush1.msra.mxu0 0.0
    %4026 = vmatprep.subr.mxu0 0.0
    %4027 = vmatpush1.msra.mxu0 0.0
    %4028 = vmatprep.subr.mxu0 0.0
    %4029 = vmatpush1.msra.mxu0 0.0
    %4030 = vmatprep.subr.mxu0 0.0
    %4031 = vmatpush1.msra.mxu0 0.0
    %4032 = vmatprep.subr.mxu0 0.0
    %4033 = vmatpush1.msra.mxu0 0.0
    %4034 = vmatprep.subr.mxu0 0.0
    %4035 = vmatpush1.msra.mxu0 0.0
    %4036 = vmatprep.subr.mxu0 0.0
    %4037 = vmatpush1.msra.mxu0 0.0
    %4038 = vmatprep.subr.mxu0 0.0
    %4039 = vmatpush1.msra.mxu0 0.0
    %4040 = vmatprep.subr.mxu0 0.0
    %4041 = vmatpush1.msra.mxu0 0.0
    %4042 = vmatprep.subr.mxu0 0.0
    %4043 = vmatpush1.msra.mxu0 0.0
    %4044 = vmatprep.subr.mxu0 0.0
    %4045 = vmatpush1.msra.mxu0 0.0
    %4046 = vmatprep.subr.mxu0 0.0
    %4047 = vmatpush1.msra.mxu0 0.0
    %4048 = vmatprep.subr.mxu0 0.0
    %4049 = vmatpush1.msra.mxu0 0.0
    %4050 = vmatprep.subr.mxu0 0.0
    %4051 = vmatpush1.msra.mxu0 0.0
    %4052 = vmatprep.subr.mxu0 0.0
    %4053 = vmatpush1.msra.mxu0 0.0
    %4054 = vmatprep.subr.mxu0 0.0
    %4055 = vmatpush1.msra.mxu0 0.0
    %4056 = vmatprep.subr.mxu0 0.0
    %4057 = vmatpush1.msra.mxu0 0.0
    %4058 = vmatprep.subr.mxu0 0.0
    %4059 = vmatpush1.msra.mxu0 0.0
    %4060 = vmatprep.subr.mxu0 0.0
    %4061 = vmatpush1.msra.mxu0 0.0
    %4062 = vmatprep.mubr.f32.mxu0 0.0
    %4063 = vmatmul.mubr.f32.gmra.mrb[0].mxu0 %v3506
    %v4064 = vpop.f32.mrb[0].mxu0
    %v4065 = vadd.f32 0.0, %v4064
    %v4066 = vpop.f32.mrb[0].mxu0
    %4067 = vdwg.mxu0
    %vm4068 = vcmask 31744
    %v4070 = vsel %vm4068, %v3374, 0
    %vm4072 = vcmask 1043456
    %v4074 = vsel %vm4072, %v3575, 0
    %4076 = vmatprep.subr.mxu0 0.0
    %4077 = vmatpush1.msra.mxu0 %v4074
    %4078 = vmatprep.subr.mxu0 0.0
    %4079 = vmatpush1.msra.mxu0 0.0
    %4080 = vmatprep.subr.mxu0 0.0
    %4081 = vmatpush1.msra.mxu0 0.0
    %4082 = vmatprep.subr.mxu0 0.0
    %4083 = vmatpush1.msra.mxu0 0.0
    %4084 = vmatprep.subr.mxu0 0.0
    %4085 = vmatpush1.msra.mxu0 0.0
    %4086 = vmatprep.subr.mxu0 0.0
    %4087 = vmatpush1.msra.mxu0 0.0
    %4088 = vmatprep.subr.mxu0 0.0
    %4089 = vmatpush1.msra.mxu0 0.0
    %4090 = vmatprep.subr.mxu0 0.0
    %4091 = vmatpush1.msra.mxu0 0.0
    %4092 = vmatprep.subr.mxu0 0.0
    %4093 = vmatpush1.msra.mxu0 0.0
    %4094 = vmatprep.subr.mxu0 0.0
    %4095 = vmatpush1.msra.mxu0 0.0
    %4096 = vmatprep.subr.mxu0 0.0
    %4097 = vmatpush1.msra.mxu0 0.0
    %4098 = vmatprep.subr.mxu0 0.0
    %4099 = vmatpush1.msra.mxu0 0.0
    %4100 = vmatprep.subr.mxu0 0.0
    %4101 = vmatpush1.msra.mxu0 0.0
    %4102 = vmatprep.subr.mxu0 0.0
    %4103 = vmatpush1.msra.mxu0 0.0
    %4104 = vmatprep.subr.mxu0 0.0
    %4105 = vmatpush1.msra.mxu0 0.0
    %4106 = vmatprep.subr.mxu0 0.0
    %4107 = vmatpush1.msra.mxu0 0.0
    %4108 = vmatprep.subr.mxu0 0.0
    %4109 = vmatpush1.msra.mxu0 0.0
    %4110 = vmatprep.subr.mxu0 0.0
    %4111 = vmatpush1.msra.mxu0 0.0
    %4112 = vmatprep.subr.mxu0 0.0
    %4113 = vmatpush1.msra.mxu0 0.0
    %4114 = vmatprep.subr.mxu0 0.0
    %4115 = vmatpush1.msra.mxu0 0.0
    %4116 = vmatprep.subr.mxu0 0.0
    %4117 = vmatpush1.msra.mxu0 0.0
    %4118 = vmatprep.subr.mxu0 0.0
    %4119 = vmatpush1.msra.mxu0 0.0
    %4120 = vmatprep.subr.mxu0 0.0
    %4121 = vmatpush1.msra.mxu0 0.0
    %4122 = vmatprep.subr.mxu0 0.0
    %4123 = vmatpush1.msra.mxu0 0.0
    %4124 = vmatprep.subr.mxu0 0.0
    %4125 = vmatpush1.msra.mxu0 0.0
    %4126 = vmatprep.subr.mxu0 0.0
    %4127 = vmatpush1.msra.mxu0 0.0
    %4128 = vmatprep.subr.mxu0 0.0
    %4129 = vmatpush1.msra.mxu0 0.0
    %4130 = vmatprep.subr.mxu0 0.0
    %4131 = vmatpush1.msra.mxu0 0.0
    %4132 = vmatprep.subr.mxu0 0.0
    %4133 = vmatpush1.msra.mxu0 0.0
    %4134 = vmatprep.subr.mxu0 0.0
    %4135 = vmatpush1.msra.mxu0 0.0
    %4136 = vmatprep.subr.mxu0 0.0
    %4137 = vmatpush1.msra.mxu0 0.0
    %4138 = vmatprep.subr.mxu0 0.0
    %4139 = vmatpush1.msra.mxu0 0.0
    %4140 = vmatprep.mubr.f32.mxu0 0.0
    %4141 = vmatmul.mubr.f32.gmra.mrb[0].mxu0 %v4070
    %v4142 = vpop.f32.mrb[0].mxu0
    %v4143 = vadd.f32 0.0, %v4142
    %v4144 = vpop.f32.mrb[0].mxu0
    %4145 = vdwg.mxu0
    %v4147 = vsel %vm4072, %v3645, 0
    %4149 = vmatprep.subr.mxu0 0.0
    %4150 = vmatpush1.msra.mxu0 %v4147
    %4151 = vmatprep.subr.mxu0 0.0
    %4152 = vmatpush1.msra.mxu0 0.0
    %4153 = vmatprep.subr.mxu0 0.0
    %4154 = vmatpush1.msra.mxu0 0.0
    %4155 = vmatprep.subr.mxu0 0.0
    %4156 = vmatpush1.msra.mxu0 0.0
    %4157 = vmatprep.subr.mxu0 0.0
    %4158 = vmatpush1.msra.mxu0 0.0
    %4159 = vmatprep.subr.mxu0 0.0
    %4160 = vmatpush1.msra.mxu0 0.0
    %4161 = vmatprep.subr.mxu0 0.0
    %4162 = vmatpush1.msra.mxu0 0.0
    %4163 = vmatprep.subr.mxu0 0.0
    %4164 = vmatpush1.msra.mxu0 0.0
    %4165 = vmatprep.subr.mxu0 0.0
    %4166 = vmatpush1.msra.mxu0 0.0
    %4167 = vmatprep.subr.mxu0 0.0
    %4168 = vmatpush1.msra.mxu0 0.0
    %4169 = vmatprep.subr.mxu0 0.0
    %4170 = vmatpush1.msra.mxu0 0.0
    %4171 = vmatprep.subr.mxu0 0.0
    %4172 = vmatpush1.msra.mxu0 0.0
    %4173 = vmatprep.subr.mxu0 0.0
    %4174 = vmatpush1.msra.mxu0 0.0
    %4175 = vmatprep.subr.mxu0 0.0
    %4176 = vmatpush1.msra.mxu0 0.0
    %4177 = vmatprep.subr.mxu0 0.0
    %4178 = vmatpush1.msra.mxu0 0.0
    %4179 = vmatprep.subr.mxu0 0.0
    %4180 = vmatpush1.msra.mxu0 0.0
    %4181 = vmatprep.subr.mxu0 0.0
    %4182 = vmatpush1.msra.mxu0 0.0
    %4183 = vmatprep.subr.mxu0 0.0
    %4184 = vmatpush1.msra.mxu0 0.0
    %4185 = vmatprep.subr.mxu0 0.0
    %4186 = vmatpush1.msra.mxu0 0.0
    %4187 = vmatprep.subr.mxu0 0.0
    %4188 = vmatpush1.msra.mxu0 0.0
    %4189 = vmatprep.subr.mxu0 0.0
    %4190 = vmatpush1.msra.mxu0 0.0
    %4191 = vmatprep.subr.mxu0 0.0
    %4192 = vmatpush1.msra.mxu0 0.0
    %4193 = vmatprep.subr.mxu0 0.0
    %4194 = vmatpush1.msra.mxu0 0.0
    %4195 = vmatprep.subr.mxu0 0.0
    %4196 = vmatpush1.msra.mxu0 0.0
    %4197 = vmatprep.subr.mxu0 0.0
    %4198 = vmatpush1.msra.mxu0 0.0
    %4199 = vmatprep.subr.mxu0 0.0
    %4200 = vmatpush1.msra.mxu0 0.0
    %4201 = vmatprep.subr.mxu0 0.0
    %4202 = vmatpush1.msra.mxu0 0.0
    %4203 = vmatprep.subr.mxu0 0.0
    %4204 = vmatpush1.msra.mxu0 0.0
    %4205 = vmatprep.subr.mxu0 0.0
    %4206 = vmatpush1.msra.mxu0 0.0
    %4207 = vmatprep.subr.mxu0 0.0
    %4208 = vmatpush1.msra.mxu0 0.0
    %4209 = vmatprep.subr.mxu0 0.0
    %4210 = vmatpush1.msra.mxu0 0.0
    %4211 = vmatprep.subr.mxu0 0.0
    %4212 = vmatpush1.msra.mxu0 0.0
    %4213 = vmatprep.mubr.f32.mxu0 0.0
    %4214 = vmatmul.mubr.f32.gmra.mrb[0].mxu0 %v4070
    %v4215 = vpop.f32.mrb[0].mxu0
    %v4216 = vadd.f32 0.0, %v4215
    %v4217 = vpop.f32.mrb[0].mxu0
    %4218 = vdwg.mxu0
    %v4220 = vsel %vm4072, %v3715, 0
    %4222 = vmatprep.subr.mxu0 0.0
    %4223 = vmatpush1.msra.mxu0 %v4220
    %4224 = vmatprep.subr.mxu0 0.0
    %4225 = vmatpush1.msra.mxu0 0.0
    %4226 = vmatprep.subr.mxu0 0.0
    %4227 = vmatpush1.msra.mxu0 0.0
    %4228 = vmatprep.subr.mxu0 0.0
    %4229 = vmatpush1.msra.mxu0 0.0
    %4230 = vmatprep.subr.mxu0 0.0
    %4231 = vmatpush1.msra.mxu0 0.0
    %4232 = vmatprep.subr.mxu0 0.0
    %4233 = vmatpush1.msra.mxu0 0.0
    %4234 = vmatprep.subr.mxu0 0.0
    %4235 = vmatpush1.msra.mxu0 0.0
    %4236 = vmatprep.subr.mxu0 0.0
    %4237 = vmatpush1.msra.mxu0 0.0
    %4238 = vmatprep.subr.mxu0 0.0
    %4239 = vmatpush1.msra.mxu0 0.0
    %4240 = vmatprep.subr.mxu0 0.0
    %4241 = vmatpush1.msra.mxu0 0.0
    %4242 = vmatprep.subr.mxu0 0.0
    %4243 = vmatpush1.msra.mxu0 0.0
    %4244 = vmatprep.subr.mxu0 0.0
    %4245 = vmatpush1.msra.mxu0 0.0
    %4246 = vmatprep.subr.mxu0 0.0
    %4247 = vmatpush1.msra.mxu0 0.0
    %4248 = vmatprep.subr.mxu0 0.0
    %4249 = vmatpush1.msra.mxu0 0.0
    %4250 = vmatprep.subr.mxu0 0.0
    %4251 = vmatpush1.msra.mxu0 0.0
    %4252 = vmatprep.subr.mxu0 0.0
    %4253 = vmatpush1.msra.mxu0 0.0
    %4254 = vmatprep.subr.mxu0 0.0
    %4255 = vmatpush1.msra.mxu0 0.0
    %4256 = vmatprep.subr.mxu0 0.0
    %4257 = vmatpush1.msra.mxu0 0.0
    %4258 = vmatprep.subr.mxu0 0.0
    %4259 = vmatpush1.msra.mxu0 0.0
    %4260 = vmatprep.subr.mxu0 0.0
    %4261 = vmatpush1.msra.mxu0 0.0
    %4262 = vmatprep.subr.mxu0 0.0
    %4263 = vmatpush1.msra.mxu0 0.0
    %4264 = vmatprep.subr.mxu0 0.0
    %4265 = vmatpush1.msra.mxu0 0.0
    %4266 = vmatprep.subr.mxu0 0.0
    %4267 = vmatpush1.msra.mxu0 0.0
    %4268 = vmatprep.subr.mxu0 0.0
    %4269 = vmatpush1.msra.mxu0 0.0
    %4270 = vmatprep.subr.mxu0 0.0
    %4271 = vmatpush1.msra.mxu0 0.0
    %4272 = vmatprep.subr.mxu0 0.0
    %4273 = vmatpush1.msra.mxu0 0.0
    %4274 = vmatprep.subr.mxu0 0.0
    %4275 = vmatpush1.msra.mxu0 0.0
    %4276 = vmatprep.subr.mxu0 0.0
    %4277 = vmatpush1.msra.mxu0 0.0
    %4278 = vmatprep.subr.mxu0 0.0
    %4279 = vmatpush1.msra.mxu0 0.0
    %4280 = vmatprep.subr.mxu0 0.0
    %4281 = vmatpush1.msra.mxu0 0.0
    %4282 = vmatprep.subr.mxu0 0.0
    %4283 = vmatpush1.msra.mxu0 0.0
    %4284 = vmatprep.subr.mxu0 0.0
    %4285 = vmatpush1.msra.mxu0 0.0
    %4286 = vmatprep.mubr.f32.mxu0 0.0
    %4287 = vmatmul.mubr.f32.gmra.mrb[0].mxu0 %v4070
    %v4288 = vpop.f32.mrb[0].mxu0
    %v4289 = vadd.f32 0.0, %v4288
    %v4290 = vpop.f32.mrb[0].mxu0
    %4291 = vdwg.mxu0
    %v4293 = vsel %vm4072, %v3785, 0
    %4295 = vmatprep.subr.mxu0 0.0
    %4296 = vmatpush1.msra.mxu0 %v4293
    %4297 = vmatprep.subr.mxu0 0.0
    %4298 = vmatpush1.msra.mxu0 0.0
    %4299 = vmatprep.subr.mxu0 0.0
    %4300 = vmatpush1.msra.mxu0 0.0
    %4301 = vmatprep.subr.mxu0 0.0
    %4302 = vmatpush1.msra.mxu0 0.0
    %4303 = vmatprep.subr.mxu0 0.0
    %4304 = vmatpush1.msra.mxu0 0.0
    %4305 = vmatprep.subr.mxu0 0.0
    %4306 = vmatpush1.msra.mxu0 0.0
    %4307 = vmatprep.subr.mxu0 0.0
    %4308 = vmatpush1.msra.mxu0 0.0
    %4309 = vmatprep.subr.mxu0 0.0
    %4310 = vmatpush1.msra.mxu0 0.0
    %4311 = vmatprep.subr.mxu0 0.0
    %4312 = vmatpush1.msra.mxu0 0.0
    %4313 = vmatprep.subr.mxu0 0.0
    %4314 = vmatpush1.msra.mxu0 0.0
    %4315 = vmatprep.subr.mxu0 0.0
    %4316 = vmatpush1.msra.mxu0 0.0
    %4317 = vmatprep.subr.mxu0 0.0
    %4318 = vmatpush1.msra.mxu0 0.0
    %4319 = vmatprep.subr.mxu0 0.0
    %4320 = vmatpush1.msra.mxu0 0.0
    %4321 = vmatprep.subr.mxu0 0.0
    %4322 = vmatpush1.msra.mxu0 0.0
    %4323 = vmatprep.subr.mxu0 0.0
    %4324 = vmatpush1.msra.mxu0 0.0
    %4325 = vmatprep.subr.mxu0 0.0
    %4326 = vmatpush1.msra.mxu0 0.0
    %4327 = vmatprep.subr.mxu0 0.0
    %4328 = vmatpush1.msra.mxu0 0.0
    %4329 = vmatprep.subr.mxu0 0.0
    %4330 = vmatpush1.msra.mxu0 0.0
    %4331 = vmatprep.subr.mxu0 0.0
    %4332 = vmatpush1.msra.mxu0 0.0
    %4333 = vmatprep.subr.mxu0 0.0
    %4334 = vmatpush1.msra.mxu0 0.0
    %4335 = vmatprep.subr.mxu0 0.0
    %4336 = vmatpush1.msra.mxu0 0.0
    %4337 = vmatprep.subr.mxu0 0.0
    %4338 = vmatpush1.msra.mxu0 0.0
    %4339 = vmatprep.subr.mxu0 0.0
    %4340 = vmatpush1.msra.mxu0 0.0
    %4341 = vmatprep.subr.mxu0 0.0
    %4342 = vmatpush1.msra.mxu0 0.0
    %4343 = vmatprep.subr.mxu0 0.0
    %4344 = vmatpush1.msra.mxu0 0.0
    %4345 = vmatprep.subr.mxu0 0.0
    %4346 = vmatpush1.msra.mxu0 0.0
    %4347 = vmatprep.subr.mxu0 0.0
    %4348 = vmatpush1.msra.mxu0 0.0
    %4349 = vmatprep.subr.mxu0 0.0
    %4350 = vmatpush1.msra.mxu0 0.0
    %4351 = vmatprep.subr.mxu0 0.0
    %4352 = vmatpush1.msra.mxu0 0.0
    %4353 = vmatprep.subr.mxu0 0.0
    %4354 = vmatpush1.msra.mxu0 0.0
    %4355 = vmatprep.subr.mxu0 0.0
    %4356 = vmatpush1.msra.mxu0 0.0
    %4357 = vmatprep.subr.mxu0 0.0
    %4358 = vmatpush1.msra.mxu0 0.0
    %4359 = vmatprep.mubr.f32.mxu0 0.0
    %4360 = vmatmul.mubr.f32.gmra.mrb[0].mxu0 %v4070
    %v4361 = vpop.f32.mrb[0].mxu0
    %v4362 = vadd.f32 0.0, %v4361
    %v4363 = vpop.f32.mrb[0].mxu0
    %4364 = vdwg.mxu0
    %v4366 = vsel %vm4072, %v3855, 0
    %4368 = vmatprep.subr.mxu0 0.0
    %4369 = vmatpush1.msra.mxu0 %v4366
    %4370 = vmatprep.subr.mxu0 0.0
    %4371 = vmatpush1.msra.mxu0 0.0
    %4372 = vmatprep.subr.mxu0 0.0
    %4373 = vmatpush1.msra.mxu0 0.0
    %4374 = vmatprep.subr.mxu0 0.0
    %4375 = vmatpush1.msra.mxu0 0.0
    %4376 = vmatprep.subr.mxu0 0.0
    %4377 = vmatpush1.msra.mxu0 0.0
    %4378 = vmatprep.subr.mxu0 0.0
    %4379 = vmatpush1.msra.mxu0 0.0
    %4380 = vmatprep.subr.mxu0 0.0
    %4381 = vmatpush1.msra.mxu0 0.0
    %4382 = vmatprep.subr.mxu0 0.0
    %4383 = vmatpush1.msra.mxu0 0.0
    %4384 = vmatprep.subr.mxu0 0.0
    %4385 = vmatpush1.msra.mxu0 0.0
    %4386 = vmatprep.subr.mxu0 0.0
    %4387 = vmatpush1.msra.mxu0 0.0
    %4388 = vmatprep.subr.mxu0 0.0
    %4389 = vmatpush1.msra.mxu0 0.0
    %4390 = vmatprep.subr.mxu0 0.0
    %4391 = vmatpush1.msra.mxu0 0.0
    %4392 = vmatprep.subr.mxu0 0.0
    %4393 = vmatpush1.msra.mxu0 0.0
    %4394 = vmatprep.subr.mxu0 0.0
    %4395 = vmatpush1.msra.mxu0 0.0
    %4396 = vmatprep.subr.mxu0 0.0
    %4397 = vmatpush1.msra.mxu0 0.0
    %4398 = vmatprep.subr.mxu0 0.0
    %4399 = vmatpush1.msra.mxu0 0.0
    %4400 = vmatprep.subr.mxu0 0.0
    %4401 = vmatpush1.msra.mxu0 0.0
    %4402 = vmatprep.subr.mxu0 0.0
    %4403 = vmatpush1.msra.mxu0 0.0
    %4404 = vmatprep.subr.mxu0 0.0
    %4405 = vmatpush1.msra.mxu0 0.0
    %4406 = vmatprep.subr.mxu0 0.0
    %4407 = vmatpush1.msra.mxu0 0.0
    %4408 = vmatprep.subr.mxu0 0.0
    %4409 = vmatpush1.msra.mxu0 0.0
    %4410 = vmatprep.subr.mxu0 0.0
    %4411 = vmatpush1.msra.mxu0 0.0
    %4412 = vmatprep.subr.mxu0 0.0
    %4413 = vmatpush1.msra.mxu0 0.0
    %4414 = vmatprep.subr.mxu0 0.0
    %4415 = vmatpush1.msra.mxu0 0.0
    %4416 = vmatprep.subr.mxu0 0.0
    %4417 = vmatpush1.msra.mxu0 0.0
    %4418 = vmatprep.subr.mxu0 0.0
    %4419 = vmatpush1.msra.mxu0 0.0
    %4420 = vmatprep.subr.mxu0 0.0
    %4421 = vmatpush1.msra.mxu0 0.0
    %4422 = vmatprep.subr.mxu0 0.0
    %4423 = vmatpush1.msra.mxu0 0.0
    %4424 = vmatprep.subr.mxu0 0.0
    %4425 = vmatpush1.msra.mxu0 0.0
    %4426 = vmatprep.subr.mxu0 0.0
    %4427 = vmatpush1.msra.mxu0 0.0
    %4428 = vmatprep.subr.mxu0 0.0
    %4429 = vmatpush1.msra.mxu0 0.0
    %4430 = vmatprep.subr.mxu0 0.0
    %4431 = vmatpush1.msra.mxu0 0.0
    %4432 = vmatprep.mubr.f32.mxu0 0.0
    %4433 = vmatmul.mubr.f32.gmra.mrb[0].mxu0 %v4070
    %v4434 = vpop.f32.mrb[0].mxu0
    %v4435 = vadd.f32 0.0, %v4434
    %v4436 = vpop.f32.mrb[0].mxu0
    %4437 = vdwg.mxu0
    %v4439 = vsel %vm4072, %v3925, 0
    %4441 = vmatprep.subr.mxu0 0.0
    %4442 = vmatpush1.msra.mxu0 %v4439
    %4443 = vmatprep.subr.mxu0 0.0
    %4444 = vmatpush1.msra.mxu0 0.0
    %4445 = vmatprep.subr.mxu0 0.0
    %4446 = vmatpush1.msra.mxu0 0.0
    %4447 = vmatprep.subr.mxu0 0.0
    %4448 = vmatpush1.msra.mxu0 0.0
    %4449 = vmatprep.subr.mxu0 0.0
    %4450 = vmatpush1.msra.mxu0 0.0
    %4451 = vmatprep.subr.mxu0 0.0
    %4452 = vmatpush1.msra.mxu0 0.0
    %4453 = vmatprep.subr.mxu0 0.0
    %4454 = vmatpush1.msra.mxu0 0.0
    %4455 = vmatprep.subr.mxu0 0.0
    %4456 = vmatpush1.msra.mxu0 0.0
    %4457 = vmatprep.subr.mxu0 0.0
    %4458 = vmatpush1.msra.mxu0 0.0
    %4459 = vmatprep.subr.mxu0 0.0
    %4460 = vmatpush1.msra.mxu0 0.0
    %4461 = vmatprep.subr.mxu0 0.0
    %4462 = vmatpush1.msra.mxu0 0.0
    %4463 = vmatprep.subr.mxu0 0.0
    %4464 = vmatpush1.msra.mxu0 0.0
    %4465 = vmatprep.subr.mxu0 0.0
    %4466 = vmatpush1.msra.mxu0 0.0
    %4467 = vmatprep.subr.mxu0 0.0
    %4468 = vmatpush1.msra.mxu0 0.0
    %4469 = vmatprep.subr.mxu0 0.0
    %4470 = vmatpush1.msra.mxu0 0.0
    %4471 = vmatprep.subr.mxu0 0.0
    %4472 = vmatpush1.msra.mxu0 0.0
    %4473 = vmatprep.subr.mxu0 0.0
    %4474 = vmatpush1.msra.mxu0 0.0
    %4475 = vmatprep.subr.mxu0 0.0
    %4476 = vmatpush1.msra.mxu0 0.0
    %4477 = vmatprep.subr.mxu0 0.0
    %4478 = vmatpush1.msra.mxu0 0.0
    %4479 = vmatprep.subr.mxu0 0.0
    %4480 = vmatpush1.msra.mxu0 0.0
    %4481 = vmatprep.subr.mxu0 0.0
    %4482 = vmatpush1.msra.mxu0 0.0
    %4483 = vmatprep.subr.mxu0 0.0
    %4484 = vmatpush1.msra.mxu0 0.0
    %4485 = vmatprep.subr.mxu0 0.0
    %4486 = vmatpush1.msra.mxu0 0.0
    %4487 = vmatprep.subr.mxu0 0.0
    %4488 = vmatpush1.msra.mxu0 0.0
    %4489 = vmatprep.subr.mxu0 0.0
    %4490 = vmatpush1.msra.mxu0 0.0
    %4491 = vmatprep.subr.mxu0 0.0
    %4492 = vmatpush1.msra.mxu0 0.0
    %4493 = vmatprep.subr.mxu0 0.0
    %4494 = vmatpush1.msra.mxu0 0.0
    %4495 = vmatprep.subr.mxu0 0.0
    %4496 = vmatpush1.msra.mxu0 0.0
    %4497 = vmatprep.subr.mxu0 0.0
    %4498 = vmatpush1.msra.mxu0 0.0
    %4499 = vmatprep.subr.mxu0 0.0
    %4500 = vmatpush1.msra.mxu0 0.0
    %4501 = vmatprep.subr.mxu0 0.0
    %4502 = vmatpush1.msra.mxu0 0.0
    %4503 = vmatprep.subr.mxu0 0.0
    %4504 = vmatpush1.msra.mxu0 0.0
    %4505 = vmatprep.mubr.f32.mxu0 0.0
    %4506 = vmatmul.mubr.f32.gmra.mrb[0].mxu0 %v4070
    %v4507 = vpop.f32.mrb[0].mxu0
    %v4508 = vadd.f32 0.0, %v4507
    %v4509 = vpop.f32.mrb[0].mxu0
    %4510 = vdwg.mxu0
    %v4512 = vsel %vm4072, %v3995, 0
    %4514 = vmatprep.subr.mxu0 0.0
    %4515 = vmatpush1.msra.mxu0 %v4512
    %4516 = vmatprep.subr.mxu0 0.0
    %4517 = vmatpush1.msra.mxu0 0.0
    %4518 = vmatprep.subr.mxu0 0.0
    %4519 = vmatpush1.msra.mxu0 0.0
    %4520 = vmatprep.subr.mxu0 0.0
    %4521 = vmatpush1.msra.mxu0 0.0
    %4522 = vmatprep.subr.mxu0 0.0
    %4523 = vmatpush1.msra.mxu0 0.0
    %4524 = vmatprep.subr.mxu0 0.0
    %4525 = vmatpush1.msra.mxu0 0.0
    %4526 = vmatprep.subr.mxu0 0.0
    %4527 = vmatpush1.msra.mxu0 0.0
    %4528 = vmatprep.subr.mxu0 0.0
    %4529 = vmatpush1.msra.mxu0 0.0
    %4530 = vmatprep.subr.mxu0 0.0
    %4531 = vmatpush1.msra.mxu0 0.0
    %4532 = vmatprep.subr.mxu0 0.0
    %4533 = vmatpush1.msra.mxu0 0.0
    %4534 = vmatprep.subr.mxu0 0.0
    %4535 = vmatpush1.msra.mxu0 0.0
    %4536 = vmatprep.subr.mxu0 0.0
    %4537 = vmatpush1.msra.mxu0 0.0
    %4538 = vmatprep.subr.mxu0 0.0
    %4539 = vmatpush1.msra.mxu0 0.0
    %4540 = vmatprep.subr.mxu0 0.0
    %4541 = vmatpush1.msra.mxu0 0.0
    %4542 = vmatprep.subr.mxu0 0.0
    %4543 = vmatpush1.msra.mxu0 0.0
    %4544 = vmatprep.subr.mxu0 0.0
    %4545 = vmatpush1.msra.mxu0 0.0
    %4546 = vmatprep.subr.mxu0 0.0
    %4547 = vmatpush1.msra.mxu0 0.0
    %4548 = vmatprep.subr.mxu0 0.0
    %4549 = vmatpush1.msra.mxu0 0.0
    %4550 = vmatprep.subr.mxu0 0.0
    %4551 = vmatpush1.msra.mxu0 0.0
    %4552 = vmatprep.subr.mxu0 0.0
    %4553 = vmatpush1.msra.mxu0 0.0
    %4554 = vmatprep.subr.mxu0 0.0
    %4555 = vmatpush1.msra.mxu0 0.0
    %4556 = vmatprep.subr.mxu0 0.0
    %4557 = vmatpush1.msra.mxu0 0.0
    %4558 = vmatprep.subr.mxu0 0.0
    %4559 = vmatpush1.msra.mxu0 0.0
    %4560 = vmatprep.subr.mxu0 0.0
    %4561 = vmatpush1.msra.mxu0 0.0
    %4562 = vmatprep.subr.mxu0 0.0
    %4563 = vmatpush1.msra.mxu0 0.0
    %4564 = vmatprep.subr.mxu0 0.0
    %4565 = vmatpush1.msra.mxu0 0.0
    %4566 = vmatprep.subr.mxu0 0.0
    %4567 = vmatpush1.msra.mxu0 0.0
    %4568 = vmatprep.subr.mxu0 0.0
    %4569 = vmatpush1.msra.mxu0 0.0
    %4570 = vmatprep.subr.mxu0 0.0
    %4571 = vmatpush1.msra.mxu0 0.0
    %4572 = vmatprep.subr.mxu0 0.0
    %4573 = vmatpush1.msra.mxu0 0.0
    %4574 = vmatprep.subr.mxu0 0.0
    %4575 = vmatpush1.msra.mxu0 0.0
    %4576 = vmatprep.subr.mxu0 0.0
    %4577 = vmatpush1.msra.mxu0 0.0
    %4578 = vmatprep.mubr.f32.mxu0 0.0
    %4579 = vmatmul.mubr.f32.gmra.mrb[0].mxu0 %v4070
    %v4580 = vpop.f32.mrb[0].mxu0
    %v4581 = vadd.f32 0.0, %v4580
    %v4582 = vpop.f32.mrb[0].mxu0
    %4583 = vdwg.mxu0
    %v4585 = vsel %vm4072, %v4065, 0
    %4587 = vmatprep.subr.mxu0 0.0
    %4588 = vmatpush1.msra.mxu0 %v4585
    %4589 = vmatprep.subr.mxu0 0.0
    %4590 = vmatpush1.msra.mxu0 0.0
    %4591 = vmatprep.subr.mxu0 0.0
    %4592 = vmatpush1.msra.mxu0 0.0
    %4593 = vmatprep.subr.mxu0 0.0
    %4594 = vmatpush1.msra.mxu0 0.0
    %4595 = vmatprep.subr.mxu0 0.0
    %4596 = vmatpush1.msra.mxu0 0.0
    %4597 = vmatprep.subr.mxu0 0.0
    %4598 = vmatpush1.msra.mxu0 0.0
    %4599 = vmatprep.subr.mxu0 0.0
    %4600 = vmatpush1.msra.mxu0 0.0
    %4601 = vmatprep.subr.mxu0 0.0
    %4602 = vmatpush1.msra.mxu0 0.0
    %4603 = vmatprep.subr.mxu0 0.0
    %4604 = vmatpush1.msra.mxu0 0.0
    %4605 = vmatprep.subr.mxu0 0.0
    %4606 = vmatpush1.msra.mxu0 0.0
    %4607 = vmatprep.subr.mxu0 0.0
    %4608 = vmatpush1.msra.mxu0 0.0
    %4609 = vmatprep.subr.mxu0 0.0
    %4610 = vmatpush1.msra.mxu0 0.0
    %4611 = vmatprep.subr.mxu0 0.0
    %4612 = vmatpush1.msra.mxu0 0.0
    %4613 = vmatprep.subr.mxu0 0.0
    %4614 = vmatpush1.msra.mxu0 0.0
    %4615 = vmatprep.subr.mxu0 0.0
    %4616 = vmatpush1.msra.mxu0 0.0
    %4617 = vmatprep.subr.mxu0 0.0
    %4618 = vmatpush1.msra.mxu0 0.0
    %4619 = vmatprep.subr.mxu0 0.0
    %4620 = vmatpush1.msra.mxu0 0.0
    %4621 = vmatprep.subr.mxu0 0.0
    %4622 = vmatpush1.msra.mxu0 0.0
    %4623 = vmatprep.subr.mxu0 0.0
    %4624 = vmatpush1.msra.mxu0 0.0
    %4625 = vmatprep.subr.mxu0 0.0
    %4626 = vmatpush1.msra.mxu0 0.0
    %4627 = vmatprep.subr.mxu0 0.0
    %4628 = vmatpush1.msra.mxu0 0.0
    %4629 = vmatprep.subr.mxu0 0.0
    %4630 = vmatpush1.msra.mxu0 0.0
    %4631 = vmatprep.subr.mxu0 0.0
    %4632 = vmatpush1.msra.mxu0 0.0
    %4633 = vmatprep.subr.mxu0 0.0
    %4634 = vmatpush1.msra.mxu0 0.0
    %4635 = vmatprep.subr.mxu0 0.0
    %4636 = vmatpush1.msra.mxu0 0.0
    %4637 = vmatprep.subr.mxu0 0.0
    %4638 = vmatpush1.msra.mxu0 0.0
    %4639 = vmatprep.subr.mxu0 0.0
    %4640 = vmatpush1.msra.mxu0 0.0
    %4641 = vmatprep.subr.mxu0 0.0
    %4642 = vmatpush1.msra.mxu0 0.0
    %4643 = vmatprep.subr.mxu0 0.0
    %4644 = vmatpush1.msra.mxu0 0.0
    %4645 = vmatprep.subr.mxu0 0.0
    %4646 = vmatpush1.msra.mxu0 0.0
    %4647 = vmatprep.subr.mxu0 0.0
    %4648 = vmatpush1.msra.mxu0 0.0
    %4649 = vmatprep.subr.mxu0 0.0
    %4650 = vmatpush1.msra.mxu0 0.0
    %4651 = vmatprep.mubr.f32.mxu0 0.0
    %4652 = vmatmul.mubr.f32.gmra.mrb[0].mxu0 %v4070
    %v4653 = vpop.f32.mrb[0].mxu0
    %v4654 = vadd.f32 0.0, %v4653
    %v4655 = vpop.f32.mrb[0].mxu0
    %4656 = vdwg.mxu0
    %v4658 = vsel %vm4068, %v4143, 0
    %v4661 = vsel %vm4068, %v4216, 0
    %v4664 = vsel %vm4068, %v4289, 0
    %v4667 = vsel %vm4068, %v4362, 0
    %v4670 = vsel %vm4068, %v4435, 0
    %v4673 = vsel %vm4068, %v4508, 0
    %v4676 = vsel %vm4068, %v4581, 0
    %v4679 = vsel %vm4068, %v4654, 0
    %v4682 = vsel %vm4072, %v3375, 0
    %4684 = vmatprep.subr.mxu0 0.0
    %4685 = vmatpush1.msra.mxu0 %v4682
    %4686 = vmatprep.subr.mxu0 0.0
    %4687 = vmatpush1.msra.mxu0 0.0
    %4688 = vmatprep.subr.mxu0 0.0
    %4689 = vmatpush1.msra.mxu0 0.0
    %4690 = vmatprep.subr.mxu0 0.0
    %4691 = vmatpush1.msra.mxu0 0.0
    %4692 = vmatprep.subr.mxu0 0.0
    %4693 = vmatpush1.msra.mxu0 0.0
    %4694 = vmatprep.subr.mxu0 0.0
    %4695 = vmatpush1.msra.mxu0 0.0
    %4696 = vmatprep.subr.mxu0 0.0
    %4697 = vmatpush1.msra.mxu0 0.0
    %4698 = vmatprep.subr.mxu0 0.0
    %4699 = vmatpush1.msra.mxu0 0.0
    %4700 = vmatprep.subr.mxu0 0.0
    %4701 = vmatpush1.msra.mxu0 0.0
    %4702 = vmatprep.subr.mxu0 0.0
    %4703 = vmatpush1.msra.mxu0 0.0
    %4704 = vmatprep.subr.mxu0 0.0
    %4705 = vmatpush1.msra.mxu0 0.0
    %4706 = vmatprep.subr.mxu0 0.0
    %4707 = vmatpush1.msra.mxu0 0.0
    %4708 = vmatprep.subr.mxu0 0.0
    %4709 = vmatpush1.msra.mxu0 0.0
    %4710 = vmatprep.subr.mxu0 0.0
    %4711 = vmatpush1.msra.mxu0 0.0
    %4712 = vmatprep.subr.mxu0 0.0
    %4713 = vmatpush1.msra.mxu0 0.0
    %4714 = vmatprep.subr.mxu0 0.0
    %4715 = vmatpush1.msra.mxu0 0.0
    %4716 = vmatprep.subr.mxu0 0.0
    %4717 = vmatpush1.msra.mxu0 0.0
    %4718 = vmatprep.subr.mxu0 0.0
    %4719 = vmatpush1.msra.mxu0 0.0
    %4720 = vmatprep.subr.mxu0 0.0
    %4721 = vmatpush1.msra.mxu0 0.0
    %4722 = vmatprep.subr.mxu0 0.0
    %4723 = vmatpush1.msra.mxu0 0.0
    %4724 = vmatprep.subr.mxu0 0.0
    %4725 = vmatpush1.msra.mxu0 0.0
    %4726 = vmatprep.subr.mxu0 0.0
    %4727 = vmatpush1.msra.mxu0 0.0
    %4728 = vmatprep.subr.mxu0 0.0
    %4729 = vmatpush1.msra.mxu0 0.0
    %4730 = vmatprep.subr.mxu0 0.0
    %4731 = vmatpush1.msra.mxu0 0.0
    %4732 = vmatprep.subr.mxu0 0.0
    %4733 = vmatpush1.msra.mxu0 0.0
    %4734 = vmatprep.subr.mxu0 0.0
    %4735 = vmatpush1.msra.mxu0 0.0
    %4736 = vmatprep.subr.mxu0 0.0
    %4737 = vmatpush1.msra.mxu0 0.0
    %4738 = vmatprep.subr.mxu0 0.0
    %4739 = vmatpush1.msra.mxu0 0.0
    %4740 = vmatprep.subr.mxu0 0.0
    %4741 = vmatpush1.msra.mxu0 0.0
    %4742 = vmatprep.subr.mxu0 0.0
    %4743 = vmatpush1.msra.mxu0 0.0
    %4744 = vmatprep.subr.mxu0 0.0
    %4745 = vmatpush1.msra.mxu0 0.0
    %4746 = vmatprep.subr.mxu0 0.0
    %4747 = vmatpush1.msra.mxu0 0.0
    %4748 = vmatprep.mubr.f32.mxu0 0.0
    %4749 = vmatmul.mubr.f32.gmra.mrb[0].mxu0 %v4658
    %v4750 = vpop.f32.mrb[0].mxu0
    %v4751 = vadd.f32 0.0, %v4750
    %v4752 = vpop.f32.mrb[0].mxu0
    %4753 = vmatprep.mubr.f32.mxu0 0.0
    %4754 = vmatmul.mubr.f32.gmra.mrb[0].mxu0 %v4661
    %v4755 = vpop.f32.mrb[0].mxu0
    %v4756 = vadd.f32 0.0, %v4755
    %v4757 = vpop.f32.mrb[0].mxu0
    %4758 = vmatprep.mubr.f32.mxu0 0.0
    %4759 = vmatmul.mubr.f32.gmra.mrb[0].mxu0 %v4664
    %v4760 = vpop.f32.mrb[0].mxu0
    %v4761 = vadd.f32 0.0, %v4760
    %v4762 = vpop.f32.mrb[0].mxu0
    %4763 = vmatprep.mubr.f32.mxu0 0.0
    %4764 = vmatmul.mubr.f32.gmra.mrb[0].mxu0 %v4667
    %v4765 = vpop.f32.mrb[0].mxu0
    %v4766 = vadd.f32 0.0, %v4765
    %v4767 = vpop.f32.mrb[0].mxu0
    %4768 = vmatprep.mubr.f32.mxu0 0.0
    %4769 = vmatmul.mubr.f32.gmra.mrb[0].mxu0 %v4670
    %v4770 = vpop.f32.mrb[0].mxu0
    %v4771 = vadd.f32 0.0, %v4770
    %v4772 = vpop.f32.mrb[0].mxu0
    %4773 = vmatprep.mubr.f32.mxu0 0.0
    %4774 = vmatmul.mubr.f32.gmra.mrb[0].mxu0 %v4673
    %v4775 = vpop.f32.mrb[0].mxu0
    %v4776 = vadd.f32 0.0, %v4775
    %v4777 = vpop.f32.mrb[0].mxu0
    %4778 = vmatprep.mubr.f32.mxu0 0.0
    %4779 = vmatmul.mubr.f32.gmra.mrb[0].mxu0 %v4676
    %v4780 = vpop.f32.mrb[0].mxu0
    %v4781 = vadd.f32 0.0, %v4780
    %v4782 = vpop.f32.mrb[0].mxu0
    %4783 = vmatprep.mubr.f32.mxu0 0.0
    %4784 = vmatmul.mubr.f32.gmra.mrb[0].mxu0 %v4679
    %v4785 = vpop.f32.mrb[0].mxu0
    %v4786 = vadd.f32 0.0, %v4785
    %v4787 = vpop.f32.mrb[0].mxu0
    %4788 = vdwg.mxu0
    %v4790 = vsel %vm920, %v1980, 0
    %v4793 = vsel %vm920, %v2050, 0
    %v4796 = vsel %vm920, %v2120, 0
    %v4799 = vsel %vm920, %v2190, 0
    %v4802 = vsel %vm920, %v2260, 0
    %v4805 = vsel %vm920, %v2330, 0
    %v4808 = vsel %vm920, %v2400, 0
    %v4811 = vsel %vm920, %v2470, 0
    %4813 = vmatprep.subr.mxu0 0.0
    %4814 = vmatpush1.msra.mxu0 %v3373
    %4815 = vmatprep.subr.mxu0 0.0
    %4816 = vmatpush1.msra.mxu0 0.0
    %4817 = vmatprep.subr.mxu0 0.0
    %4818 = vmatpush1.msra.mxu0 0.0
    %4819 = vmatprep.subr.mxu0 0.0
    %4820 = vmatpush1.msra.mxu0 0.0
    %4821 = vmatprep.subr.mxu0 0.0
    %4822 = vmatpush1.msra.mxu0 0.0
    %4823 = vmatprep.subr.mxu0 0.0
    %4824 = vmatpush1.msra.mxu0 0.0
    %4825 = vmatprep.subr.mxu0 0.0
    %4826 = vmatpush1.msra.mxu0 0.0
    %4827 = vmatprep.subr.mxu0 0.0
    %4828 = vmatpush1.msra.mxu0 0.0
    %4829 = vmatprep.subr.mxu0 0.0
    %4830 = vmatpush1.msra.mxu0 0.0
    %4831 = vmatprep.subr.mxu0 0.0
    %4832 = vmatpush1.msra.mxu0 0.0
    %4833 = vmatprep.subr.mxu0 0.0
    %4834 = vmatpush1.msra.mxu0 0.0
    %4835 = vmatprep.subr.mxu0 0.0
    %4836 = vmatpush1.msra.mxu0 0.0
    %4837 = vmatprep.subr.mxu0 0.0
    %4838 = vmatpush1.msra.mxu0 0.0
    %4839 = vmatprep.subr.mxu0 0.0
    %4840 = vmatpush1.msra.mxu0 0.0
    %4841 = vmatprep.subr.mxu0 0.0
    %4842 = vmatpush1.msra.mxu0 0.0
    %4843 = vmatprep.subr.mxu0 0.0
    %4844 = vmatpush1.msra.mxu0 0.0
    %4845 = vmatprep.subr.mxu0 0.0
    %4846 = vmatpush1.msra.mxu0 0.0
    %4847 = vmatprep.subr.mxu0 0.0
    %4848 = vmatpush1.msra.mxu0 0.0
    %4849 = vmatprep.subr.mxu0 0.0
    %4850 = vmatpush1.msra.mxu0 0.0
    %4851 = vmatprep.subr.mxu0 0.0
    %4852 = vmatpush1.msra.mxu0 0.0
    %4853 = vmatprep.subr.mxu0 0.0
    %4854 = vmatpush1.msra.mxu0 0.0
    %4855 = vmatprep.subr.mxu0 0.0
    %4856 = vmatpush1.msra.mxu0 0.0
    %4857 = vmatprep.subr.mxu0 0.0
    %4858 = vmatpush1.msra.mxu0 0.0
    %4859 = vmatprep.subr.mxu0 0.0
    %4860 = vmatpush1.msra.mxu0 0.0
    %4861 = vmatprep.subr.mxu0 0.0
    %4862 = vmatpush1.msra.mxu0 0.0
    %4863 = vmatprep.subr.mxu0 0.0
    %4864 = vmatpush1.msra.mxu0 0.0
    %4865 = vmatprep.subr.mxu0 0.0
    %4866 = vmatpush1.msra.mxu0 0.0
    %4867 = vmatprep.subr.mxu0 0.0
    %4868 = vmatpush1.msra.mxu0 0.0
    %4869 = vmatprep.subr.mxu0 0.0
    %4870 = vmatpush1.msra.mxu0 0.0
    %4871 = vmatprep.subr.mxu0 0.0
    %4872 = vmatpush1.msra.mxu0 0.0
    %4873 = vmatprep.subr.mxu0 0.0
    %4874 = vmatpush1.msra.mxu0 0.0
    %4875 = vmatprep.subr.mxu0 0.0
    %4876 = vmatpush1.msra.mxu0 0.0
    %4877 = vmatprep.mubr.f32.mxu0 0.0
    %4878 = vmatmul.mubr.f32.gmra.mrb[0].mxu0 %v4790
    %v4879 = vpop.f32.mrb[0].mxu0
    %v4880 = vadd.f32 0.0, %v4879
    %v4881 = vpop.f32.mrb[0].mxu0
    %4882 = vmatprep.mubr.f32.mxu0 0.0
    %4883 = vmatmul.mubr.f32.gmra.mrb[0].mxu0 %v4793
    %v4884 = vpop.f32.mrb[0].mxu0
    %v4885 = vadd.f32 0.0, %v4884
    %v4886 = vpop.f32.mrb[0].mxu0
    %4887 = vmatprep.mubr.f32.mxu0 0.0
    %4888 = vmatmul.mubr.f32.gmra.mrb[0].mxu0 %v4796
    %v4889 = vpop.f32.mrb[0].mxu0
    %v4890 = vadd.f32 0.0, %v4889
    %v4891 = vpop.f32.mrb[0].mxu0
    %4892 = vmatprep.mubr.f32.mxu0 0.0
    %4893 = vmatmul.mubr.f32.gmra.mrb[0].mxu0 %v4799
    %v4894 = vpop.f32.mrb[0].mxu0
    %v4895 = vadd.f32 0.0, %v4894
    %v4896 = vpop.f32.mrb[0].mxu0
    %4897 = vmatprep.mubr.f32.mxu0 0.0
    %4898 = vmatmul.mubr.f32.gmra.mrb[0].mxu0 %v4802
    %v4899 = vpop.f32.mrb[0].mxu0
    %v4900 = vadd.f32 0.0, %v4899
    %v4901 = vpop.f32.mrb[0].mxu0
    %4902 = vmatprep.mubr.f32.mxu0 0.0
    %4903 = vmatmul.mubr.f32.gmra.mrb[0].mxu0 %v4805
    %v4904 = vpop.f32.mrb[0].mxu0
    %v4905 = vadd.f32 0.0, %v4904
    %v4906 = vpop.f32.mrb[0].mxu0
    %4907 = vmatprep.mubr.f32.mxu0 0.0
    %4908 = vmatmul.mubr.f32.gmra.mrb[0].mxu0 %v4808
    %v4909 = vpop.f32.mrb[0].mxu0
    %v4910 = vadd.f32 0.0, %v4909
    %v4911 = vpop.f32.mrb[0].mxu0
    %4912 = vmatprep.mubr.f32.mxu0 0.0
    %4913 = vmatmul.mubr.f32.gmra.mrb[0].mxu0 %v4811
    %v4914 = vpop.f32.mrb[0].mxu0
    %v4915 = vadd.f32 0.0, %v4914
    %v4916 = vpop.f32.mrb[0].mxu0
    %4917 = vdwg.mxu0
    %4918 = vmatprep.subr.mxu0 0.0
    %4919 = vmatpush1.msra.mxu0 %v4880
    %4920 = vmatprep.subr.mxu0 0.0
    %4921 = vmatpush1.msra.mxu0 0.0
    %4922 = vmatprep.subr.mxu0 0.0
    %4923 = vmatpush1.msra.mxu0 0.0
    %4924 = vmatprep.subr.mxu0 0.0
    %4925 = vmatpush1.msra.mxu0 0.0
    %4926 = vmatprep.subr.mxu0 0.0
    %4927 = vmatpush1.msra.mxu0 0.0
    %4928 = vmatprep.subr.mxu0 0.0
    %4929 = vmatpush1.msra.mxu0 0.0
    %4930 = vmatprep.subr.mxu0 0.0
    %4931 = vmatpush1.msra.mxu0 0.0
    %4932 = vmatprep.subr.mxu0 0.0
    %4933 = vmatpush1.msra.mxu0 0.0
    %4934 = vmatprep.subr.mxu0 0.0
    %4935 = vmatpush1.msra.mxu0 0.0
    %4936 = vmatprep.subr.mxu0 0.0
    %4937 = vmatpush1.msra.mxu0 0.0
    %4938 = vmatprep.subr.mxu0 0.0
    %4939 = vmatpush1.msra.mxu0 0.0
    %4940 = vmatprep.subr.mxu0 0.0
    %4941 = vmatpush1.msra.mxu0 0.0
    %4942 = vmatprep.subr.mxu0 0.0
    %4943 = vmatpush1.msra.mxu0 0.0
    %4944 = vmatprep.subr.mxu0 0.0
    %4945 = vmatpush1.msra.mxu0 0.0
    %4946 = vmatprep.subr.mxu0 0.0
    %4947 = vmatpush1.msra.mxu0 0.0
    %4948 = vmatprep.subr.mxu0 0.0
    %4949 = vmatpush1.msra.mxu0 0.0
    %4950 = vmatprep.subr.mxu0 0.0
    %4951 = vmatpush1.msra.mxu0 0.0
    %4952 = vmatprep.subr.mxu0 0.0
    %4953 = vmatpush1.msra.mxu0 0.0
    %4954 = vmatprep.subr.mxu0 0.0
    %4955 = vmatpush1.msra.mxu0 0.0
    %4956 = vmatprep.subr.mxu0 0.0
    %4957 = vmatpush1.msra.mxu0 0.0
    %4958 = vmatprep.subr.mxu0 0.0
    %4959 = vmatpush1.msra.mxu0 0.0
    %4960 = vmatprep.subr.mxu0 0.0
    %4961 = vmatpush1.msra.mxu0 0.0
    %4962 = vmatprep.subr.mxu0 0.0
    %4963 = vmatpush1.msra.mxu0 0.0
    %4964 = vmatprep.subr.mxu0 0.0
    %4965 = vmatpush1.msra.mxu0 0.0
    %4966 = vmatprep.subr.mxu0 0.0
    %4967 = vmatpush1.msra.mxu0 0.0
    %4968 = vmatprep.subr.mxu0 0.0
    %4969 = vmatpush1.msra.mxu0 0.0
    %4970 = vmatprep.subr.mxu0 0.0
    %4971 = vmatpush1.msra.mxu0 0.0
    %4972 = vmatprep.subr.mxu0 0.0
    %4973 = vmatpush1.msra.mxu0 0.0
    %4974 = vmatprep.subr.mxu0 0.0
    %4975 = vmatpush1.msra.mxu0 0.0
    %4976 = vmatprep.subr.mxu0 0.0
    %4977 = vmatpush1.msra.mxu0 0.0
    %4978 = vmatprep.subr.mxu0 0.0
    %4979 = vmatpush1.msra.mxu0 0.0
    %4980 = vmatprep.subr.mxu0 0.0
    %4981 = vmatpush1.msra.mxu0 0.0
    %4982 = vmatprep.mubr.f32.mxu0 0.0
    %4983 = vmatmul.mubr.f32.gmra.mrb[0].mxu0 %v3506
    %v4984 = vpop.f32.mrb[0].mxu0
    %v4985 = vadd.f32 0.0, %v4984
    %v4986 = vpop.f32.mrb[0].mxu0
    %4987 = vdwg.mxu0
    %4988 = vmatprep.subr.mxu0 0.0
    %4989 = vmatpush1.msra.mxu0 %v4885
    %4990 = vmatprep.subr.mxu0 0.0
    %4991 = vmatpush1.msra.mxu0 0.0
    %4992 = vmatprep.subr.mxu0 0.0
    %4993 = vmatpush1.msra.mxu0 0.0
    %4994 = vmatprep.subr.mxu0 0.0
    %4995 = vmatpush1.msra.mxu0 0.0
    %4996 = vmatprep.subr.mxu0 0.0
    %4997 = vmatpush1.msra.mxu0 0.0
    %4998 = vmatprep.subr.mxu0 0.0
    %4999 = vmatpush1.msra.mxu0 0.0
    %5000 = vmatprep.subr.mxu0 0.0
    %5001 = vmatpush1.msra.mxu0 0.0
    %5002 = vmatprep.subr.mxu0 0.0
    %5003 = vmatpush1.msra.mxu0 0.0
    %5004 = vmatprep.subr.mxu0 0.0
    %5005 = vmatpush1.msra.mxu0 0.0
    %5006 = vmatprep.subr.mxu0 0.0
    %5007 = vmatpush1.msra.mxu0 0.0
    %5008 = vmatprep.subr.mxu0 0.0
    %5009 = vmatpush1.msra.mxu0 0.0
    %5010 = vmatprep.subr.mxu0 0.0
    %5011 = vmatpush1.msra.mxu0 0.0
    %5012 = vmatprep.subr.mxu0 0.0
    %5013 = vmatpush1.msra.mxu0 0.0
    %5014 = vmatprep.subr.mxu0 0.0
    %5015 = vmatpush1.msra.mxu0 0.0
    %5016 = vmatprep.subr.mxu0 0.0
    %5017 = vmatpush1.msra.mxu0 0.0
    %5018 = vmatprep.subr.mxu0 0.0
    %5019 = vmatpush1.msra.mxu0 0.0
    %5020 = vmatprep.subr.mxu0 0.0
    %5021 = vmatpush1.msra.mxu0 0.0
    %5022 = vmatprep.subr.mxu0 0.0
    %5023 = vmatpush1.msra.mxu0 0.0
    %5024 = vmatprep.subr.mxu0 0.0
    %5025 = vmatpush1.msra.mxu0 0.0
    %5026 = vmatprep.subr.mxu0 0.0
    %5027 = vmatpush1.msra.mxu0 0.0
    %5028 = vmatprep.subr.mxu0 0.0
    %5029 = vmatpush1.msra.mxu0 0.0
    %5030 = vmatprep.subr.mxu0 0.0
    %5031 = vmatpush1.msra.mxu0 0.0
    %5032 = vmatprep.subr.mxu0 0.0
    %5033 = vmatpush1.msra.mxu0 0.0
    %5034 = vmatprep.subr.mxu0 0.0
    %5035 = vmatpush1.msra.mxu0 0.0
    %5036 = vmatprep.subr.mxu0 0.0
    %5037 = vmatpush1.msra.mxu0 0.0
    %5038 = vmatprep.subr.mxu0 0.0
    %5039 = vmatpush1.msra.mxu0 0.0
    %5040 = vmatprep.subr.mxu0 0.0
    %5041 = vmatpush1.msra.mxu0 0.0
    %5042 = vmatprep.subr.mxu0 0.0
    %5043 = vmatpush1.msra.mxu0 0.0
    %5044 = vmatprep.subr.mxu0 0.0
    %5045 = vmatpush1.msra.mxu0 0.0
    %5046 = vmatprep.subr.mxu0 0.0
    %5047 = vmatpush1.msra.mxu0 0.0
    %5048 = vmatprep.subr.mxu0 0.0
    %5049 = vmatpush1.msra.mxu0 0.0
    %5050 = vmatprep.subr.mxu0 0.0
    %5051 = vmatpush1.msra.mxu0 0.0
    %5052 = vmatprep.mubr.f32.mxu0 0.0
    %5053 = vmatmul.mubr.f32.gmra.mrb[0].mxu0 %v3506
    %v5054 = vpop.f32.mrb[0].mxu0
    %v5055 = vadd.f32 0.0, %v5054
    %v5056 = vpop.f32.mrb[0].mxu0
    %5057 = vdwg.mxu0
    %5058 = vmatprep.subr.mxu0 0.0
    %5059 = vmatpush1.msra.mxu0 %v4890
    %5060 = vmatprep.subr.mxu0 0.0
    %5061 = vmatpush1.msra.mxu0 0.0
    %5062 = vmatprep.subr.mxu0 0.0
    %5063 = vmatpush1.msra.mxu0 0.0
    %5064 = vmatprep.subr.mxu0 0.0
    %5065 = vmatpush1.msra.mxu0 0.0
    %5066 = vmatprep.subr.mxu0 0.0
    %5067 = vmatpush1.msra.mxu0 0.0
    %5068 = vmatprep.subr.mxu0 0.0
    %5069 = vmatpush1.msra.mxu0 0.0
    %5070 = vmatprep.subr.mxu0 0.0
    %5071 = vmatpush1.msra.mxu0 0.0
    %5072 = vmatprep.subr.mxu0 0.0
    %5073 = vmatpush1.msra.mxu0 0.0
    %5074 = vmatprep.subr.mxu0 0.0
    %5075 = vmatpush1.msra.mxu0 0.0
    %5076 = vmatprep.subr.mxu0 0.0
    %5077 = vmatpush1.msra.mxu0 0.0
    %5078 = vmatprep.subr.mxu0 0.0
    %5079 = vmatpush1.msra.mxu0 0.0
    %5080 = vmatprep.subr.mxu0 0.0
    %5081 = vmatpush1.msra.mxu0 0.0
    %5082 = vmatprep.subr.mxu0 0.0
    %5083 = vmatpush1.msra.mxu0 0.0
    %5084 = vmatprep.subr.mxu0 0.0
    %5085 = vmatpush1.msra.mxu0 0.0
    %5086 = vmatprep.subr.mxu0 0.0
    %5087 = vmatpush1.msra.mxu0 0.0
    %5088 = vmatprep.subr.mxu0 0.0
    %5089 = vmatpush1.msra.mxu0 0.0
    %5090 = vmatprep.subr.mxu0 0.0
    %5091 = vmatpush1.msra.mxu0 0.0
    %5092 = vmatprep.subr.mxu0 0.0
    %5093 = vmatpush1.msra.mxu0 0.0
    %5094 = vmatprep.subr.mxu0 0.0
    %5095 = vmatpush1.msra.mxu0 0.0
    %5096 = vmatprep.subr.mxu0 0.0
    %5097 = vmatpush1.msra.mxu0 0.0
    %5098 = vmatprep.subr.mxu0 0.0
    %5099 = vmatpush1.msra.mxu0 0.0
    %5100 = vmatprep.subr.mxu0 0.0
    %5101 = vmatpush1.msra.mxu0 0.0
    %5102 = vmatprep.subr.mxu0 0.0
    %5103 = vmatpush1.msra.mxu0 0.0
    %5104 = vmatprep.subr.mxu0 0.0
    %5105 = vmatpush1.msra.mxu0 0.0
    %5106 = vmatprep.subr.mxu0 0.0
    %5107 = vmatpush1.msra.mxu0 0.0
    %5108 = vmatprep.subr.mxu0 0.0
    %5109 = vmatpush1.msra.mxu0 0.0
    %5110 = vmatprep.subr.mxu0 0.0
    %5111 = vmatpush1.msra.mxu0 0.0
    %5112 = vmatprep.subr.mxu0 0.0
    %5113 = vmatpush1.msra.mxu0 0.0
    %5114 = vmatprep.subr.mxu0 0.0
    %5115 = vmatpush1.msra.mxu0 0.0
    %5116 = vmatprep.subr.mxu0 0.0
    %5117 = vmatpush1.msra.mxu0 0.0
    %5118 = vmatprep.subr.mxu0 0.0
    %5119 = vmatpush1.msra.mxu0 0.0
    %5120 = vmatprep.subr.mxu0 0.0
    %5121 = vmatpush1.msra.mxu0 0.0
    %5122 = vmatprep.mubr.f32.mxu0 0.0
    %5123 = vmatmul.mubr.f32.gmra.mrb[0].mxu0 %v3506
    %v5124 = vpop.f32.mrb[0].mxu0
    %v5125 = vadd.f32 0.0, %v5124
    %v5126 = vpop.f32.mrb[0].mxu0
    %5127 = vdwg.mxu0
    %5128 = vmatprep.subr.mxu0 0.0
    %5129 = vmatpush1.msra.mxu0 %v4895
    %5130 = vmatprep.subr.mxu0 0.0
    %5131 = vmatpush1.msra.mxu0 0.0
    %5132 = vmatprep.subr.mxu0 0.0
    %5133 = vmatpush1.msra.mxu0 0.0
    %5134 = vmatprep.subr.mxu0 0.0
    %5135 = vmatpush1.msra.mxu0 0.0
    %5136 = vmatprep.subr.mxu0 0.0
    %5137 = vmatpush1.msra.mxu0 0.0
    %5138 = vmatprep.subr.mxu0 0.0
    %5139 = vmatpush1.msra.mxu0 0.0
    %5140 = vmatprep.subr.mxu0 0.0
    %5141 = vmatpush1.msra.mxu0 0.0
    %5142 = vmatprep.subr.mxu0 0.0
    %5143 = vmatpush1.msra.mxu0 0.0
    %5144 = vmatprep.subr.mxu0 0.0
    %5145 = vmatpush1.msra.mxu0 0.0
    %5146 = vmatprep.subr.mxu0 0.0
    %5147 = vmatpush1.msra.mxu0 0.0
    %5148 = vmatprep.subr.mxu0 0.0
    %5149 = vmatpush1.msra.mxu0 0.0
    %5150 = vmatprep.subr.mxu0 0.0
    %5151 = vmatpush1.msra.mxu0 0.0
    %5152 = vmatprep.subr.mxu0 0.0
    %5153 = vmatpush1.msra.mxu0 0.0
    %5154 = vmatprep.subr.mxu0 0.0
    %5155 = vmatpush1.msra.mxu0 0.0
    %5156 = vmatprep.subr.mxu0 0.0
    %5157 = vmatpush1.msra.mxu0 0.0
    %5158 = vmatprep.subr.mxu0 0.0
    %5159 = vmatpush1.msra.mxu0 0.0
    %5160 = vmatprep.subr.mxu0 0.0
    %5161 = vmatpush1.msra.mxu0 0.0
    %5162 = vmatprep.subr.mxu0 0.0
    %5163 = vmatpush1.msra.mxu0 0.0
    %5164 = vmatprep.subr.mxu0 0.0
    %5165 = vmatpush1.msra.mxu0 0.0
    %5166 = vmatprep.subr.mxu0 0.0
    %5167 = vmatpush1.msra.mxu0 0.0
    %5168 = vmatprep.subr.mxu0 0.0
    %5169 = vmatpush1.msra.mxu0 0.0
    %5170 = vmatprep.subr.mxu0 0.0
    %5171 = vmatpush1.msra.mxu0 0.0
    %5172 = vmatprep.subr.mxu0 0.0
    %5173 = vmatpush1.msra.mxu0 0.0
    %5174 = vmatprep.subr.mxu0 0.0
    %5175 = vmatpush1.msra.mxu0 0.0
    %5176 = vmatprep.subr.mxu0 0.0
    %5177 = vmatpush1.msra.mxu0 0.0
    %5178 = vmatprep.subr.mxu0 0.0
    %5179 = vmatpush1.msra.mxu0 0.0
    %5180 = vmatprep.subr.mxu0 0.0
    %5181 = vmatpush1.msra.mxu0 0.0
    %5182 = vmatprep.subr.mxu0 0.0
    %5183 = vmatpush1.msra.mxu0 0.0
    %5184 = vmatprep.subr.mxu0 0.0
    %5185 = vmatpush1.msra.mxu0 0.0
    %5186 = vmatprep.subr.mxu0 0.0
    %5187 = vmatpush1.msra.mxu0 0.0
    %5188 = vmatprep.subr.mxu0 0.0
    %5189 = vmatpush1.msra.mxu0 0.0
    %5190 = vmatprep.subr.mxu0 0.0
    %5191 = vmatpush1.msra.mxu0 0.0
    %5192 = vmatprep.mubr.f32.mxu0 0.0
    %5193 = vmatmul.mubr.f32.gmra.mrb[0].mxu0 %v3506
    %v5194 = vpop.f32.mrb[0].mxu0
    %v5195 = vadd.f32 0.0, %v5194
    %v5196 = vpop.f32.mrb[0].mxu0
    %5197 = vdwg.mxu0
    %5198 = vmatprep.subr.mxu0 0.0
    %5199 = vmatpush1.msra.mxu0 %v4900
    %5200 = vmatprep.subr.mxu0 0.0
    %5201 = vmatpush1.msra.mxu0 0.0
    %5202 = vmatprep.subr.mxu0 0.0
    %5203 = vmatpush1.msra.mxu0 0.0
    %5204 = vmatprep.subr.mxu0 0.0
    %5205 = vmatpush1.msra.mxu0 0.0
    %5206 = vmatprep.subr.mxu0 0.0
    %5207 = vmatpush1.msra.mxu0 0.0
    %5208 = vmatprep.subr.mxu0 0.0
    %5209 = vmatpush1.msra.mxu0 0.0
    %5210 = vmatprep.subr.mxu0 0.0
    %5211 = vmatpush1.msra.mxu0 0.0
    %5212 = vmatprep.subr.mxu0 0.0
    %5213 = vmatpush1.msra.mxu0 0.0
    %5214 = vmatprep.subr.mxu0 0.0
    %5215 = vmatpush1.msra.mxu0 0.0
    %5216 = vmatprep.subr.mxu0 0.0
    %5217 = vmatpush1.msra.mxu0 0.0
    %5218 = vmatprep.subr.mxu0 0.0
    %5219 = vmatpush1.msra.mxu0 0.0
    %5220 = vmatprep.subr.mxu0 0.0
    %5221 = vmatpush1.msra.mxu0 0.0
    %5222 = vmatprep.subr.mxu0 0.0
    %5223 = vmatpush1.msra.mxu0 0.0
    %5224 = vmatprep.subr.mxu0 0.0
    %5225 = vmatpush1.msra.mxu0 0.0
    %5226 = vmatprep.subr.mxu0 0.0
    %5227 = vmatpush1.msra.mxu0 0.0
    %5228 = vmatprep.subr.mxu0 0.0
    %5229 = vmatpush1.msra.mxu0 0.0
    %5230 = vmatprep.subr.mxu0 0.0
    %5231 = vmatpush1.msra.mxu0 0.0
    %5232 = vmatprep.subr.mxu0 0.0
    %5233 = vmatpush1.msra.mxu0 0.0
    %5234 = vmatprep.subr.mxu0 0.0
    %5235 = vmatpush1.msra.mxu0 0.0
    %5236 = vmatprep.subr.mxu0 0.0
    %5237 = vmatpush1.msra.mxu0 0.0
    %5238 = vmatprep.subr.mxu0 0.0
    %5239 = vmatpush1.msra.mxu0 0.0
    %5240 = vmatprep.subr.mxu0 0.0
    %5241 = vmatpush1.msra.mxu0 0.0
    %5242 = vmatprep.subr.mxu0 0.0
    %5243 = vmatpush1.msra.mxu0 0.0
    %5244 = vmatprep.subr.mxu0 0.0
    %5245 = vmatpush1.msra.mxu0 0.0
    %5246 = vmatprep.subr.mxu0 0.0
    %5247 = vmatpush1.msra.mxu0 0.0
    %5248 = vmatprep.subr.mxu0 0.0
    %5249 = vmatpush1.msra.mxu0 0.0
    %5250 = vmatprep.subr.mxu0 0.0
    %5251 = vmatpush1.msra.mxu0 0.0
    %5252 = vmatprep.subr.mxu0 0.0
    %5253 = vmatpush1.msra.mxu0 0.0
    %5254 = vmatprep.subr.mxu0 0.0
    %5255 = vmatpush1.msra.mxu0 0.0
    %5256 = vmatprep.subr.mxu0 0.0
    %5257 = vmatpush1.msra.mxu0 0.0
    %5258 = vmatprep.subr.mxu0 0.0
    %5259 = vmatpush1.msra.mxu0 0.0
    %5260 = vmatprep.subr.mxu0 0.0
    %5261 = vmatpush1.msra.mxu0 0.0
    %5262 = vmatprep.mubr.f32.mxu0 0.0
    %5263 = vmatmul.mubr.f32.gmra.mrb[0].mxu0 %v3506
    %v5264 = vpop.f32.mrb[0].mxu0
    %v5265 = vadd.f32 0.0, %v5264
    %v5266 = vpop.f32.mrb[0].mxu0
    %5267 = vdwg.mxu0
    %5268 = vmatprep.subr.mxu0 0.0
    %5269 = vmatpush1.msra.mxu0 %v4905
    %5270 = vmatprep.subr.mxu0 0.0
    %5271 = vmatpush1.msra.mxu0 0.0
    %5272 = vmatprep.subr.mxu0 0.0
    %5273 = vmatpush1.msra.mxu0 0.0
    %5274 = vmatprep.subr.mxu0 0.0
    %5275 = vmatpush1.msra.mxu0 0.0
    %5276 = vmatprep.subr.mxu0 0.0
    %5277 = vmatpush1.msra.mxu0 0.0
    %5278 = vmatprep.subr.mxu0 0.0
    %5279 = vmatpush1.msra.mxu0 0.0
    %5280 = vmatprep.subr.mxu0 0.0
    %5281 = vmatpush1.msra.mxu0 0.0
    %5282 = vmatprep.subr.mxu0 0.0
    %5283 = vmatpush1.msra.mxu0 0.0
    %5284 = vmatprep.subr.mxu0 0.0
    %5285 = vmatpush1.msra.mxu0 0.0
    %5286 = vmatprep.subr.mxu0 0.0
    %5287 = vmatpush1.msra.mxu0 0.0
    %5288 = vmatprep.subr.mxu0 0.0
    %5289 = vmatpush1.msra.mxu0 0.0
    %5290 = vmatprep.subr.mxu0 0.0
    %5291 = vmatpush1.msra.mxu0 0.0
    %5292 = vmatprep.subr.mxu0 0.0
    %5293 = vmatpush1.msra.mxu0 0.0
    %5294 = vmatprep.subr.mxu0 0.0
    %5295 = vmatpush1.msra.mxu0 0.0
    %5296 = vmatprep.subr.mxu0 0.0
    %5297 = vmatpush1.msra.mxu0 0.0
    %5298 = vmatprep.subr.mxu0 0.0
    %5299 = vmatpush1.msra.mxu0 0.0
    %5300 = vmatprep.subr.mxu0 0.0
    %5301 = vmatpush1.msra.mxu0 0.0
    %5302 = vmatprep.subr.mxu0 0.0
    %5303 = vmatpush1.msra.mxu0 0.0
    %5304 = vmatprep.subr.mxu0 0.0
    %5305 = vmatpush1.msra.mxu0 0.0
    %5306 = vmatprep.subr.mxu0 0.0
    %5307 = vmatpush1.msra.mxu0 0.0
    %5308 = vmatprep.subr.mxu0 0.0
    %5309 = vmatpush1.msra.mxu0 0.0
    %5310 = vmatprep.subr.mxu0 0.0
    %5311 = vmatpush1.msra.mxu0 0.0
    %5312 = vmatprep.subr.mxu0 0.0
    %5313 = vmatpush1.msra.mxu0 0.0
    %5314 = vmatprep.subr.mxu0 0.0
    %5315 = vmatpush1.msra.mxu0 0.0
    %5316 = vmatprep.subr.mxu0 0.0
    %5317 = vmatpush1.msra.mxu0 0.0
    %5318 = vmatprep.subr.mxu0 0.0
    %5319 = vmatpush1.msra.mxu0 0.0
    %5320 = vmatprep.subr.mxu0 0.0
    %5321 = vmatpush1.msra.mxu0 0.0
    %5322 = vmatprep.subr.mxu0 0.0
    %5323 = vmatpush1.msra.mxu0 0.0
    %5324 = vmatprep.subr.mxu0 0.0
    %5325 = vmatpush1.msra.mxu0 0.0
    %5326 = vmatprep.subr.mxu0 0.0
    %5327 = vmatpush1.msra.mxu0 0.0
    %5328 = vmatprep.subr.mxu0 0.0
    %5329 = vmatpush1.msra.mxu0 0.0
    %5330 = vmatprep.subr.mxu0 0.0
    %5331 = vmatpush1.msra.mxu0 0.0
    %5332 = vmatprep.mubr.f32.mxu0 0.0
    %5333 = vmatmul.mubr.f32.gmra.mrb[0].mxu0 %v3506
    %v5334 = vpop.f32.mrb[0].mxu0
    %v5335 = vadd.f32 0.0, %v5334
    %v5336 = vpop.f32.mrb[0].mxu0
    %5337 = vdwg.mxu0
    %5338 = vmatprep.subr.mxu0 0.0
    %5339 = vmatpush1.msra.mxu0 %v4910
    %5340 = vmatprep.subr.mxu0 0.0
    %5341 = vmatpush1.msra.mxu0 0.0
    %5342 = vmatprep.subr.mxu0 0.0
    %5343 = vmatpush1.msra.mxu0 0.0
    %5344 = vmatprep.subr.mxu0 0.0
    %5345 = vmatpush1.msra.mxu0 0.0
    %5346 = vmatprep.subr.mxu0 0.0
    %5347 = vmatpush1.msra.mxu0 0.0
    %5348 = vmatprep.subr.mxu0 0.0
    %5349 = vmatpush1.msra.mxu0 0.0
    %5350 = vmatprep.subr.mxu0 0.0
    %5351 = vmatpush1.msra.mxu0 0.0
    %5352 = vmatprep.subr.mxu0 0.0
    %5353 = vmatpush1.msra.mxu0 0.0
    %5354 = vmatprep.subr.mxu0 0.0
    %5355 = vmatpush1.msra.mxu0 0.0
    %5356 = vmatprep.subr.mxu0 0.0
    %5357 = vmatpush1.msra.mxu0 0.0
    %5358 = vmatprep.subr.mxu0 0.0
    %5359 = vmatpush1.msra.mxu0 0.0
    %5360 = vmatprep.subr.mxu0 0.0
    %5361 = vmatpush1.msra.mxu0 0.0
    %5362 = vmatprep.subr.mxu0 0.0
    %5363 = vmatpush1.msra.mxu0 0.0
    %5364 = vmatprep.subr.mxu0 0.0
    %5365 = vmatpush1.msra.mxu0 0.0
    %5366 = vmatprep.subr.mxu0 0.0
    %5367 = vmatpush1.msra.mxu0 0.0
    %5368 = vmatprep.subr.mxu0 0.0
    %5369 = vmatpush1.msra.mxu0 0.0
    %5370 = vmatprep.subr.mxu0 0.0
    %5371 = vmatpush1.msra.mxu0 0.0
    %5372 = vmatprep.subr.mxu0 0.0
    %5373 = vmatpush1.msra.mxu0 0.0
    %5374 = vmatprep.subr.mxu0 0.0
    %5375 = vmatpush1.msra.mxu0 0.0
    %5376 = vmatprep.subr.mxu0 0.0
    %5377 = vmatpush1.msra.mxu0 0.0
    %5378 = vmatprep.subr.mxu0 0.0
    %5379 = vmatpush1.msra.mxu0 0.0
    %5380 = vmatprep.subr.mxu0 0.0
    %5381 = vmatpush1.msra.mxu0 0.0
    %5382 = vmatprep.subr.mxu0 0.0
    %5383 = vmatpush1.msra.mxu0 0.0
    %5384 = vmatprep.subr.mxu0 0.0
    %5385 = vmatpush1.msra.mxu0 0.0
    %5386 = vmatprep.subr.mxu0 0.0
    %5387 = vmatpush1.msra.mxu0 0.0
    %5388 = vmatprep.subr.mxu0 0.0
    %5389 = vmatpush1.msra.mxu0 0.0
    %5390 = vmatprep.subr.mxu0 0.0
    %5391 = vmatpush1.msra.mxu0 0.0
    %5392 = vmatprep.subr.mxu0 0.0
    %5393 = vmatpush1.msra.mxu0 0.0
    %5394 = vmatprep.subr.mxu0 0.0
    %5395 = vmatpush1.msra.mxu0 0.0
    %5396 = vmatprep.subr.mxu0 0.0
    %5397 = vmatpush1.msra.mxu0 0.0
    %5398 = vmatprep.subr.mxu0 0.0
    %5399 = vmatpush1.msra.mxu0 0.0
    %5400 = vmatprep.subr.mxu0 0.0
    %5401 = vmatpush1.msra.mxu0 0.0
    %5402 = vmatprep.mubr.f32.mxu0 0.0
    %5403 = vmatmul.mubr.f32.gmra.mrb[0].mxu0 %v3506
    %v5404 = vpop.f32.mrb[0].mxu0
    %v5405 = vadd.f32 0.0, %v5404
    %v5406 = vpop.f32.mrb[0].mxu0
    %5407 = vdwg.mxu0
    %5408 = vmatprep.subr.mxu0 0.0
    %5409 = vmatpush1.msra.mxu0 %v4915
    %5410 = vmatprep.subr.mxu0 0.0
    %5411 = vmatpush1.msra.mxu0 0.0
    %5412 = vmatprep.subr.mxu0 0.0
    %5413 = vmatpush1.msra.mxu0 0.0
    %5414 = vmatprep.subr.mxu0 0.0
    %5415 = vmatpush1.msra.mxu0 0.0
    %5416 = vmatprep.subr.mxu0 0.0
    %5417 = vmatpush1.msra.mxu0 0.0
    %5418 = vmatprep.subr.mxu0 0.0
    %5419 = vmatpush1.msra.mxu0 0.0
    %5420 = vmatprep.subr.mxu0 0.0
    %5421 = vmatpush1.msra.mxu0 0.0
    %5422 = vmatprep.subr.mxu0 0.0
    %5423 = vmatpush1.msra.mxu0 0.0
    %5424 = vmatprep.subr.mxu0 0.0
    %5425 = vmatpush1.msra.mxu0 0.0
    %5426 = vmatprep.subr.mxu0 0.0
    %5427 = vmatpush1.msra.mxu0 0.0
    %5428 = vmatprep.subr.mxu0 0.0
    %5429 = vmatpush1.msra.mxu0 0.0
    %5430 = vmatprep.subr.mxu0 0.0
    %5431 = vmatpush1.msra.mxu0 0.0
    %5432 = vmatprep.subr.mxu0 0.0
    %5433 = vmatpush1.msra.mxu0 0.0
    %5434 = vmatprep.subr.mxu0 0.0
    %5435 = vmatpush1.msra.mxu0 0.0
    %5436 = vmatprep.subr.mxu0 0.0
    %5437 = vmatpush1.msra.mxu0 0.0
    %5438 = vmatprep.subr.mxu0 0.0
    %5439 = vmatpush1.msra.mxu0 0.0
    %5440 = vmatprep.subr.mxu0 0.0
    %5441 = vmatpush1.msra.mxu0 0.0
    %5442 = vmatprep.subr.mxu0 0.0
    %5443 = vmatpush1.msra.mxu0 0.0
    %5444 = vmatprep.subr.mxu0 0.0
    %5445 = vmatpush1.msra.mxu0 0.0
    %5446 = vmatprep.subr.mxu0 0.0
    %5447 = vmatpush1.msra.mxu0 0.0
    %5448 = vmatprep.subr.mxu0 0.0
    %5449 = vmatpush1.msra.mxu0 0.0
    %5450 = vmatprep.subr.mxu0 0.0
    %5451 = vmatpush1.msra.mxu0 0.0
    %5452 = vmatprep.subr.mxu0 0.0
    %5453 = vmatpush1.msra.mxu0 0.0
    %5454 = vmatprep.subr.mxu0 0.0
    %5455 = vmatpush1.msra.mxu0 0.0
    %5456 = vmatprep.subr.mxu0 0.0
    %5457 = vmatpush1.msra.mxu0 0.0
    %5458 = vmatprep.subr.mxu0 0.0
    %5459 = vmatpush1.msra.mxu0 0.0
    %5460 = vmatprep.subr.mxu0 0.0
    %5461 = vmatpush1.msra.mxu0 0.0
    %5462 = vmatprep.subr.mxu0 0.0
    %5463 = vmatpush1.msra.mxu0 0.0
    %5464 = vmatprep.subr.mxu0 0.0
    %5465 = vmatpush1.msra.mxu0 0.0
    %5466 = vmatprep.subr.mxu0 0.0
    %5467 = vmatpush1.msra.mxu0 0.0
    %5468 = vmatprep.subr.mxu0 0.0
    %5469 = vmatpush1.msra.mxu0 0.0
    %5470 = vmatprep.subr.mxu0 0.0
    %5471 = vmatpush1.msra.mxu0 0.0
    %5472 = vmatprep.mubr.f32.mxu0 0.0
    %5473 = vmatmul.mubr.f32.gmra.mrb[0].mxu0 %v3506
    %v5474 = vpop.f32.mrb[0].mxu0
    %v5475 = vadd.f32 0.0, %v5474
    %v5476 = vpop.f32.mrb[0].mxu0
    %5477 = vdwg.mxu0
    %v5479 = vsel %vm4072, %v4985, 0
    %5481 = vmatprep.subr.mxu0 0.0
    %5482 = vmatpush1.msra.mxu0 %v5479
    %5483 = vmatprep.subr.mxu0 0.0
    %5484 = vmatpush1.msra.mxu0 0.0
    %5485 = vmatprep.subr.mxu0 0.0
    %5486 = vmatpush1.msra.mxu0 0.0
    %5487 = vmatprep.subr.mxu0 0.0
    %5488 = vmatpush1.msra.mxu0 0.0
    %5489 = vmatprep.subr.mxu0 0.0
    %5490 = vmatpush1.msra.mxu0 0.0
    %5491 = vmatprep.subr.mxu0 0.0
    %5492 = vmatpush1.msra.mxu0 0.0
    %5493 = vmatprep.subr.mxu0 0.0
    %5494 = vmatpush1.msra.mxu0 0.0
    %5495 = vmatprep.subr.mxu0 0.0
    %5496 = vmatpush1.msra.mxu0 0.0
    %5497 = vmatprep.subr.mxu0 0.0
    %5498 = vmatpush1.msra.mxu0 0.0
    %5499 = vmatprep.subr.mxu0 0.0
    %5500 = vmatpush1.msra.mxu0 0.0
    %5501 = vmatprep.subr.mxu0 0.0
    %5502 = vmatpush1.msra.mxu0 0.0
    %5503 = vmatprep.subr.mxu0 0.0
    %5504 = vmatpush1.msra.mxu0 0.0
    %5505 = vmatprep.subr.mxu0 0.0
    %5506 = vmatpush1.msra.mxu0 0.0
    %5507 = vmatprep.subr.mxu0 0.0
    %5508 = vmatpush1.msra.mxu0 0.0
    %5509 = vmatprep.subr.mxu0 0.0
    %5510 = vmatpush1.msra.mxu0 0.0
    %5511 = vmatprep.subr.mxu0 0.0
    %5512 = vmatpush1.msra.mxu0 0.0
    %5513 = vmatprep.subr.mxu0 0.0
    %5514 = vmatpush1.msra.mxu0 0.0
    %5515 = vmatprep.subr.mxu0 0.0
    %5516 = vmatpush1.msra.mxu0 0.0
    %5517 = vmatprep.subr.mxu0 0.0
    %5518 = vmatpush1.msra.mxu0 0.0
    %5519 = vmatprep.subr.mxu0 0.0
    %5520 = vmatpush1.msra.mxu0 0.0
    %5521 = vmatprep.subr.mxu0 0.0
    %5522 = vmatpush1.msra.mxu0 0.0
    %5523 = vmatprep.subr.mxu0 0.0
    %5524 = vmatpush1.msra.mxu0 0.0
    %5525 = vmatprep.subr.mxu0 0.0
    %5526 = vmatpush1.msra.mxu0 0.0
    %5527 = vmatprep.subr.mxu0 0.0
    %5528 = vmatpush1.msra.mxu0 0.0
    %5529 = vmatprep.subr.mxu0 0.0
    %5530 = vmatpush1.msra.mxu0 0.0
    %5531 = vmatprep.subr.mxu0 0.0
    %5532 = vmatpush1.msra.mxu0 0.0
    %5533 = vmatprep.subr.mxu0 0.0
    %5534 = vmatpush1.msra.mxu0 0.0
    %5535 = vmatprep.subr.mxu0 0.0
    %5536 = vmatpush1.msra.mxu0 0.0
    %5537 = vmatprep.subr.mxu0 0.0
    %5538 = vmatpush1.msra.mxu0 0.0
    %5539 = vmatprep.subr.mxu0 0.0
    %5540 = vmatpush1.msra.mxu0 0.0
    %5541 = vmatprep.subr.mxu0 0.0
    %5542 = vmatpush1.msra.mxu0 0.0
    %5543 = vmatprep.subr.mxu0 0.0
    %5544 = vmatpush1.msra.mxu0 0.0
    %5545 = vmatprep.mubr.f32.mxu0 0.0
    %5546 = vmatmul.mubr.f32.gmra.mrb[0].mxu0 %v4070
    %v5547 = vpop.f32.mrb[0].mxu0
    %v5548 = vadd.f32 0.0, %v5547
    %v5549 = vpop.f32.mrb[0].mxu0
    %5550 = vdwg.mxu0
    %v5552 = vsel %vm4072, %v5055, 0
    %5554 = vmatprep.subr.mxu0 0.0
    %5555 = vmatpush1.msra.mxu0 %v5552
    %5556 = vmatprep.subr.mxu0 0.0
    %5557 = vmatpush1.msra.mxu0 0.0
    %5558 = vmatprep.subr.mxu0 0.0
    %5559 = vmatpush1.msra.mxu0 0.0
    %5560 = vmatprep.subr.mxu0 0.0
    %5561 = vmatpush1.msra.mxu0 0.0
    %5562 = vmatprep.subr.mxu0 0.0
    %5563 = vmatpush1.msra.mxu0 0.0
    %5564 = vmatprep.subr.mxu0 0.0
    %5565 = vmatpush1.msra.mxu0 0.0
    %5566 = vmatprep.subr.mxu0 0.0
    %5567 = vmatpush1.msra.mxu0 0.0
    %5568 = vmatprep.subr.mxu0 0.0
    %5569 = vmatpush1.msra.mxu0 0.0
    %5570 = vmatprep.subr.mxu0 0.0
    %5571 = vmatpush1.msra.mxu0 0.0
    %5572 = vmatprep.subr.mxu0 0.0
    %5573 = vmatpush1.msra.mxu0 0.0
    %5574 = vmatprep.subr.mxu0 0.0
    %5575 = vmatpush1.msra.mxu0 0.0
    %5576 = vmatprep.subr.mxu0 0.0
    %5577 = vmatpush1.msra.mxu0 0.0
    %5578 = vmatprep.subr.mxu0 0.0
    %5579 = vmatpush1.msra.mxu0 0.0
    %5580 = vmatprep.subr.mxu0 0.0
    %5581 = vmatpush1.msra.mxu0 0.0
    %5582 = vmatprep.subr.mxu0 0.0
    %5583 = vmatpush1.msra.mxu0 0.0
    %5584 = vmatprep.subr.mxu0 0.0
    %5585 = vmatpush1.msra.mxu0 0.0
    %5586 = vmatprep.subr.mxu0 0.0
    %5587 = vmatpush1.msra.mxu0 0.0
    %5588 = vmatprep.subr.mxu0 0.0
    %5589 = vmatpush1.msra.mxu0 0.0
    %5590 = vmatprep.subr.mxu0 0.0
    %5591 = vmatpush1.msra.mxu0 0.0
    %5592 = vmatprep.subr.mxu0 0.0
    %5593 = vmatpush1.msra.mxu0 0.0
    %5594 = vmatprep.subr.mxu0 0.0
    %5595 = vmatpush1.msra.mxu0 0.0
    %5596 = vmatprep.subr.mxu0 0.0
    %5597 = vmatpush1.msra.mxu0 0.0
    %5598 = vmatprep.subr.mxu0 0.0
    %5599 = vmatpush1.msra.mxu0 0.0
    %5600 = vmatprep.subr.mxu0 0.0
    %5601 = vmatpush1.msra.mxu0 0.0
    %5602 = vmatprep.subr.mxu0 0.0
    %5603 = vmatpush1.msra.mxu0 0.0
    %5604 = vmatprep.subr.mxu0 0.0
    %5605 = vmatpush1.msra.mxu0 0.0
    %5606 = vmatprep.subr.mxu0 0.0
    %5607 = vmatpush1.msra.mxu0 0.0
    %5608 = vmatprep.subr.mxu0 0.0
    %5609 = vmatpush1.msra.mxu0 0.0
    %5610 = vmatprep.subr.mxu0 0.0
    %5611 = vmatpush1.msra.mxu0 0.0
    %5612 = vmatprep.subr.mxu0 0.0
    %5613 = vmatpush1.msra.mxu0 0.0
    %5614 = vmatprep.subr.mxu0 0.0
    %5615 = vmatpush1.msra.mxu0 0.0
    %5616 = vmatprep.subr.mxu0 0.0
    %5617 = vmatpush1.msra.mxu0 0.0
    %5618 = vmatprep.mubr.f32.mxu0 0.0
    %5619 = vmatmul.mubr.f32.gmra.mrb[0].mxu0 %v4070
    %v5620 = vpop.f32.mrb[0].mxu0
    %v5621 = vadd.f32 0.0, %v5620
    %v5622 = vpop.f32.mrb[0].mxu0
    %5623 = vdwg.mxu0
    %v5625 = vsel %vm4072, %v5125, 0
    %5627 = vmatprep.subr.mxu0 0.0
    %5628 = vmatpush1.msra.mxu0 %v5625
    %5629 = vmatprep.subr.mxu0 0.0
    %5630 = vmatpush1.msra.mxu0 0.0
    %5631 = vmatprep.subr.mxu0 0.0
    %5632 = vmatpush1.msra.mxu0 0.0
    %5633 = vmatprep.subr.mxu0 0.0
    %5634 = vmatpush1.msra.mxu0 0.0
    %5635 = vmatprep.subr.mxu0 0.0
    %5636 = vmatpush1.msra.mxu0 0.0
    %5637 = vmatprep.subr.mxu0 0.0
    %5638 = vmatpush1.msra.mxu0 0.0
    %5639 = vmatprep.subr.mxu0 0.0
    %5640 = vmatpush1.msra.mxu0 0.0
    %5641 = vmatprep.subr.mxu0 0.0
    %5642 = vmatpush1.msra.mxu0 0.0
    %5643 = vmatprep.subr.mxu0 0.0
    %5644 = vmatpush1.msra.mxu0 0.0
    %5645 = vmatprep.subr.mxu0 0.0
    %5646 = vmatpush1.msra.mxu0 0.0
    %5647 = vmatprep.subr.mxu0 0.0
    %5648 = vmatpush1.msra.mxu0 0.0
    %5649 = vmatprep.subr.mxu0 0.0
    %5650 = vmatpush1.msra.mxu0 0.0
    %5651 = vmatprep.subr.mxu0 0.0
    %5652 = vmatpush1.msra.mxu0 0.0
    %5653 = vmatprep.subr.mxu0 0.0
    %5654 = vmatpush1.msra.mxu0 0.0
    %5655 = vmatprep.subr.mxu0 0.0
    %5656 = vmatpush1.msra.mxu0 0.0
    %5657 = vmatprep.subr.mxu0 0.0
    %5658 = vmatpush1.msra.mxu0 0.0
    %5659 = vmatprep.subr.mxu0 0.0
    %5660 = vmatpush1.msra.mxu0 0.0
    %5661 = vmatprep.subr.mxu0 0.0
    %5662 = vmatpush1.msra.mxu0 0.0
    %5663 = vmatprep.subr.mxu0 0.0
    %5664 = vmatpush1.msra.mxu0 0.0
    %5665 = vmatprep.subr.mxu0 0.0
    %5666 = vmatpush1.msra.mxu0 0.0
    %5667 = vmatprep.subr.mxu0 0.0
    %5668 = vmatpush1.msra.mxu0 0.0
    %5669 = vmatprep.subr.mxu0 0.0
    %5670 = vmatpush1.msra.mxu0 0.0
    %5671 = vmatprep.subr.mxu0 0.0
    %5672 = vmatpush1.msra.mxu0 0.0
    %5673 = vmatprep.subr.mxu0 0.0
    %5674 = vmatpush1.msra.mxu0 0.0
    %5675 = vmatprep.subr.mxu0 0.0
    %5676 = vmatpush1.msra.mxu0 0.0
    %5677 = vmatprep.subr.mxu0 0.0
    %5678 = vmatpush1.msra.mxu0 0.0
    %5679 = vmatprep.subr.mxu0 0.0
    %5680 = vmatpush1.msra.mxu0 0.0
    %5681 = vmatprep.subr.mxu0 0.0
    %5682 = vmatpush1.msra.mxu0 0.0
    %5683 = vmatprep.subr.mxu0 0.0
    %5684 = vmatpush1.msra.mxu0 0.0
    %5685 = vmatprep.subr.mxu0 0.0
    %5686 = vmatpush1.msra.mxu0 0.0
    %5687 = vmatprep.subr.mxu0 0.0
    %5688 = vmatpush1.msra.mxu0 0.0
    %5689 = vmatprep.subr.mxu0 0.0
    %5690 = vmatpush1.msra.mxu0 0.0
    %5691 = vmatprep.mubr.f32.mxu0 0.0
    %5692 = vmatmul.mubr.f32.gmra.mrb[0].mxu0 %v4070
    %v5693 = vpop.f32.mrb[0].mxu0
    %v5694 = vadd.f32 0.0, %v5693
    %v5695 = vpop.f32.mrb[0].mxu0
    %5696 = vdwg.mxu0
    %v5698 = vsel %vm4072, %v5195, 0
    %5700 = vmatprep.subr.mxu0 0.0
    %5701 = vmatpush1.msra.mxu0 %v5698
    %5702 = vmatprep.subr.mxu0 0.0
    %5703 = vmatpush1.msra.mxu0 0.0
    %5704 = vmatprep.subr.mxu0 0.0
    %5705 = vmatpush1.msra.mxu0 0.0
    %5706 = vmatprep.subr.mxu0 0.0
    %5707 = vmatpush1.msra.mxu0 0.0
    %5708 = vmatprep.subr.mxu0 0.0
    %5709 = vmatpush1.msra.mxu0 0.0
    %5710 = vmatprep.subr.mxu0 0.0
    %5711 = vmatpush1.msra.mxu0 0.0
    %5712 = vmatprep.subr.mxu0 0.0
    %5713 = vmatpush1.msra.mxu0 0.0
    %5714 = vmatprep.subr.mxu0 0.0
    %5715 = vmatpush1.msra.mxu0 0.0
    %5716 = vmatprep.subr.mxu0 0.0
    %5717 = vmatpush1.msra.mxu0 0.0
    %5718 = vmatprep.subr.mxu0 0.0
    %5719 = vmatpush1.msra.mxu0 0.0
    %5720 = vmatprep.subr.mxu0 0.0
    %5721 = vmatpush1.msra.mxu0 0.0
    %5722 = vmatprep.subr.mxu0 0.0
    %5723 = vmatpush1.msra.mxu0 0.0
    %5724 = vmatprep.subr.mxu0 0.0
    %5725 = vmatpush1.msra.mxu0 0.0
    %5726 = vmatprep.subr.mxu0 0.0
    %5727 = vmatpush1.msra.mxu0 0.0
    %5728 = vmatprep.subr.mxu0 0.0
    %5729 = vmatpush1.msra.mxu0 0.0
    %5730 = vmatprep.subr.mxu0 0.0
    %5731 = vmatpush1.msra.mxu0 0.0
    %5732 = vmatprep.subr.mxu0 0.0
    %5733 = vmatpush1.msra.mxu0 0.0
    %5734 = vmatprep.subr.mxu0 0.0
    %5735 = vmatpush1.msra.mxu0 0.0
    %5736 = vmatprep.subr.mxu0 0.0
    %5737 = vmatpush1.msra.mxu0 0.0
    %5738 = vmatprep.subr.mxu0 0.0
    %5739 = vmatpush1.msra.mxu0 0.0
    %5740 = vmatprep.subr.mxu0 0.0
    %5741 = vmatpush1.msra.mxu0 0.0
    %5742 = vmatprep.subr.mxu0 0.0
    %5743 = vmatpush1.msra.mxu0 0.0
    %5744 = vmatprep.subr.mxu0 0.0
    %5745 = vmatpush1.msra.mxu0 0.0
    %5746 = vmatprep.subr.mxu0 0.0
    %5747 = vmatpush1.msra.mxu0 0.0
    %5748 = vmatprep.subr.mxu0 0.0
    %5749 = vmatpush1.msra.mxu0 0.0
    %5750 = vmatprep.subr.mxu0 0.0
    %5751 = vmatpush1.msra.mxu0 0.0
    %5752 = vmatprep.subr.mxu0 0.0
    %5753 = vmatpush1.msra.mxu0 0.0
    %5754 = vmatprep.subr.mxu0 0.0
    %5755 = vmatpush1.msra.mxu0 0.0
    %5756 = vmatprep.subr.mxu0 0.0
    %5757 = vmatpush1.msra.mxu0 0.0
    %5758 = vmatprep.subr.mxu0 0.0
    %5759 = vmatpush1.msra.mxu0 0.0
    %5760 = vmatprep.subr.mxu0 0.0
    %5761 = vmatpush1.msra.mxu0 0.0
    %5762 = vmatprep.subr.mxu0 0.0
    %5763 = vmatpush1.msra.mxu0 0.0
    %5764 = vmatprep.mubr.f32.mxu0 0.0
    %5765 = vmatmul.mubr.f32.gmra.mrb[0].mxu0 %v4070
    %v5766 = vpop.f32.mrb[0].mxu0
    %v5767 = vadd.f32 0.0, %v5766
    %v5768 = vpop.f32.mrb[0].mxu0
    %5769 = vdwg.mxu0
    %v5771 = vsel %vm4072, %v5265, 0
    %5773 = vmatprep.subr.mxu0 0.0
    %5774 = vmatpush1.msra.mxu0 %v5771
    %5775 = vmatprep.subr.mxu0 0.0
    %5776 = vmatpush1.msra.mxu0 0.0
    %5777 = vmatprep.subr.mxu0 0.0
    %5778 = vmatpush1.msra.mxu0 0.0
    %5779 = vmatprep.subr.mxu0 0.0
    %5780 = vmatpush1.msra.mxu0 0.0
    %5781 = vmatprep.subr.mxu0 0.0
    %5782 = vmatpush1.msra.mxu0 0.0
    %5783 = vmatprep.subr.mxu0 0.0
    %5784 = vmatpush1.msra.mxu0 0.0
    %5785 = vmatprep.subr.mxu0 0.0
    %5786 = vmatpush1.msra.mxu0 0.0
    %5787 = vmatprep.subr.mxu0 0.0
    %5788 = vmatpush1.msra.mxu0 0.0
    %5789 = vmatprep.subr.mxu0 0.0
    %5790 = vmatpush1.msra.mxu0 0.0
    %5791 = vmatprep.subr.mxu0 0.0
    %5792 = vmatpush1.msra.mxu0 0.0
    %5793 = vmatprep.subr.mxu0 0.0
    %5794 = vmatpush1.msra.mxu0 0.0
    %5795 = vmatprep.subr.mxu0 0.0
    %5796 = vmatpush1.msra.mxu0 0.0
    %5797 = vmatprep.subr.mxu0 0.0
    %5798 = vmatpush1.msra.mxu0 0.0
    %5799 = vmatprep.subr.mxu0 0.0
    %5800 = vmatpush1.msra.mxu0 0.0
    %5801 = vmatprep.subr.mxu0 0.0
    %5802 = vmatpush1.msra.mxu0 0.0
    %5803 = vmatprep.subr.mxu0 0.0
    %5804 = vmatpush1.msra.mxu0 0.0
    %5805 = vmatprep.subr.mxu0 0.0
    %5806 = vmatpush1.msra.mxu0 0.0
    %5807 = vmatprep.subr.mxu0 0.0
    %5808 = vmatpush1.msra.mxu0 0.0
    %5809 = vmatprep.subr.mxu0 0.0
    %5810 = vmatpush1.msra.mxu0 0.0
    %5811 = vmatprep.subr.mxu0 0.0
    %5812 = vmatpush1.msra.mxu0 0.0
    %5813 = vmatprep.subr.mxu0 0.0
    %5814 = vmatpush1.msra.mxu0 0.0
    %5815 = vmatprep.subr.mxu0 0.0
    %5816 = vmatpush1.msra.mxu0 0.0
    %5817 = vmatprep.subr.mxu0 0.0
    %5818 = vmatpush1.msra.mxu0 0.0
    %5819 = vmatprep.subr.mxu0 0.0
    %5820 = vmatpush1.msra.mxu0 0.0
    %5821 = vmatprep.subr.mxu0 0.0
    %5822 = vmatpush1.msra.mxu0 0.0
    %5823 = vmatprep.subr.mxu0 0.0
    %5824 = vmatpush1.msra.mxu0 0.0
    %5825 = vmatprep.subr.mxu0 0.0
    %5826 = vmatpush1.msra.mxu0 0.0
    %5827 = vmatprep.subr.mxu0 0.0
    %5828 = vmatpush1.msra.mxu0 0.0
    %5829 = vmatprep.subr.mxu0 0.0
    %5830 = vmatpush1.msra.mxu0 0.0
    %5831 = vmatprep.subr.mxu0 0.0
    %5832 = vmatpush1.msra.mxu0 0.0
    %5833 = vmatprep.subr.mxu0 0.0
    %5834 = vmatpush1.msra.mxu0 0.0
    %5835 = vmatprep.subr.mxu0 0.0
    %5836 = vmatpush1.msra.mxu0 0.0
    %5837 = vmatprep.mubr.f32.mxu0 0.0
    %5838 = vmatmul.mubr.f32.gmra.mrb[0].mxu0 %v4070
    %v5839 = vpop.f32.mrb[0].mxu0
    %v5840 = vadd.f32 0.0, %v5839
    %v5841 = vpop.f32.mrb[0].mxu0
    %5842 = vdwg.mxu0
    %v5844 = vsel %vm4072, %v5335, 0
    %5846 = vmatprep.subr.mxu0 0.0
    %5847 = vmatpush1.msra.mxu0 %v5844
    %5848 = vmatprep.subr.mxu0 0.0
    %5849 = vmatpush1.msra.mxu0 0.0
    %5850 = vmatprep.subr.mxu0 0.0
    %5851 = vmatpush1.msra.mxu0 0.0
    %5852 = vmatprep.subr.mxu0 0.0
    %5853 = vmatpush1.msra.mxu0 0.0
    %5854 = vmatprep.subr.mxu0 0.0
    %5855 = vmatpush1.msra.mxu0 0.0
    %5856 = vmatprep.subr.mxu0 0.0
    %5857 = vmatpush1.msra.mxu0 0.0
    %5858 = vmatprep.subr.mxu0 0.0
    %5859 = vmatpush1.msra.mxu0 0.0
    %5860 = vmatprep.subr.mxu0 0.0
    %5861 = vmatpush1.msra.mxu0 0.0
    %5862 = vmatprep.subr.mxu0 0.0
    %5863 = vmatpush1.msra.mxu0 0.0
    %5864 = vmatprep.subr.mxu0 0.0
    %5865 = vmatpush1.msra.mxu0 0.0
    %5866 = vmatprep.subr.mxu0 0.0
    %5867 = vmatpush1.msra.mxu0 0.0
    %5868 = vmatprep.subr.mxu0 0.0
    %5869 = vmatpush1.msra.mxu0 0.0
    %5870 = vmatprep.subr.mxu0 0.0
    %5871 = vmatpush1.msra.mxu0 0.0
    %5872 = vmatprep.subr.mxu0 0.0
    %5873 = vmatpush1.msra.mxu0 0.0
    %5874 = vmatprep.subr.mxu0 0.0
    %5875 = vmatpush1.msra.mxu0 0.0
    %5876 = vmatprep.subr.mxu0 0.0
    %5877 = vmatpush1.msra.mxu0 0.0
    %5878 = vmatprep.subr.mxu0 0.0
    %5879 = vmatpush1.msra.mxu0 0.0
    %5880 = vmatprep.subr.mxu0 0.0
    %5881 = vmatpush1.msra.mxu0 0.0
    %5882 = vmatprep.subr.mxu0 0.0
    %5883 = vmatpush1.msra.mxu0 0.0
    %5884 = vmatprep.subr.mxu0 0.0
    %5885 = vmatpush1.msra.mxu0 0.0
    %5886 = vmatprep.subr.mxu0 0.0
    %5887 = vmatpush1.msra.mxu0 0.0
    %5888 = vmatprep.subr.mxu0 0.0
    %5889 = vmatpush1.msra.mxu0 0.0
    %5890 = vmatprep.subr.mxu0 0.0
    %5891 = vmatpush1.msra.mxu0 0.0
    %5892 = vmatprep.subr.mxu0 0.0
    %5893 = vmatpush1.msra.mxu0 0.0
    %5894 = vmatprep.subr.mxu0 0.0
    %5895 = vmatpush1.msra.mxu0 0.0
    %5896 = vmatprep.subr.mxu0 0.0
    %5897 = vmatpush1.msra.mxu0 0.0
    %5898 = vmatprep.subr.mxu0 0.0
    %5899 = vmatpush1.msra.mxu0 0.0
    %5900 = vmatprep.subr.mxu0 0.0
    %5901 = vmatpush1.msra.mxu0 0.0
    %5902 = vmatprep.subr.mxu0 0.0
    %5903 = vmatpush1.msra.mxu0 0.0
    %5904 = vmatprep.subr.mxu0 0.0
    %5905 = vmatpush1.msra.mxu0 0.0
    %5906 = vmatprep.subr.mxu0 0.0
    %5907 = vmatpush1.msra.mxu0 0.0
    %5908 = vmatprep.subr.mxu0 0.0
    %5909 = vmatpush1.msra.mxu0 0.0
    %5910 = vmatprep.mubr.f32.mxu0 0.0
    %5911 = vmatmul.mubr.f32.gmra.mrb[0].mxu0 %v4070
    %v5912 = vpop.f32.mrb[0].mxu0
    %v5913 = vadd.f32 0.0, %v5912
    %v5914 = vpop.f32.mrb[0].mxu0
    %5915 = vdwg.mxu0
    %v5917 = vsel %vm4072, %v5405, 0
    %5919 = vmatprep.subr.mxu0 0.0
    %5920 = vmatpush1.msra.mxu0 %v5917
    %5921 = vmatprep.subr.mxu0 0.0
    %5922 = vmatpush1.msra.mxu0 0.0
    %5923 = vmatprep.subr.mxu0 0.0
    %5924 = vmatpush1.msra.mxu0 0.0
    %5925 = vmatprep.subr.mxu0 0.0
    %5926 = vmatpush1.msra.mxu0 0.0
    %5927 = vmatprep.subr.mxu0 0.0
    %5928 = vmatpush1.msra.mxu0 0.0
    %5929 = vmatprep.subr.mxu0 0.0
    %5930 = vmatpush1.msra.mxu0 0.0
    %5931 = vmatprep.subr.mxu0 0.0
    %5932 = vmatpush1.msra.mxu0 0.0
    %5933 = vmatprep.subr.mxu0 0.0
    %5934 = vmatpush1.msra.mxu0 0.0
    %5935 = vmatprep.subr.mxu0 0.0
    %5936 = vmatpush1.msra.mxu0 0.0
    %5937 = vmatprep.subr.mxu0 0.0
    %5938 = vmatpush1.msra.mxu0 0.0
    %5939 = vmatprep.subr.mxu0 0.0
    %5940 = vmatpush1.msra.mxu0 0.0
    %5941 = vmatprep.subr.mxu0 0.0
    %5942 = vmatpush1.msra.mxu0 0.0
    %5943 = vmatprep.subr.mxu0 0.0
    %5944 = vmatpush1.msra.mxu0 0.0
    %5945 = vmatprep.subr.mxu0 0.0
    %5946 = vmatpush1.msra.mxu0 0.0
    %5947 = vmatprep.subr.mxu0 0.0
    %5948 = vmatpush1.msra.mxu0 0.0
    %5949 = vmatprep.subr.mxu0 0.0
    %5950 = vmatpush1.msra.mxu0 0.0
    %5951 = vmatprep.subr.mxu0 0.0
    %5952 = vmatpush1.msra.mxu0 0.0
    %5953 = vmatprep.subr.mxu0 0.0
    %5954 = vmatpush1.msra.mxu0 0.0
    %5955 = vmatprep.subr.mxu0 0.0
    %5956 = vmatpush1.msra.mxu0 0.0
    %5957 = vmatprep.subr.mxu0 0.0
    %5958 = vmatpush1.msra.mxu0 0.0
    %5959 = vmatprep.subr.mxu0 0.0
    %5960 = vmatpush1.msra.mxu0 0.0
    %5961 = vmatprep.subr.mxu0 0.0
    %5962 = vmatpush1.msra.mxu0 0.0
    %5963 = vmatprep.subr.mxu0 0.0
    %5964 = vmatpush1.msra.mxu0 0.0
    %5965 = vmatprep.subr.mxu0 0.0
    %5966 = vmatpush1.msra.mxu0 0.0
    %5967 = vmatprep.subr.mxu0 0.0
    %5968 = vmatpush1.msra.mxu0 0.0
    %5969 = vmatprep.subr.mxu0 0.0
    %5970 = vmatpush1.msra.mxu0 0.0
    %5971 = vmatprep.subr.mxu0 0.0
    %5972 = vmatpush1.msra.mxu0 0.0
    %5973 = vmatprep.subr.mxu0 0.0
    %5974 = vmatpush1.msra.mxu0 0.0
    %5975 = vmatprep.subr.mxu0 0.0
    %5976 = vmatpush1.msra.mxu0 0.0
    %5977 = vmatprep.subr.mxu0 0.0
    %5978 = vmatpush1.msra.mxu0 0.0
    %5979 = vmatprep.subr.mxu0 0.0
    %5980 = vmatpush1.msra.mxu0 0.0
    %5981 = vmatprep.subr.mxu0 0.0
    %5982 = vmatpush1.msra.mxu0 0.0
    %5983 = vmatprep.mubr.f32.mxu0 0.0
    %5984 = vmatmul.mubr.f32.gmra.mrb[0].mxu0 %v4070
    %v5985 = vpop.f32.mrb[0].mxu0
    %v5986 = vadd.f32 0.0, %v5985
    %v5987 = vpop.f32.mrb[0].mxu0
    %5988 = vdwg.mxu0
    %v5990 = vsel %vm4072, %v5475, 0
    %5992 = vmatprep.subr.mxu0 0.0
    %5993 = vmatpush1.msra.mxu0 %v5990
    %5994 = vmatprep.subr.mxu0 0.0
    %5995 = vmatpush1.msra.mxu0 0.0
    %5996 = vmatprep.subr.mxu0 0.0
    %5997 = vmatpush1.msra.mxu0 0.0
    %5998 = vmatprep.subr.mxu0 0.0
    %5999 = vmatpush1.msra.mxu0 0.0
    %6000 = vmatprep.subr.mxu0 0.0
    %6001 = vmatpush1.msra.mxu0 0.0
    %6002 = vmatprep.subr.mxu0 0.0
    %6003 = vmatpush1.msra.mxu0 0.0
    %6004 = vmatprep.subr.mxu0 0.0
    %6005 = vmatpush1.msra.mxu0 0.0
    %6006 = vmatprep.subr.mxu0 0.0
    %6007 = vmatpush1.msra.mxu0 0.0
    %6008 = vmatprep.subr.mxu0 0.0
    %6009 = vmatpush1.msra.mxu0 0.0
    %6010 = vmatprep.subr.mxu0 0.0
    %6011 = vmatpush1.msra.mxu0 0.0
    %6012 = vmatprep.subr.mxu0 0.0
    %6013 = vmatpush1.msra.mxu0 0.0
    %6014 = vmatprep.subr.mxu0 0.0
    %6015 = vmatpush1.msra.mxu0 0.0
    %6016 = vmatprep.subr.mxu0 0.0
    %6017 = vmatpush1.msra.mxu0 0.0
    %6018 = vmatprep.subr.mxu0 0.0
    %6019 = vmatpush1.msra.mxu0 0.0
    %6020 = vmatprep.subr.mxu0 0.0
    %6021 = vmatpush1.msra.mxu0 0.0
    %6022 = vmatprep.subr.mxu0 0.0
    %6023 = vmatpush1.msra.mxu0 0.0
    %6024 = vmatprep.subr.mxu0 0.0
    %6025 = vmatpush1.msra.mxu0 0.0
    %6026 = vmatprep.subr.mxu0 0.0
    %6027 = vmatpush1.msra.mxu0 0.0
    %6028 = vmatprep.subr.mxu0 0.0
    %6029 = vmatpush1.msra.mxu0 0.0
    %6030 = vmatprep.subr.mxu0 0.0
    %6031 = vmatpush1.msra.mxu0 0.0
    %6032 = vmatprep.subr.mxu0 0.0
    %6033 = vmatpush1.msra.mxu0 0.0
    %6034 = vmatprep.subr.mxu0 0.0
    %6035 = vmatpush1.msra.mxu0 0.0
    %6036 = vmatprep.subr.mxu0 0.0
    %6037 = vmatpush1.msra.mxu0 0.0
    %6038 = vmatprep.subr.mxu0 0.0
    %6039 = vmatpush1.msra.mxu0 0.0
    %6040 = vmatprep.subr.mxu0 0.0
    %6041 = vmatpush1.msra.mxu0 0.0
    %6042 = vmatprep.subr.mxu0 0.0
    %6043 = vmatpush1.msra.mxu0 0.0
    %6044 = vmatprep.subr.mxu0 0.0
    %6045 = vmatpush1.msra.mxu0 0.0
    %6046 = vmatprep.subr.mxu0 0.0
    %6047 = vmatpush1.msra.mxu0 0.0
    %6048 = vmatprep.subr.mxu0 0.0
    %6049 = vmatpush1.msra.mxu0 0.0
    %6050 = vmatprep.subr.mxu0 0.0
    %6051 = vmatpush1.msra.mxu0 0.0
    %6052 = vmatprep.subr.mxu0 0.0
    %6053 = vmatpush1.msra.mxu0 0.0
    %6054 = vmatprep.subr.mxu0 0.0
    %6055 = vmatpush1.msra.mxu0 0.0
    %6056 = vmatprep.mubr.f32.mxu0 0.0
    %6057 = vmatmul.mubr.f32.gmra.mrb[0].mxu0 %v4070
    %v6058 = vpop.f32.mrb[0].mxu0
    %v6059 = vadd.f32 0.0, %v6058
    %v6060 = vpop.f32.mrb[0].mxu0
    %6061 = vdwg.mxu0
    %v6063 = vsel %vm4068, %v5548, 0
    %v6066 = vsel %vm4068, %v5621, 0
    %v6069 = vsel %vm4068, %v5694, 0
    %v6072 = vsel %vm4068, %v5767, 0
    %v6075 = vsel %vm4068, %v5840, 0
    %v6078 = vsel %vm4068, %v5913, 0
    %v6081 = vsel %vm4068, %v5986, 0
    %v6084 = vsel %vm4068, %v6059, 0
    %6086 = vmatprep.subr.mxu0 0.0
    %6087 = vmatpush1.msra.mxu0 %v4682
    %6088 = vmatprep.subr.mxu0 0.0
    %6089 = vmatpush1.msra.mxu0 0.0
    %6090 = vmatprep.subr.mxu0 0.0
    %6091 = vmatpush1.msra.mxu0 0.0
    %6092 = vmatprep.subr.mxu0 0.0
    %6093 = vmatpush1.msra.mxu0 0.0
    %6094 = vmatprep.subr.mxu0 0.0
    %6095 = vmatpush1.msra.mxu0 0.0
    %6096 = vmatprep.subr.mxu0 0.0
    %6097 = vmatpush1.msra.mxu0 0.0
    %6098 = vmatprep.subr.mxu0 0.0
    %6099 = vmatpush1.msra.mxu0 0.0
    %6100 = vmatprep.subr.mxu0 0.0
    %6101 = vmatpush1.msra.mxu0 0.0
    %6102 = vmatprep.subr.mxu0 0.0
    %6103 = vmatpush1.msra.mxu0 0.0
    %6104 = vmatprep.subr.mxu0 0.0
    %6105 = vmatpush1.msra.mxu0 0.0
    %6106 = vmatprep.subr.mxu0 0.0
    %6107 = vmatpush1.msra.mxu0 0.0
    %6108 = vmatprep.subr.mxu0 0.0
    %6109 = vmatpush1.msra.mxu0 0.0
    %6110 = vmatprep.subr.mxu0 0.0
    %6111 = vmatpush1.msra.mxu0 0.0
    %6112 = vmatprep.subr.mxu0 0.0
    %6113 = vmatpush1.msra.mxu0 0.0
    %6114 = vmatprep.subr.mxu0 0.0
    %6115 = vmatpush1.msra.mxu0 0.0
    %6116 = vmatprep.subr.mxu0 0.0
    %6117 = vmatpush1.msra.mxu0 0.0
    %6118 = vmatprep.subr.mxu0 0.0
    %6119 = vmatpush1.msra.mxu0 0.0
    %6120 = vmatprep.subr.mxu0 0.0
    %6121 = vmatpush1.msra.mxu0 0.0
    %6122 = vmatprep.subr.mxu0 0.0
    %6123 = vmatpush1.msra.mxu0 0.0
    %6124 = vmatprep.subr.mxu0 0.0
    %6125 = vmatpush1.msra.mxu0 0.0
    %6126 = vmatprep.subr.mxu0 0.0
    %6127 = vmatpush1.msra.mxu0 0.0
    %6128 = vmatprep.subr.mxu0 0.0
    %6129 = vmatpush1.msra.mxu0 0.0
    %6130 = vmatprep.subr.mxu0 0.0
    %6131 = vmatpush1.msra.mxu0 0.0
    %6132 = vmatprep.subr.mxu0 0.0
    %6133 = vmatpush1.msra.mxu0 0.0
    %6134 = vmatprep.subr.mxu0 0.0
    %6135 = vmatpush1.msra.mxu0 0.0
    %6136 = vmatprep.subr.mxu0 0.0
    %6137 = vmatpush1.msra.mxu0 0.0
    %6138 = vmatprep.subr.mxu0 0.0
    %6139 = vmatpush1.msra.mxu0 0.0
    %6140 = vmatprep.subr.mxu0 0.0
    %6141 = vmatpush1.msra.mxu0 0.0
    %6142 = vmatprep.subr.mxu0 0.0
    %6143 = vmatpush1.msra.mxu0 0.0
    %6144 = vmatprep.subr.mxu0 0.0
    %6145 = vmatpush1.msra.mxu0 0.0
    %6146 = vmatprep.subr.mxu0 0.0
    %6147 = vmatpush1.msra.mxu0 0.0
    %6148 = vmatprep.subr.mxu0 0.0
    %6149 = vmatpush1.msra.mxu0 0.0
    %6150 = vmatprep.mubr.f32.mxu0 0.0
    %6151 = vmatmul.mubr.f32.gmra.mrb[0].mxu0 %v6063
    %v6152 = vpop.f32.mrb[0].mxu0
    %v6153 = vadd.f32 0.0, %v6152
    %v6154 = vpop.f32.mrb[0].mxu0
    %6155 = vmatprep.mubr.f32.mxu0 0.0
    %6156 = vmatmul.mubr.f32.gmra.mrb[0].mxu0 %v6066
    %v6157 = vpop.f32.mrb[0].mxu0
    %v6158 = vadd.f32 0.0, %v6157
    %v6159 = vpop.f32.mrb[0].mxu0
    %6160 = vmatprep.mubr.f32.mxu0 0.0
    %6161 = vmatmul.mubr.f32.gmra.mrb[0].mxu0 %v6069
    %v6162 = vpop.f32.mrb[0].mxu0
    %v6163 = vadd.f32 0.0, %v6162
    %v6164 = vpop.f32.mrb[0].mxu0
    %6165 = vmatprep.mubr.f32.mxu0 0.0
    %6166 = vmatmul.mubr.f32.gmra.mrb[0].mxu0 %v6072
    %v6167 = vpop.f32.mrb[0].mxu0
    %v6168 = vadd.f32 0.0, %v6167
    %v6169 = vpop.f32.mrb[0].mxu0
    %6170 = vmatprep.mubr.f32.mxu0 0.0
    %6171 = vmatmul.mubr.f32.gmra.mrb[0].mxu0 %v6075
    %v6172 = vpop.f32.mrb[0].mxu0
    %v6173 = vadd.f32 0.0, %v6172
    %v6174 = vpop.f32.mrb[0].mxu0
    %6175 = vmatprep.mubr.f32.mxu0 0.0
    %6176 = vmatmul.mubr.f32.gmra.mrb[0].mxu0 %v6078
    %v6177 = vpop.f32.mrb[0].mxu0
    %v6178 = vadd.f32 0.0, %v6177
    %v6179 = vpop.f32.mrb[0].mxu0
    %6180 = vmatprep.mubr.f32.mxu0 0.0
    %6181 = vmatmul.mubr.f32.gmra.mrb[0].mxu0 %v6081
    %v6182 = vpop.f32.mrb[0].mxu0
    %v6183 = vadd.f32 0.0, %v6182
    %v6184 = vpop.f32.mrb[0].mxu0
    %6185 = vmatprep.mubr.f32.mxu0 0.0
    %6186 = vmatmul.mubr.f32.gmra.mrb[0].mxu0 %v6084
    %v6187 = vpop.f32.mrb[0].mxu0
    %v6188 = vadd.f32 0.0, %v6187
    %v6189 = vpop.f32.mrb[0].mxu0
    %6190 = vdwg.mxu0
    %v6191 = vsub.f32 %v427, %v4751
    %v6192 = vsub.f32 %v497, %v4756
    %v6193 = vsub.f32 %v567, %v4761
    %v6194 = vsub.f32 %v637, %v4766
    %v6195 = vsub.f32 %v707, %v4771
    %v6196 = vsub.f32 %v777, %v4776
    %v6197 = vsub.f32 %v847, %v4781
    %v6198 = vsub.f32 %v917, %v4786
    %v6199 = vsub.f32 %v1980, %v6153
    %v6200 = vsub.f32 %v2050, %v6158
    %v6201 = vsub.f32 %v2120, %v6163
    %v6202 = vsub.f32 %v2190, %v6168
    %v6203 = vsub.f32 %v2260, %v6173
    %v6204 = vsub.f32 %v2330, %v6178
    %v6205 = vsub.f32 %v2400, %v6183
    %v6206 = vsub.f32 %v2470, %v6188
    %v6207 = vsub.f32 %v6191, %v6199
    %v6208 = vsub.f32 %v6192, %v6200
    %v6209 = vsub.f32 %v6193, %v6201
    %v6210 = vsub.f32 %v6194, %v6202
    %v6211 = vsub.f32 %v6195, %v6203
    %v6212 = vsub.f32 %v6196, %v6204
    %v6213 = vsub.f32 %v6197, %v6205
    %v6214 = vsub.f32 %v6198, %v6206
    %v6215 = vand.u32 2147483647, %v6207
    %v6216 = vand.u32 2147483647, %v6208
    %v6217 = vand.u32 2147483647, %v6209
    %v6218 = vand.u32 2147483647, %v6210
    %v6219 = vand.u32 2147483647, %v6211
    %v6220 = vand.u32 2147483647, %v6212
    %v6221 = vand.u32 2147483647, %v6213
    %v6222 = vand.u32 2147483647, %v6214
    %v6223 = vsel %vm920, %v6215, 0.0
    %v6224 = vsel %vm920, %v6216, 0.0
    %v6225 = vadd.f32 %v6223, %v6224
    %v6226 = vsel %vm920, %v6217, 0.0
    %v6227 = vadd.f32 %v6225, %v6226
    %v6228 = vsel %vm920, %v6218, 0.0
    %v6229 = vadd.f32 %v6227, %v6228
    %v6230 = vsel %vm920, %v6219, 0.0
    %v6231 = vadd.f32 %v6229, %v6230
    %v6232 = vsel %vm920, %v6220, 0.0
    %v6233 = vadd.f32 %v6231, %v6232
    %v6234 = vsel %vm920, %v6221, 0.0
    %v6235 = vadd.f32 %v6233, %v6234
    %v6236 = vsel %vm920, %v6222, 0.0
    %v6237 = vadd.f32 %v6235, %v6236
    %6238 = vadd.xlane.f32.xlu0 %v6237
    %v6239 = vpop.xlane.xlu0 %6238
    %v6240 = vrot.slane %v6239, 4
    %v6241 = vadd.f32 %v6239, %v6240
    %v6242 = vrot.slane %v6241, 2
    %v6243 = vadd.f32 %v6241, %v6242
    %v6244 = vrot.slane %v6243, 1
    %v6245 = vadd.f32 %v6243, %v6244
    %s6246 = vtos %v6245
    %v6247 = vstv %s6246
    %6248 = vst [vmem:[%s15] sm:$0xff] %v6247
    %v6249 = vld [vmem:[%s10] sm:$0x3]
    %v6250 = vld [vmem:[%s11] sm:$0xf]
    %v6251 = vld [vmem:[%s12] sm:$0xf]
    %v6252 = vld [vmem:[%s13] sm:$0x3]
    %v6253 = vsel %vm4068, %v3575, 0
    %v6256 = vsel %vm4072, %v6250, 0
    %6258 = vmatprep.subr.mxu0 0.0
    %6259 = vmatpush1.msra.mxu0 %v6256
    %6260 = vmatprep.subr.mxu0 0.0
    %6261 = vmatpush1.msra.mxu0 0.0
    %6262 = vmatprep.subr.mxu0 0.0
    %6263 = vmatpush1.msra.mxu0 0.0
    %6264 = vmatprep.subr.mxu0 0.0
    %6265 = vmatpush1.msra.mxu0 0.0
    %6266 = vmatprep.subr.mxu0 0.0
    %6267 = vmatpush1.msra.mxu0 0.0
    %6268 = vmatprep.subr.mxu0 0.0
    %6269 = vmatpush1.msra.mxu0 0.0
    %6270 = vmatprep.subr.mxu0 0.0
    %6271 = vmatpush1.msra.mxu0 0.0
    %6272 = vmatprep.subr.mxu0 0.0
    %6273 = vmatpush1.msra.mxu0 0.0
    %6274 = vmatprep.subr.mxu0 0.0
    %6275 = vmatpush1.msra.mxu0 0.0
    %6276 = vmatprep.subr.mxu0 0.0
    %6277 = vmatpush1.msra.mxu0 0.0
    %6278 = vmatprep.subr.mxu0 0.0
    %6279 = vmatpush1.msra.mxu0 0.0
    %6280 = vmatprep.subr.mxu0 0.0
    %6281 = vmatpush1.msra.mxu0 0.0
    %6282 = vmatprep.subr.mxu0 0.0
    %6283 = vmatpush1.msra.mxu0 0.0
    %6284 = vmatprep.subr.mxu0 0.0
    %6285 = vmatpush1.msra.mxu0 0.0
    %6286 = vmatprep.subr.mxu0 0.0
    %6287 = vmatpush1.msra.mxu0 0.0
    %6288 = vmatprep.subr.mxu0 0.0
    %6289 = vmatpush1.msra.mxu0 0.0
    %6290 = vmatprep.subr.mxu0 0.0
    %6291 = vmatpush1.msra.mxu0 0.0
    %6292 = vmatprep.subr.mxu0 0.0
    %6293 = vmatpush1.msra.mxu0 0.0
    %6294 = vmatprep.subr.mxu0 0.0
    %6295 = vmatpush1.msra.mxu0 0.0
    %6296 = vmatprep.subr.mxu0 0.0
    %6297 = vmatpush1.msra.mxu0 0.0
    %6298 = vmatprep.subr.mxu0 0.0
    %6299 = vmatpush1.msra.mxu0 0.0
    %6300 = vmatprep.subr.mxu0 0.0
    %6301 = vmatpush1.msra.mxu0 0.0
    %6302 = vmatprep.subr.mxu0 0.0
    %6303 = vmatpush1.msra.mxu0 0.0
    %6304 = vmatprep.subr.mxu0 0.0
    %6305 = vmatpush1.msra.mxu0 0.0
    %6306 = vmatprep.subr.mxu0 0.0
    %6307 = vmatpush1.msra.mxu0 0.0
    %6308 = vmatprep.subr.mxu0 0.0
    %6309 = vmatpush1.msra.mxu0 0.0
    %6310 = vmatprep.subr.mxu0 0.0
    %6311 = vmatpush1.msra.mxu0 0.0
    %6312 = vmatprep.subr.mxu0 0.0
    %6313 = vmatpush1.msra.mxu0 0.0
    %6314 = vmatprep.subr.mxu0 0.0
    %6315 = vmatpush1.msra.mxu0 0.0
    %6316 = vmatprep.subr.mxu0 0.0
    %6317 = vmatpush1.msra.mxu0 0.0
    %6318 = vmatprep.subr.mxu0 0.0
    %6319 = vmatpush1.msra.mxu0 0.0
    %6320 = vmatprep.subr.mxu0 0.0
    %6321 = vmatpush1.msra.mxu0 0.0
    %6322 = vmatprep.mubr.f32.mxu0 0.0
    %6323 = vmatmul.mubr.f32.gmra.mrb[0].mxu0 %v6253
    %v6324 = vpop.f32.mrb[0].mxu0
    %v6325 = vadd.f32 0.0, %v6324
    %v6326 = vpop.f32.mrb[0].mxu0
    %6327 = vdwg.mxu0
    %v6328 = vsel %vm4068, %v3645, 0
    %6330 = vmatprep.subr.mxu0 0.0
    %6331 = vmatpush1.msra.mxu0 %v6256
    %6332 = vmatprep.subr.mxu0 0.0
    %6333 = vmatpush1.msra.mxu0 0.0
    %6334 = vmatprep.subr.mxu0 0.0
    %6335 = vmatpush1.msra.mxu0 0.0
    %6336 = vmatprep.subr.mxu0 0.0
    %6337 = vmatpush1.msra.mxu0 0.0
    %6338 = vmatprep.subr.mxu0 0.0
    %6339 = vmatpush1.msra.mxu0 0.0
    %6340 = vmatprep.subr.mxu0 0.0
    %6341 = vmatpush1.msra.mxu0 0.0
    %6342 = vmatprep.subr.mxu0 0.0
    %6343 = vmatpush1.msra.mxu0 0.0
    %6344 = vmatprep.subr.mxu0 0.0
    %6345 = vmatpush1.msra.mxu0 0.0
    %6346 = vmatprep.subr.mxu0 0.0
    %6347 = vmatpush1.msra.mxu0 0.0
    %6348 = vmatprep.subr.mxu0 0.0
    %6349 = vmatpush1.msra.mxu0 0.0
    %6350 = vmatprep.subr.mxu0 0.0
    %6351 = vmatpush1.msra.mxu0 0.0
    %6352 = vmatprep.subr.mxu0 0.0
    %6353 = vmatpush1.msra.mxu0 0.0
    %6354 = vmatprep.subr.mxu0 0.0
    %6355 = vmatpush1.msra.mxu0 0.0
    %6356 = vmatprep.subr.mxu0 0.0
    %6357 = vmatpush1.msra.mxu0 0.0
    %6358 = vmatprep.subr.mxu0 0.0
    %6359 = vmatpush1.msra.mxu0 0.0
    %6360 = vmatprep.subr.mxu0 0.0
    %6361 = vmatpush1.msra.mxu0 0.0
    %6362 = vmatprep.subr.mxu0 0.0
    %6363 = vmatpush1.msra.mxu0 0.0
    %6364 = vmatprep.subr.mxu0 0.0
    %6365 = vmatpush1.msra.mxu0 0.0
    %6366 = vmatprep.subr.mxu0 0.0
    %6367 = vmatpush1.msra.mxu0 0.0
    %6368 = vmatprep.subr.mxu0 0.0
    %6369 = vmatpush1.msra.mxu0 0.0
    %6370 = vmatprep.subr.mxu0 0.0
    %6371 = vmatpush1.msra.mxu0 0.0
    %6372 = vmatprep.subr.mxu0 0.0
    %6373 = vmatpush1.msra.mxu0 0.0
    %6374 = vmatprep.subr.mxu0 0.0
    %6375 = vmatpush1.msra.mxu0 0.0
    %6376 = vmatprep.subr.mxu0 0.0
    %6377 = vmatpush1.msra.mxu0 0.0
    %6378 = vmatprep.subr.mxu0 0.0
    %6379 = vmatpush1.msra.mxu0 0.0
    %6380 = vmatprep.subr.mxu0 0.0
    %6381 = vmatpush1.msra.mxu0 0.0
    %6382 = vmatprep.subr.mxu0 0.0
    %6383 = vmatpush1.msra.mxu0 0.0
    %6384 = vmatprep.subr.mxu0 0.0
    %6385 = vmatpush1.msra.mxu0 0.0
    %6386 = vmatprep.subr.mxu0 0.0
    %6387 = vmatpush1.msra.mxu0 0.0
    %6388 = vmatprep.subr.mxu0 0.0
    %6389 = vmatpush1.msra.mxu0 0.0
    %6390 = vmatprep.subr.mxu0 0.0
    %6391 = vmatpush1.msra.mxu0 0.0
    %6392 = vmatprep.subr.mxu0 0.0
    %6393 = vmatpush1.msra.mxu0 0.0
    %6394 = vmatprep.mubr.f32.mxu0 0.0
    %6395 = vmatmul.mubr.f32.gmra.mrb[0].mxu0 %v6328
    %v6396 = vpop.f32.mrb[0].mxu0
    %v6397 = vadd.f32 0.0, %v6396
    %v6398 = vpop.f32.mrb[0].mxu0
    %6399 = vdwg.mxu0
    %v6400 = vsel %vm4068, %v3715, 0
    %6402 = vmatprep.subr.mxu0 0.0
    %6403 = vmatpush1.msra.mxu0 %v6256
    %6404 = vmatprep.subr.mxu0 0.0
    %6405 = vmatpush1.msra.mxu0 0.0
    %6406 = vmatprep.subr.mxu0 0.0
    %6407 = vmatpush1.msra.mxu0 0.0
    %6408 = vmatprep.subr.mxu0 0.0
    %6409 = vmatpush1.msra.mxu0 0.0
    %6410 = vmatprep.subr.mxu0 0.0
    %6411 = vmatpush1.msra.mxu0 0.0
    %6412 = vmatprep.subr.mxu0 0.0
    %6413 = vmatpush1.msra.mxu0 0.0
    %6414 = vmatprep.subr.mxu0 0.0
    %6415 = vmatpush1.msra.mxu0 0.0
    %6416 = vmatprep.subr.mxu0 0.0
    %6417 = vmatpush1.msra.mxu0 0.0
    %6418 = vmatprep.subr.mxu0 0.0
    %6419 = vmatpush1.msra.mxu0 0.0
    %6420 = vmatprep.subr.mxu0 0.0
    %6421 = vmatpush1.msra.mxu0 0.0
    %6422 = vmatprep.subr.mxu0 0.0
    %6423 = vmatpush1.msra.mxu0 0.0
    %6424 = vmatprep.subr.mxu0 0.0
    %6425 = vmatpush1.msra.mxu0 0.0
    %6426 = vmatprep.subr.mxu0 0.0
    %6427 = vmatpush1.msra.mxu0 0.0
    %6428 = vmatprep.subr.mxu0 0.0
    %6429 = vmatpush1.msra.mxu0 0.0
    %6430 = vmatprep.subr.mxu0 0.0
    %6431 = vmatpush1.msra.mxu0 0.0
    %6432 = vmatprep.subr.mxu0 0.0
    %6433 = vmatpush1.msra.mxu0 0.0
    %6434 = vmatprep.subr.mxu0 0.0
    %6435 = vmatpush1.msra.mxu0 0.0
    %6436 = vmatprep.subr.mxu0 0.0
    %6437 = vmatpush1.msra.mxu0 0.0
    %6438 = vmatprep.subr.mxu0 0.0
    %6439 = vmatpush1.msra.mxu0 0.0
    %6440 = vmatprep.subr.mxu0 0.0
    %6441 = vmatpush1.msra.mxu0 0.0
    %6442 = vmatprep.subr.mxu0 0.0
    %6443 = vmatpush1.msra.mxu0 0.0
    %6444 = vmatprep.subr.mxu0 0.0
    %6445 = vmatpush1.msra.mxu0 0.0
    %6446 = vmatprep.subr.mxu0 0.0
    %6447 = vmatpush1.msra.mxu0 0.0
    %6448 = vmatprep.subr.mxu0 0.0
    %6449 = vmatpush1.msra.mxu0 0.0
    %6450 = vmatprep.subr.mxu0 0.0
    %6451 = vmatpush1.msra.mxu0 0.0
    %6452 = vmatprep.subr.mxu0 0.0
    %6453 = vmatpush1.msra.mxu0 0.0
    %6454 = vmatprep.subr.mxu0 0.0
    %6455 = vmatpush1.msra.mxu0 0.0
    %6456 = vmatprep.subr.mxu0 0.0
    %6457 = vmatpush1.msra.mxu0 0.0
    %6458 = vmatprep.subr.mxu0 0.0
    %6459 = vmatpush1.msra.mxu0 0.0
    %6460 = vmatprep.subr.mxu0 0.0
    %6461 = vmatpush1.msra.mxu0 0.0
    %6462 = vmatprep.subr.mxu0 0.0
    %6463 = vmatpush1.msra.mxu0 0.0
    %6464 = vmatprep.subr.mxu0 0.0
    %6465 = vmatpush1.msra.mxu0 0.0
    %6466 = vmatprep.mubr.f32.mxu0 0.0
    %6467 = vmatmul.mubr.f32.gmra.mrb[0].mxu0 %v6400
    %v6468 = vpop.f32.mrb[0].mxu0
    %v6469 = vadd.f32 0.0, %v6468
    %v6470 = vpop.f32.mrb[0].mxu0
    %6471 = vdwg.mxu0
    %v6472 = vsel %vm4068, %v3785, 0
    %6474 = vmatprep.subr.mxu0 0.0
    %6475 = vmatpush1.msra.mxu0 %v6256
    %6476 = vmatprep.subr.mxu0 0.0
    %6477 = vmatpush1.msra.mxu0 0.0
    %6478 = vmatprep.subr.mxu0 0.0
    %6479 = vmatpush1.msra.mxu0 0.0
    %6480 = vmatprep.subr.mxu0 0.0
    %6481 = vmatpush1.msra.mxu0 0.0
    %6482 = vmatprep.subr.mxu0 0.0
    %6483 = vmatpush1.msra.mxu0 0.0
    %6484 = vmatprep.subr.mxu0 0.0
    %6485 = vmatpush1.msra.mxu0 0.0
    %6486 = vmatprep.subr.mxu0 0.0
    %6487 = vmatpush1.msra.mxu0 0.0
    %6488 = vmatprep.subr.mxu0 0.0
    %6489 = vmatpush1.msra.mxu0 0.0
    %6490 = vmatprep.subr.mxu0 0.0
    %6491 = vmatpush1.msra.mxu0 0.0
    %6492 = vmatprep.subr.mxu0 0.0
    %6493 = vmatpush1.msra.mxu0 0.0
    %6494 = vmatprep.subr.mxu0 0.0
    %6495 = vmatpush1.msra.mxu0 0.0
    %6496 = vmatprep.subr.mxu0 0.0
    %6497 = vmatpush1.msra.mxu0 0.0
    %6498 = vmatprep.subr.mxu0 0.0
    %6499 = vmatpush1.msra.mxu0 0.0
    %6500 = vmatprep.subr.mxu0 0.0
    %6501 = vmatpush1.msra.mxu0 0.0
    %6502 = vmatprep.subr.mxu0 0.0
    %6503 = vmatpush1.msra.mxu0 0.0
    %6504 = vmatprep.subr.mxu0 0.0
    %6505 = vmatpush1.msra.mxu0 0.0
    %6506 = vmatprep.subr.mxu0 0.0
    %6507 = vmatpush1.msra.mxu0 0.0
    %6508 = vmatprep.subr.mxu0 0.0
    %6509 = vmatpush1.msra.mxu0 0.0
    %6510 = vmatprep.subr.mxu0 0.0
    %6511 = vmatpush1.msra.mxu0 0.0
    %6512 = vmatprep.subr.mxu0 0.0
    %6513 = vmatpush1.msra.mxu0 0.0
    %6514 = vmatprep.subr.mxu0 0.0
    %6515 = vmatpush1.msra.mxu0 0.0
    %6516 = vmatprep.subr.mxu0 0.0
    %6517 = vmatpush1.msra.mxu0 0.0
    %6518 = vmatprep.subr.mxu0 0.0
    %6519 = vmatpush1.msra.mxu0 0.0
    %6520 = vmatprep.subr.mxu0 0.0
    %6521 = vmatpush1.msra.mxu0 0.0
    %6522 = vmatprep.subr.mxu0 0.0
    %6523 = vmatpush1.msra.mxu0 0.0
    %6524 = vmatprep.subr.mxu0 0.0
    %6525 = vmatpush1.msra.mxu0 0.0
    %6526 = vmatprep.subr.mxu0 0.0
    %6527 = vmatpush1.msra.mxu0 0.0
    %6528 = vmatprep.subr.mxu0 0.0
    %6529 = vmatpush1.msra.mxu0 0.0
    %6530 = vmatprep.subr.mxu0 0.0
    %6531 = vmatpush1.msra.mxu0 0.0
    %6532 = vmatprep.subr.mxu0 0.0
    %6533 = vmatpush1.msra.mxu0 0.0
    %6534 = vmatprep.subr.mxu0 0.0
    %6535 = vmatpush1.msra.mxu0 0.0
    %6536 = vmatprep.subr.mxu0 0.0
    %6537 = vmatpush1.msra.mxu0 0.0
    %6538 = vmatprep.mubr.f32.mxu0 0.0
    %6539 = vmatmul.mubr.f32.gmra.mrb[0].mxu0 %v6472
    %v6540 = vpop.f32.mrb[0].mxu0
    %v6541 = vadd.f32 0.0, %v6540
    %v6542 = vpop.f32.mrb[0].mxu0
    %6543 = vdwg.mxu0
    %v6544 = vsel %vm4068, %v3855, 0
    %6546 = vmatprep.subr.mxu0 0.0
    %6547 = vmatpush1.msra.mxu0 %v6256
    %6548 = vmatprep.subr.mxu0 0.0
    %6549 = vmatpush1.msra.mxu0 0.0
    %6550 = vmatprep.subr.mxu0 0.0
    %6551 = vmatpush1.msra.mxu0 0.0
    %6552 = vmatprep.subr.mxu0 0.0
    %6553 = vmatpush1.msra.mxu0 0.0
    %6554 = vmatprep.subr.mxu0 0.0
    %6555 = vmatpush1.msra.mxu0 0.0
    %6556 = vmatprep.subr.mxu0 0.0
    %6557 = vmatpush1.msra.mxu0 0.0
    %6558 = vmatprep.subr.mxu0 0.0
    %6559 = vmatpush1.msra.mxu0 0.0
    %6560 = vmatprep.subr.mxu0 0.0
    %6561 = vmatpush1.msra.mxu0 0.0
    %6562 = vmatprep.subr.mxu0 0.0
    %6563 = vmatpush1.msra.mxu0 0.0
    %6564 = vmatprep.subr.mxu0 0.0
    %6565 = vmatpush1.msra.mxu0 0.0
    %6566 = vmatprep.subr.mxu0 0.0
    %6567 = vmatpush1.msra.mxu0 0.0
    %6568 = vmatprep.subr.mxu0 0.0
    %6569 = vmatpush1.msra.mxu0 0.0
    %6570 = vmatprep.subr.mxu0 0.0
    %6571 = vmatpush1.msra.mxu0 0.0
    %6572 = vmatprep.subr.mxu0 0.0
    %6573 = vmatpush1.msra.mxu0 0.0
    %6574 = vmatprep.subr.mxu0 0.0
    %6575 = vmatpush1.msra.mxu0 0.0
    %6576 = vmatprep.subr.mxu0 0.0
    %6577 = vmatpush1.msra.mxu0 0.0
    %6578 = vmatprep.subr.mxu0 0.0
    %6579 = vmatpush1.msra.mxu0 0.0
    %6580 = vmatprep.subr.mxu0 0.0
    %6581 = vmatpush1.msra.mxu0 0.0
    %6582 = vmatprep.subr.mxu0 0.0
    %6583 = vmatpush1.msra.mxu0 0.0
    %6584 = vmatprep.subr.mxu0 0.0
    %6585 = vmatpush1.msra.mxu0 0.0
    %6586 = vmatprep.subr.mxu0 0.0
    %6587 = vmatpush1.msra.mxu0 0.0
    %6588 = vmatprep.subr.mxu0 0.0
    %6589 = vmatpush1.msra.mxu0 0.0
    %6590 = vmatprep.subr.mxu0 0.0
    %6591 = vmatpush1.msra.mxu0 0.0
    %6592 = vmatprep.subr.mxu0 0.0
    %6593 = vmatpush1.msra.mxu0 0.0
    %6594 = vmatprep.subr.mxu0 0.0
    %6595 = vmatpush1.msra.mxu0 0.0
    %6596 = vmatprep.subr.mxu0 0.0
    %6597 = vmatpush1.msra.mxu0 0.0
    %6598 = vmatprep.subr.mxu0 0.0
    %6599 = vmatpush1.msra.mxu0 0.0
    %6600 = vmatprep.subr.mxu0 0.0
    %6601 = vmatpush1.msra.mxu0 0.0
    %6602 = vmatprep.subr.mxu0 0.0
    %6603 = vmatpush1.msra.mxu0 0.0
    %6604 = vmatprep.subr.mxu0 0.0
    %6605 = vmatpush1.msra.mxu0 0.0
    %6606 = vmatprep.subr.mxu0 0.0
    %6607 = vmatpush1.msra.mxu0 0.0
    %6608 = vmatprep.subr.mxu0 0.0
    %6609 = vmatpush1.msra.mxu0 0.0
    %6610 = vmatprep.mubr.f32.mxu0 0.0
    %6611 = vmatmul.mubr.f32.gmra.mrb[0].mxu0 %v6544
    %v6612 = vpop.f32.mrb[0].mxu0
    %v6613 = vadd.f32 0.0, %v6612
    %v6614 = vpop.f32.mrb[0].mxu0
    %6615 = vdwg.mxu0
    %v6616 = vsel %vm4068, %v3925, 0
    %6618 = vmatprep.subr.mxu0 0.0
    %6619 = vmatpush1.msra.mxu0 %v6256
    %6620 = vmatprep.subr.mxu0 0.0
    %6621 = vmatpush1.msra.mxu0 0.0
    %6622 = vmatprep.subr.mxu0 0.0
    %6623 = vmatpush1.msra.mxu0 0.0
    %6624 = vmatprep.subr.mxu0 0.0
    %6625 = vmatpush1.msra.mxu0 0.0
    %6626 = vmatprep.subr.mxu0 0.0
    %6627 = vmatpush1.msra.mxu0 0.0
    %6628 = vmatprep.subr.mxu0 0.0
    %6629 = vmatpush1.msra.mxu0 0.0
    %6630 = vmatprep.subr.mxu0 0.0
    %6631 = vmatpush1.msra.mxu0 0.0
    %6632 = vmatprep.subr.mxu0 0.0
    %6633 = vmatpush1.msra.mxu0 0.0
    %6634 = vmatprep.subr.mxu0 0.0
    %6635 = vmatpush1.msra.mxu0 0.0
    %6636 = vmatprep.subr.mxu0 0.0
    %6637 = vmatpush1.msra.mxu0 0.0
    %6638 = vmatprep.subr.mxu0 0.0
    %6639 = vmatpush1.msra.mxu0 0.0
    %6640 = vmatprep.subr.mxu0 0.0
    %6641 = vmatpush1.msra.mxu0 0.0
    %6642 = vmatprep.subr.mxu0 0.0
    %6643 = vmatpush1.msra.mxu0 0.0
    %6644 = vmatprep.subr.mxu0 0.0
    %6645 = vmatpush1.msra.mxu0 0.0
    %6646 = vmatprep.subr.mxu0 0.0
    %6647 = vmatpush1.msra.mxu0 0.0
    %6648 = vmatprep.subr.mxu0 0.0
    %6649 = vmatpush1.msra.mxu0 0.0
    %6650 = vmatprep.subr.mxu0 0.0
    %6651 = vmatpush1.msra.mxu0 0.0
    %6652 = vmatprep.subr.mxu0 0.0
    %6653 = vmatpush1.msra.mxu0 0.0
    %6654 = vmatprep.subr.mxu0 0.0
    %6655 = vmatpush1.msra.mxu0 0.0
    %6656 = vmatprep.subr.mxu0 0.0
    %6657 = vmatpush1.msra.mxu0 0.0
    %6658 = vmatprep.subr.mxu0 0.0
    %6659 = vmatpush1.msra.mxu0 0.0
    %6660 = vmatprep.subr.mxu0 0.0
    %6661 = vmatpush1.msra.mxu0 0.0
    %6662 = vmatprep.subr.mxu0 0.0
    %6663 = vmatpush1.msra.mxu0 0.0
    %6664 = vmatprep.subr.mxu0 0.0
    %6665 = vmatpush1.msra.mxu0 0.0
    %6666 = vmatprep.subr.mxu0 0.0
    %6667 = vmatpush1.msra.mxu0 0.0
    %6668 = vmatprep.subr.mxu0 0.0
    %6669 = vmatpush1.msra.mxu0 0.0
    %6670 = vmatprep.subr.mxu0 0.0
    %6671 = vmatpush1.msra.mxu0 0.0
    %6672 = vmatprep.subr.mxu0 0.0
    %6673 = vmatpush1.msra.mxu0 0.0
    %6674 = vmatprep.subr.mxu0 0.0
    %6675 = vmatpush1.msra.mxu0 0.0
    %6676 = vmatprep.subr.mxu0 0.0
    %6677 = vmatpush1.msra.mxu0 0.0
    %6678 = vmatprep.subr.mxu0 0.0
    %6679 = vmatpush1.msra.mxu0 0.0
    %6680 = vmatprep.subr.mxu0 0.0
    %6681 = vmatpush1.msra.mxu0 0.0
    %6682 = vmatprep.mubr.f32.mxu0 0.0
    %6683 = vmatmul.mubr.f32.gmra.mrb[0].mxu0 %v6616
    %v6684 = vpop.f32.mrb[0].mxu0
    %v6685 = vadd.f32 0.0, %v6684
    %v6686 = vpop.f32.mrb[0].mxu0
    %6687 = vdwg.mxu0
    %v6688 = vsel %vm4068, %v3995, 0
    %6690 = vmatprep.subr.mxu0 0.0
    %6691 = vmatpush1.msra.mxu0 %v6256
    %6692 = vmatprep.subr.mxu0 0.0
    %6693 = vmatpush1.msra.mxu0 0.0
    %6694 = vmatprep.subr.mxu0 0.0
    %6695 = vmatpush1.msra.mxu0 0.0
    %6696 = vmatprep.subr.mxu0 0.0
    %6697 = vmatpush1.msra.mxu0 0.0
    %6698 = vmatprep.subr.mxu0 0.0
    %6699 = vmatpush1.msra.mxu0 0.0
    %6700 = vmatprep.subr.mxu0 0.0
    %6701 = vmatpush1.msra.mxu0 0.0
    %6702 = vmatprep.subr.mxu0 0.0
    %6703 = vmatpush1.msra.mxu0 0.0
    %6704 = vmatprep.subr.mxu0 0.0
    %6705 = vmatpush1.msra.mxu0 0.0
    %6706 = vmatprep.subr.mxu0 0.0
    %6707 = vmatpush1.msra.mxu0 0.0
    %6708 = vmatprep.subr.mxu0 0.0
    %6709 = vmatpush1.msra.mxu0 0.0
    %6710 = vmatprep.subr.mxu0 0.0
    %6711 = vmatpush1.msra.mxu0 0.0
    %6712 = vmatprep.subr.mxu0 0.0
    %6713 = vmatpush1.msra.mxu0 0.0
    %6714 = vmatprep.subr.mxu0 0.0
    %6715 = vmatpush1.msra.mxu0 0.0
    %6716 = vmatprep.subr.mxu0 0.0
    %6717 = vmatpush1.msra.mxu0 0.0
    %6718 = vmatprep.subr.mxu0 0.0
    %6719 = vmatpush1.msra.mxu0 0.0
    %6720 = vmatprep.subr.mxu0 0.0
    %6721 = vmatpush1.msra.mxu0 0.0
    %6722 = vmatprep.subr.mxu0 0.0
    %6723 = vmatpush1.msra.mxu0 0.0
    %6724 = vmatprep.subr.mxu0 0.0
    %6725 = vmatpush1.msra.mxu0 0.0
    %6726 = vmatprep.subr.mxu0 0.0
    %6727 = vmatpush1.msra.mxu0 0.0
    %6728 = vmatprep.subr.mxu0 0.0
    %6729 = vmatpush1.msra.mxu0 0.0
    %6730 = vmatprep.subr.mxu0 0.0
    %6731 = vmatpush1.msra.mxu0 0.0
    %6732 = vmatprep.subr.mxu0 0.0
    %6733 = vmatpush1.msra.mxu0 0.0
    %6734 = vmatprep.subr.mxu0 0.0
    %6735 = vmatpush1.msra.mxu0 0.0
    %6736 = vmatprep.subr.mxu0 0.0
    %6737 = vmatpush1.msra.mxu0 0.0
    %6738 = vmatprep.subr.mxu0 0.0
    %6739 = vmatpush1.msra.mxu0 0.0
    %6740 = vmatprep.subr.mxu0 0.0
    %6741 = vmatpush1.msra.mxu0 0.0
    %6742 = vmatprep.subr.mxu0 0.0
    %6743 = vmatpush1.msra.mxu0 0.0
    %6744 = vmatprep.subr.mxu0 0.0
    %6745 = vmatpush1.msra.mxu0 0.0
    %6746 = vmatprep.subr.mxu0 0.0
    %6747 = vmatpush1.msra.mxu0 0.0
    %6748 = vmatprep.subr.mxu0 0.0
    %6749 = vmatpush1.msra.mxu0 0.0
    %6750 = vmatprep.subr.mxu0 0.0
    %6751 = vmatpush1.msra.mxu0 0.0
    %6752 = vmatprep.subr.mxu0 0.0
    %6753 = vmatpush1.msra.mxu0 0.0
    %6754 = vmatprep.mubr.f32.mxu0 0.0
    %6755 = vmatmul.mubr.f32.gmra.mrb[0].mxu0 %v6688
    %v6756 = vpop.f32.mrb[0].mxu0
    %v6757 = vadd.f32 0.0, %v6756
    %v6758 = vpop.f32.mrb[0].mxu0
    %6759 = vdwg.mxu0
    %v6760 = vsel %vm4068, %v4065, 0
    %6762 = vmatprep.subr.mxu0 0.0
    %6763 = vmatpush1.msra.mxu0 %v6256
    %6764 = vmatprep.subr.mxu0 0.0
    %6765 = vmatpush1.msra.mxu0 0.0
    %6766 = vmatprep.subr.mxu0 0.0
    %6767 = vmatpush1.msra.mxu0 0.0
    %6768 = vmatprep.subr.mxu0 0.0
    %6769 = vmatpush1.msra.mxu0 0.0
    %6770 = vmatprep.subr.mxu0 0.0
    %6771 = vmatpush1.msra.mxu0 0.0
    %6772 = vmatprep.subr.mxu0 0.0
    %6773 = vmatpush1.msra.mxu0 0.0
    %6774 = vmatprep.subr.mxu0 0.0
    %6775 = vmatpush1.msra.mxu0 0.0
    %6776 = vmatprep.subr.mxu0 0.0
    %6777 = vmatpush1.msra.mxu0 0.0
    %6778 = vmatprep.subr.mxu0 0.0
    %6779 = vmatpush1.msra.mxu0 0.0
    %6780 = vmatprep.subr.mxu0 0.0
    %6781 = vmatpush1.msra.mxu0 0.0
    %6782 = vmatprep.subr.mxu0 0.0
    %6783 = vmatpush1.msra.mxu0 0.0
    %6784 = vmatprep.subr.mxu0 0.0
    %6785 = vmatpush1.msra.mxu0 0.0
    %6786 = vmatprep.subr.mxu0 0.0
    %6787 = vmatpush1.msra.mxu0 0.0
    %6788 = vmatprep.subr.mxu0 0.0
    %6789 = vmatpush1.msra.mxu0 0.0
    %6790 = vmatprep.subr.mxu0 0.0
    %6791 = vmatpush1.msra.mxu0 0.0
    %6792 = vmatprep.subr.mxu0 0.0
    %6793 = vmatpush1.msra.mxu0 0.0
    %6794 = vmatprep.subr.mxu0 0.0
    %6795 = vmatpush1.msra.mxu0 0.0
    %6796 = vmatprep.subr.mxu0 0.0
    %6797 = vmatpush1.msra.mxu0 0.0
    %6798 = vmatprep.subr.mxu0 0.0
    %6799 = vmatpush1.msra.mxu0 0.0
    %6800 = vmatprep.subr.mxu0 0.0
    %6801 = vmatpush1.msra.mxu0 0.0
    %6802 = vmatprep.subr.mxu0 0.0
    %6803 = vmatpush1.msra.mxu0 0.0
    %6804 = vmatprep.subr.mxu0 0.0
    %6805 = vmatpush1.msra.mxu0 0.0
    %6806 = vmatprep.subr.mxu0 0.0
    %6807 = vmatpush1.msra.mxu0 0.0
    %6808 = vmatprep.subr.mxu0 0.0
    %6809 = vmatpush1.msra.mxu0 0.0
    %6810 = vmatprep.subr.mxu0 0.0
    %6811 = vmatpush1.msra.mxu0 0.0
    %6812 = vmatprep.subr.mxu0 0.0
    %6813 = vmatpush1.msra.mxu0 0.0
    %6814 = vmatprep.subr.mxu0 0.0
    %6815 = vmatpush1.msra.mxu0 0.0
    %6816 = vmatprep.subr.mxu0 0.0
    %6817 = vmatpush1.msra.mxu0 0.0
    %6818 = vmatprep.subr.mxu0 0.0
    %6819 = vmatpush1.msra.mxu0 0.0
    %6820 = vmatprep.subr.mxu0 0.0
    %6821 = vmatpush1.msra.mxu0 0.0
    %6822 = vmatprep.subr.mxu0 0.0
    %6823 = vmatpush1.msra.mxu0 0.0
    %6824 = vmatprep.subr.mxu0 0.0
    %6825 = vmatpush1.msra.mxu0 0.0
    %6826 = vmatprep.mubr.f32.mxu0 0.0
    %6827 = vmatmul.mubr.f32.gmra.mrb[0].mxu0 %v6760
    %v6828 = vpop.f32.mrb[0].mxu0
    %v6829 = vadd.f32 0.0, %v6828
    %v6830 = vpop.f32.mrb[0].mxu0
    %6831 = vdwg.mxu0
    %v6833 = vsel %vm4068, %v6249, 0
    %v6836 = vsel %vm4072, %v6325, 0
    %6838 = vmatprep.subr.mxu0 0.0
    %6839 = vmatpush1.msra.mxu0 %v6836
    %6840 = vmatprep.subr.mxu0 0.0
    %6841 = vmatpush1.msra.mxu0 0.0
    %6842 = vmatprep.subr.mxu0 0.0
    %6843 = vmatpush1.msra.mxu0 0.0
    %6844 = vmatprep.subr.mxu0 0.0
    %6845 = vmatpush1.msra.mxu0 0.0
    %6846 = vmatprep.subr.mxu0 0.0
    %6847 = vmatpush1.msra.mxu0 0.0
    %6848 = vmatprep.subr.mxu0 0.0
    %6849 = vmatpush1.msra.mxu0 0.0
    %6850 = vmatprep.subr.mxu0 0.0
    %6851 = vmatpush1.msra.mxu0 0.0
    %6852 = vmatprep.subr.mxu0 0.0
    %6853 = vmatpush1.msra.mxu0 0.0
    %6854 = vmatprep.subr.mxu0 0.0
    %6855 = vmatpush1.msra.mxu0 0.0
    %6856 = vmatprep.subr.mxu0 0.0
    %6857 = vmatpush1.msra.mxu0 0.0
    %6858 = vmatprep.subr.mxu0 0.0
    %6859 = vmatpush1.msra.mxu0 0.0
    %6860 = vmatprep.subr.mxu0 0.0
    %6861 = vmatpush1.msra.mxu0 0.0
    %6862 = vmatprep.subr.mxu0 0.0
    %6863 = vmatpush1.msra.mxu0 0.0
    %6864 = vmatprep.subr.mxu0 0.0
    %6865 = vmatpush1.msra.mxu0 0.0
    %6866 = vmatprep.subr.mxu0 0.0
    %6867 = vmatpush1.msra.mxu0 0.0
    %6868 = vmatprep.subr.mxu0 0.0
    %6869 = vmatpush1.msra.mxu0 0.0
    %6870 = vmatprep.subr.mxu0 0.0
    %6871 = vmatpush1.msra.mxu0 0.0
    %6872 = vmatprep.subr.mxu0 0.0
    %6873 = vmatpush1.msra.mxu0 0.0
    %6874 = vmatprep.subr.mxu0 0.0
    %6875 = vmatpush1.msra.mxu0 0.0
    %6876 = vmatprep.subr.mxu0 0.0
    %6877 = vmatpush1.msra.mxu0 0.0
    %6878 = vmatprep.subr.mxu0 0.0
    %6879 = vmatpush1.msra.mxu0 0.0
    %6880 = vmatprep.subr.mxu0 0.0
    %6881 = vmatpush1.msra.mxu0 0.0
    %6882 = vmatprep.subr.mxu0 0.0
    %6883 = vmatpush1.msra.mxu0 0.0
    %6884 = vmatprep.subr.mxu0 0.0
    %6885 = vmatpush1.msra.mxu0 0.0
    %6886 = vmatprep.subr.mxu0 0.0
    %6887 = vmatpush1.msra.mxu0 0.0
    %6888 = vmatprep.subr.mxu0 0.0
    %6889 = vmatpush1.msra.mxu0 0.0
    %6890 = vmatprep.subr.mxu0 0.0
    %6891 = vmatpush1.msra.mxu0 0.0
    %6892 = vmatprep.subr.mxu0 0.0
    %6893 = vmatpush1.msra.mxu0 0.0
    %6894 = vmatprep.subr.mxu0 0.0
    %6895 = vmatpush1.msra.mxu0 0.0
    %6896 = vmatprep.subr.mxu0 0.0
    %6897 = vmatpush1.msra.mxu0 0.0
    %6898 = vmatprep.subr.mxu0 0.0
    %6899 = vmatpush1.msra.mxu0 0.0
    %6900 = vmatprep.subr.mxu0 0.0
    %6901 = vmatpush1.msra.mxu0 0.0
    %6902 = vmatprep.mubr.f32.mxu0 0.0
    %6903 = vmatmul.mubr.f32.gmra.mrb[0].mxu0 %v6833
    %v6904 = vpop.f32.mrb[0].mxu0
    %v6905 = vadd.f32 0.0, %v6904
    %v6906 = vpop.f32.mrb[0].mxu0
    %6907 = vdwg.mxu0
    %v6909 = vsel %vm4072, %v6397, 0
    %6911 = vmatprep.subr.mxu0 0.0
    %6912 = vmatpush1.msra.mxu0 %v6909
    %6913 = vmatprep.subr.mxu0 0.0
    %6914 = vmatpush1.msra.mxu0 0.0
    %6915 = vmatprep.subr.mxu0 0.0
    %6916 = vmatpush1.msra.mxu0 0.0
    %6917 = vmatprep.subr.mxu0 0.0
    %6918 = vmatpush1.msra.mxu0 0.0
    %6919 = vmatprep.subr.mxu0 0.0
    %6920 = vmatpush1.msra.mxu0 0.0
    %6921 = vmatprep.subr.mxu0 0.0
    %6922 = vmatpush1.msra.mxu0 0.0
    %6923 = vmatprep.subr.mxu0 0.0
    %6924 = vmatpush1.msra.mxu0 0.0
    %6925 = vmatprep.subr.mxu0 0.0
    %6926 = vmatpush1.msra.mxu0 0.0
    %6927 = vmatprep.subr.mxu0 0.0
    %6928 = vmatpush1.msra.mxu0 0.0
    %6929 = vmatprep.subr.mxu0 0.0
    %6930 = vmatpush1.msra.mxu0 0.0
    %6931 = vmatprep.subr.mxu0 0.0
    %6932 = vmatpush1.msra.mxu0 0.0
    %6933 = vmatprep.subr.mxu0 0.0
    %6934 = vmatpush1.msra.mxu0 0.0
    %6935 = vmatprep.subr.mxu0 0.0
    %6936 = vmatpush1.msra.mxu0 0.0
    %6937 = vmatprep.subr.mxu0 0.0
    %6938 = vmatpush1.msra.mxu0 0.0
    %6939 = vmatprep.subr.mxu0 0.0
    %6940 = vmatpush1.msra.mxu0 0.0
    %6941 = vmatprep.subr.mxu0 0.0
    %6942 = vmatpush1.msra.mxu0 0.0
    %6943 = vmatprep.subr.mxu0 0.0
    %6944 = vmatpush1.msra.mxu0 0.0
    %6945 = vmatprep.subr.mxu0 0.0
    %6946 = vmatpush1.msra.mxu0 0.0
    %6947 = vmatprep.subr.mxu0 0.0
    %6948 = vmatpush1.msra.mxu0 0.0
    %6949 = vmatprep.subr.mxu0 0.0
    %6950 = vmatpush1.msra.mxu0 0.0
    %6951 = vmatprep.subr.mxu0 0.0
    %6952 = vmatpush1.msra.mxu0 0.0
    %6953 = vmatprep.subr.mxu0 0.0
    %6954 = vmatpush1.msra.mxu0 0.0
    %6955 = vmatprep.subr.mxu0 0.0
    %6956 = vmatpush1.msra.mxu0 0.0
    %6957 = vmatprep.subr.mxu0 0.0
    %6958 = vmatpush1.msra.mxu0 0.0
    %6959 = vmatprep.subr.mxu0 0.0
    %6960 = vmatpush1.msra.mxu0 0.0
    %6961 = vmatprep.subr.mxu0 0.0
    %6962 = vmatpush1.msra.mxu0 0.0
    %6963 = vmatprep.subr.mxu0 0.0
    %6964 = vmatpush1.msra.mxu0 0.0
    %6965 = vmatprep.subr.mxu0 0.0
    %6966 = vmatpush1.msra.mxu0 0.0
    %6967 = vmatprep.subr.mxu0 0.0
    %6968 = vmatpush1.msra.mxu0 0.0
    %6969 = vmatprep.subr.mxu0 0.0
    %6970 = vmatpush1.msra.mxu0 0.0
    %6971 = vmatprep.subr.mxu0 0.0
    %6972 = vmatpush1.msra.mxu0 0.0
    %6973 = vmatprep.subr.mxu0 0.0
    %6974 = vmatpush1.msra.mxu0 0.0
    %6975 = vmatprep.mubr.f32.mxu0 0.0
    %6976 = vmatmul.mubr.f32.gmra.mrb[0].mxu0 %v6833
    %v6977 = vpop.f32.mrb[0].mxu0
    %v6978 = vadd.f32 0.0, %v6977
    %v6979 = vpop.f32.mrb[0].mxu0
    %6980 = vdwg.mxu0
    %v6982 = vsel %vm4072, %v6469, 0
    %6984 = vmatprep.subr.mxu0 0.0
    %6985 = vmatpush1.msra.mxu0 %v6982
    %6986 = vmatprep.subr.mxu0 0.0
    %6987 = vmatpush1.msra.mxu0 0.0
    %6988 = vmatprep.subr.mxu0 0.0
    %6989 = vmatpush1.msra.mxu0 0.0
    %6990 = vmatprep.subr.mxu0 0.0
    %6991 = vmatpush1.msra.mxu0 0.0
    %6992 = vmatprep.subr.mxu0 0.0
    %6993 = vmatpush1.msra.mxu0 0.0
    %6994 = vmatprep.subr.mxu0 0.0
    %6995 = vmatpush1.msra.mxu0 0.0
    %6996 = vmatprep.subr.mxu0 0.0
    %6997 = vmatpush1.msra.mxu0 0.0
    %6998 = vmatprep.subr.mxu0 0.0
    %6999 = vmatpush1.msra.mxu0 0.0
    %7000 = vmatprep.subr.mxu0 0.0
    %7001 = vmatpush1.msra.mxu0 0.0
    %7002 = vmatprep.subr.mxu0 0.0
    %7003 = vmatpush1.msra.mxu0 0.0
    %7004 = vmatprep.subr.mxu0 0.0
    %7005 = vmatpush1.msra.mxu0 0.0
    %7006 = vmatprep.subr.mxu0 0.0
    %7007 = vmatpush1.msra.mxu0 0.0
    %7008 = vmatprep.subr.mxu0 0.0
    %7009 = vmatpush1.msra.mxu0 0.0
    %7010 = vmatprep.subr.mxu0 0.0
    %7011 = vmatpush1.msra.mxu0 0.0
    %7012 = vmatprep.subr.mxu0 0.0
    %7013 = vmatpush1.msra.mxu0 0.0
    %7014 = vmatprep.subr.mxu0 0.0
    %7015 = vmatpush1.msra.mxu0 0.0
    %7016 = vmatprep.subr.mxu0 0.0
    %7017 = vmatpush1.msra.mxu0 0.0
    %7018 = vmatprep.subr.mxu0 0.0
    %7019 = vmatpush1.msra.mxu0 0.0
    %7020 = vmatprep.subr.mxu0 0.0
    %7021 = vmatpush1.msra.mxu0 0.0
    %7022 = vmatprep.subr.mxu0 0.0
    %7023 = vmatpush1.msra.mxu0 0.0
    %7024 = vmatprep.subr.mxu0 0.0
    %7025 = vmatpush1.msra.mxu0 0.0
    %7026 = vmatprep.subr.mxu0 0.0
    %7027 = vmatpush1.msra.mxu0 0.0
    %7028 = vmatprep.subr.mxu0 0.0
    %7029 = vmatpush1.msra.mxu0 0.0
    %7030 = vmatprep.subr.mxu0 0.0
    %7031 = vmatpush1.msra.mxu0 0.0
    %7032 = vmatprep.subr.mxu0 0.0
    %7033 = vmatpush1.msra.mxu0 0.0
    %7034 = vmatprep.subr.mxu0 0.0
    %7035 = vmatpush1.msra.mxu0 0.0
    %7036 = vmatprep.subr.mxu0 0.0
    %7037 = vmatpush1.msra.mxu0 0.0
    %7038 = vmatprep.subr.mxu0 0.0
    %7039 = vmatpush1.msra.mxu0 0.0
    %7040 = vmatprep.subr.mxu0 0.0
    %7041 = vmatpush1.msra.mxu0 0.0
    %7042 = vmatprep.subr.mxu0 0.0
    %7043 = vmatpush1.msra.mxu0 0.0
    %7044 = vmatprep.subr.mxu0 0.0
    %7045 = vmatpush1.msra.mxu0 0.0
    %7046 = vmatprep.subr.mxu0 0.0
    %7047 = vmatpush1.msra.mxu0 0.0
    %7048 = vmatprep.mubr.f32.mxu0 0.0
    %7049 = vmatmul.mubr.f32.gmra.mrb[0].mxu0 %v6833
    %v7050 = vpop.f32.mrb[0].mxu0
    %v7051 = vadd.f32 0.0, %v7050
    %v7052 = vpop.f32.mrb[0].mxu0
    %7053 = vdwg.mxu0
    %v7055 = vsel %vm4072, %v6541, 0
    %7057 = vmatprep.subr.mxu0 0.0
    %7058 = vmatpush1.msra.mxu0 %v7055
    %7059 = vmatprep.subr.mxu0 0.0
    %7060 = vmatpush1.msra.mxu0 0.0
    %7061 = vmatprep.subr.mxu0 0.0
    %7062 = vmatpush1.msra.mxu0 0.0
    %7063 = vmatprep.subr.mxu0 0.0
    %7064 = vmatpush1.msra.mxu0 0.0
    %7065 = vmatprep.subr.mxu0 0.0
    %7066 = vmatpush1.msra.mxu0 0.0
    %7067 = vmatprep.subr.mxu0 0.0
    %7068 = vmatpush1.msra.mxu0 0.0
    %7069 = vmatprep.subr.mxu0 0.0
    %7070 = vmatpush1.msra.mxu0 0.0
    %7071 = vmatprep.subr.mxu0 0.0
    %7072 = vmatpush1.msra.mxu0 0.0
    %7073 = vmatprep.subr.mxu0 0.0
    %7074 = vmatpush1.msra.mxu0 0.0
    %7075 = vmatprep.subr.mxu0 0.0
    %7076 = vmatpush1.msra.mxu0 0.0
    %7077 = vmatprep.subr.mxu0 0.0
    %7078 = vmatpush1.msra.mxu0 0.0
    %7079 = vmatprep.subr.mxu0 0.0
    %7080 = vmatpush1.msra.mxu0 0.0
    %7081 = vmatprep.subr.mxu0 0.0
    %7082 = vmatpush1.msra.mxu0 0.0
    %7083 = vmatprep.subr.mxu0 0.0
    %7084 = vmatpush1.msra.mxu0 0.0
    %7085 = vmatprep.subr.mxu0 0.0
    %7086 = vmatpush1.msra.mxu0 0.0
    %7087 = vmatprep.subr.mxu0 0.0
    %7088 = vmatpush1.msra.mxu0 0.0
    %7089 = vmatprep.subr.mxu0 0.0
    %7090 = vmatpush1.msra.mxu0 0.0
    %7091 = vmatprep.subr.mxu0 0.0
    %7092 = vmatpush1.msra.mxu0 0.0
    %7093 = vmatprep.subr.mxu0 0.0
    %7094 = vmatpush1.msra.mxu0 0.0
    %7095 = vmatprep.subr.mxu0 0.0
    %7096 = vmatpush1.msra.mxu0 0.0
    %7097 = vmatprep.subr.mxu0 0.0
    %7098 = vmatpush1.msra.mxu0 0.0
    %7099 = vmatprep.subr.mxu0 0.0
    %7100 = vmatpush1.msra.mxu0 0.0
    %7101 = vmatprep.subr.mxu0 0.0
    %7102 = vmatpush1.msra.mxu0 0.0
    %7103 = vmatprep.subr.mxu0 0.0
    %7104 = vmatpush1.msra.mxu0 0.0
    %7105 = vmatprep.subr.mxu0 0.0
    %7106 = vmatpush1.msra.mxu0 0.0
    %7107 = vmatprep.subr.mxu0 0.0
    %7108 = vmatpush1.msra.mxu0 0.0
    %7109 = vmatprep.subr.mxu0 0.0
    %7110 = vmatpush1.msra.mxu0 0.0
    %7111 = vmatprep.subr.mxu0 0.0
    %7112 = vmatpush1.msra.mxu0 0.0
    %7113 = vmatprep.subr.mxu0 0.0
    %7114 = vmatpush1.msra.mxu0 0.0
    %7115 = vmatprep.subr.mxu0 0.0
    %7116 = vmatpush1.msra.mxu0 0.0
    %7117 = vmatprep.subr.mxu0 0.0
    %7118 = vmatpush1.msra.mxu0 0.0
    %7119 = vmatprep.subr.mxu0 0.0
    %7120 = vmatpush1.msra.mxu0 0.0
    %7121 = vmatprep.mubr.f32.mxu0 0.0
    %7122 = vmatmul.mubr.f32.gmra.mrb[0].mxu0 %v6833
    %v7123 = vpop.f32.mrb[0].mxu0
    %v7124 = vadd.f32 0.0, %v7123
    %v7125 = vpop.f32.mrb[0].mxu0
    %7126 = vdwg.mxu0
    %v7128 = vsel %vm4072, %v6613, 0
    %7130 = vmatprep.subr.mxu0 0.0
    %7131 = vmatpush1.msra.mxu0 %v7128
    %7132 = vmatprep.subr.mxu0 0.0
    %7133 = vmatpush1.msra.mxu0 0.0
    %7134 = vmatprep.subr.mxu0 0.0
    %7135 = vmatpush1.msra.mxu0 0.0
    %7136 = vmatprep.subr.mxu0 0.0
    %7137 = vmatpush1.msra.mxu0 0.0
    %7138 = vmatprep.subr.mxu0 0.0
    %7139 = vmatpush1.msra.mxu0 0.0
    %7140 = vmatprep.subr.mxu0 0.0
    %7141 = vmatpush1.msra.mxu0 0.0
    %7142 = vmatprep.subr.mxu0 0.0
    %7143 = vmatpush1.msra.mxu0 0.0
    %7144 = vmatprep.subr.mxu0 0.0
    %7145 = vmatpush1.msra.mxu0 0.0
    %7146 = vmatprep.subr.mxu0 0.0
    %7147 = vmatpush1.msra.mxu0 0.0
    %7148 = vmatprep.subr.mxu0 0.0
    %7149 = vmatpush1.msra.mxu0 0.0
    %7150 = vmatprep.subr.mxu0 0.0
    %7151 = vmatpush1.msra.mxu0 0.0
    %7152 = vmatprep.subr.mxu0 0.0
    %7153 = vmatpush1.msra.mxu0 0.0
    %7154 = vmatprep.subr.mxu0 0.0
    %7155 = vmatpush1.msra.mxu0 0.0
    %7156 = vmatprep.subr.mxu0 0.0
    %7157 = vmatpush1.msra.mxu0 0.0
    %7158 = vmatprep.subr.mxu0 0.0
    %7159 = vmatpush1.msra.mxu0 0.0
    %7160 = vmatprep.subr.mxu0 0.0
    %7161 = vmatpush1.msra.mxu0 0.0
    %7162 = vmatprep.subr.mxu0 0.0
    %7163 = vmatpush1.msra.mxu0 0.0
    %7164 = vmatprep.subr.mxu0 0.0
    %7165 = vmatpush1.msra.mxu0 0.0
    %7166 = vmatprep.subr.mxu0 0.0
    %7167 = vmatpush1.msra.mxu0 0.0
    %7168 = vmatprep.subr.mxu0 0.0
    %7169 = vmatpush1.msra.mxu0 0.0
    %7170 = vmatprep.subr.mxu0 0.0
    %7171 = vmatpush1.msra.mxu0 0.0
    %7172 = vmatprep.subr.mxu0 0.0
    %7173 = vmatpush1.msra.mxu0 0.0
    %7174 = vmatprep.subr.mxu0 0.0
    %7175 = vmatpush1.msra.mxu0 0.0
    %7176 = vmatprep.subr.mxu0 0.0
    %7177 = vmatpush1.msra.mxu0 0.0
    %7178 = vmatprep.subr.mxu0 0.0
    %7179 = vmatpush1.msra.mxu0 0.0
    %7180 = vmatprep.subr.mxu0 0.0
    %7181 = vmatpush1.msra.mxu0 0.0
    %7182 = vmatprep.subr.mxu0 0.0
    %7183 = vmatpush1.msra.mxu0 0.0
    %7184 = vmatprep.subr.mxu0 0.0
    %7185 = vmatpush1.msra.mxu0 0.0
    %7186 = vmatprep.subr.mxu0 0.0
    %7187 = vmatpush1.msra.mxu0 0.0
    %7188 = vmatprep.subr.mxu0 0.0
    %7189 = vmatpush1.msra.mxu0 0.0
    %7190 = vmatprep.subr.mxu0 0.0
    %7191 = vmatpush1.msra.mxu0 0.0
    %7192 = vmatprep.subr.mxu0 0.0
    %7193 = vmatpush1.msra.mxu0 0.0
    %7194 = vmatprep.mubr.f32.mxu0 0.0
    %7195 = vmatmul.mubr.f32.gmra.mrb[0].mxu0 %v6833
    %v7196 = vpop.f32.mrb[0].mxu0
    %v7197 = vadd.f32 0.0, %v7196
    %v7198 = vpop.f32.mrb[0].mxu0
    %7199 = vdwg.mxu0
    %v7201 = vsel %vm4072, %v6685, 0
    %7203 = vmatprep.subr.mxu0 0.0
    %7204 = vmatpush1.msra.mxu0 %v7201
    %7205 = vmatprep.subr.mxu0 0.0
    %7206 = vmatpush1.msra.mxu0 0.0
    %7207 = vmatprep.subr.mxu0 0.0
    %7208 = vmatpush1.msra.mxu0 0.0
    %7209 = vmatprep.subr.mxu0 0.0
    %7210 = vmatpush1.msra.mxu0 0.0
    %7211 = vmatprep.subr.mxu0 0.0
    %7212 = vmatpush1.msra.mxu0 0.0
    %7213 = vmatprep.subr.mxu0 0.0
    %7214 = vmatpush1.msra.mxu0 0.0
    %7215 = vmatprep.subr.mxu0 0.0
    %7216 = vmatpush1.msra.mxu0 0.0
    %7217 = vmatprep.subr.mxu0 0.0
    %7218 = vmatpush1.msra.mxu0 0.0
    %7219 = vmatprep.subr.mxu0 0.0
    %7220 = vmatpush1.msra.mxu0 0.0
    %7221 = vmatprep.subr.mxu0 0.0
    %7222 = vmatpush1.msra.mxu0 0.0
    %7223 = vmatprep.subr.mxu0 0.0
    %7224 = vmatpush1.msra.mxu0 0.0
    %7225 = vmatprep.subr.mxu0 0.0
    %7226 = vmatpush1.msra.mxu0 0.0
    %7227 = vmatprep.subr.mxu0 0.0
    %7228 = vmatpush1.msra.mxu0 0.0
    %7229 = vmatprep.subr.mxu0 0.0
    %7230 = vmatpush1.msra.mxu0 0.0
    %7231 = vmatprep.subr.mxu0 0.0
    %7232 = vmatpush1.msra.mxu0 0.0
    %7233 = vmatprep.subr.mxu0 0.0
    %7234 = vmatpush1.msra.mxu0 0.0
    %7235 = vmatprep.subr.mxu0 0.0
    %7236 = vmatpush1.msra.mxu0 0.0
    %7237 = vmatprep.subr.mxu0 0.0
    %7238 = vmatpush1.msra.mxu0 0.0
    %7239 = vmatprep.subr.mxu0 0.0
    %7240 = vmatpush1.msra.mxu0 0.0
    %7241 = vmatprep.subr.mxu0 0.0
    %7242 = vmatpush1.msra.mxu0 0.0
    %7243 = vmatprep.subr.mxu0 0.0
    %7244 = vmatpush1.msra.mxu0 0.0
    %7245 = vmatprep.subr.mxu0 0.0
    %7246 = vmatpush1.msra.mxu0 0.0
    %7247 = vmatprep.subr.mxu0 0.0
    %7248 = vmatpush1.msra.mxu0 0.0
    %7249 = vmatprep.subr.mxu0 0.0
    %7250 = vmatpush1.msra.mxu0 0.0
    %7251 = vmatprep.subr.mxu0 0.0
    %7252 = vmatpush1.msra.mxu0 0.0
    %7253 = vmatprep.subr.mxu0 0.0
    %7254 = vmatpush1.msra.mxu0 0.0
    %7255 = vmatprep.subr.mxu0 0.0
    %7256 = vmatpush1.msra.mxu0 0.0
    %7257 = vmatprep.subr.mxu0 0.0
    %7258 = vmatpush1.msra.mxu0 0.0
    %7259 = vmatprep.subr.mxu0 0.0
    %7260 = vmatpush1.msra.mxu0 0.0
    %7261 = vmatprep.subr.mxu0 0.0
    %7262 = vmatpush1.msra.mxu0 0.0
    %7263 = vmatprep.subr.mxu0 0.0
    %7264 = vmatpush1.msra.mxu0 0.0
    %7265 = vmatprep.subr.mxu0 0.0
    %7266 = vmatpush1.msra.mxu0 0.0
    %7267 = vmatprep.mubr.f32.mxu0 0.0
    %7268 = vmatmul.mubr.f32.gmra.mrb[0].mxu0 %v6833
    %v7269 = vpop.f32.mrb[0].mxu0
    %v7270 = vadd.f32 0.0, %v7269
    %v7271 = vpop.f32.mrb[0].mxu0
    %7272 = vdwg.mxu0
    %v7274 = vsel %vm4072, %v6757, 0
    %7276 = vmatprep.subr.mxu0 0.0
    %7277 = vmatpush1.msra.mxu0 %v7274
    %7278 = vmatprep.subr.mxu0 0.0
    %7279 = vmatpush1.msra.mxu0 0.0
    %7280 = vmatprep.subr.mxu0 0.0
    %7281 = vmatpush1.msra.mxu0 0.0
    %7282 = vmatprep.subr.mxu0 0.0
    %7283 = vmatpush1.msra.mxu0 0.0
    %7284 = vmatprep.subr.mxu0 0.0
    %7285 = vmatpush1.msra.mxu0 0.0
    %7286 = vmatprep.subr.mxu0 0.0
    %7287 = vmatpush1.msra.mxu0 0.0
    %7288 = vmatprep.subr.mxu0 0.0
    %7289 = vmatpush1.msra.mxu0 0.0
    %7290 = vmatprep.subr.mxu0 0.0
    %7291 = vmatpush1.msra.mxu0 0.0
    %7292 = vmatprep.subr.mxu0 0.0
    %7293 = vmatpush1.msra.mxu0 0.0
    %7294 = vmatprep.subr.mxu0 0.0
    %7295 = vmatpush1.msra.mxu0 0.0
    %7296 = vmatprep.subr.mxu0 0.0
    %7297 = vmatpush1.msra.mxu0 0.0
    %7298 = vmatprep.subr.mxu0 0.0
    %7299 = vmatpush1.msra.mxu0 0.0
    %7300 = vmatprep.subr.mxu0 0.0
    %7301 = vmatpush1.msra.mxu0 0.0
    %7302 = vmatprep.subr.mxu0 0.0
    %7303 = vmatpush1.msra.mxu0 0.0
    %7304 = vmatprep.subr.mxu0 0.0
    %7305 = vmatpush1.msra.mxu0 0.0
    %7306 = vmatprep.subr.mxu0 0.0
    %7307 = vmatpush1.msra.mxu0 0.0
    %7308 = vmatprep.subr.mxu0 0.0
    %7309 = vmatpush1.msra.mxu0 0.0
    %7310 = vmatprep.subr.mxu0 0.0
    %7311 = vmatpush1.msra.mxu0 0.0
    %7312 = vmatprep.subr.mxu0 0.0
    %7313 = vmatpush1.msra.mxu0 0.0
    %7314 = vmatprep.subr.mxu0 0.0
    %7315 = vmatpush1.msra.mxu0 0.0
    %7316 = vmatprep.subr.mxu0 0.0
    %7317 = vmatpush1.msra.mxu0 0.0
    %7318 = vmatprep.subr.mxu0 0.0
    %7319 = vmatpush1.msra.mxu0 0.0
    %7320 = vmatprep.subr.mxu0 0.0
    %7321 = vmatpush1.msra.mxu0 0.0
    %7322 = vmatprep.subr.mxu0 0.0
    %7323 = vmatpush1.msra.mxu0 0.0
    %7324 = vmatprep.subr.mxu0 0.0
    %7325 = vmatpush1.msra.mxu0 0.0
    %7326 = vmatprep.subr.mxu0 0.0
    %7327 = vmatpush1.msra.mxu0 0.0
    %7328 = vmatprep.subr.mxu0 0.0
    %7329 = vmatpush1.msra.mxu0 0.0
    %7330 = vmatprep.subr.mxu0 0.0
    %7331 = vmatpush1.msra.mxu0 0.0
    %7332 = vmatprep.subr.mxu0 0.0
    %7333 = vmatpush1.msra.mxu0 0.0
    %7334 = vmatprep.subr.mxu0 0.0
    %7335 = vmatpush1.msra.mxu0 0.0
    %7336 = vmatprep.subr.mxu0 0.0
    %7337 = vmatpush1.msra.mxu0 0.0
    %7338 = vmatprep.subr.mxu0 0.0
    %7339 = vmatpush1.msra.mxu0 0.0
    %7340 = vmatprep.mubr.f32.mxu0 0.0
    %7341 = vmatmul.mubr.f32.gmra.mrb[0].mxu0 %v6833
    %v7342 = vpop.f32.mrb[0].mxu0
    %v7343 = vadd.f32 0.0, %v7342
    %v7344 = vpop.f32.mrb[0].mxu0
    %7345 = vdwg.mxu0
    %v7347 = vsel %vm4072, %v6829, 0
    %7349 = vmatprep.subr.mxu0 0.0
    %7350 = vmatpush1.msra.mxu0 %v7347
    %7351 = vmatprep.subr.mxu0 0.0
    %7352 = vmatpush1.msra.mxu0 0.0
    %7353 = vmatprep.subr.mxu0 0.0
    %7354 = vmatpush1.msra.mxu0 0.0
    %7355 = vmatprep.subr.mxu0 0.0
    %7356 = vmatpush1.msra.mxu0 0.0
    %7357 = vmatprep.subr.mxu0 0.0
    %7358 = vmatpush1.msra.mxu0 0.0
    %7359 = vmatprep.subr.mxu0 0.0
    %7360 = vmatpush1.msra.mxu0 0.0
    %7361 = vmatprep.subr.mxu0 0.0
    %7362 = vmatpush1.msra.mxu0 0.0
    %7363 = vmatprep.subr.mxu0 0.0
    %7364 = vmatpush1.msra.mxu0 0.0
    %7365 = vmatprep.subr.mxu0 0.0
    %7366 = vmatpush1.msra.mxu0 0.0
    %7367 = vmatprep.subr.mxu0 0.0
    %7368 = vmatpush1.msra.mxu0 0.0
    %7369 = vmatprep.subr.mxu0 0.0
    %7370 = vmatpush1.msra.mxu0 0.0
    %7371 = vmatprep.subr.mxu0 0.0
    %7372 = vmatpush1.msra.mxu0 0.0
    %7373 = vmatprep.subr.mxu0 0.0
    %7374 = vmatpush1.msra.mxu0 0.0
    %7375 = vmatprep.subr.mxu0 0.0
    %7376 = vmatpush1.msra.mxu0 0.0
    %7377 = vmatprep.subr.mxu0 0.0
    %7378 = vmatpush1.msra.mxu0 0.0
    %7379 = vmatprep.subr.mxu0 0.0
    %7380 = vmatpush1.msra.mxu0 0.0
    %7381 = vmatprep.subr.mxu0 0.0
    %7382 = vmatpush1.msra.mxu0 0.0
    %7383 = vmatprep.subr.mxu0 0.0
    %7384 = vmatpush1.msra.mxu0 0.0
    %7385 = vmatprep.subr.mxu0 0.0
    %7386 = vmatpush1.msra.mxu0 0.0
    %7387 = vmatprep.subr.mxu0 0.0
    %7388 = vmatpush1.msra.mxu0 0.0
    %7389 = vmatprep.subr.mxu0 0.0
    %7390 = vmatpush1.msra.mxu0 0.0
    %7391 = vmatprep.subr.mxu0 0.0
    %7392 = vmatpush1.msra.mxu0 0.0
    %7393 = vmatprep.subr.mxu0 0.0
    %7394 = vmatpush1.msra.mxu0 0.0
    %7395 = vmatprep.subr.mxu0 0.0
    %7396 = vmatpush1.msra.mxu0 0.0
    %7397 = vmatprep.subr.mxu0 0.0
    %7398 = vmatpush1.msra.mxu0 0.0
    %7399 = vmatprep.subr.mxu0 0.0
    %7400 = vmatpush1.msra.mxu0 0.0
    %7401 = vmatprep.subr.mxu0 0.0
    %7402 = vmatpush1.msra.mxu0 0.0
    %7403 = vmatprep.subr.mxu0 0.0
    %7404 = vmatpush1.msra.mxu0 0.0
    %7405 = vmatprep.subr.mxu0 0.0
    %7406 = vmatpush1.msra.mxu0 0.0
    %7407 = vmatprep.subr.mxu0 0.0
    %7408 = vmatpush1.msra.mxu0 0.0
    %7409 = vmatprep.subr.mxu0 0.0
    %7410 = vmatpush1.msra.mxu0 0.0
    %7411 = vmatprep.subr.mxu0 0.0
    %7412 = vmatpush1.msra.mxu0 0.0
    %7413 = vmatprep.mubr.f32.mxu0 0.0
    %7414 = vmatmul.mubr.f32.gmra.mrb[0].mxu0 %v6833
    %v7415 = vpop.f32.mrb[0].mxu0
    %v7416 = vadd.f32 0.0, %v7415
    %v7417 = vpop.f32.mrb[0].mxu0
    %7418 = vdwg.mxu0
    %vm7419 = vcmask 15360
    %v7421 = vsel %vm7419, %v6251, 0
    %vm7423 = vcmask 1041408
    %v7425 = vsel %vm7423, %v6905, 0
    %7427 = vmatprep.subr.mxu0 0.0
    %7428 = vmatpush1.msra.mxu0 %v7425
    %7429 = vmatprep.subr.mxu0 0.0
    %7430 = vmatpush1.msra.mxu0 0.0
    %7431 = vmatprep.subr.mxu0 0.0
    %7432 = vmatpush1.msra.mxu0 0.0
    %7433 = vmatprep.subr.mxu0 0.0
    %7434 = vmatpush1.msra.mxu0 0.0
    %7435 = vmatprep.subr.mxu0 0.0
    %7436 = vmatpush1.msra.mxu0 0.0
    %7437 = vmatprep.subr.mxu0 0.0
    %7438 = vmatpush1.msra.mxu0 0.0
    %7439 = vmatprep.subr.mxu0 0.0
    %7440 = vmatpush1.msra.mxu0 0.0
    %7441 = vmatprep.subr.mxu0 0.0
    %7442 = vmatpush1.msra.mxu0 0.0
    %7443 = vmatprep.subr.mxu0 0.0
    %7444 = vmatpush1.msra.mxu0 0.0
    %7445 = vmatprep.subr.mxu0 0.0
    %7446 = vmatpush1.msra.mxu0 0.0
    %7447 = vmatprep.subr.mxu0 0.0
    %7448 = vmatpush1.msra.mxu0 0.0
    %7449 = vmatprep.subr.mxu0 0.0
    %7450 = vmatpush1.msra.mxu0 0.0
    %7451 = vmatprep.subr.mxu0 0.0
    %7452 = vmatpush1.msra.mxu0 0.0
    %7453 = vmatprep.subr.mxu0 0.0
    %7454 = vmatpush1.msra.mxu0 0.0
    %7455 = vmatprep.subr.mxu0 0.0
    %7456 = vmatpush1.msra.mxu0 0.0
    %7457 = vmatprep.subr.mxu0 0.0
    %7458 = vmatpush1.msra.mxu0 0.0
    %7459 = vmatprep.subr.mxu0 0.0
    %7460 = vmatpush1.msra.mxu0 0.0
    %7461 = vmatprep.subr.mxu0 0.0
    %7462 = vmatpush1.msra.mxu0 0.0
    %7463 = vmatprep.subr.mxu0 0.0
    %7464 = vmatpush1.msra.mxu0 0.0
    %7465 = vmatprep.subr.mxu0 0.0
    %7466 = vmatpush1.msra.mxu0 0.0
    %7467 = vmatprep.subr.mxu0 0.0
    %7468 = vmatpush1.msra.mxu0 0.0
    %7469 = vmatprep.subr.mxu0 0.0
    %7470 = vmatpush1.msra.mxu0 0.0
    %7471 = vmatprep.subr.mxu0 0.0
    %7472 = vmatpush1.msra.mxu0 0.0
    %7473 = vmatprep.subr.mxu0 0.0
    %7474 = vmatpush1.msra.mxu0 0.0
    %7475 = vmatprep.subr.mxu0 0.0
    %7476 = vmatpush1.msra.mxu0 0.0
    %7477 = vmatprep.subr.mxu0 0.0
    %7478 = vmatpush1.msra.mxu0 0.0
    %7479 = vmatprep.subr.mxu0 0.0
    %7480 = vmatpush1.msra.mxu0 0.0
    %7481 = vmatprep.subr.mxu0 0.0
    %7482 = vmatpush1.msra.mxu0 0.0
    %7483 = vmatprep.subr.mxu0 0.0
    %7484 = vmatpush1.msra.mxu0 0.0
    %7485 = vmatprep.subr.mxu0 0.0
    %7486 = vmatpush1.msra.mxu0 0.0
    %7487 = vmatprep.subr.mxu0 0.0
    %7488 = vmatpush1.msra.mxu0 0.0
    %7489 = vmatprep.subr.mxu0 0.0
    %7490 = vmatpush1.msra.mxu0 0.0
    %7491 = vmatprep.mubr.f32.mxu0 0.0
    %7492 = vmatmul.mubr.f32.gmra.mrb[0].mxu0 %v7421
    %v7493 = vpop.f32.mrb[0].mxu0
    %v7494 = vadd.f32 0.0, %v7493
    %v7495 = vpop.f32.mrb[0].mxu0
    %7496 = vdwg.mxu0
    %v7498 = vsel %vm7423, %v6978, 0
    %7500 = vmatprep.subr.mxu0 0.0
    %7501 = vmatpush1.msra.mxu0 %v7498
    %7502 = vmatprep.subr.mxu0 0.0
    %7503 = vmatpush1.msra.mxu0 0.0
    %7504 = vmatprep.subr.mxu0 0.0
    %7505 = vmatpush1.msra.mxu0 0.0
    %7506 = vmatprep.subr.mxu0 0.0
    %7507 = vmatpush1.msra.mxu0 0.0
    %7508 = vmatprep.subr.mxu0 0.0
    %7509 = vmatpush1.msra.mxu0 0.0
    %7510 = vmatprep.subr.mxu0 0.0
    %7511 = vmatpush1.msra.mxu0 0.0
    %7512 = vmatprep.subr.mxu0 0.0
    %7513 = vmatpush1.msra.mxu0 0.0
    %7514 = vmatprep.subr.mxu0 0.0
    %7515 = vmatpush1.msra.mxu0 0.0
    %7516 = vmatprep.subr.mxu0 0.0
    %7517 = vmatpush1.msra.mxu0 0.0
    %7518 = vmatprep.subr.mxu0 0.0
    %7519 = vmatpush1.msra.mxu0 0.0
    %7520 = vmatprep.subr.mxu0 0.0
    %7521 = vmatpush1.msra.mxu0 0.0
    %7522 = vmatprep.subr.mxu0 0.0
    %7523 = vmatpush1.msra.mxu0 0.0
    %7524 = vmatprep.subr.mxu0 0.0
    %7525 = vmatpush1.msra.mxu0 0.0
    %7526 = vmatprep.subr.mxu0 0.0
    %7527 = vmatpush1.msra.mxu0 0.0
    %7528 = vmatprep.subr.mxu0 0.0
    %7529 = vmatpush1.msra.mxu0 0.0
    %7530 = vmatprep.subr.mxu0 0.0
    %7531 = vmatpush1.msra.mxu0 0.0
    %7532 = vmatprep.subr.mxu0 0.0
    %7533 = vmatpush1.msra.mxu0 0.0
    %7534 = vmatprep.subr.mxu0 0.0
    %7535 = vmatpush1.msra.mxu0 0.0
    %7536 = vmatprep.subr.mxu0 0.0
    %7537 = vmatpush1.msra.mxu0 0.0
    %7538 = vmatprep.subr.mxu0 0.0
    %7539 = vmatpush1.msra.mxu0 0.0
    %7540 = vmatprep.subr.mxu0 0.0
    %7541 = vmatpush1.msra.mxu0 0.0
    %7542 = vmatprep.subr.mxu0 0.0
    %7543 = vmatpush1.msra.mxu0 0.0
    %7544 = vmatprep.subr.mxu0 0.0
    %7545 = vmatpush1.msra.mxu0 0.0
    %7546 = vmatprep.subr.mxu0 0.0
    %7547 = vmatpush1.msra.mxu0 0.0
    %7548 = vmatprep.subr.mxu0 0.0
    %7549 = vmatpush1.msra.mxu0 0.0
    %7550 = vmatprep.subr.mxu0 0.0
    %7551 = vmatpush1.msra.mxu0 0.0
    %7552 = vmatprep.subr.mxu0 0.0
    %7553 = vmatpush1.msra.mxu0 0.0
    %7554 = vmatprep.subr.mxu0 0.0
    %7555 = vmatpush1.msra.mxu0 0.0
    %7556 = vmatprep.subr.mxu0 0.0
    %7557 = vmatpush1.msra.mxu0 0.0
    %7558 = vmatprep.subr.mxu0 0.0
    %7559 = vmatpush1.msra.mxu0 0.0
    %7560 = vmatprep.subr.mxu0 0.0
    %7561 = vmatpush1.msra.mxu0 0.0
    %7562 = vmatprep.subr.mxu0 0.0
    %7563 = vmatpush1.msra.mxu0 0.0
    %7564 = vmatprep.mubr.f32.mxu0 0.0
    %7565 = vmatmul.mubr.f32.gmra.mrb[0].mxu0 %v7421
    %v7566 = vpop.f32.mrb[0].mxu0
    %v7567 = vadd.f32 0.0, %v7566
    %v7568 = vpop.f32.mrb[0].mxu0
    %7569 = vdwg.mxu0
    %v7571 = vsel %vm7423, %v7051, 0
    %7573 = vmatprep.subr.mxu0 0.0
    %7574 = vmatpush1.msra.mxu0 %v7571
    %7575 = vmatprep.subr.mxu0 0.0
    %7576 = vmatpush1.msra.mxu0 0.0
    %7577 = vmatprep.subr.mxu0 0.0
    %7578 = vmatpush1.msra.mxu0 0.0
    %7579 = vmatprep.subr.mxu0 0.0
    %7580 = vmatpush1.msra.mxu0 0.0
    %7581 = vmatprep.subr.mxu0 0.0
    %7582 = vmatpush1.msra.mxu0 0.0
    %7583 = vmatprep.subr.mxu0 0.0
    %7584 = vmatpush1.msra.mxu0 0.0
    %7585 = vmatprep.subr.mxu0 0.0
    %7586 = vmatpush1.msra.mxu0 0.0
    %7587 = vmatprep.subr.mxu0 0.0
    %7588 = vmatpush1.msra.mxu0 0.0
    %7589 = vmatprep.subr.mxu0 0.0
    %7590 = vmatpush1.msra.mxu0 0.0
    %7591 = vmatprep.subr.mxu0 0.0
    %7592 = vmatpush1.msra.mxu0 0.0
    %7593 = vmatprep.subr.mxu0 0.0
    %7594 = vmatpush1.msra.mxu0 0.0
    %7595 = vmatprep.subr.mxu0 0.0
    %7596 = vmatpush1.msra.mxu0 0.0
    %7597 = vmatprep.subr.mxu0 0.0
    %7598 = vmatpush1.msra.mxu0 0.0
    %7599 = vmatprep.subr.mxu0 0.0
    %7600 = vmatpush1.msra.mxu0 0.0
    %7601 = vmatprep.subr.mxu0 0.0
    %7602 = vmatpush1.msra.mxu0 0.0
    %7603 = vmatprep.subr.mxu0 0.0
    %7604 = vmatpush1.msra.mxu0 0.0
    %7605 = vmatprep.subr.mxu0 0.0
    %7606 = vmatpush1.msra.mxu0 0.0
    %7607 = vmatprep.subr.mxu0 0.0
    %7608 = vmatpush1.msra.mxu0 0.0
    %7609 = vmatprep.subr.mxu0 0.0
    %7610 = vmatpush1.msra.mxu0 0.0
    %7611 = vmatprep.subr.mxu0 0.0
    %7612 = vmatpush1.msra.mxu0 0.0
    %7613 = vmatprep.subr.mxu0 0.0
    %7614 = vmatpush1.msra.mxu0 0.0
    %7615 = vmatprep.subr.mxu0 0.0
    %7616 = vmatpush1.msra.mxu0 0.0
    %7617 = vmatprep.subr.mxu0 0.0
    %7618 = vmatpush1.msra.mxu0 0.0
    %7619 = vmatprep.subr.mxu0 0.0
    %7620 = vmatpush1.msra.mxu0 0.0
    %7621 = vmatprep.subr.mxu0 0.0
    %7622 = vmatpush1.msra.mxu0 0.0
    %7623 = vmatprep.subr.mxu0 0.0
    %7624 = vmatpush1.msra.mxu0 0.0
    %7625 = vmatprep.subr.mxu0 0.0
    %7626 = vmatpush1.msra.mxu0 0.0
    %7627 = vmatprep.subr.mxu0 0.0
    %7628 = vmatpush1.msra.mxu0 0.0
    %7629 = vmatprep.subr.mxu0 0.0
    %7630 = vmatpush1.msra.mxu0 0.0
    %7631 = vmatprep.subr.mxu0 0.0
    %7632 = vmatpush1.msra.mxu0 0.0
    %7633 = vmatprep.subr.mxu0 0.0
    %7634 = vmatpush1.msra.mxu0 0.0
    %7635 = vmatprep.subr.mxu0 0.0
    %7636 = vmatpush1.msra.mxu0 0.0
    %7637 = vmatprep.mubr.f32.mxu0 0.0
    %7638 = vmatmul.mubr.f32.gmra.mrb[0].mxu0 %v7421
    %v7639 = vpop.f32.mrb[0].mxu0
    %v7640 = vadd.f32 0.0, %v7639
    %v7641 = vpop.f32.mrb[0].mxu0
    %7642 = vdwg.mxu0
    %v7644 = vsel %vm7423, %v7124, 0
    %7646 = vmatprep.subr.mxu0 0.0
    %7647 = vmatpush1.msra.mxu0 %v7644
    %7648 = vmatprep.subr.mxu0 0.0
    %7649 = vmatpush1.msra.mxu0 0.0
    %7650 = vmatprep.subr.mxu0 0.0
    %7651 = vmatpush1.msra.mxu0 0.0
    %7652 = vmatprep.subr.mxu0 0.0
    %7653 = vmatpush1.msra.mxu0 0.0
    %7654 = vmatprep.subr.mxu0 0.0
    %7655 = vmatpush1.msra.mxu0 0.0
    %7656 = vmatprep.subr.mxu0 0.0
    %7657 = vmatpush1.msra.mxu0 0.0
    %7658 = vmatprep.subr.mxu0 0.0
    %7659 = vmatpush1.msra.mxu0 0.0
    %7660 = vmatprep.subr.mxu0 0.0
    %7661 = vmatpush1.msra.mxu0 0.0
    %7662 = vmatprep.subr.mxu0 0.0
    %7663 = vmatpush1.msra.mxu0 0.0
    %7664 = vmatprep.subr.mxu0 0.0
    %7665 = vmatpush1.msra.mxu0 0.0
    %7666 = vmatprep.subr.mxu0 0.0
    %7667 = vmatpush1.msra.mxu0 0.0
    %7668 = vmatprep.subr.mxu0 0.0
    %7669 = vmatpush1.msra.mxu0 0.0
    %7670 = vmatprep.subr.mxu0 0.0
    %7671 = vmatpush1.msra.mxu0 0.0
    %7672 = vmatprep.subr.mxu0 0.0
    %7673 = vmatpush1.msra.mxu0 0.0
    %7674 = vmatprep.subr.mxu0 0.0
    %7675 = vmatpush1.msra.mxu0 0.0
    %7676 = vmatprep.subr.mxu0 0.0
    %7677 = vmatpush1.msra.mxu0 0.0
    %7678 = vmatprep.subr.mxu0 0.0
    %7679 = vmatpush1.msra.mxu0 0.0
    %7680 = vmatprep.subr.mxu0 0.0
    %7681 = vmatpush1.msra.mxu0 0.0
    %7682 = vmatprep.subr.mxu0 0.0
    %7683 = vmatpush1.msra.mxu0 0.0
    %7684 = vmatprep.subr.mxu0 0.0
    %7685 = vmatpush1.msra.mxu0 0.0
    %7686 = vmatprep.subr.mxu0 0.0
    %7687 = vmatpush1.msra.mxu0 0.0
    %7688 = vmatprep.subr.mxu0 0.0
    %7689 = vmatpush1.msra.mxu0 0.0
    %7690 = vmatprep.subr.mxu0 0.0
    %7691 = vmatpush1.msra.mxu0 0.0
    %7692 = vmatprep.subr.mxu0 0.0
    %7693 = vmatpush1.msra.mxu0 0.0
    %7694 = vmatprep.subr.mxu0 0.0
    %7695 = vmatpush1.msra.mxu0 0.0
    %7696 = vmatprep.subr.mxu0 0.0
    %7697 = vmatpush1.msra.mxu0 0.0
    %7698 = vmatprep.subr.mxu0 0.0
    %7699 = vmatpush1.msra.mxu0 0.0
    %7700 = vmatprep.subr.mxu0 0.0
    %7701 = vmatpush1.msra.mxu0 0.0
    %7702 = vmatprep.subr.mxu0 0.0
    %7703 = vmatpush1.msra.mxu0 0.0
    %7704 = vmatprep.subr.mxu0 0.0
    %7705 = vmatpush1.msra.mxu0 0.0
    %7706 = vmatprep.subr.mxu0 0.0
    %7707 = vmatpush1.msra.mxu0 0.0
    %7708 = vmatprep.subr.mxu0 0.0
    %7709 = vmatpush1.msra.mxu0 0.0
    %7710 = vmatprep.mubr.f32.mxu0 0.0
    %7711 = vmatmul.mubr.f32.gmra.mrb[0].mxu0 %v7421
    %v7712 = vpop.f32.mrb[0].mxu0
    %v7713 = vadd.f32 0.0, %v7712
    %v7714 = vpop.f32.mrb[0].mxu0
    %7715 = vdwg.mxu0
    %v7717 = vsel %vm7423, %v7197, 0
    %7719 = vmatprep.subr.mxu0 0.0
    %7720 = vmatpush1.msra.mxu0 %v7717
    %7721 = vmatprep.subr.mxu0 0.0
    %7722 = vmatpush1.msra.mxu0 0.0
    %7723 = vmatprep.subr.mxu0 0.0
    %7724 = vmatpush1.msra.mxu0 0.0
    %7725 = vmatprep.subr.mxu0 0.0
    %7726 = vmatpush1.msra.mxu0 0.0
    %7727 = vmatprep.subr.mxu0 0.0
    %7728 = vmatpush1.msra.mxu0 0.0
    %7729 = vmatprep.subr.mxu0 0.0
    %7730 = vmatpush1.msra.mxu0 0.0
    %7731 = vmatprep.subr.mxu0 0.0
    %7732 = vmatpush1.msra.mxu0 0.0
    %7733 = vmatprep.subr.mxu0 0.0
    %7734 = vmatpush1.msra.mxu0 0.0
    %7735 = vmatprep.subr.mxu0 0.0
    %7736 = vmatpush1.msra.mxu0 0.0
    %7737 = vmatprep.subr.mxu0 0.0
    %7738 = vmatpush1.msra.mxu0 0.0
    %7739 = vmatprep.subr.mxu0 0.0
    %7740 = vmatpush1.msra.mxu0 0.0
    %7741 = vmatprep.subr.mxu0 0.0
    %7742 = vmatpush1.msra.mxu0 0.0
    %7743 = vmatprep.subr.mxu0 0.0
    %7744 = vmatpush1.msra.mxu0 0.0
    %7745 = vmatprep.subr.mxu0 0.0
    %7746 = vmatpush1.msra.mxu0 0.0
    %7747 = vmatprep.subr.mxu0 0.0
    %7748 = vmatpush1.msra.mxu0 0.0
    %7749 = vmatprep.subr.mxu0 0.0
    %7750 = vmatpush1.msra.mxu0 0.0
    %7751 = vmatprep.subr.mxu0 0.0
    %7752 = vmatpush1.msra.mxu0 0.0
    %7753 = vmatprep.subr.mxu0 0.0
    %7754 = vmatpush1.msra.mxu0 0.0
    %7755 = vmatprep.subr.mxu0 0.0
    %7756 = vmatpush1.msra.mxu0 0.0
    %7757 = vmatprep.subr.mxu0 0.0
    %7758 = vmatpush1.msra.mxu0 0.0
    %7759 = vmatprep.subr.mxu0 0.0
    %7760 = vmatpush1.msra.mxu0 0.0
    %7761 = vmatprep.subr.mxu0 0.0
    %7762 = vmatpush1.msra.mxu0 0.0
    %7763 = vmatprep.subr.mxu0 0.0
    %7764 = vmatpush1.msra.mxu0 0.0
    %7765 = vmatprep.subr.mxu0 0.0
    %7766 = vmatpush1.msra.mxu0 0.0
    %7767 = vmatprep.subr.mxu0 0.0
    %7768 = vmatpush1.msra.mxu0 0.0
    %7769 = vmatprep.subr.mxu0 0.0
    %7770 = vmatpush1.msra.mxu0 0.0
    %7771 = vmatprep.subr.mxu0 0.0
    %7772 = vmatpush1.msra.mxu0 0.0
    %7773 = vmatprep.subr.mxu0 0.0
    %7774 = vmatpush1.msra.mxu0 0.0
    %7775 = vmatprep.subr.mxu0 0.0
    %7776 = vmatpush1.msra.mxu0 0.0
    %7777 = vmatprep.subr.mxu0 0.0
    %7778 = vmatpush1.msra.mxu0 0.0
    %7779 = vmatprep.subr.mxu0 0.0
    %7780 = vmatpush1.msra.mxu0 0.0
    %7781 = vmatprep.subr.mxu0 0.0
    %7782 = vmatpush1.msra.mxu0 0.0
    %7783 = vmatprep.mubr.f32.mxu0 0.0
    %7784 = vmatmul.mubr.f32.gmra.mrb[0].mxu0 %v7421
    %v7785 = vpop.f32.mrb[0].mxu0
    %v7786 = vadd.f32 0.0, %v7785
    %v7787 = vpop.f32.mrb[0].mxu0
    %7788 = vdwg.mxu0
    %v7790 = vsel %vm7423, %v7270, 0
    %7792 = vmatprep.subr.mxu0 0.0
    %7793 = vmatpush1.msra.mxu0 %v7790
    %7794 = vmatprep.subr.mxu0 0.0
    %7795 = vmatpush1.msra.mxu0 0.0
    %7796 = vmatprep.subr.mxu0 0.0
    %7797 = vmatpush1.msra.mxu0 0.0
    %7798 = vmatprep.subr.mxu0 0.0
    %7799 = vmatpush1.msra.mxu0 0.0
    %7800 = vmatprep.subr.mxu0 0.0
    %7801 = vmatpush1.msra.mxu0 0.0
    %7802 = vmatprep.subr.mxu0 0.0
    %7803 = vmatpush1.msra.mxu0 0.0
    %7804 = vmatprep.subr.mxu0 0.0
    %7805 = vmatpush1.msra.mxu0 0.0
    %7806 = vmatprep.subr.mxu0 0.0
    %7807 = vmatpush1.msra.mxu0 0.0
    %7808 = vmatprep.subr.mxu0 0.0
    %7809 = vmatpush1.msra.mxu0 0.0
    %7810 = vmatprep.subr.mxu0 0.0
    %7811 = vmatpush1.msra.mxu0 0.0
    %7812 = vmatprep.subr.mxu0 0.0
    %7813 = vmatpush1.msra.mxu0 0.0
    %7814 = vmatprep.subr.mxu0 0.0
    %7815 = vmatpush1.msra.mxu0 0.0
    %7816 = vmatprep.subr.mxu0 0.0
    %7817 = vmatpush1.msra.mxu0 0.0
    %7818 = vmatprep.subr.mxu0 0.0
    %7819 = vmatpush1.msra.mxu0 0.0
    %7820 = vmatprep.subr.mxu0 0.0
    %7821 = vmatpush1.msra.mxu0 0.0
    %7822 = vmatprep.subr.mxu0 0.0
    %7823 = vmatpush1.msra.mxu0 0.0
    %7824 = vmatprep.subr.mxu0 0.0
    %7825 = vmatpush1.msra.mxu0 0.0
    %7826 = vmatprep.subr.mxu0 0.0
    %7827 = vmatpush1.msra.mxu0 0.0
    %7828 = vmatprep.subr.mxu0 0.0
    %7829 = vmatpush1.msra.mxu0 0.0
    %7830 = vmatprep.subr.mxu0 0.0
    %7831 = vmatpush1.msra.mxu0 0.0
    %7832 = vmatprep.subr.mxu0 0.0
    %7833 = vmatpush1.msra.mxu0 0.0
    %7834 = vmatprep.subr.mxu0 0.0
    %7835 = vmatpush1.msra.mxu0 0.0
    %7836 = vmatprep.subr.mxu0 0.0
    %7837 = vmatpush1.msra.mxu0 0.0
    %7838 = vmatprep.subr.mxu0 0.0
    %7839 = vmatpush1.msra.mxu0 0.0
    %7840 = vmatprep.subr.mxu0 0.0
    %7841 = vmatpush1.msra.mxu0 0.0
    %7842 = vmatprep.subr.mxu0 0.0
    %7843 = vmatpush1.msra.mxu0 0.0
    %7844 = vmatprep.subr.mxu0 0.0
    %7845 = vmatpush1.msra.mxu0 0.0
    %7846 = vmatprep.subr.mxu0 0.0
    %7847 = vmatpush1.msra.mxu0 0.0
    %7848 = vmatprep.subr.mxu0 0.0
    %7849 = vmatpush1.msra.mxu0 0.0
    %7850 = vmatprep.subr.mxu0 0.0
    %7851 = vmatpush1.msra.mxu0 0.0
    %7852 = vmatprep.subr.mxu0 0.0
    %7853 = vmatpush1.msra.mxu0 0.0
    %7854 = vmatprep.subr.mxu0 0.0
    %7855 = vmatpush1.msra.mxu0 0.0
    %7856 = vmatprep.mubr.f32.mxu0 0.0
    %7857 = vmatmul.mubr.f32.gmra.mrb[0].mxu0 %v7421
    %v7858 = vpop.f32.mrb[0].mxu0
    %v7859 = vadd.f32 0.0, %v7858
    %v7860 = vpop.f32.mrb[0].mxu0
    %7861 = vdwg.mxu0
    %v7863 = vsel %vm7423, %v7343, 0
    %7865 = vmatprep.subr.mxu0 0.0
    %7866 = vmatpush1.msra.mxu0 %v7863
    %7867 = vmatprep.subr.mxu0 0.0
    %7868 = vmatpush1.msra.mxu0 0.0
    %7869 = vmatprep.subr.mxu0 0.0
    %7870 = vmatpush1.msra.mxu0 0.0
    %7871 = vmatprep.subr.mxu0 0.0
    %7872 = vmatpush1.msra.mxu0 0.0
    %7873 = vmatprep.subr.mxu0 0.0
    %7874 = vmatpush1.msra.mxu0 0.0
    %7875 = vmatprep.subr.mxu0 0.0
    %7876 = vmatpush1.msra.mxu0 0.0
    %7877 = vmatprep.subr.mxu0 0.0
    %7878 = vmatpush1.msra.mxu0 0.0
    %7879 = vmatprep.subr.mxu0 0.0
    %7880 = vmatpush1.msra.mxu0 0.0
    %7881 = vmatprep.subr.mxu0 0.0
    %7882 = vmatpush1.msra.mxu0 0.0
    %7883 = vmatprep.subr.mxu0 0.0
    %7884 = vmatpush1.msra.mxu0 0.0
    %7885 = vmatprep.subr.mxu0 0.0
    %7886 = vmatpush1.msra.mxu0 0.0
    %7887 = vmatprep.subr.mxu0 0.0
    %7888 = vmatpush1.msra.mxu0 0.0
    %7889 = vmatprep.subr.mxu0 0.0
    %7890 = vmatpush1.msra.mxu0 0.0
    %7891 = vmatprep.subr.mxu0 0.0
    %7892 = vmatpush1.msra.mxu0 0.0
    %7893 = vmatprep.subr.mxu0 0.0
    %7894 = vmatpush1.msra.mxu0 0.0
    %7895 = vmatprep.subr.mxu0 0.0
    %7896 = vmatpush1.msra.mxu0 0.0
    %7897 = vmatprep.subr.mxu0 0.0
    %7898 = vmatpush1.msra.mxu0 0.0
    %7899 = vmatprep.subr.mxu0 0.0
    %7900 = vmatpush1.msra.mxu0 0.0
    %7901 = vmatprep.subr.mxu0 0.0
    %7902 = vmatpush1.msra.mxu0 0.0
    %7903 = vmatprep.subr.mxu0 0.0
    %7904 = vmatpush1.msra.mxu0 0.0
    %7905 = vmatprep.subr.mxu0 0.0
    %7906 = vmatpush1.msra.mxu0 0.0
    %7907 = vmatprep.subr.mxu0 0.0
    %7908 = vmatpush1.msra.mxu0 0.0
    %7909 = vmatprep.subr.mxu0 0.0
    %7910 = vmatpush1.msra.mxu0 0.0
    %7911 = vmatprep.subr.mxu0 0.0
    %7912 = vmatpush1.msra.mxu0 0.0
    %7913 = vmatprep.subr.mxu0 0.0
    %7914 = vmatpush1.msra.mxu0 0.0
    %7915 = vmatprep.subr.mxu0 0.0
    %7916 = vmatpush1.msra.mxu0 0.0
    %7917 = vmatprep.subr.mxu0 0.0
    %7918 = vmatpush1.msra.mxu0 0.0
    %7919 = vmatprep.subr.mxu0 0.0
    %7920 = vmatpush1.msra.mxu0 0.0
    %7921 = vmatprep.subr.mxu0 0.0
    %7922 = vmatpush1.msra.mxu0 0.0
    %7923 = vmatprep.subr.mxu0 0.0
    %7924 = vmatpush1.msra.mxu0 0.0
    %7925 = vmatprep.subr.mxu0 0.0
    %7926 = vmatpush1.msra.mxu0 0.0
    %7927 = vmatprep.subr.mxu0 0.0
    %7928 = vmatpush1.msra.mxu0 0.0
    %7929 = vmatprep.mubr.f32.mxu0 0.0
    %7930 = vmatmul.mubr.f32.gmra.mrb[0].mxu0 %v7421
    %v7931 = vpop.f32.mrb[0].mxu0
    %v7932 = vadd.f32 0.0, %v7931
    %v7933 = vpop.f32.mrb[0].mxu0
    %7934 = vdwg.mxu0
    %v7936 = vsel %vm7423, %v7416, 0
    %7938 = vmatprep.subr.mxu0 0.0
    %7939 = vmatpush1.msra.mxu0 %v7936
    %7940 = vmatprep.subr.mxu0 0.0
    %7941 = vmatpush1.msra.mxu0 0.0
    %7942 = vmatprep.subr.mxu0 0.0
    %7943 = vmatpush1.msra.mxu0 0.0
    %7944 = vmatprep.subr.mxu0 0.0
    %7945 = vmatpush1.msra.mxu0 0.0
    %7946 = vmatprep.subr.mxu0 0.0
    %7947 = vmatpush1.msra.mxu0 0.0
    %7948 = vmatprep.subr.mxu0 0.0
    %7949 = vmatpush1.msra.mxu0 0.0
    %7950 = vmatprep.subr.mxu0 0.0
    %7951 = vmatpush1.msra.mxu0 0.0
    %7952 = vmatprep.subr.mxu0 0.0
    %7953 = vmatpush1.msra.mxu0 0.0
    %7954 = vmatprep.subr.mxu0 0.0
    %7955 = vmatpush1.msra.mxu0 0.0
    %7956 = vmatprep.subr.mxu0 0.0
    %7957 = vmatpush1.msra.mxu0 0.0
    %7958 = vmatprep.subr.mxu0 0.0
    %7959 = vmatpush1.msra.mxu0 0.0
    %7960 = vmatprep.subr.mxu0 0.0
    %7961 = vmatpush1.msra.mxu0 0.0
    %7962 = vmatprep.subr.mxu0 0.0
    %7963 = vmatpush1.msra.mxu0 0.0
    %7964 = vmatprep.subr.mxu0 0.0
    %7965 = vmatpush1.msra.mxu0 0.0
    %7966 = vmatprep.subr.mxu0 0.0
    %7967 = vmatpush1.msra.mxu0 0.0
    %7968 = vmatprep.subr.mxu0 0.0
    %7969 = vmatpush1.msra.mxu0 0.0
    %7970 = vmatprep.subr.mxu0 0.0
    %7971 = vmatpush1.msra.mxu0 0.0
    %7972 = vmatprep.subr.mxu0 0.0
    %7973 = vmatpush1.msra.mxu0 0.0
    %7974 = vmatprep.subr.mxu0 0.0
    %7975 = vmatpush1.msra.mxu0 0.0
    %7976 = vmatprep.subr.mxu0 0.0
    %7977 = vmatpush1.msra.mxu0 0.0
    %7978 = vmatprep.subr.mxu0 0.0
    %7979 = vmatpush1.msra.mxu0 0.0
    %7980 = vmatprep.subr.mxu0 0.0
    %7981 = vmatpush1.msra.mxu0 0.0
    %7982 = vmatprep.subr.mxu0 0.0
    %7983 = vmatpush1.msra.mxu0 0.0
    %7984 = vmatprep.subr.mxu0 0.0
    %7985 = vmatpush1.msra.mxu0 0.0
    %7986 = vmatprep.subr.mxu0 0.0
    %7987 = vmatpush1.msra.mxu0 0.0
    %7988 = vmatprep.subr.mxu0 0.0
    %7989 = vmatpush1.msra.mxu0 0.0
    %7990 = vmatprep.subr.mxu0 0.0
    %7991 = vmatpush1.msra.mxu0 0.0
    %7992 = vmatprep.subr.mxu0 0.0
    %7993 = vmatpush1.msra.mxu0 0.0
    %7994 = vmatprep.subr.mxu0 0.0
    %7995 = vmatpush1.msra.mxu0 0.0
    %7996 = vmatprep.subr.mxu0 0.0
    %7997 = vmatpush1.msra.mxu0 0.0
    %7998 = vmatprep.subr.mxu0 0.0
    %7999 = vmatpush1.msra.mxu0 0.0
    %8000 = vmatprep.subr.mxu0 0.0
    %8001 = vmatpush1.msra.mxu0 0.0
    %8002 = vmatprep.mubr.f32.mxu0 0.0
    %8003 = vmatmul.mubr.f32.gmra.mrb[0].mxu0 %v7421
    %v8004 = vpop.f32.mrb[0].mxu0
    %v8005 = vadd.f32 0.0, %v8004
    %v8006 = vpop.f32.mrb[0].mxu0
    %8007 = vdwg.mxu0
    %v8009 = vsel %vm7419, %v7494, 0
    %v8012 = vsel %vm7423, %v6252, 0
    %8014 = vmatprep.subr.mxu0 0.0
    %8015 = vmatpush1.msra.mxu0 %v8012
    %8016 = vmatprep.subr.mxu0 0.0
    %8017 = vmatpush1.msra.mxu0 0.0
    %8018 = vmatprep.subr.mxu0 0.0
    %8019 = vmatpush1.msra.mxu0 0.0
    %8020 = vmatprep.subr.mxu0 0.0
    %8021 = vmatpush1.msra.mxu0 0.0
    %8022 = vmatprep.subr.mxu0 0.0
    %8023 = vmatpush1.msra.mxu0 0.0
    %8024 = vmatprep.subr.mxu0 0.0
    %8025 = vmatpush1.msra.mxu0 0.0
    %8026 = vmatprep.subr.mxu0 0.0
    %8027 = vmatpush1.msra.mxu0 0.0
    %8028 = vmatprep.subr.mxu0 0.0
    %8029 = vmatpush1.msra.mxu0 0.0
    %8030 = vmatprep.subr.mxu0 0.0
    %8031 = vmatpush1.msra.mxu0 0.0
    %8032 = vmatprep.subr.mxu0 0.0
    %8033 = vmatpush1.msra.mxu0 0.0
    %8034 = vmatprep.subr.mxu0 0.0
    %8035 = vmatpush1.msra.mxu0 0.0
    %8036 = vmatprep.subr.mxu0 0.0
    %8037 = vmatpush1.msra.mxu0 0.0
    %8038 = vmatprep.subr.mxu0 0.0
    %8039 = vmatpush1.msra.mxu0 0.0
    %8040 = vmatprep.subr.mxu0 0.0
    %8041 = vmatpush1.msra.mxu0 0.0
    %8042 = vmatprep.subr.mxu0 0.0
    %8043 = vmatpush1.msra.mxu0 0.0
    %8044 = vmatprep.subr.mxu0 0.0
    %8045 = vmatpush1.msra.mxu0 0.0
    %8046 = vmatprep.subr.mxu0 0.0
    %8047 = vmatpush1.msra.mxu0 0.0
    %8048 = vmatprep.subr.mxu0 0.0
    %8049 = vmatpush1.msra.mxu0 0.0
    %8050 = vmatprep.subr.mxu0 0.0
    %8051 = vmatpush1.msra.mxu0 0.0
    %8052 = vmatprep.subr.mxu0 0.0
    %8053 = vmatpush1.msra.mxu0 0.0
    %8054 = vmatprep.subr.mxu0 0.0
    %8055 = vmatpush1.msra.mxu0 0.0
    %8056 = vmatprep.subr.mxu0 0.0
    %8057 = vmatpush1.msra.mxu0 0.0
    %8058 = vmatprep.subr.mxu0 0.0
    %8059 = vmatpush1.msra.mxu0 0.0
    %8060 = vmatprep.subr.mxu0 0.0
    %8061 = vmatpush1.msra.mxu0 0.0
    %8062 = vmatprep.subr.mxu0 0.0
    %8063 = vmatpush1.msra.mxu0 0.0
    %8064 = vmatprep.subr.mxu0 0.0
    %8065 = vmatpush1.msra.mxu0 0.0
    %8066 = vmatprep.subr.mxu0 0.0
    %8067 = vmatpush1.msra.mxu0 0.0
    %8068 = vmatprep.subr.mxu0 0.0
    %8069 = vmatpush1.msra.mxu0 0.0
    %8070 = vmatprep.subr.mxu0 0.0
    %8071 = vmatpush1.msra.mxu0 0.0
    %8072 = vmatprep.subr.mxu0 0.0
    %8073 = vmatpush1.msra.mxu0 0.0
    %8074 = vmatprep.subr.mxu0 0.0
    %8075 = vmatpush1.msra.mxu0 0.0
    %8076 = vmatprep.subr.mxu0 0.0
    %8077 = vmatpush1.msra.mxu0 0.0
    %8078 = vmatprep.mubr.f32.mxu0 0.0
    %8079 = vmatmul.mubr.f32.gmra.mrb[0].mxu0 %v8009
    %v8080 = vpop.f32.mrb[0].mxu0
    %v8081 = vadd.f32 0.0, %v8080
    %v8082 = vpop.f32.mrb[0].mxu0
    %8083 = vdwg.mxu0
    %v8085 = vsel %vm7419, %v7567, 0
    %8087 = vmatprep.subr.mxu0 0.0
    %8088 = vmatpush1.msra.mxu0 %v8012
    %8089 = vmatprep.subr.mxu0 0.0
    %8090 = vmatpush1.msra.mxu0 0.0
    %8091 = vmatprep.subr.mxu0 0.0
    %8092 = vmatpush1.msra.mxu0 0.0
    %8093 = vmatprep.subr.mxu0 0.0
    %8094 = vmatpush1.msra.mxu0 0.0
    %8095 = vmatprep.subr.mxu0 0.0
    %8096 = vmatpush1.msra.mxu0 0.0
    %8097 = vmatprep.subr.mxu0 0.0
    %8098 = vmatpush1.msra.mxu0 0.0
    %8099 = vmatprep.subr.mxu0 0.0
    %8100 = vmatpush1.msra.mxu0 0.0
    %8101 = vmatprep.subr.mxu0 0.0
    %8102 = vmatpush1.msra.mxu0 0.0
    %8103 = vmatprep.subr.mxu0 0.0
    %8104 = vmatpush1.msra.mxu0 0.0
    %8105 = vmatprep.subr.mxu0 0.0
    %8106 = vmatpush1.msra.mxu0 0.0
    %8107 = vmatprep.subr.mxu0 0.0
    %8108 = vmatpush1.msra.mxu0 0.0
    %8109 = vmatprep.subr.mxu0 0.0
    %8110 = vmatpush1.msra.mxu0 0.0
    %8111 = vmatprep.subr.mxu0 0.0
    %8112 = vmatpush1.msra.mxu0 0.0
    %8113 = vmatprep.subr.mxu0 0.0
    %8114 = vmatpush1.msra.mxu0 0.0
    %8115 = vmatprep.subr.mxu0 0.0
    %8116 = vmatpush1.msra.mxu0 0.0
    %8117 = vmatprep.subr.mxu0 0.0
    %8118 = vmatpush1.msra.mxu0 0.0
    %8119 = vmatprep.subr.mxu0 0.0
    %8120 = vmatpush1.msra.mxu0 0.0
    %8121 = vmatprep.subr.mxu0 0.0
    %8122 = vmatpush1.msra.mxu0 0.0
    %8123 = vmatprep.subr.mxu0 0.0
    %8124 = vmatpush1.msra.mxu0 0.0
    %8125 = vmatprep.subr.mxu0 0.0
    %8126 = vmatpush1.msra.mxu0 0.0
    %8127 = vmatprep.subr.mxu0 0.0
    %8128 = vmatpush1.msra.mxu0 0.0
    %8129 = vmatprep.subr.mxu0 0.0
    %8130 = vmatpush1.msra.mxu0 0.0
    %8131 = vmatprep.subr.mxu0 0.0
    %8132 = vmatpush1.msra.mxu0 0.0
    %8133 = vmatprep.subr.mxu0 0.0
    %8134 = vmatpush1.msra.mxu0 0.0
    %8135 = vmatprep.subr.mxu0 0.0
    %8136 = vmatpush1.msra.mxu0 0.0
    %8137 = vmatprep.subr.mxu0 0.0
    %8138 = vmatpush1.msra.mxu0 0.0
    %8139 = vmatprep.subr.mxu0 0.0
    %8140 = vmatpush1.msra.mxu0 0.0
    %8141 = vmatprep.subr.mxu0 0.0
    %8142 = vmatpush1.msra.mxu0 0.0
    %8143 = vmatprep.subr.mxu0 0.0
    %8144 = vmatpush1.msra.mxu0 0.0
    %8145 = vmatprep.subr.mxu0 0.0
    %8146 = vmatpush1.msra.mxu0 0.0
    %8147 = vmatprep.subr.mxu0 0.0
    %8148 = vmatpush1.msra.mxu0 0.0
    %8149 = vmatprep.subr.mxu0 0.0
    %8150 = vmatpush1.msra.mxu0 0.0
    %8151 = vmatprep.mubr.f32.mxu0 0.0
    %8152 = vmatmul.mubr.f32.gmra.mrb[0].mxu0 %v8085
    %v8153 = vpop.f32.mrb[0].mxu0
    %v8154 = vadd.f32 0.0, %v8153
    %v8155 = vpop.f32.mrb[0].mxu0
    %8156 = vdwg.mxu0
    %v8158 = vsel %vm7419, %v7640, 0
    %8160 = vmatprep.subr.mxu0 0.0
    %8161 = vmatpush1.msra.mxu0 %v8012
    %8162 = vmatprep.subr.mxu0 0.0
    %8163 = vmatpush1.msra.mxu0 0.0
    %8164 = vmatprep.subr.mxu0 0.0
    %8165 = vmatpush1.msra.mxu0 0.0
    %8166 = vmatprep.subr.mxu0 0.0
    %8167 = vmatpush1.msra.mxu0 0.0
    %8168 = vmatprep.subr.mxu0 0.0
    %8169 = vmatpush1.msra.mxu0 0.0
    %8170 = vmatprep.subr.mxu0 0.0
    %8171 = vmatpush1.msra.mxu0 0.0
    %8172 = vmatprep.subr.mxu0 0.0
    %8173 = vmatpush1.msra.mxu0 0.0
    %8174 = vmatprep.subr.mxu0 0.0
    %8175 = vmatpush1.msra.mxu0 0.0
    %8176 = vmatprep.subr.mxu0 0.0
    %8177 = vmatpush1.msra.mxu0 0.0
    %8178 = vmatprep.subr.mxu0 0.0
    %8179 = vmatpush1.msra.mxu0 0.0
    %8180 = vmatprep.subr.mxu0 0.0
    %8181 = vmatpush1.msra.mxu0 0.0
    %8182 = vmatprep.subr.mxu0 0.0
    %8183 = vmatpush1.msra.mxu0 0.0
    %8184 = vmatprep.subr.mxu0 0.0
    %8185 = vmatpush1.msra.mxu0 0.0
    %8186 = vmatprep.subr.mxu0 0.0
    %8187 = vmatpush1.msra.mxu0 0.0
    %8188 = vmatprep.subr.mxu0 0.0
    %8189 = vmatpush1.msra.mxu0 0.0
    %8190 = vmatprep.subr.mxu0 0.0
    %8191 = vmatpush1.msra.mxu0 0.0
    %8192 = vmatprep.subr.mxu0 0.0
    %8193 = vmatpush1.msra.mxu0 0.0
    %8194 = vmatprep.subr.mxu0 0.0
    %8195 = vmatpush1.msra.mxu0 0.0
    %8196 = vmatprep.subr.mxu0 0.0
    %8197 = vmatpush1.msra.mxu0 0.0
    %8198 = vmatprep.subr.mxu0 0.0
    %8199 = vmatpush1.msra.mxu0 0.0
    %8200 = vmatprep.subr.mxu0 0.0
    %8201 = vmatpush1.msra.mxu0 0.0
    %8202 = vmatprep.subr.mxu0 0.0
    %8203 = vmatpush1.msra.mxu0 0.0
    %8204 = vmatprep.subr.mxu0 0.0
    %8205 = vmatpush1.msra.mxu0 0.0
    %8206 = vmatprep.subr.mxu0 0.0
    %8207 = vmatpush1.msra.mxu0 0.0
    %8208 = vmatprep.subr.mxu0 0.0
    %8209 = vmatpush1.msra.mxu0 0.0
    %8210 = vmatprep.subr.mxu0 0.0
    %8211 = vmatpush1.msra.mxu0 0.0
    %8212 = vmatprep.subr.mxu0 0.0
    %8213 = vmatpush1.msra.mxu0 0.0
    %8214 = vmatprep.subr.mxu0 0.0
    %8215 = vmatpush1.msra.mxu0 0.0
    %8216 = vmatprep.subr.mxu0 0.0
    %8217 = vmatpush1.msra.mxu0 0.0
    %8218 = vmatprep.subr.mxu0 0.0
    %8219 = vmatpush1.msra.mxu0 0.0
    %8220 = vmatprep.subr.mxu0 0.0
    %8221 = vmatpush1.msra.mxu0 0.0
    %8222 = vmatprep.subr.mxu0 0.0
    %8223 = vmatpush1.msra.mxu0 0.0
    %8224 = vmatprep.mubr.f32.mxu0 0.0
    %8225 = vmatmul.mubr.f32.gmra.mrb[0].mxu0 %v8158
    %v8226 = vpop.f32.mrb[0].mxu0
    %v8227 = vadd.f32 0.0, %v8226
    %v8228 = vpop.f32.mrb[0].mxu0
    %8229 = vdwg.mxu0
    %v8231 = vsel %vm7419, %v7713, 0
    %8233 = vmatprep.subr.mxu0 0.0
    %8234 = vmatpush1.msra.mxu0 %v8012
    %8235 = vmatprep.subr.mxu0 0.0
    %8236 = vmatpush1.msra.mxu0 0.0
    %8237 = vmatprep.subr.mxu0 0.0
    %8238 = vmatpush1.msra.mxu0 0.0
    %8239 = vmatprep.subr.mxu0 0.0
    %8240 = vmatpush1.msra.mxu0 0.0
    %8241 = vmatprep.subr.mxu0 0.0
    %8242 = vmatpush1.msra.mxu0 0.0
    %8243 = vmatprep.subr.mxu0 0.0
    %8244 = vmatpush1.msra.mxu0 0.0
    %8245 = vmatprep.subr.mxu0 0.0
    %8246 = vmatpush1.msra.mxu0 0.0
    %8247 = vmatprep.subr.mxu0 0.0
    %8248 = vmatpush1.msra.mxu0 0.0
    %8249 = vmatprep.subr.mxu0 0.0
    %8250 = vmatpush1.msra.mxu0 0.0
    %8251 = vmatprep.subr.mxu0 0.0
    %8252 = vmatpush1.msra.mxu0 0.0
    %8253 = vmatprep.subr.mxu0 0.0
    %8254 = vmatpush1.msra.mxu0 0.0
    %8255 = vmatprep.subr.mxu0 0.0
    %8256 = vmatpush1.msra.mxu0 0.0
    %8257 = vmatprep.subr.mxu0 0.0
    %8258 = vmatpush1.msra.mxu0 0.0
    %8259 = vmatprep.subr.mxu0 0.0
    %8260 = vmatpush1.msra.mxu0 0.0
    %8261 = vmatprep.subr.mxu0 0.0
    %8262 = vmatpush1.msra.mxu0 0.0
    %8263 = vmatprep.subr.mxu0 0.0
    %8264 = vmatpush1.msra.mxu0 0.0
    %8265 = vmatprep.subr.mxu0 0.0
    %8266 = vmatpush1.msra.mxu0 0.0
    %8267 = vmatprep.subr.mxu0 0.0
    %8268 = vmatpush1.msra.mxu0 0.0
    %8269 = vmatprep.subr.mxu0 0.0
    %8270 = vmatpush1.msra.mxu0 0.0
    %8271 = vmatprep.subr.mxu0 0.0
    %8272 = vmatpush1.msra.mxu0 0.0
    %8273 = vmatprep.subr.mxu0 0.0
    %8274 = vmatpush1.msra.mxu0 0.0
    %8275 = vmatprep.subr.mxu0 0.0
    %8276 = vmatpush1.msra.mxu0 0.0
    %8277 = vmatprep.subr.mxu0 0.0
    %8278 = vmatpush1.msra.mxu0 0.0
    %8279 = vmatprep.subr.mxu0 0.0
    %8280 = vmatpush1.msra.mxu0 0.0
    %8281 = vmatprep.subr.mxu0 0.0
    %8282 = vmatpush1.msra.mxu0 0.0
    %8283 = vmatprep.subr.mxu0 0.0
    %8284 = vmatpush1.msra.mxu0 0.0
    %8285 = vmatprep.subr.mxu0 0.0
    %8286 = vmatpush1.msra.mxu0 0.0
    %8287 = vmatprep.subr.mxu0 0.0
    %8288 = vmatpush1.msra.mxu0 0.0
    %8289 = vmatprep.subr.mxu0 0.0
    %8290 = vmatpush1.msra.mxu0 0.0
    %8291 = vmatprep.subr.mxu0 0.0
    %8292 = vmatpush1.msra.mxu0 0.0
    %8293 = vmatprep.subr.mxu0 0.0
    %8294 = vmatpush1.msra.mxu0 0.0
    %8295 = vmatprep.subr.mxu0 0.0
    %8296 = vmatpush1.msra.mxu0 0.0
    %8297 = vmatprep.mubr.f32.mxu0 0.0
    %8298 = vmatmul.mubr.f32.gmra.mrb[0].mxu0 %v8231
    %v8299 = vpop.f32.mrb[0].mxu0
    %v8300 = vadd.f32 0.0, %v8299
    %v8301 = vpop.f32.mrb[0].mxu0
    %8302 = vdwg.mxu0
    %v8304 = vsel %vm7419, %v7786, 0
    %8306 = vmatprep.subr.mxu0 0.0
    %8307 = vmatpush1.msra.mxu0 %v8012
    %8308 = vmatprep.subr.mxu0 0.0
    %8309 = vmatpush1.msra.mxu0 0.0
    %8310 = vmatprep.subr.mxu0 0.0
    %8311 = vmatpush1.msra.mxu0 0.0
    %8312 = vmatprep.subr.mxu0 0.0
    %8313 = vmatpush1.msra.mxu0 0.0
    %8314 = vmatprep.subr.mxu0 0.0
    %8315 = vmatpush1.msra.mxu0 0.0
    %8316 = vmatprep.subr.mxu0 0.0
    %8317 = vmatpush1.msra.mxu0 0.0
    %8318 = vmatprep.subr.mxu0 0.0
    %8319 = vmatpush1.msra.mxu0 0.0
    %8320 = vmatprep.subr.mxu0 0.0
    %8321 = vmatpush1.msra.mxu0 0.0
    %8322 = vmatprep.subr.mxu0 0.0
    %8323 = vmatpush1.msra.mxu0 0.0
    %8324 = vmatprep.subr.mxu0 0.0
    %8325 = vmatpush1.msra.mxu0 0.0
    %8326 = vmatprep.subr.mxu0 0.0
    %8327 = vmatpush1.msra.mxu0 0.0
    %8328 = vmatprep.subr.mxu0 0.0
    %8329 = vmatpush1.msra.mxu0 0.0
    %8330 = vmatprep.subr.mxu0 0.0
    %8331 = vmatpush1.msra.mxu0 0.0
    %8332 = vmatprep.subr.mxu0 0.0
    %8333 = vmatpush1.msra.mxu0 0.0
    %8334 = vmatprep.subr.mxu0 0.0
    %8335 = vmatpush1.msra.mxu0 0.0
    %8336 = vmatprep.subr.mxu0 0.0
    %8337 = vmatpush1.msra.mxu0 0.0
    %8338 = vmatprep.subr.mxu0 0.0
    %8339 = vmatpush1.msra.mxu0 0.0
    %8340 = vmatprep.subr.mxu0 0.0
    %8341 = vmatpush1.msra.mxu0 0.0
    %8342 = vmatprep.subr.mxu0 0.0
    %8343 = vmatpush1.msra.mxu0 0.0
    %8344 = vmatprep.subr.mxu0 0.0
    %8345 = vmatpush1.msra.mxu0 0.0
    %8346 = vmatprep.subr.mxu0 0.0
    %8347 = vmatpush1.msra.mxu0 0.0
    %8348 = vmatprep.subr.mxu0 0.0
    %8349 = vmatpush1.msra.mxu0 0.0
    %8350 = vmatprep.subr.mxu0 0.0
    %8351 = vmatpush1.msra.mxu0 0.0
    %8352 = vmatprep.subr.mxu0 0.0
    %8353 = vmatpush1.msra.mxu0 0.0
    %8354 = vmatprep.subr.mxu0 0.0
    %8355 = vmatpush1.msra.mxu0 0.0
    %8356 = vmatprep.subr.mxu0 0.0
    %8357 = vmatpush1.msra.mxu0 0.0
    %8358 = vmatprep.subr.mxu0 0.0
    %8359 = vmatpush1.msra.mxu0 0.0
    %8360 = vmatprep.subr.mxu0 0.0
    %8361 = vmatpush1.msra.mxu0 0.0
    %8362 = vmatprep.subr.mxu0 0.0
    %8363 = vmatpush1.msra.mxu0 0.0
    %8364 = vmatprep.subr.mxu0 0.0
    %8365 = vmatpush1.msra.mxu0 0.0
    %8366 = vmatprep.subr.mxu0 0.0
    %8367 = vmatpush1.msra.mxu0 0.0
    %8368 = vmatprep.subr.mxu0 0.0
    %8369 = vmatpush1.msra.mxu0 0.0
    %8370 = vmatprep.mubr.f32.mxu0 0.0
    %8371 = vmatmul.mubr.f32.gmra.mrb[0].mxu0 %v8304
    %v8372 = vpop.f32.mrb[0].mxu0
    %v8373 = vadd.f32 0.0, %v8372
    %v8374 = vpop.f32.mrb[0].mxu0
    %8375 = vdwg.mxu0
    %v8377 = vsel %vm7419, %v7859, 0
    %8379 = vmatprep.subr.mxu0 0.0
    %8380 = vmatpush1.msra.mxu0 %v8012
    %8381 = vmatprep.subr.mxu0 0.0
    %8382 = vmatpush1.msra.mxu0 0.0
    %8383 = vmatprep.subr.mxu0 0.0
    %8384 = vmatpush1.msra.mxu0 0.0
    %8385 = vmatprep.subr.mxu0 0.0
    %8386 = vmatpush1.msra.mxu0 0.0
    %8387 = vmatprep.subr.mxu0 0.0
    %8388 = vmatpush1.msra.mxu0 0.0
    %8389 = vmatprep.subr.mxu0 0.0
    %8390 = vmatpush1.msra.mxu0 0.0
    %8391 = vmatprep.subr.mxu0 0.0
    %8392 = vmatpush1.msra.mxu0 0.0
    %8393 = vmatprep.subr.mxu0 0.0
    %8394 = vmatpush1.msra.mxu0 0.0
    %8395 = vmatprep.subr.mxu0 0.0
    %8396 = vmatpush1.msra.mxu0 0.0
    %8397 = vmatprep.subr.mxu0 0.0
    %8398 = vmatpush1.msra.mxu0 0.0
    %8399 = vmatprep.subr.mxu0 0.0
    %8400 = vmatpush1.msra.mxu0 0.0
    %8401 = vmatprep.subr.mxu0 0.0
    %8402 = vmatpush1.msra.mxu0 0.0
    %8403 = vmatprep.subr.mxu0 0.0
    %8404 = vmatpush1.msra.mxu0 0.0
    %8405 = vmatprep.subr.mxu0 0.0
    %8406 = vmatpush1.msra.mxu0 0.0
    %8407 = vmatprep.subr.mxu0 0.0
    %8408 = vmatpush1.msra.mxu0 0.0
    %8409 = vmatprep.subr.mxu0 0.0
    %8410 = vmatpush1.msra.mxu0 0.0
    %8411 = vmatprep.subr.mxu0 0.0
    %8412 = vmatpush1.msra.mxu0 0.0
    %8413 = vmatprep.subr.mxu0 0.0
    %8414 = vmatpush1.msra.mxu0 0.0
    %8415 = vmatprep.subr.mxu0 0.0
    %8416 = vmatpush1.msra.mxu0 0.0
    %8417 = vmatprep.subr.mxu0 0.0
    %8418 = vmatpush1.msra.mxu0 0.0
    %8419 = vmatprep.subr.mxu0 0.0
    %8420 = vmatpush1.msra.mxu0 0.0
    %8421 = vmatprep.subr.mxu0 0.0
    %8422 = vmatpush1.msra.mxu0 0.0
    %8423 = vmatprep.subr.mxu0 0.0
    %8424 = vmatpush1.msra.mxu0 0.0
    %8425 = vmatprep.subr.mxu0 0.0
    %8426 = vmatpush1.msra.mxu0 0.0
    %8427 = vmatprep.subr.mxu0 0.0
    %8428 = vmatpush1.msra.mxu0 0.0
    %8429 = vmatprep.subr.mxu0 0.0
    %8430 = vmatpush1.msra.mxu0 0.0
    %8431 = vmatprep.subr.mxu0 0.0
    %8432 = vmatpush1.msra.mxu0 0.0
    %8433 = vmatprep.subr.mxu0 0.0
    %8434 = vmatpush1.msra.mxu0 0.0
    %8435 = vmatprep.subr.mxu0 0.0
    %8436 = vmatpush1.msra.mxu0 0.0
    %8437 = vmatprep.subr.mxu0 0.0
    %8438 = vmatpush1.msra.mxu0 0.0
    %8439 = vmatprep.subr.mxu0 0.0
    %8440 = vmatpush1.msra.mxu0 0.0
    %8441 = vmatprep.subr.mxu0 0.0
    %8442 = vmatpush1.msra.mxu0 0.0
    %8443 = vmatprep.mubr.f32.mxu0 0.0
    %8444 = vmatmul.mubr.f32.gmra.mrb[0].mxu0 %v8377
    %v8445 = vpop.f32.mrb[0].mxu0
    %v8446 = vadd.f32 0.0, %v8445
    %v8447 = vpop.f32.mrb[0].mxu0
    %8448 = vdwg.mxu0
    %v8450 = vsel %vm7419, %v7932, 0
    %8452 = vmatprep.subr.mxu0 0.0
    %8453 = vmatpush1.msra.mxu0 %v8012
    %8454 = vmatprep.subr.mxu0 0.0
    %8455 = vmatpush1.msra.mxu0 0.0
    %8456 = vmatprep.subr.mxu0 0.0
    %8457 = vmatpush1.msra.mxu0 0.0
    %8458 = vmatprep.subr.mxu0 0.0
    %8459 = vmatpush1.msra.mxu0 0.0
    %8460 = vmatprep.subr.mxu0 0.0
    %8461 = vmatpush1.msra.mxu0 0.0
    %8462 = vmatprep.subr.mxu0 0.0
    %8463 = vmatpush1.msra.mxu0 0.0
    %8464 = vmatprep.subr.mxu0 0.0
    %8465 = vmatpush1.msra.mxu0 0.0
    %8466 = vmatprep.subr.mxu0 0.0
    %8467 = vmatpush1.msra.mxu0 0.0
    %8468 = vmatprep.subr.mxu0 0.0
    %8469 = vmatpush1.msra.mxu0 0.0
    %8470 = vmatprep.subr.mxu0 0.0
    %8471 = vmatpush1.msra.mxu0 0.0
    %8472 = vmatprep.subr.mxu0 0.0
    %8473 = vmatpush1.msra.mxu0 0.0
    %8474 = vmatprep.subr.mxu0 0.0
    %8475 = vmatpush1.msra.mxu0 0.0
    %8476 = vmatprep.subr.mxu0 0.0
    %8477 = vmatpush1.msra.mxu0 0.0
    %8478 = vmatprep.subr.mxu0 0.0
    %8479 = vmatpush1.msra.mxu0 0.0
    %8480 = vmatprep.subr.mxu0 0.0
    %8481 = vmatpush1.msra.mxu0 0.0
    %8482 = vmatprep.subr.mxu0 0.0
    %8483 = vmatpush1.msra.mxu0 0.0
    %8484 = vmatprep.subr.mxu0 0.0
    %8485 = vmatpush1.msra.mxu0 0.0
    %8486 = vmatprep.subr.mxu0 0.0
    %8487 = vmatpush1.msra.mxu0 0.0
    %8488 = vmatprep.subr.mxu0 0.0
    %8489 = vmatpush1.msra.mxu0 0.0
    %8490 = vmatprep.subr.mxu0 0.0
    %8491 = vmatpush1.msra.mxu0 0.0
    %8492 = vmatprep.subr.mxu0 0.0
    %8493 = vmatpush1.msra.mxu0 0.0
    %8494 = vmatprep.subr.mxu0 0.0
    %8495 = vmatpush1.msra.mxu0 0.0
    %8496 = vmatprep.subr.mxu0 0.0
    %8497 = vmatpush1.msra.mxu0 0.0
    %8498 = vmatprep.subr.mxu0 0.0
    %8499 = vmatpush1.msra.mxu0 0.0
    %8500 = vmatprep.subr.mxu0 0.0
    %8501 = vmatpush1.msra.mxu0 0.0
    %8502 = vmatprep.subr.mxu0 0.0
    %8503 = vmatpush1.msra.mxu0 0.0
    %8504 = vmatprep.subr.mxu0 0.0
    %8505 = vmatpush1.msra.mxu0 0.0
    %8506 = vmatprep.subr.mxu0 0.0
    %8507 = vmatpush1.msra.mxu0 0.0
    %8508 = vmatprep.subr.mxu0 0.0
    %8509 = vmatpush1.msra.mxu0 0.0
    %8510 = vmatprep.subr.mxu0 0.0
    %8511 = vmatpush1.msra.mxu0 0.0
    %8512 = vmatprep.subr.mxu0 0.0
    %8513 = vmatpush1.msra.mxu0 0.0
    %8514 = vmatprep.subr.mxu0 0.0
    %8515 = vmatpush1.msra.mxu0 0.0
    %8516 = vmatprep.mubr.f32.mxu0 0.0
    %8517 = vmatmul.mubr.f32.gmra.mrb[0].mxu0 %v8450
    %v8518 = vpop.f32.mrb[0].mxu0
    %v8519 = vadd.f32 0.0, %v8518
    %v8520 = vpop.f32.mrb[0].mxu0
    %8521 = vdwg.mxu0
    %v8523 = vsel %vm7419, %v8005, 0
    %8525 = vmatprep.subr.mxu0 0.0
    %8526 = vmatpush1.msra.mxu0 %v8012
    %8527 = vmatprep.subr.mxu0 0.0
    %8528 = vmatpush1.msra.mxu0 0.0
    %8529 = vmatprep.subr.mxu0 0.0
    %8530 = vmatpush1.msra.mxu0 0.0
    %8531 = vmatprep.subr.mxu0 0.0
    %8532 = vmatpush1.msra.mxu0 0.0
    %8533 = vmatprep.subr.mxu0 0.0
    %8534 = vmatpush1.msra.mxu0 0.0
    %8535 = vmatprep.subr.mxu0 0.0
    %8536 = vmatpush1.msra.mxu0 0.0
    %8537 = vmatprep.subr.mxu0 0.0
    %8538 = vmatpush1.msra.mxu0 0.0
    %8539 = vmatprep.subr.mxu0 0.0
    %8540 = vmatpush1.msra.mxu0 0.0
    %8541 = vmatprep.subr.mxu0 0.0
    %8542 = vmatpush1.msra.mxu0 0.0
    %8543 = vmatprep.subr.mxu0 0.0
    %8544 = vmatpush1.msra.mxu0 0.0
    %8545 = vmatprep.subr.mxu0 0.0
    %8546 = vmatpush1.msra.mxu0 0.0
    %8547 = vmatprep.subr.mxu0 0.0
    %8548 = vmatpush1.msra.mxu0 0.0
    %8549 = vmatprep.subr.mxu0 0.0
    %8550 = vmatpush1.msra.mxu0 0.0
    %8551 = vmatprep.subr.mxu0 0.0
    %8552 = vmatpush1.msra.mxu0 0.0
    %8553 = vmatprep.subr.mxu0 0.0
    %8554 = vmatpush1.msra.mxu0 0.0
    %8555 = vmatprep.subr.mxu0 0.0
    %8556 = vmatpush1.msra.mxu0 0.0
    %8557 = vmatprep.subr.mxu0 0.0
    %8558 = vmatpush1.msra.mxu0 0.0
    %8559 = vmatprep.subr.mxu0 0.0
    %8560 = vmatpush1.msra.mxu0 0.0
    %8561 = vmatprep.subr.mxu0 0.0
    %8562 = vmatpush1.msra.mxu0 0.0
    %8563 = vmatprep.subr.mxu0 0.0
    %8564 = vmatpush1.msra.mxu0 0.0
    %8565 = vmatprep.subr.mxu0 0.0
    %8566 = vmatpush1.msra.mxu0 0.0
    %8567 = vmatprep.subr.mxu0 0.0
    %8568 = vmatpush1.msra.mxu0 0.0
    %8569 = vmatprep.subr.mxu0 0.0
    %8570 = vmatpush1.msra.mxu0 0.0
    %8571 = vmatprep.subr.mxu0 0.0
    %8572 = vmatpush1.msra.mxu0 0.0
    %8573 = vmatprep.subr.mxu0 0.0
    %8574 = vmatpush1.msra.mxu0 0.0
    %8575 = vmatprep.subr.mxu0 0.0
    %8576 = vmatpush1.msra.mxu0 0.0
    %8577 = vmatprep.subr.mxu0 0.0
    %8578 = vmatpush1.msra.mxu0 0.0
    %8579 = vmatprep.subr.mxu0 0.0
    %8580 = vmatpush1.msra.mxu0 0.0
    %8581 = vmatprep.subr.mxu0 0.0
    %8582 = vmatpush1.msra.mxu0 0.0
    %8583 = vmatprep.subr.mxu0 0.0
    %8584 = vmatpush1.msra.mxu0 0.0
    %8585 = vmatprep.subr.mxu0 0.0
    %8586 = vmatpush1.msra.mxu0 0.0
    %8587 = vmatprep.subr.mxu0 0.0
    %8588 = vmatpush1.msra.mxu0 0.0
    %8589 = vmatprep.mubr.f32.mxu0 0.0
    %8590 = vmatmul.mubr.f32.gmra.mrb[0].mxu0 %v8523
    %v8591 = vpop.f32.mrb[0].mxu0
    %v8592 = vadd.f32 0.0, %v8591
    %v8593 = vpop.f32.mrb[0].mxu0
    %8594 = vdwg.mxu0
    %v8595 = vsel %vm4068, %v4985, 0
    %8597 = vmatprep.subr.mxu0 0.0
    %8598 = vmatpush1.msra.mxu0 %v6256
    %8599 = vmatprep.subr.mxu0 0.0
    %8600 = vmatpush1.msra.mxu0 0.0
    %8601 = vmatprep.subr.mxu0 0.0
    %8602 = vmatpush1.msra.mxu0 0.0
    %8603 = vmatprep.subr.mxu0 0.0
    %8604 = vmatpush1.msra.mxu0 0.0
    %8605 = vmatprep.subr.mxu0 0.0
    %8606 = vmatpush1.msra.mxu0 0.0
    %8607 = vmatprep.subr.mxu0 0.0
    %8608 = vmatpush1.msra.mxu0 0.0
    %8609 = vmatprep.subr.mxu0 0.0
    %8610 = vmatpush1.msra.mxu0 0.0
    %8611 = vmatprep.subr.mxu0 0.0
    %8612 = vmatpush1.msra.mxu0 0.0
    %8613 = vmatprep.subr.mxu0 0.0
    %8614 = vmatpush1.msra.mxu0 0.0
    %8615 = vmatprep.subr.mxu0 0.0
    %8616 = vmatpush1.msra.mxu0 0.0
    %8617 = vmatprep.subr.mxu0 0.0
    %8618 = vmatpush1.msra.mxu0 0.0
    %8619 = vmatprep.subr.mxu0 0.0
    %8620 = vmatpush1.msra.mxu0 0.0
    %8621 = vmatprep.subr.mxu0 0.0
    %8622 = vmatpush1.msra.mxu0 0.0
    %8623 = vmatprep.subr.mxu0 0.0
    %8624 = vmatpush1.msra.mxu0 0.0
    %8625 = vmatprep.subr.mxu0 0.0
    %8626 = vmatpush1.msra.mxu0 0.0
    %8627 = vmatprep.subr.mxu0 0.0
    %8628 = vmatpush1.msra.mxu0 0.0
    %8629 = vmatprep.subr.mxu0 0.0
    %8630 = vmatpush1.msra.mxu0 0.0
    %8631 = vmatprep.subr.mxu0 0.0
    %8632 = vmatpush1.msra.mxu0 0.0
    %8633 = vmatprep.subr.mxu0 0.0
    %8634 = vmatpush1.msra.mxu0 0.0
    %8635 = vmatprep.subr.mxu0 0.0
    %8636 = vmatpush1.msra.mxu0 0.0
    %8637 = vmatprep.subr.mxu0 0.0
    %8638 = vmatpush1.msra.mxu0 0.0
    %8639 = vmatprep.subr.mxu0 0.0
    %8640 = vmatpush1.msra.mxu0 0.0
    %8641 = vmatprep.subr.mxu0 0.0
    %8642 = vmatpush1.msra.mxu0 0.0
    %8643 = vmatprep.subr.mxu0 0.0
    %8644 = vmatpush1.msra.mxu0 0.0
    %8645 = vmatprep.subr.mxu0 0.0
    %8646 = vmatpush1.msra.mxu0 0.0
    %8647 = vmatprep.subr.mxu0 0.0
    %8648 = vmatpush1.msra.mxu0 0.0
    %8649 = vmatprep.subr.mxu0 0.0
    %8650 = vmatpush1.msra.mxu0 0.0
    %8651 = vmatprep.subr.mxu0 0.0
    %8652 = vmatpush1.msra.mxu0 0.0
    %8653 = vmatprep.subr.mxu0 0.0
    %8654 = vmatpush1.msra.mxu0 0.0
    %8655 = vmatprep.subr.mxu0 0.0
    %8656 = vmatpush1.msra.mxu0 0.0
    %8657 = vmatprep.subr.mxu0 0.0
    %8658 = vmatpush1.msra.mxu0 0.0
    %8659 = vmatprep.subr.mxu0 0.0
    %8660 = vmatpush1.msra.mxu0 0.0
    %8661 = vmatprep.mubr.f32.mxu0 0.0
    %8662 = vmatmul.mubr.f32.gmra.mrb[0].mxu0 %v8595
    %v8663 = vpop.f32.mrb[0].mxu0
    %v8664 = vadd.f32 0.0, %v8663
    %v8665 = vpop.f32.mrb[0].mxu0
    %8666 = vdwg.mxu0
    %v8667 = vsel %vm4068, %v5055, 0
    %8669 = vmatprep.subr.mxu0 0.0
    %8670 = vmatpush1.msra.mxu0 %v6256
    %8671 = vmatprep.subr.mxu0 0.0
    %8672 = vmatpush1.msra.mxu0 0.0
    %8673 = vmatprep.subr.mxu0 0.0
    %8674 = vmatpush1.msra.mxu0 0.0
    %8675 = vmatprep.subr.mxu0 0.0
    %8676 = vmatpush1.msra.mxu0 0.0
    %8677 = vmatprep.subr.mxu0 0.0
    %8678 = vmatpush1.msra.mxu0 0.0
    %8679 = vmatprep.subr.mxu0 0.0
    %8680 = vmatpush1.msra.mxu0 0.0
    %8681 = vmatprep.subr.mxu0 0.0
    %8682 = vmatpush1.msra.mxu0 0.0
    %8683 = vmatprep.subr.mxu0 0.0
    %8684 = vmatpush1.msra.mxu0 0.0
    %8685 = vmatprep.subr.mxu0 0.0
    %8686 = vmatpush1.msra.mxu0 0.0
    %8687 = vmatprep.subr.mxu0 0.0
    %8688 = vmatpush1.msra.mxu0 0.0
    %8689 = vmatprep.subr.mxu0 0.0
    %8690 = vmatpush1.msra.mxu0 0.0
    %8691 = vmatprep.subr.mxu0 0.0
    %8692 = vmatpush1.msra.mxu0 0.0
    %8693 = vmatprep.subr.mxu0 0.0
    %8694 = vmatpush1.msra.mxu0 0.0
    %8695 = vmatprep.subr.mxu0 0.0
    %8696 = vmatpush1.msra.mxu0 0.0
    %8697 = vmatprep.subr.mxu0 0.0
    %8698 = vmatpush1.msra.mxu0 0.0
    %8699 = vmatprep.subr.mxu0 0.0
    %8700 = vmatpush1.msra.mxu0 0.0
    %8701 = vmatprep.subr.mxu0 0.0
    %8702 = vmatpush1.msra.mxu0 0.0
    %8703 = vmatprep.subr.mxu0 0.0
    %8704 = vmatpush1.msra.mxu0 0.0
    %8705 = vmatprep.subr.mxu0 0.0
    %8706 = vmatpush1.msra.mxu0 0.0
    %8707 = vmatprep.subr.mxu0 0.0
    %8708 = vmatpush1.msra.mxu0 0.0
    %8709 = vmatprep.subr.mxu0 0.0
    %8710 = vmatpush1.msra.mxu0 0.0
    %8711 = vmatprep.subr.mxu0 0.0
    %8712 = vmatpush1.msra.mxu0 0.0
    %8713 = vmatprep.subr.mxu0 0.0
    %8714 = vmatpush1.msra.mxu0 0.0
    %8715 = vmatprep.subr.mxu0 0.0
    %8716 = vmatpush1.msra.mxu0 0.0
    %8717 = vmatprep.subr.mxu0 0.0
    %8718 = vmatpush1.msra.mxu0 0.0
    %8719 = vmatprep.subr.mxu0 0.0
    %8720 = vmatpush1.msra.mxu0 0.0
    %8721 = vmatprep.subr.mxu0 0.0
    %8722 = vmatpush1.msra.mxu0 0.0
    %8723 = vmatprep.subr.mxu0 0.0
    %8724 = vmatpush1.msra.mxu0 0.0
    %8725 = vmatprep.subr.mxu0 0.0
    %8726 = vmatpush1.msra.mxu0 0.0
    %8727 = vmatprep.subr.mxu0 0.0
    %8728 = vmatpush1.msra.mxu0 0.0
    %8729 = vmatprep.subr.mxu0 0.0
    %8730 = vmatpush1.msra.mxu0 0.0
    %8731 = vmatprep.subr.mxu0 0.0
    %8732 = vmatpush1.msra.mxu0 0.0
    %8733 = vmatprep.mubr.f32.mxu0 0.0
    %8734 = vmatmul.mubr.f32.gmra.mrb[0].mxu0 %v8667
    %v8735 = vpop.f32.mrb[0].mxu0
    %v8736 = vadd.f32 0.0, %v8735
    %v8737 = vpop.f32.mrb[0].mxu0
    %8738 = vdwg.mxu0
    %v8739 = vsel %vm4068, %v5125, 0
    %8741 = vmatprep.subr.mxu0 0.0
    %8742 = vmatpush1.msra.mxu0 %v6256
    %8743 = vmatprep.subr.mxu0 0.0
    %8744 = vmatpush1.msra.mxu0 0.0
    %8745 = vmatprep.subr.mxu0 0.0
    %8746 = vmatpush1.msra.mxu0 0.0
    %8747 = vmatprep.subr.mxu0 0.0
    %8748 = vmatpush1.msra.mxu0 0.0
    %8749 = vmatprep.subr.mxu0 0.0
    %8750 = vmatpush1.msra.mxu0 0.0
    %8751 = vmatprep.subr.mxu0 0.0
    %8752 = vmatpush1.msra.mxu0 0.0
    %8753 = vmatprep.subr.mxu0 0.0
    %8754 = vmatpush1.msra.mxu0 0.0
    %8755 = vmatprep.subr.mxu0 0.0
    %8756 = vmatpush1.msra.mxu0 0.0
    %8757 = vmatprep.subr.mxu0 0.0
    %8758 = vmatpush1.msra.mxu0 0.0
    %8759 = vmatprep.subr.mxu0 0.0
    %8760 = vmatpush1.msra.mxu0 0.0
    %8761 = vmatprep.subr.mxu0 0.0
    %8762 = vmatpush1.msra.mxu0 0.0
    %8763 = vmatprep.subr.mxu0 0.0
    %8764 = vmatpush1.msra.mxu0 0.0
    %8765 = vmatprep.subr.mxu0 0.0
    %8766 = vmatpush1.msra.mxu0 0.0
    %8767 = vmatprep.subr.mxu0 0.0
    %8768 = vmatpush1.msra.mxu0 0.0
    %8769 = vmatprep.subr.mxu0 0.0
    %8770 = vmatpush1.msra.mxu0 0.0
    %8771 = vmatprep.subr.mxu0 0.0
    %8772 = vmatpush1.msra.mxu0 0.0
    %8773 = vmatprep.subr.mxu0 0.0
    %8774 = vmatpush1.msra.mxu0 0.0
    %8775 = vmatprep.subr.mxu0 0.0
    %8776 = vmatpush1.msra.mxu0 0.0
    %8777 = vmatprep.subr.mxu0 0.0
    %8778 = vmatpush1.msra.mxu0 0.0
    %8779 = vmatprep.subr.mxu0 0.0
    %8780 = vmatpush1.msra.mxu0 0.0
    %8781 = vmatprep.subr.mxu0 0.0
    %8782 = vmatpush1.msra.mxu0 0.0
    %8783 = vmatprep.subr.mxu0 0.0
    %8784 = vmatpush1.msra.mxu0 0.0
    %8785 = vmatprep.subr.mxu0 0.0
    %8786 = vmatpush1.msra.mxu0 0.0
    %8787 = vmatprep.subr.mxu0 0.0
    %8788 = vmatpush1.msra.mxu0 0.0
    %8789 = vmatprep.subr.mxu0 0.0
    %8790 = vmatpush1.msra.mxu0 0.0
    %8791 = vmatprep.subr.mxu0 0.0
    %8792 = vmatpush1.msra.mxu0 0.0
    %8793 = vmatprep.subr.mxu0 0.0
    %8794 = vmatpush1.msra.mxu0 0.0
    %8795 = vmatprep.subr.mxu0 0.0
    %8796 = vmatpush1.msra.mxu0 0.0
    %8797 = vmatprep.subr.mxu0 0.0
    %8798 = vmatpush1.msra.mxu0 0.0
    %8799 = vmatprep.subr.mxu0 0.0
    %8800 = vmatpush1.msra.mxu0 0.0
    %8801 = vmatprep.subr.mxu0 0.0
    %8802 = vmatpush1.msra.mxu0 0.0
    %8803 = vmatprep.subr.mxu0 0.0
    %8804 = vmatpush1.msra.mxu0 0.0
    %8805 = vmatprep.mubr.f32.mxu0 0.0
    %8806 = vmatmul.mubr.f32.gmra.mrb[0].mxu0 %v8739
    %v8807 = vpop.f32.mrb[0].mxu0
    %v8808 = vadd.f32 0.0, %v8807
    %v8809 = vpop.f32.mrb[0].mxu0
    %8810 = vdwg.mxu0
    %v8811 = vsel %vm4068, %v5195, 0
    %8813 = vmatprep.subr.mxu0 0.0
    %8814 = vmatpush1.msra.mxu0 %v6256
    %8815 = vmatprep.subr.mxu0 0.0
    %8816 = vmatpush1.msra.mxu0 0.0
    %8817 = vmatprep.subr.mxu0 0.0
    %8818 = vmatpush1.msra.mxu0 0.0
    %8819 = vmatprep.subr.mxu0 0.0
    %8820 = vmatpush1.msra.mxu0 0.0
    %8821 = vmatprep.subr.mxu0 0.0
    %8822 = vmatpush1.msra.mxu0 0.0
    %8823 = vmatprep.subr.mxu0 0.0
    %8824 = vmatpush1.msra.mxu0 0.0
    %8825 = vmatprep.subr.mxu0 0.0
    %8826 = vmatpush1.msra.mxu0 0.0
    %8827 = vmatprep.subr.mxu0 0.0
    %8828 = vmatpush1.msra.mxu0 0.0
    %8829 = vmatprep.subr.mxu0 0.0
    %8830 = vmatpush1.msra.mxu0 0.0
    %8831 = vmatprep.subr.mxu0 0.0
    %8832 = vmatpush1.msra.mxu0 0.0
    %8833 = vmatprep.subr.mxu0 0.0
    %8834 = vmatpush1.msra.mxu0 0.0
    %8835 = vmatprep.subr.mxu0 0.0
    %8836 = vmatpush1.msra.mxu0 0.0
    %8837 = vmatprep.subr.mxu0 0.0
    %8838 = vmatpush1.msra.mxu0 0.0
    %8839 = vmatprep.subr.mxu0 0.0
    %8840 = vmatpush1.msra.mxu0 0.0
    %8841 = vmatprep.subr.mxu0 0.0
    %8842 = vmatpush1.msra.mxu0 0.0
    %8843 = vmatprep.subr.mxu0 0.0
    %8844 = vmatpush1.msra.mxu0 0.0
    %8845 = vmatprep.subr.mxu0 0.0
    %8846 = vmatpush1.msra.mxu0 0.0
    %8847 = vmatprep.subr.mxu0 0.0
    %8848 = vmatpush1.msra.mxu0 0.0
    %8849 = vmatprep.subr.mxu0 0.0
    %8850 = vmatpush1.msra.mxu0 0.0
    %8851 = vmatprep.subr.mxu0 0.0
    %8852 = vmatpush1.msra.mxu0 0.0
    %8853 = vmatprep.subr.mxu0 0.0
    %8854 = vmatpush1.msra.mxu0 0.0
    %8855 = vmatprep.subr.mxu0 0.0
    %8856 = vmatpush1.msra.mxu0 0.0
    %8857 = vmatprep.subr.mxu0 0.0
    %8858 = vmatpush1.msra.mxu0 0.0
    %8859 = vmatprep.subr.mxu0 0.0
    %8860 = vmatpush1.msra.mxu0 0.0
    %8861 = vmatprep.subr.mxu0 0.0
    %8862 = vmatpush1.msra.mxu0 0.0
    %8863 = vmatprep.subr.mxu0 0.0
    %8864 = vmatpush1.msra.mxu0 0.0
    %8865 = vmatprep.subr.mxu0 0.0
    %8866 = vmatpush1.msra.mxu0 0.0
    %8867 = vmatprep.subr.mxu0 0.0
    %8868 = vmatpush1.msra.mxu0 0.0
    %8869 = vmatprep.subr.mxu0 0.0
    %8870 = vmatpush1.msra.mxu0 0.0
    %8871 = vmatprep.subr.mxu0 0.0
    %8872 = vmatpush1.msra.mxu0 0.0
    %8873 = vmatprep.subr.mxu0 0.0
    %8874 = vmatpush1.msra.mxu0 0.0
    %8875 = vmatprep.subr.mxu0 0.0
    %8876 = vmatpush1.msra.mxu0 0.0
    %8877 = vmatprep.mubr.f32.mxu0 0.0
    %8878 = vmatmul.mubr.f32.gmra.mrb[0].mxu0 %v8811
    %v8879 = vpop.f32.mrb[0].mxu0
    %v8880 = vadd.f32 0.0, %v8879
    %v8881 = vpop.f32.mrb[0].mxu0
    %8882 = vdwg.mxu0
    %v8883 = vsel %vm4068, %v5265, 0
    %8885 = vmatprep.subr.mxu0 0.0
    %8886 = vmatpush1.msra.mxu0 %v6256
    %8887 = vmatprep.subr.mxu0 0.0
    %8888 = vmatpush1.msra.mxu0 0.0
    %8889 = vmatprep.subr.mxu0 0.0
    %8890 = vmatpush1.msra.mxu0 0.0
    %8891 = vmatprep.subr.mxu0 0.0
    %8892 = vmatpush1.msra.mxu0 0.0
    %8893 = vmatprep.subr.mxu0 0.0
    %8894 = vmatpush1.msra.mxu0 0.0
    %8895 = vmatprep.subr.mxu0 0.0
    %8896 = vmatpush1.msra.mxu0 0.0
    %8897 = vmatprep.subr.mxu0 0.0
    %8898 = vmatpush1.msra.mxu0 0.0
    %8899 = vmatprep.subr.mxu0 0.0
    %8900 = vmatpush1.msra.mxu0 0.0
    %8901 = vmatprep.subr.mxu0 0.0
    %8902 = vmatpush1.msra.mxu0 0.0
    %8903 = vmatprep.subr.mxu0 0.0
    %8904 = vmatpush1.msra.mxu0 0.0
    %8905 = vmatprep.subr.mxu0 0.0
    %8906 = vmatpush1.msra.mxu0 0.0
    %8907 = vmatprep.subr.mxu0 0.0
    %8908 = vmatpush1.msra.mxu0 0.0
    %8909 = vmatprep.subr.mxu0 0.0
    %8910 = vmatpush1.msra.mxu0 0.0
    %8911 = vmatprep.subr.mxu0 0.0
    %8912 = vmatpush1.msra.mxu0 0.0
    %8913 = vmatprep.subr.mxu0 0.0
    %8914 = vmatpush1.msra.mxu0 0.0
    %8915 = vmatprep.subr.mxu0 0.0
    %8916 = vmatpush1.msra.mxu0 0.0
    %8917 = vmatprep.subr.mxu0 0.0
    %8918 = vmatpush1.msra.mxu0 0.0
    %8919 = vmatprep.subr.mxu0 0.0
    %8920 = vmatpush1.msra.mxu0 0.0
    %8921 = vmatprep.subr.mxu0 0.0
    %8922 = vmatpush1.msra.mxu0 0.0
    %8923 = vmatprep.subr.mxu0 0.0
    %8924 = vmatpush1.msra.mxu0 0.0
    %8925 = vmatprep.subr.mxu0 0.0
    %8926 = vmatpush1.msra.mxu0 0.0
    %8927 = vmatprep.subr.mxu0 0.0
    %8928 = vmatpush1.msra.mxu0 0.0
    %8929 = vmatprep.subr.mxu0 0.0
    %8930 = vmatpush1.msra.mxu0 0.0
    %8931 = vmatprep.subr.mxu0 0.0
    %8932 = vmatpush1.msra.mxu0 0.0
    %8933 = vmatprep.subr.mxu0 0.0
    %8934 = vmatpush1.msra.mxu0 0.0
    %8935 = vmatprep.subr.mxu0 0.0
    %8936 = vmatpush1.msra.mxu0 0.0
    %8937 = vmatprep.subr.mxu0 0.0
    %8938 = vmatpush1.msra.mxu0 0.0
    %8939 = vmatprep.subr.mxu0 0.0
    %8940 = vmatpush1.msra.mxu0 0.0
    %8941 = vmatprep.subr.mxu0 0.0
    %8942 = vmatpush1.msra.mxu0 0.0
    %8943 = vmatprep.subr.mxu0 0.0
    %8944 = vmatpush1.msra.mxu0 0.0
    %8945 = vmatprep.subr.mxu0 0.0
    %8946 = vmatpush1.msra.mxu0 0.0
    %8947 = vmatprep.subr.mxu0 0.0
    %8948 = vmatpush1.msra.mxu0 0.0
    %8949 = vmatprep.mubr.f32.mxu0 0.0
    %8950 = vmatmul.mubr.f32.gmra.mrb[0].mxu0 %v8883
    %v8951 = vpop.f32.mrb[0].mxu0
    %v8952 = vadd.f32 0.0, %v8951
    %v8953 = vpop.f32.mrb[0].mxu0
    %8954 = vdwg.mxu0
    %v8955 = vsel %vm4068, %v5335, 0
    %8957 = vmatprep.subr.mxu0 0.0
    %8958 = vmatpush1.msra.mxu0 %v6256
    %8959 = vmatprep.subr.mxu0 0.0
    %8960 = vmatpush1.msra.mxu0 0.0
    %8961 = vmatprep.subr.mxu0 0.0
    %8962 = vmatpush1.msra.mxu0 0.0
    %8963 = vmatprep.subr.mxu0 0.0
    %8964 = vmatpush1.msra.mxu0 0.0
    %8965 = vmatprep.subr.mxu0 0.0
    %8966 = vmatpush1.msra.mxu0 0.0
    %8967 = vmatprep.subr.mxu0 0.0
    %8968 = vmatpush1.msra.mxu0 0.0
    %8969 = vmatprep.subr.mxu0 0.0
    %8970 = vmatpush1.msra.mxu0 0.0
    %8971 = vmatprep.subr.mxu0 0.0
    %8972 = vmatpush1.msra.mxu0 0.0
    %8973 = vmatprep.subr.mxu0 0.0
    %8974 = vmatpush1.msra.mxu0 0.0
    %8975 = vmatprep.subr.mxu0 0.0
    %8976 = vmatpush1.msra.mxu0 0.0
    %8977 = vmatprep.subr.mxu0 0.0
    %8978 = vmatpush1.msra.mxu0 0.0
    %8979 = vmatprep.subr.mxu0 0.0
    %8980 = vmatpush1.msra.mxu0 0.0
    %8981 = vmatprep.subr.mxu0 0.0
    %8982 = vmatpush1.msra.mxu0 0.0
    %8983 = vmatprep.subr.mxu0 0.0
    %8984 = vmatpush1.msra.mxu0 0.0
    %8985 = vmatprep.subr.mxu0 0.0
    %8986 = vmatpush1.msra.mxu0 0.0
    %8987 = vmatprep.subr.mxu0 0.0
    %8988 = vmatpush1.msra.mxu0 0.0
    %8989 = vmatprep.subr.mxu0 0.0
    %8990 = vmatpush1.msra.mxu0 0.0
    %8991 = vmatprep.subr.mxu0 0.0
    %8992 = vmatpush1.msra.mxu0 0.0
    %8993 = vmatprep.subr.mxu0 0.0
    %8994 = vmatpush1.msra.mxu0 0.0
    %8995 = vmatprep.subr.mxu0 0.0
    %8996 = vmatpush1.msra.mxu0 0.0
    %8997 = vmatprep.subr.mxu0 0.0
    %8998 = vmatpush1.msra.mxu0 0.0
    %8999 = vmatprep.subr.mxu0 0.0
    %9000 = vmatpush1.msra.mxu0 0.0
    %9001 = vmatprep.subr.mxu0 0.0
    %9002 = vmatpush1.msra.mxu0 0.0
    %9003 = vmatprep.subr.mxu0 0.0
    %9004 = vmatpush1.msra.mxu0 0.0
    %9005 = vmatprep.subr.mxu0 0.0
    %9006 = vmatpush1.msra.mxu0 0.0
    %9007 = vmatprep.subr.mxu0 0.0
    %9008 = vmatpush1.msra.mxu0 0.0
    %9009 = vmatprep.subr.mxu0 0.0
    %9010 = vmatpush1.msra.mxu0 0.0
    %9011 = vmatprep.subr.mxu0 0.0
    %9012 = vmatpush1.msra.mxu0 0.0
    %9013 = vmatprep.subr.mxu0 0.0
    %9014 = vmatpush1.msra.mxu0 0.0
    %9015 = vmatprep.subr.mxu0 0.0
    %9016 = vmatpush1.msra.mxu0 0.0
    %9017 = vmatprep.subr.mxu0 0.0
    %9018 = vmatpush1.msra.mxu0 0.0
    %9019 = vmatprep.subr.mxu0 0.0
    %9020 = vmatpush1.msra.mxu0 0.0
    %9021 = vmatprep.mubr.f32.mxu0 0.0
    %9022 = vmatmul.mubr.f32.gmra.mrb[0].mxu0 %v8955
    %v9023 = vpop.f32.mrb[0].mxu0
    %v9024 = vadd.f32 0.0, %v9023
    %v9025 = vpop.f32.mrb[0].mxu0
    %9026 = vdwg.mxu0
    %v9027 = vsel %vm4068, %v5405, 0
    %9029 = vmatprep.subr.mxu0 0.0
    %9030 = vmatpush1.msra.mxu0 %v6256
    %9031 = vmatprep.subr.mxu0 0.0
    %9032 = vmatpush1.msra.mxu0 0.0
    %9033 = vmatprep.subr.mxu0 0.0
    %9034 = vmatpush1.msra.mxu0 0.0
    %9035 = vmatprep.subr.mxu0 0.0
    %9036 = vmatpush1.msra.mxu0 0.0
    %9037 = vmatprep.subr.mxu0 0.0
    %9038 = vmatpush1.msra.mxu0 0.0
    %9039 = vmatprep.subr.mxu0 0.0
    %9040 = vmatpush1.msra.mxu0 0.0
    %9041 = vmatprep.subr.mxu0 0.0
    %9042 = vmatpush1.msra.mxu0 0.0
    %9043 = vmatprep.subr.mxu0 0.0
    %9044 = vmatpush1.msra.mxu0 0.0
    %9045 = vmatprep.subr.mxu0 0.0
    %9046 = vmatpush1.msra.mxu0 0.0
    %9047 = vmatprep.subr.mxu0 0.0
    %9048 = vmatpush1.msra.mxu0 0.0
    %9049 = vmatprep.subr.mxu0 0.0
    %9050 = vmatpush1.msra.mxu0 0.0
    %9051 = vmatprep.subr.mxu0 0.0
    %9052 = vmatpush1.msra.mxu0 0.0
    %9053 = vmatprep.subr.mxu0 0.0
    %9054 = vmatpush1.msra.mxu0 0.0
    %9055 = vmatprep.subr.mxu0 0.0
    %9056 = vmatpush1.msra.mxu0 0.0
    %9057 = vmatprep.subr.mxu0 0.0
    %9058 = vmatpush1.msra.mxu0 0.0
    %9059 = vmatprep.subr.mxu0 0.0
    %9060 = vmatpush1.msra.mxu0 0.0
    %9061 = vmatprep.subr.mxu0 0.0
    %9062 = vmatpush1.msra.mxu0 0.0
    %9063 = vmatprep.subr.mxu0 0.0
    %9064 = vmatpush1.msra.mxu0 0.0
    %9065 = vmatprep.subr.mxu0 0.0
    %9066 = vmatpush1.msra.mxu0 0.0
    %9067 = vmatprep.subr.mxu0 0.0
    %9068 = vmatpush1.msra.mxu0 0.0
    %9069 = vmatprep.subr.mxu0 0.0
    %9070 = vmatpush1.msra.mxu0 0.0
    %9071 = vmatprep.subr.mxu0 0.0
    %9072 = vmatpush1.msra.mxu0 0.0
    %9073 = vmatprep.subr.mxu0 0.0
    %9074 = vmatpush1.msra.mxu0 0.0
    %9075 = vmatprep.subr.mxu0 0.0
    %9076 = vmatpush1.msra.mxu0 0.0
    %9077 = vmatprep.subr.mxu0 0.0
    %9078 = vmatpush1.msra.mxu0 0.0
    %9079 = vmatprep.subr.mxu0 0.0
    %9080 = vmatpush1.msra.mxu0 0.0
    %9081 = vmatprep.subr.mxu0 0.0
    %9082 = vmatpush1.msra.mxu0 0.0
    %9083 = vmatprep.subr.mxu0 0.0
    %9084 = vmatpush1.msra.mxu0 0.0
    %9085 = vmatprep.subr.mxu0 0.0
    %9086 = vmatpush1.msra.mxu0 0.0
    %9087 = vmatprep.subr.mxu0 0.0
    %9088 = vmatpush1.msra.mxu0 0.0
    %9089 = vmatprep.subr.mxu0 0.0
    %9090 = vmatpush1.msra.mxu0 0.0
    %9091 = vmatprep.subr.mxu0 0.0
    %9092 = vmatpush1.msra.mxu0 0.0
    %9093 = vmatprep.mubr.f32.mxu0 0.0
    %9094 = vmatmul.mubr.f32.gmra.mrb[0].mxu0 %v9027
    %v9095 = vpop.f32.mrb[0].mxu0
    %v9096 = vadd.f32 0.0, %v9095
    %v9097 = vpop.f32.mrb[0].mxu0
    %9098 = vdwg.mxu0
    %v9099 = vsel %vm4068, %v5475, 0
    %9101 = vmatprep.subr.mxu0 0.0
    %9102 = vmatpush1.msra.mxu0 %v6256
    %9103 = vmatprep.subr.mxu0 0.0
    %9104 = vmatpush1.msra.mxu0 0.0
    %9105 = vmatprep.subr.mxu0 0.0
    %9106 = vmatpush1.msra.mxu0 0.0
    %9107 = vmatprep.subr.mxu0 0.0
    %9108 = vmatpush1.msra.mxu0 0.0
    %9109 = vmatprep.subr.mxu0 0.0
    %9110 = vmatpush1.msra.mxu0 0.0
    %9111 = vmatprep.subr.mxu0 0.0
    %9112 = vmatpush1.msra.mxu0 0.0
    %9113 = vmatprep.subr.mxu0 0.0
    %9114 = vmatpush1.msra.mxu0 0.0
    %9115 = vmatprep.subr.mxu0 0.0
    %9116 = vmatpush1.msra.mxu0 0.0
    %9117 = vmatprep.subr.mxu0 0.0
    %9118 = vmatpush1.msra.mxu0 0.0
    %9119 = vmatprep.subr.mxu0 0.0
    %9120 = vmatpush1.msra.mxu0 0.0
    %9121 = vmatprep.subr.mxu0 0.0
    %9122 = vmatpush1.msra.mxu0 0.0
    %9123 = vmatprep.subr.mxu0 0.0
    %9124 = vmatpush1.msra.mxu0 0.0
    %9125 = vmatprep.subr.mxu0 0.0
    %9126 = vmatpush1.msra.mxu0 0.0
    %9127 = vmatprep.subr.mxu0 0.0
    %9128 = vmatpush1.msra.mxu0 0.0
    %9129 = vmatprep.subr.mxu0 0.0
    %9130 = vmatpush1.msra.mxu0 0.0
    %9131 = vmatprep.subr.mxu0 0.0
    %9132 = vmatpush1.msra.mxu0 0.0
    %9133 = vmatprep.subr.mxu0 0.0
    %9134 = vmatpush1.msra.mxu0 0.0
    %9135 = vmatprep.subr.mxu0 0.0
    %9136 = vmatpush1.msra.mxu0 0.0
    %9137 = vmatprep.subr.mxu0 0.0
    %9138 = vmatpush1.msra.mxu0 0.0
    %9139 = vmatprep.subr.mxu0 0.0
    %9140 = vmatpush1.msra.mxu0 0.0
    %9141 = vmatprep.subr.mxu0 0.0
    %9142 = vmatpush1.msra.mxu0 0.0
    %9143 = vmatprep.subr.mxu0 0.0
    %9144 = vmatpush1.msra.mxu0 0.0
    %9145 = vmatprep.subr.mxu0 0.0
    %9146 = vmatpush1.msra.mxu0 0.0
    %9147 = vmatprep.subr.mxu0 0.0
    %9148 = vmatpush1.msra.mxu0 0.0
    %9149 = vmatprep.subr.mxu0 0.0
    %9150 = vmatpush1.msra.mxu0 0.0
    %9151 = vmatprep.subr.mxu0 0.0
    %9152 = vmatpush1.msra.mxu0 0.0
    %9153 = vmatprep.subr.mxu0 0.0
    %9154 = vmatpush1.msra.mxu0 0.0
    %9155 = vmatprep.subr.mxu0 0.0
    %9156 = vmatpush1.msra.mxu0 0.0
    %9157 = vmatprep.subr.mxu0 0.0
    %9158 = vmatpush1.msra.mxu0 0.0
    %9159 = vmatprep.subr.mxu0 0.0
    %9160 = vmatpush1.msra.mxu0 0.0
    %9161 = vmatprep.subr.mxu0 0.0
    %9162 = vmatpush1.msra.mxu0 0.0
    %9163 = vmatprep.subr.mxu0 0.0
    %9164 = vmatpush1.msra.mxu0 0.0
    %9165 = vmatprep.mubr.f32.mxu0 0.0
    %9166 = vmatmul.mubr.f32.gmra.mrb[0].mxu0 %v9099
    %v9167 = vpop.f32.mrb[0].mxu0
    %v9168 = vadd.f32 0.0, %v9167
    %v9169 = vpop.f32.mrb[0].mxu0
    %9170 = vdwg.mxu0
    %v9172 = vsel %vm4072, %v8664, 0
    %9174 = vmatprep.subr.mxu0 0.0
    %9175 = vmatpush1.msra.mxu0 %v9172
    %9176 = vmatprep.subr.mxu0 0.0
    %9177 = vmatpush1.msra.mxu0 0.0
    %9178 = vmatprep.subr.mxu0 0.0
    %9179 = vmatpush1.msra.mxu0 0.0
    %9180 = vmatprep.subr.mxu0 0.0
    %9181 = vmatpush1.msra.mxu0 0.0
    %9182 = vmatprep.subr.mxu0 0.0
    %9183 = vmatpush1.msra.mxu0 0.0
    %9184 = vmatprep.subr.mxu0 0.0
    %9185 = vmatpush1.msra.mxu0 0.0
    %9186 = vmatprep.subr.mxu0 0.0
    %9187 = vmatpush1.msra.mxu0 0.0
    %9188 = vmatprep.subr.mxu0 0.0
    %9189 = vmatpush1.msra.mxu0 0.0
    %9190 = vmatprep.subr.mxu0 0.0
    %9191 = vmatpush1.msra.mxu0 0.0
    %9192 = vmatprep.subr.mxu0 0.0
    %9193 = vmatpush1.msra.mxu0 0.0
    %9194 = vmatprep.subr.mxu0 0.0
    %9195 = vmatpush1.msra.mxu0 0.0
    %9196 = vmatprep.subr.mxu0 0.0
    %9197 = vmatpush1.msra.mxu0 0.0
    %9198 = vmatprep.subr.mxu0 0.0
    %9199 = vmatpush1.msra.mxu0 0.0
    %9200 = vmatprep.subr.mxu0 0.0
    %9201 = vmatpush1.msra.mxu0 0.0
    %9202 = vmatprep.subr.mxu0 0.0
    %9203 = vmatpush1.msra.mxu0 0.0
    %9204 = vmatprep.subr.mxu0 0.0
    %9205 = vmatpush1.msra.mxu0 0.0
    %9206 = vmatprep.subr.mxu0 0.0
    %9207 = vmatpush1.msra.mxu0 0.0
    %9208 = vmatprep.subr.mxu0 0.0
    %9209 = vmatpush1.msra.mxu0 0.0
    %9210 = vmatprep.subr.mxu0 0.0
    %9211 = vmatpush1.msra.mxu0 0.0
    %9212 = vmatprep.subr.mxu0 0.0
    %9213 = vmatpush1.msra.mxu0 0.0
    %9214 = vmatprep.subr.mxu0 0.0
    %9215 = vmatpush1.msra.mxu0 0.0
    %9216 = vmatprep.subr.mxu0 0.0
    %9217 = vmatpush1.msra.mxu0 0.0
    %9218 = vmatprep.subr.mxu0 0.0
    %9219 = vmatpush1.msra.mxu0 0.0
    %9220 = vmatprep.subr.mxu0 0.0
    %9221 = vmatpush1.msra.mxu0 0.0
    %9222 = vmatprep.subr.mxu0 0.0
    %9223 = vmatpush1.msra.mxu0 0.0
    %9224 = vmatprep.subr.mxu0 0.0
    %9225 = vmatpush1.msra.mxu0 0.0
    %9226 = vmatprep.subr.mxu0 0.0
    %9227 = vmatpush1.msra.mxu0 0.0
    %9228 = vmatprep.subr.mxu0 0.0
    %9229 = vmatpush1.msra.mxu0 0.0
    %9230 = vmatprep.subr.mxu0 0.0
    %9231 = vmatpush1.msra.mxu0 0.0
    %9232 = vmatprep.subr.mxu0 0.0
    %9233 = vmatpush1.msra.mxu0 0.0
    %9234 = vmatprep.subr.mxu0 0.0
    %9235 = vmatpush1.msra.mxu0 0.0
    %9236 = vmatprep.subr.mxu0 0.0
    %9237 = vmatpush1.msra.mxu0 0.0
    %9238 = vmatprep.mubr.f32.mxu0 0.0
    %9239 = vmatmul.mubr.f32.gmra.mrb[0].mxu0 %v6833
    %v9240 = vpop.f32.mrb[0].mxu0
    %v9241 = vadd.f32 0.0, %v9240
    %v9242 = vpop.f32.mrb[0].mxu0
    %9243 = vdwg.mxu0
    %v9245 = vsel %vm4072, %v8736, 0
    %9247 = vmatprep.subr.mxu0 0.0
    %9248 = vmatpush1.msra.mxu0 %v9245
    %9249 = vmatprep.subr.mxu0 0.0
    %9250 = vmatpush1.msra.mxu0 0.0
    %9251 = vmatprep.subr.mxu0 0.0
    %9252 = vmatpush1.msra.mxu0 0.0
    %9253 = vmatprep.subr.mxu0 0.0
    %9254 = vmatpush1.msra.mxu0 0.0
    %9255 = vmatprep.subr.mxu0 0.0
    %9256 = vmatpush1.msra.mxu0 0.0
    %9257 = vmatprep.subr.mxu0 0.0
    %9258 = vmatpush1.msra.mxu0 0.0
    %9259 = vmatprep.subr.mxu0 0.0
    %9260 = vmatpush1.msra.mxu0 0.0
    %9261 = vmatprep.subr.mxu0 0.0
    %9262 = vmatpush1.msra.mxu0 0.0
    %9263 = vmatprep.subr.mxu0 0.0
    %9264 = vmatpush1.msra.mxu0 0.0
    %9265 = vmatprep.subr.mxu0 0.0
    %9266 = vmatpush1.msra.mxu0 0.0
    %9267 = vmatprep.subr.mxu0 0.0
    %9268 = vmatpush1.msra.mxu0 0.0
    %9269 = vmatprep.subr.mxu0 0.0
    %9270 = vmatpush1.msra.mxu0 0.0
    %9271 = vmatprep.subr.mxu0 0.0
    %9272 = vmatpush1.msra.mxu0 0.0
    %9273 = vmatprep.subr.mxu0 0.0
    %9274 = vmatpush1.msra.mxu0 0.0
    %9275 = vmatprep.subr.mxu0 0.0
    %9276 = vmatpush1.msra.mxu0 0.0
    %9277 = vmatprep.subr.mxu0 0.0
    %9278 = vmatpush1.msra.mxu0 0.0
    %9279 = vmatprep.subr.mxu0 0.0
    %9280 = vmatpush1.msra.mxu0 0.0
    %9281 = vmatprep.subr.mxu0 0.0
    %9282 = vmatpush1.msra.mxu0 0.0
    %9283 = vmatprep.subr.mxu0 0.0
    %9284 = vmatpush1.msra.mxu0 0.0
    %9285 = vmatprep.subr.mxu0 0.0
    %9286 = vmatpush1.msra.mxu0 0.0
    %9287 = vmatprep.subr.mxu0 0.0
    %9288 = vmatpush1.msra.mxu0 0.0
    %9289 = vmatprep.subr.mxu0 0.0
    %9290 = vmatpush1.msra.mxu0 0.0
    %9291 = vmatprep.subr.mxu0 0.0
    %9292 = vmatpush1.msra.mxu0 0.0
    %9293 = vmatprep.subr.mxu0 0.0
    %9294 = vmatpush1.msra.mxu0 0.0
    %9295 = vmatprep.subr.mxu0 0.0
    %9296 = vmatpush1.msra.mxu0 0.0
    %9297 = vmatprep.subr.mxu0 0.0
    %9298 = vmatpush1.msra.mxu0 0.0
    %9299 = vmatprep.subr.mxu0 0.0
    %9300 = vmatpush1.msra.mxu0 0.0
    %9301 = vmatprep.subr.mxu0 0.0
    %9302 = vmatpush1.msra.mxu0 0.0
    %9303 = vmatprep.subr.mxu0 0.0
    %9304 = vmatpush1.msra.mxu0 0.0
    %9305 = vmatprep.subr.mxu0 0.0
    %9306 = vmatpush1.msra.mxu0 0.0
    %9307 = vmatprep.subr.mxu0 0.0
    %9308 = vmatpush1.msra.mxu0 0.0
    %9309 = vmatprep.subr.mxu0 0.0
    %9310 = vmatpush1.msra.mxu0 0.0
    %9311 = vmatprep.mubr.f32.mxu0 0.0
    %9312 = vmatmul.mubr.f32.gmra.mrb[0].mxu0 %v6833
    %v9313 = vpop.f32.mrb[0].mxu0
    %v9314 = vadd.f32 0.0, %v9313
    %v9315 = vpop.f32.mrb[0].mxu0
    %9316 = vdwg.mxu0
    %v9318 = vsel %vm4072, %v8808, 0
    %9320 = vmatprep.subr.mxu0 0.0
    %9321 = vmatpush1.msra.mxu0 %v9318
    %9322 = vmatprep.subr.mxu0 0.0
    %9323 = vmatpush1.msra.mxu0 0.0
    %9324 = vmatprep.subr.mxu0 0.0
    %9325 = vmatpush1.msra.mxu0 0.0
    %9326 = vmatprep.subr.mxu0 0.0
    %9327 = vmatpush1.msra.mxu0 0.0
    %9328 = vmatprep.subr.mxu0 0.0
    %9329 = vmatpush1.msra.mxu0 0.0
    %9330 = vmatprep.subr.mxu0 0.0
    %9331 = vmatpush1.msra.mxu0 0.0
    %9332 = vmatprep.subr.mxu0 0.0
    %9333 = vmatpush1.msra.mxu0 0.0
    %9334 = vmatprep.subr.mxu0 0.0
    %9335 = vmatpush1.msra.mxu0 0.0
    %9336 = vmatprep.subr.mxu0 0.0
    %9337 = vmatpush1.msra.mxu0 0.0
    %9338 = vmatprep.subr.mxu0 0.0
    %9339 = vmatpush1.msra.mxu0 0.0
    %9340 = vmatprep.subr.mxu0 0.0
    %9341 = vmatpush1.msra.mxu0 0.0
    %9342 = vmatprep.subr.mxu0 0.0
    %9343 = vmatpush1.msra.mxu0 0.0
    %9344 = vmatprep.subr.mxu0 0.0
    %9345 = vmatpush1.msra.mxu0 0.0
    %9346 = vmatprep.subr.mxu0 0.0
    %9347 = vmatpush1.msra.mxu0 0.0
    %9348 = vmatprep.subr.mxu0 0.0
    %9349 = vmatpush1.msra.mxu0 0.0
    %9350 = vmatprep.subr.mxu0 0.0
    %9351 = vmatpush1.msra.mxu0 0.0
    %9352 = vmatprep.subr.mxu0 0.0
    %9353 = vmatpush1.msra.mxu0 0.0
    %9354 = vmatprep.subr.mxu0 0.0
    %9355 = vmatpush1.msra.mxu0 0.0
    %9356 = vmatprep.subr.mxu0 0.0
    %9357 = vmatpush1.msra.mxu0 0.0
    %9358 = vmatprep.subr.mxu0 0.0
    %9359 = vmatpush1.msra.mxu0 0.0
    %9360 = vmatprep.subr.mxu0 0.0
    %9361 = vmatpush1.msra.mxu0 0.0
    %9362 = vmatprep.subr.mxu0 0.0
    %9363 = vmatpush1.msra.mxu0 0.0
    %9364 = vmatprep.subr.mxu0 0.0
    %9365 = vmatpush1.msra.mxu0 0.0
    %9366 = vmatprep.subr.mxu0 0.0
    %9367 = vmatpush1.msra.mxu0 0.0
    %9368 = vmatprep.subr.mxu0 0.0
    %9369 = vmatpush1.msra.mxu0 0.0
    %9370 = vmatprep.subr.mxu0 0.0
    %9371 = vmatpush1.msra.mxu0 0.0
    %9372 = vmatprep.subr.mxu0 0.0
    %9373 = vmatpush1.msra.mxu0 0.0
    %9374 = vmatprep.subr.mxu0 0.0
    %9375 = vmatpush1.msra.mxu0 0.0
    %9376 = vmatprep.subr.mxu0 0.0
    %9377 = vmatpush1.msra.mxu0 0.0
    %9378 = vmatprep.subr.mxu0 0.0
    %9379 = vmatpush1.msra.mxu0 0.0
    %9380 = vmatprep.subr.mxu0 0.0
    %9381 = vmatpush1.msra.mxu0 0.0
    %9382 = vmatprep.subr.mxu0 0.0
    %9383 = vmatpush1.msra.mxu0 0.0
    %9384 = vmatprep.mubr.f32.mxu0 0.0
    %9385 = vmatmul.mubr.f32.gmra.mrb[0].mxu0 %v6833
    %v9386 = vpop.f32.mrb[0].mxu0
    %v9387 = vadd.f32 0.0, %v9386
    %v9388 = vpop.f32.mrb[0].mxu0
    %9389 = vdwg.mxu0
    %v9391 = vsel %vm4072, %v8880, 0
    %9393 = vmatprep.subr.mxu0 0.0
    %9394 = vmatpush1.msra.mxu0 %v9391
    %9395 = vmatprep.subr.mxu0 0.0
    %9396 = vmatpush1.msra.mxu0 0.0
    %9397 = vmatprep.subr.mxu0 0.0
    %9398 = vmatpush1.msra.mxu0 0.0
    %9399 = vmatprep.subr.mxu0 0.0
    %9400 = vmatpush1.msra.mxu0 0.0
    %9401 = vmatprep.subr.mxu0 0.0
    %9402 = vmatpush1.msra.mxu0 0.0
    %9403 = vmatprep.subr.mxu0 0.0
    %9404 = vmatpush1.msra.mxu0 0.0
    %9405 = vmatprep.subr.mxu0 0.0
    %9406 = vmatpush1.msra.mxu0 0.0
    %9407 = vmatprep.subr.mxu0 0.0
    %9408 = vmatpush1.msra.mxu0 0.0
    %9409 = vmatprep.subr.mxu0 0.0
    %9410 = vmatpush1.msra.mxu0 0.0
    %9411 = vmatprep.subr.mxu0 0.0
    %9412 = vmatpush1.msra.mxu0 0.0
    %9413 = vmatprep.subr.mxu0 0.0
    %9414 = vmatpush1.msra.mxu0 0.0
    %9415 = vmatprep.subr.mxu0 0.0
    %9416 = vmatpush1.msra.mxu0 0.0
    %9417 = vmatprep.subr.mxu0 0.0
    %9418 = vmatpush1.msra.mxu0 0.0
    %9419 = vmatprep.subr.mxu0 0.0
    %9420 = vmatpush1.msra.mxu0 0.0
    %9421 = vmatprep.subr.mxu0 0.0
    %9422 = vmatpush1.msra.mxu0 0.0
    %9423 = vmatprep.subr.mxu0 0.0
    %9424 = vmatpush1.msra.mxu0 0.0
    %9425 = vmatprep.subr.mxu0 0.0
    %9426 = vmatpush1.msra.mxu0 0.0
    %9427 = vmatprep.subr.mxu0 0.0
    %9428 = vmatpush1.msra.mxu0 0.0
    %9429 = vmatprep.subr.mxu0 0.0
    %9430 = vmatpush1.msra.mxu0 0.0
    %9431 = vmatprep.subr.mxu0 0.0
    %9432 = vmatpush1.msra.mxu0 0.0
    %9433 = vmatprep.subr.mxu0 0.0
    %9434 = vmatpush1.msra.mxu0 0.0
    %9435 = vmatprep.subr.mxu0 0.0
    %9436 = vmatpush1.msra.mxu0 0.0
    %9437 = vmatprep.subr.mxu0 0.0
    %9438 = vmatpush1.msra.mxu0 0.0
    %9439 = vmatprep.subr.mxu0 0.0
    %9440 = vmatpush1.msra.mxu0 0.0
    %9441 = vmatprep.subr.mxu0 0.0
    %9442 = vmatpush1.msra.mxu0 0.0
    %9443 = vmatprep.subr.mxu0 0.0
    %9444 = vmatpush1.msra.mxu0 0.0
    %9445 = vmatprep.subr.mxu0 0.0
    %9446 = vmatpush1.msra.mxu0 0.0
    %9447 = vmatprep.subr.mxu0 0.0
    %9448 = vmatpush1.msra.mxu0 0.0
    %9449 = vmatprep.subr.mxu0 0.0
    %9450 = vmatpush1.msra.mxu0 0.0
    %9451 = vmatprep.subr.mxu0 0.0
    %9452 = vmatpush1.msra.mxu0 0.0
    %9453 = vmatprep.subr.mxu0 0.0
    %9454 = vmatpush1.msra.mxu0 0.0
    %9455 = vmatprep.subr.mxu0 0.0
    %9456 = vmatpush1.msra.mxu0 0.0
    %9457 = vmatprep.mubr.f32.mxu0 0.0
    %9458 = vmatmul.mubr.f32.gmra.mrb[0].mxu0 %v6833
    %v9459 = vpop.f32.mrb[0].mxu0
    %v9460 = vadd.f32 0.0, %v9459
    %v9461 = vpop.f32.mrb[0].mxu0
    %9462 = vdwg.mxu0
    %v9464 = vsel %vm4072, %v8952, 0
    %9466 = vmatprep.subr.mxu0 0.0
    %9467 = vmatpush1.msra.mxu0 %v9464
    %9468 = vmatprep.subr.mxu0 0.0
    %9469 = vmatpush1.msra.mxu0 0.0
    %9470 = vmatprep.subr.mxu0 0.0
    %9471 = vmatpush1.msra.mxu0 0.0
    %9472 = vmatprep.subr.mxu0 0.0
    %9473 = vmatpush1.msra.mxu0 0.0
    %9474 = vmatprep.subr.mxu0 0.0
    %9475 = vmatpush1.msra.mxu0 0.0
    %9476 = vmatprep.subr.mxu0 0.0
    %9477 = vmatpush1.msra.mxu0 0.0
    %9478 = vmatprep.subr.mxu0 0.0
    %9479 = vmatpush1.msra.mxu0 0.0
    %9480 = vmatprep.subr.mxu0 0.0
    %9481 = vmatpush1.msra.mxu0 0.0
    %9482 = vmatprep.subr.mxu0 0.0
    %9483 = vmatpush1.msra.mxu0 0.0
    %9484 = vmatprep.subr.mxu0 0.0
    %9485 = vmatpush1.msra.mxu0 0.0
    %9486 = vmatprep.subr.mxu0 0.0
    %9487 = vmatpush1.msra.mxu0 0.0
    %9488 = vmatprep.subr.mxu0 0.0
    %9489 = vmatpush1.msra.mxu0 0.0
    %9490 = vmatprep.subr.mxu0 0.0
    %9491 = vmatpush1.msra.mxu0 0.0
    %9492 = vmatprep.subr.mxu0 0.0
    %9493 = vmatpush1.msra.mxu0 0.0
    %9494 = vmatprep.subr.mxu0 0.0
    %9495 = vmatpush1.msra.mxu0 0.0
    %9496 = vmatprep.subr.mxu0 0.0
    %9497 = vmatpush1.msra.mxu0 0.0
    %9498 = vmatprep.subr.mxu0 0.0
    %9499 = vmatpush1.msra.mxu0 0.0
    %9500 = vmatprep.subr.mxu0 0.0
    %9501 = vmatpush1.msra.mxu0 0.0
    %9502 = vmatprep.subr.mxu0 0.0
    %9503 = vmatpush1.msra.mxu0 0.0
    %9504 = vmatprep.subr.mxu0 0.0
    %9505 = vmatpush1.msra.mxu0 0.0
    %9506 = vmatprep.subr.mxu0 0.0
    %9507 = vmatpush1.msra.mxu0 0.0
    %9508 = vmatprep.subr.mxu0 0.0
    %9509 = vmatpush1.msra.mxu0 0.0
    %9510 = vmatprep.subr.mxu0 0.0
    %9511 = vmatpush1.msra.mxu0 0.0
    %9512 = vmatprep.subr.mxu0 0.0
    %9513 = vmatpush1.msra.mxu0 0.0
    %9514 = vmatprep.subr.mxu0 0.0
    %9515 = vmatpush1.msra.mxu0 0.0
    %9516 = vmatprep.subr.mxu0 0.0
    %9517 = vmatpush1.msra.mxu0 0.0
    %9518 = vmatprep.subr.mxu0 0.0
    %9519 = vmatpush1.msra.mxu0 0.0
    %9520 = vmatprep.subr.mxu0 0.0
    %9521 = vmatpush1.msra.mxu0 0.0
    %9522 = vmatprep.subr.mxu0 0.0
    %9523 = vmatpush1.msra.mxu0 0.0
    %9524 = vmatprep.subr.mxu0 0.0
    %9525 = vmatpush1.msra.mxu0 0.0
    %9526 = vmatprep.subr.mxu0 0.0
    %9527 = vmatpush1.msra.mxu0 0.0
    %9528 = vmatprep.subr.mxu0 0.0
    %9529 = vmatpush1.msra.mxu0 0.0
    %9530 = vmatprep.mubr.f32.mxu0 0.0
    %9531 = vmatmul.mubr.f32.gmra.mrb[0].mxu0 %v6833
    %v9532 = vpop.f32.mrb[0].mxu0
    %v9533 = vadd.f32 0.0, %v9532
    %v9534 = vpop.f32.mrb[0].mxu0
    %9535 = vdwg.mxu0
    %v9537 = vsel %vm4072, %v9024, 0
    %9539 = vmatprep.subr.mxu0 0.0
    %9540 = vmatpush1.msra.mxu0 %v9537
    %9541 = vmatprep.subr.mxu0 0.0
    %9542 = vmatpush1.msra.mxu0 0.0
    %9543 = vmatprep.subr.mxu0 0.0
    %9544 = vmatpush1.msra.mxu0 0.0
    %9545 = vmatprep.subr.mxu0 0.0
    %9546 = vmatpush1.msra.mxu0 0.0
    %9547 = vmatprep.subr.mxu0 0.0
    %9548 = vmatpush1.msra.mxu0 0.0
    %9549 = vmatprep.subr.mxu0 0.0
    %9550 = vmatpush1.msra.mxu0 0.0
    %9551 = vmatprep.subr.mxu0 0.0
    %9552 = vmatpush1.msra.mxu0 0.0
    %9553 = vmatprep.subr.mxu0 0.0
    %9554 = vmatpush1.msra.mxu0 0.0
    %9555 = vmatprep.subr.mxu0 0.0
    %9556 = vmatpush1.msra.mxu0 0.0
    %9557 = vmatprep.subr.mxu0 0.0
    %9558 = vmatpush1.msra.mxu0 0.0
    %9559 = vmatprep.subr.mxu0 0.0
    %9560 = vmatpush1.msra.mxu0 0.0
    %9561 = vmatprep.subr.mxu0 0.0
    %9562 = vmatpush1.msra.mxu0 0.0
    %9563 = vmatprep.subr.mxu0 0.0
    %9564 = vmatpush1.msra.mxu0 0.0
    %9565 = vmatprep.subr.mxu0 0.0
    %9566 = vmatpush1.msra.mxu0 0.0
    %9567 = vmatprep.subr.mxu0 0.0
    %9568 = vmatpush1.msra.mxu0 0.0
    %9569 = vmatprep.subr.mxu0 0.0
    %9570 = vmatpush1.msra.mxu0 0.0
    %9571 = vmatprep.subr.mxu0 0.0
    %9572 = vmatpush1.msra.mxu0 0.0
    %9573 = vmatprep.subr.mxu0 0.0
    %9574 = vmatpush1.msra.mxu0 0.0
    %9575 = vmatprep.subr.mxu0 0.0
    %9576 = vmatpush1.msra.mxu0 0.0
    %9577 = vmatprep.subr.mxu0 0.0
    %9578 = vmatpush1.msra.mxu0 0.0
    %9579 = vmatprep.subr.mxu0 0.0
    %9580 = vmatpush1.msra.mxu0 0.0
    %9581 = vmatprep.subr.mxu0 0.0
    %9582 = vmatpush1.msra.mxu0 0.0
    %9583 = vmatprep.subr.mxu0 0.0
    %9584 = vmatpush1.msra.mxu0 0.0
    %9585 = vmatprep.subr.mxu0 0.0
    %9586 = vmatpush1.msra.mxu0 0.0
    %9587 = vmatprep.subr.mxu0 0.0
    %9588 = vmatpush1.msra.mxu0 0.0
    %9589 = vmatprep.subr.mxu0 0.0
    %9590 = vmatpush1.msra.mxu0 0.0
    %9591 = vmatprep.subr.mxu0 0.0
    %9592 = vmatpush1.msra.mxu0 0.0
    %9593 = vmatprep.subr.mxu0 0.0
    %9594 = vmatpush1.msra.mxu0 0.0
    %9595 = vmatprep.subr.mxu0 0.0
    %9596 = vmatpush1.msra.mxu0 0.0
    %9597 = vmatprep.subr.mxu0 0.0
    %9598 = vmatpush1.msra.mxu0 0.0
    %9599 = vmatprep.subr.mxu0 0.0
    %9600 = vmatpush1.msra.mxu0 0.0
    %9601 = vmatprep.subr.mxu0 0.0
    %9602 = vmatpush1.msra.mxu0 0.0
    %9603 = vmatprep.mubr.f32.mxu0 0.0
    %9604 = vmatmul.mubr.f32.gmra.mrb[0].mxu0 %v6833
    %v9605 = vpop.f32.mrb[0].mxu0
    %v9606 = vadd.f32 0.0, %v9605
    %v9607 = vpop.f32.mrb[0].mxu0
    %9608 = vdwg.mxu0
    %v9610 = vsel %vm4072, %v9096, 0
    %9612 = vmatprep.subr.mxu0 0.0
    %9613 = vmatpush1.msra.mxu0 %v9610
    %9614 = vmatprep.subr.mxu0 0.0
    %9615 = vmatpush1.msra.mxu0 0.0
    %9616 = vmatprep.subr.mxu0 0.0
    %9617 = vmatpush1.msra.mxu0 0.0
    %9618 = vmatprep.subr.mxu0 0.0
    %9619 = vmatpush1.msra.mxu0 0.0
    %9620 = vmatprep.subr.mxu0 0.0
    %9621 = vmatpush1.msra.mxu0 0.0
    %9622 = vmatprep.subr.mxu0 0.0
    %9623 = vmatpush1.msra.mxu0 0.0
    %9624 = vmatprep.subr.mxu0 0.0
    %9625 = vmatpush1.msra.mxu0 0.0
    %9626 = vmatprep.subr.mxu0 0.0
    %9627 = vmatpush1.msra.mxu0 0.0
    %9628 = vmatprep.subr.mxu0 0.0
    %9629 = vmatpush1.msra.mxu0 0.0
    %9630 = vmatprep.subr.mxu0 0.0
    %9631 = vmatpush1.msra.mxu0 0.0
    %9632 = vmatprep.subr.mxu0 0.0
    %9633 = vmatpush1.msra.mxu0 0.0
    %9634 = vmatprep.subr.mxu0 0.0
    %9635 = vmatpush1.msra.mxu0 0.0
    %9636 = vmatprep.subr.mxu0 0.0
    %9637 = vmatpush1.msra.mxu0 0.0
    %9638 = vmatprep.subr.mxu0 0.0
    %9639 = vmatpush1.msra.mxu0 0.0
    %9640 = vmatprep.subr.mxu0 0.0
    %9641 = vmatpush1.msra.mxu0 0.0
    %9642 = vmatprep.subr.mxu0 0.0
    %9643 = vmatpush1.msra.mxu0 0.0
    %9644 = vmatprep.subr.mxu0 0.0
    %9645 = vmatpush1.msra.mxu0 0.0
    %9646 = vmatprep.subr.mxu0 0.0
    %9647 = vmatpush1.msra.mxu0 0.0
    %9648 = vmatprep.subr.mxu0 0.0
    %9649 = vmatpush1.msra.mxu0 0.0
    %9650 = vmatprep.subr.mxu0 0.0
    %9651 = vmatpush1.msra.mxu0 0.0
    %9652 = vmatprep.subr.mxu0 0.0
    %9653 = vmatpush1.msra.mxu0 0.0
    %9654 = vmatprep.subr.mxu0 0.0
    %9655 = vmatpush1.msra.mxu0 0.0
    %9656 = vmatprep.subr.mxu0 0.0
    %9657 = vmatpush1.msra.mxu0 0.0
    %9658 = vmatprep.subr.mxu0 0.0
    %9659 = vmatpush1.msra.mxu0 0.0
    %9660 = vmatprep.subr.mxu0 0.0
    %9661 = vmatpush1.msra.mxu0 0.0
    %9662 = vmatprep.subr.mxu0 0.0
    %9663 = vmatpush1.msra.mxu0 0.0
    %9664 = vmatprep.subr.mxu0 0.0
    %9665 = vmatpush1.msra.mxu0 0.0
    %9666 = vmatprep.subr.mxu0 0.0
    %9667 = vmatpush1.msra.mxu0 0.0
    %9668 = vmatprep.subr.mxu0 0.0
    %9669 = vmatpush1.msra.mxu0 0.0
    %9670 = vmatprep.subr.mxu0 0.0
    %9671 = vmatpush1.msra.mxu0 0.0
    %9672 = vmatprep.subr.mxu0 0.0
    %9673 = vmatpush1.msra.mxu0 0.0
    %9674 = vmatprep.subr.mxu0 0.0
    %9675 = vmatpush1.msra.mxu0 0.0
    %9676 = vmatprep.mubr.f32.mxu0 0.0
    %9677 = vmatmul.mubr.f32.gmra.mrb[0].mxu0 %v6833
    %v9678 = vpop.f32.mrb[0].mxu0
    %v9679 = vadd.f32 0.0, %v9678
    %v9680 = vpop.f32.mrb[0].mxu0
    %9681 = vdwg.mxu0
    %v9683 = vsel %vm4072, %v9168, 0
    %9685 = vmatprep.subr.mxu0 0.0
    %9686 = vmatpush1.msra.mxu0 %v9683
    %9687 = vmatprep.subr.mxu0 0.0
    %9688 = vmatpush1.msra.mxu0 0.0
    %9689 = vmatprep.subr.mxu0 0.0
    %9690 = vmatpush1.msra.mxu0 0.0
    %9691 = vmatprep.subr.mxu0 0.0
    %9692 = vmatpush1.msra.mxu0 0.0
    %9693 = vmatprep.subr.mxu0 0.0
    %9694 = vmatpush1.msra.mxu0 0.0
    %9695 = vmatprep.subr.mxu0 0.0
    %9696 = vmatpush1.msra.mxu0 0.0
    %9697 = vmatprep.subr.mxu0 0.0
    %9698 = vmatpush1.msra.mxu0 0.0
    %9699 = vmatprep.subr.mxu0 0.0
    %9700 = vmatpush1.msra.mxu0 0.0
    %9701 = vmatprep.subr.mxu0 0.0
    %9702 = vmatpush1.msra.mxu0 0.0
    %9703 = vmatprep.subr.mxu0 0.0
    %9704 = vmatpush1.msra.mxu0 0.0
    %9705 = vmatprep.subr.mxu0 0.0
    %9706 = vmatpush1.msra.mxu0 0.0
    %9707 = vmatprep.subr.mxu0 0.0
    %9708 = vmatpush1.msra.mxu0 0.0
    %9709 = vmatprep.subr.mxu0 0.0
    %9710 = vmatpush1.msra.mxu0 0.0
    %9711 = vmatprep.subr.mxu0 0.0
    %9712 = vmatpush1.msra.mxu0 0.0
    %9713 = vmatprep.subr.mxu0 0.0
    %9714 = vmatpush1.msra.mxu0 0.0
    %9715 = vmatprep.subr.mxu0 0.0
    %9716 = vmatpush1.msra.mxu0 0.0
    %9717 = vmatprep.subr.mxu0 0.0
    %9718 = vmatpush1.msra.mxu0 0.0
    %9719 = vmatprep.subr.mxu0 0.0
    %9720 = vmatpush1.msra.mxu0 0.0
    %9721 = vmatprep.subr.mxu0 0.0
    %9722 = vmatpush1.msra.mxu0 0.0
    %9723 = vmatprep.subr.mxu0 0.0
    %9724 = vmatpush1.msra.mxu0 0.0
    %9725 = vmatprep.subr.mxu0 0.0
    %9726 = vmatpush1.msra.mxu0 0.0
    %9727 = vmatprep.subr.mxu0 0.0
    %9728 = vmatpush1.msra.mxu0 0.0
    %9729 = vmatprep.subr.mxu0 0.0
    %9730 = vmatpush1.msra.mxu0 0.0
    %9731 = vmatprep.subr.mxu0 0.0
    %9732 = vmatpush1.msra.mxu0 0.0
    %9733 = vmatprep.subr.mxu0 0.0
    %9734 = vmatpush1.msra.mxu0 0.0
    %9735 = vmatprep.subr.mxu0 0.0
    %9736 = vmatpush1.msra.mxu0 0.0
    %9737 = vmatprep.subr.mxu0 0.0
    %9738 = vmatpush1.msra.mxu0 0.0
    %9739 = vmatprep.subr.mxu0 0.0
    %9740 = vmatpush1.msra.mxu0 0.0
    %9741 = vmatprep.subr.mxu0 0.0
    %9742 = vmatpush1.msra.mxu0 0.0
    %9743 = vmatprep.subr.mxu0 0.0
    %9744 = vmatpush1.msra.mxu0 0.0
    %9745 = vmatprep.subr.mxu0 0.0
    %9746 = vmatpush1.msra.mxu0 0.0
    %9747 = vmatprep.subr.mxu0 0.0
    %9748 = vmatpush1.msra.mxu0 0.0
    %9749 = vmatprep.mubr.f32.mxu0 0.0
    %9750 = vmatmul.mubr.f32.gmra.mrb[0].mxu0 %v6833
    %v9751 = vpop.f32.mrb[0].mxu0
    %v9752 = vadd.f32 0.0, %v9751
    %v9753 = vpop.f32.mrb[0].mxu0
    %9754 = vdwg.mxu0
    %v9756 = vsel %vm7423, %v9241, 0
    %9758 = vmatprep.subr.mxu0 0.0
    %9759 = vmatpush1.msra.mxu0 %v9756
    %9760 = vmatprep.subr.mxu0 0.0
    %9761 = vmatpush1.msra.mxu0 0.0
    %9762 = vmatprep.subr.mxu0 0.0
    %9763 = vmatpush1.msra.mxu0 0.0
    %9764 = vmatprep.subr.mxu0 0.0
    %9765 = vmatpush1.msra.mxu0 0.0
    %9766 = vmatprep.subr.mxu0 0.0
    %9767 = vmatpush1.msra.mxu0 0.0
    %9768 = vmatprep.subr.mxu0 0.0
    %9769 = vmatpush1.msra.mxu0 0.0
    %9770 = vmatprep.subr.mxu0 0.0
    %9771 = vmatpush1.msra.mxu0 0.0
    %9772 = vmatprep.subr.mxu0 0.0
    %9773 = vmatpush1.msra.mxu0 0.0
    %9774 = vmatprep.subr.mxu0 0.0
    %9775 = vmatpush1.msra.mxu0 0.0
    %9776 = vmatprep.subr.mxu0 0.0
    %9777 = vmatpush1.msra.mxu0 0.0
    %9778 = vmatprep.subr.mxu0 0.0
    %9779 = vmatpush1.msra.mxu0 0.0
    %9780 = vmatprep.subr.mxu0 0.0
    %9781 = vmatpush1.msra.mxu0 0.0
    %9782 = vmatprep.subr.mxu0 0.0
    %9783 = vmatpush1.msra.mxu0 0.0
    %9784 = vmatprep.subr.mxu0 0.0
    %9785 = vmatpush1.msra.mxu0 0.0
    %9786 = vmatprep.subr.mxu0 0.0
    %9787 = vmatpush1.msra.mxu0 0.0
    %9788 = vmatprep.subr.mxu0 0.0
    %9789 = vmatpush1.msra.mxu0 0.0
    %9790 = vmatprep.subr.mxu0 0.0
    %9791 = vmatpush1.msra.mxu0 0.0
    %9792 = vmatprep.subr.mxu0 0.0
    %9793 = vmatpush1.msra.mxu0 0.0
    %9794 = vmatprep.subr.mxu0 0.0
    %9795 = vmatpush1.msra.mxu0 0.0
    %9796 = vmatprep.subr.mxu0 0.0
    %9797 = vmatpush1.msra.mxu0 0.0
    %9798 = vmatprep.subr.mxu0 0.0
    %9799 = vmatpush1.msra.mxu0 0.0
    %9800 = vmatprep.subr.mxu0 0.0
    %9801 = vmatpush1.msra.mxu0 0.0
    %9802 = vmatprep.subr.mxu0 0.0
    %9803 = vmatpush1.msra.mxu0 0.0
    %9804 = vmatprep.subr.mxu0 0.0
    %9805 = vmatpush1.msra.mxu0 0.0
    %9806 = vmatprep.subr.mxu0 0.0
    %9807 = vmatpush1.msra.mxu0 0.0
    %9808 = vmatprep.subr.mxu0 0.0
    %9809 = vmatpush1.msra.mxu0 0.0
    %9810 = vmatprep.subr.mxu0 0.0
    %9811 = vmatpush1.msra.mxu0 0.0
    %9812 = vmatprep.subr.mxu0 0.0
    %9813 = vmatpush1.msra.mxu0 0.0
    %9814 = vmatprep.subr.mxu0 0.0
    %9815 = vmatpush1.msra.mxu0 0.0
    %9816 = vmatprep.subr.mxu0 0.0
    %9817 = vmatpush1.msra.mxu0 0.0
    %9818 = vmatprep.subr.mxu0 0.0
    %9819 = vmatpush1.msra.mxu0 0.0
    %9820 = vmatprep.subr.mxu0 0.0
    %9821 = vmatpush1.msra.mxu0 0.0
    %9822 = vmatprep.mubr.f32.mxu0 0.0
    %9823 = vmatmul.mubr.f32.gmra.mrb[0].mxu0 %v7421
    %v9824 = vpop.f32.mrb[0].mxu0
    %v9825 = vadd.f32 0.0, %v9824
    %v9826 = vpop.f32.mrb[0].mxu0
    %9827 = vdwg.mxu0
    %v9829 = vsel %vm7423, %v9314, 0
    %9831 = vmatprep.subr.mxu0 0.0
    %9832 = vmatpush1.msra.mxu0 %v9829
    %9833 = vmatprep.subr.mxu0 0.0
    %9834 = vmatpush1.msra.mxu0 0.0
    %9835 = vmatprep.subr.mxu0 0.0
    %9836 = vmatpush1.msra.mxu0 0.0
    %9837 = vmatprep.subr.mxu0 0.0
    %9838 = vmatpush1.msra.mxu0 0.0
    %9839 = vmatprep.subr.mxu0 0.0
    %9840 = vmatpush1.msra.mxu0 0.0
    %9841 = vmatprep.subr.mxu0 0.0
    %9842 = vmatpush1.msra.mxu0 0.0
    %9843 = vmatprep.subr.mxu0 0.0
    %9844 = vmatpush1.msra.mxu0 0.0
    %9845 = vmatprep.subr.mxu0 0.0
    %9846 = vmatpush1.msra.mxu0 0.0
    %9847 = vmatprep.subr.mxu0 0.0
    %9848 = vmatpush1.msra.mxu0 0.0
    %9849 = vmatprep.subr.mxu0 0.0
    %9850 = vmatpush1.msra.mxu0 0.0
    %9851 = vmatprep.subr.mxu0 0.0
    %9852 = vmatpush1.msra.mxu0 0.0
    %9853 = vmatprep.subr.mxu0 0.0
    %9854 = vmatpush1.msra.mxu0 0.0
    %9855 = vmatprep.subr.mxu0 0.0
    %9856 = vmatpush1.msra.mxu0 0.0
    %9857 = vmatprep.subr.mxu0 0.0
    %9858 = vmatpush1.msra.mxu0 0.0
    %9859 = vmatprep.subr.mxu0 0.0
    %9860 = vmatpush1.msra.mxu0 0.0
    %9861 = vmatprep.subr.mxu0 0.0
    %9862 = vmatpush1.msra.mxu0 0.0
    %9863 = vmatprep.subr.mxu0 0.0
    %9864 = vmatpush1.msra.mxu0 0.0
    %9865 = vmatprep.subr.mxu0 0.0
    %9866 = vmatpush1.msra.mxu0 0.0
    %9867 = vmatprep.subr.mxu0 0.0
    %9868 = vmatpush1.msra.mxu0 0.0
    %9869 = vmatprep.subr.mxu0 0.0
    %9870 = vmatpush1.msra.mxu0 0.0
    %9871 = vmatprep.subr.mxu0 0.0
    %9872 = vmatpush1.msra.mxu0 0.0
    %9873 = vmatprep.subr.mxu0 0.0
    %9874 = vmatpush1.msra.mxu0 0.0
    %9875 = vmatprep.subr.mxu0 0.0
    %9876 = vmatpush1.msra.mxu0 0.0
    %9877 = vmatprep.subr.mxu0 0.0
    %9878 = vmatpush1.msra.mxu0 0.0
    %9879 = vmatprep.subr.mxu0 0.0
    %9880 = vmatpush1.msra.mxu0 0.0
    %9881 = vmatprep.subr.mxu0 0.0
    %9882 = vmatpush1.msra.mxu0 0.0
    %9883 = vmatprep.subr.mxu0 0.0
    %9884 = vmatpush1.msra.mxu0 0.0
    %9885 = vmatprep.subr.mxu0 0.0
    %9886 = vmatpush1.msra.mxu0 0.0
    %9887 = vmatprep.subr.mxu0 0.0
    %9888 = vmatpush1.msra.mxu0 0.0
    %9889 = vmatprep.subr.mxu0 0.0
    %9890 = vmatpush1.msra.mxu0 0.0
    %9891 = vmatprep.subr.mxu0 0.0
    %9892 = vmatpush1.msra.mxu0 0.0
    %9893 = vmatprep.subr.mxu0 0.0
    %9894 = vmatpush1.msra.mxu0 0.0
    %9895 = vmatprep.mubr.f32.mxu0 0.0
    %9896 = vmatmul.mubr.f32.gmra.mrb[0].mxu0 %v7421
    %v9897 = vpop.f32.mrb[0].mxu0
    %v9898 = vadd.f32 0.0, %v9897
    %v9899 = vpop.f32.mrb[0].mxu0
    %9900 = vdwg.mxu0
    %v9902 = vsel %vm7423, %v9387, 0
    %9904 = vmatprep.subr.mxu0 0.0
    %9905 = vmatpush1.msra.mxu0 %v9902
    %9906 = vmatprep.subr.mxu0 0.0
    %9907 = vmatpush1.msra.mxu0 0.0
    %9908 = vmatprep.subr.mxu0 0.0
    %9909 = vmatpush1.msra.mxu0 0.0
    %9910 = vmatprep.subr.mxu0 0.0
    %9911 = vmatpush1.msra.mxu0 0.0
    %9912 = vmatprep.subr.mxu0 0.0
    %9913 = vmatpush1.msra.mxu0 0.0
    %9914 = vmatprep.subr.mxu0 0.0
    %9915 = vmatpush1.msra.mxu0 0.0
    %9916 = vmatprep.subr.mxu0 0.0
    %9917 = vmatpush1.msra.mxu0 0.0
    %9918 = vmatprep.subr.mxu0 0.0
    %9919 = vmatpush1.msra.mxu0 0.0
    %9920 = vmatprep.subr.mxu0 0.0
    %9921 = vmatpush1.msra.mxu0 0.0
    %9922 = vmatprep.subr.mxu0 0.0
    %9923 = vmatpush1.msra.mxu0 0.0
    %9924 = vmatprep.subr.mxu0 0.0
    %9925 = vmatpush1.msra.mxu0 0.0
    %9926 = vmatprep.subr.mxu0 0.0
    %9927 = vmatpush1.msra.mxu0 0.0
    %9928 = vmatprep.subr.mxu0 0.0
    %9929 = vmatpush1.msra.mxu0 0.0
    %9930 = vmatprep.subr.mxu0 0.0
    %9931 = vmatpush1.msra.mxu0 0.0
    %9932 = vmatprep.subr.mxu0 0.0
    %9933 = vmatpush1.msra.mxu0 0.0
    %9934 = vmatprep.subr.mxu0 0.0
    %9935 = vmatpush1.msra.mxu0 0.0
    %9936 = vmatprep.subr.mxu0 0.0
    %9937 = vmatpush1.msra.mxu0 0.0
    %9938 = vmatprep.subr.mxu0 0.0
    %9939 = vmatpush1.msra.mxu0 0.0
    %9940 = vmatprep.subr.mxu0 0.0
    %9941 = vmatpush1.msra.mxu0 0.0
    %9942 = vmatprep.subr.mxu0 0.0
    %9943 = vmatpush1.msra.mxu0 0.0
    %9944 = vmatprep.subr.mxu0 0.0
    %9945 = vmatpush1.msra.mxu0 0.0
    %9946 = vmatprep.subr.mxu0 0.0
    %9947 = vmatpush1.msra.mxu0 0.0
    %9948 = vmatprep.subr.mxu0 0.0
    %9949 = vmatpush1.msra.mxu0 0.0
    %9950 = vmatprep.subr.mxu0 0.0
    %9951 = vmatpush1.msra.mxu0 0.0
    %9952 = vmatprep.subr.mxu0 0.0
    %9953 = vmatpush1.msra.mxu0 0.0
    %9954 = vmatprep.subr.mxu0 0.0
    %9955 = vmatpush1.msra.mxu0 0.0
    %9956 = vmatprep.subr.mxu0 0.0
    %9957 = vmatpush1.msra.mxu0 0.0
    %9958 = vmatprep.subr.mxu0 0.0
    %9959 = vmatpush1.msra.mxu0 0.0
    %9960 = vmatprep.subr.mxu0 0.0
    %9961 = vmatpush1.msra.mxu0 0.0
    %9962 = vmatprep.subr.mxu0 0.0
    %9963 = vmatpush1.msra.mxu0 0.0
    %9964 = vmatprep.subr.mxu0 0.0
    %9965 = vmatpush1.msra.mxu0 0.0
    %9966 = vmatprep.subr.mxu0 0.0
    %9967 = vmatpush1.msra.mxu0 0.0
    %9968 = vmatprep.mubr.f32.mxu0 0.0
    %9969 = vmatmul.mubr.f32.gmra.mrb[0].mxu0 %v7421
    %v9970 = vpop.f32.mrb[0].mxu0
    %v9971 = vadd.f32 0.0, %v9970
    %v9972 = vpop.f32.mrb[0].mxu0
    %9973 = vdwg.mxu0
    %v9975 = vsel %vm7423, %v9460, 0
    %9977 = vmatprep.subr.mxu0 0.0
    %9978 = vmatpush1.msra.mxu0 %v9975
    %9979 = vmatprep.subr.mxu0 0.0
    %9980 = vmatpush1.msra.mxu0 0.0
    %9981 = vmatprep.subr.mxu0 0.0
    %9982 = vmatpush1.msra.mxu0 0.0
    %9983 = vmatprep.subr.mxu0 0.0
    %9984 = vmatpush1.msra.mxu0 0.0
    %9985 = vmatprep.subr.mxu0 0.0
    %9986 = vmatpush1.msra.mxu0 0.0
    %9987 = vmatprep.subr.mxu0 0.0
    %9988 = vmatpush1.msra.mxu0 0.0
    %9989 = vmatprep.subr.mxu0 0.0
    %9990 = vmatpush1.msra.mxu0 0.0
    %9991 = vmatprep.subr.mxu0 0.0
    %9992 = vmatpush1.msra.mxu0 0.0
    %9993 = vmatprep.subr.mxu0 0.0
    %9994 = vmatpush1.msra.mxu0 0.0
    %9995 = vmatprep.subr.mxu0 0.0
    %9996 = vmatpush1.msra.mxu0 0.0
    %9997 = vmatprep.subr.mxu0 0.0
    %9998 = vmatpush1.msra.mxu0 0.0
    %9999 = vmatprep.subr.mxu0 0.0
    %10000 = vmatpush1.msra.mxu0 0.0
    %10001 = vmatprep.subr.mxu0 0.0
    %10002 = vmatpush1.msra.mxu0 0.0
    %10003 = vmatprep.subr.mxu0 0.0
    %10004 = vmatpush1.msra.mxu0 0.0
    %10005 = vmatprep.subr.mxu0 0.0
    %10006 = vmatpush1.msra.mxu0 0.0
    %10007 = vmatprep.subr.mxu0 0.0
    %10008 = vmatpush1.msra.mxu0 0.0
    %10009 = vmatprep.subr.mxu0 0.0
    %10010 = vmatpush1.msra.mxu0 0.0
    %10011 = vmatprep.subr.mxu0 0.0
    %10012 = vmatpush1.msra.mxu0 0.0
    %10013 = vmatprep.subr.mxu0 0.0
    %10014 = vmatpush1.msra.mxu0 0.0
    %10015 = vmatprep.subr.mxu0 0.0
    %10016 = vmatpush1.msra.mxu0 0.0
    %10017 = vmatprep.subr.mxu0 0.0
    %10018 = vmatpush1.msra.mxu0 0.0
    %10019 = vmatprep.subr.mxu0 0.0
    %10020 = vmatpush1.msra.mxu0 0.0
    %10021 = vmatprep.subr.mxu0 0.0
    %10022 = vmatpush1.msra.mxu0 0.0
    %10023 = vmatprep.subr.mxu0 0.0
    %10024 = vmatpush1.msra.mxu0 0.0
    %10025 = vmatprep.subr.mxu0 0.0
    %10026 = vmatpush1.msra.mxu0 0.0
    %10027 = vmatprep.subr.mxu0 0.0
    %10028 = vmatpush1.msra.mxu0 0.0
    %10029 = vmatprep.subr.mxu0 0.0
    %10030 = vmatpush1.msra.mxu0 0.0
    %10031 = vmatprep.subr.mxu0 0.0
    %10032 = vmatpush1.msra.mxu0 0.0
    %10033 = vmatprep.subr.mxu0 0.0
    %10034 = vmatpush1.msra.mxu0 0.0
    %10035 = vmatprep.subr.mxu0 0.0
    %10036 = vmatpush1.msra.mxu0 0.0
    %10037 = vmatprep.subr.mxu0 0.0
    %10038 = vmatpush1.msra.mxu0 0.0
    %10039 = vmatprep.subr.mxu0 0.0
    %10040 = vmatpush1.msra.mxu0 0.0
    %10041 = vmatprep.mubr.f32.mxu0 0.0
    %10042 = vmatmul.mubr.f32.gmra.mrb[0].mxu0 %v7421
    %v10043 = vpop.f32.mrb[0].mxu0
    %v10044 = vadd.f32 0.0, %v10043
    %v10045 = vpop.f32.mrb[0].mxu0
    %10046 = vdwg.mxu0
    %v10048 = vsel %vm7423, %v9533, 0
    %10050 = vmatprep.subr.mxu0 0.0
    %10051 = vmatpush1.msra.mxu0 %v10048
    %10052 = vmatprep.subr.mxu0 0.0
    %10053 = vmatpush1.msra.mxu0 0.0
    %10054 = vmatprep.subr.mxu0 0.0
    %10055 = vmatpush1.msra.mxu0 0.0
    %10056 = vmatprep.subr.mxu0 0.0
    %10057 = vmatpush1.msra.mxu0 0.0
    %10058 = vmatprep.subr.mxu0 0.0
    %10059 = vmatpush1.msra.mxu0 0.0
    %10060 = vmatprep.subr.mxu0 0.0
    %10061 = vmatpush1.msra.mxu0 0.0
    %10062 = vmatprep.subr.mxu0 0.0
    %10063 = vmatpush1.msra.mxu0 0.0
    %10064 = vmatprep.subr.mxu0 0.0
    %10065 = vmatpush1.msra.mxu0 0.0
    %10066 = vmatprep.subr.mxu0 0.0
    %10067 = vmatpush1.msra.mxu0 0.0
    %10068 = vmatprep.subr.mxu0 0.0
    %10069 = vmatpush1.msra.mxu0 0.0
    %10070 = vmatprep.subr.mxu0 0.0
    %10071 = vmatpush1.msra.mxu0 0.0
    %10072 = vmatprep.subr.mxu0 0.0
    %10073 = vmatpush1.msra.mxu0 0.0
    %10074 = vmatprep.subr.mxu0 0.0
    %10075 = vmatpush1.msra.mxu0 0.0
    %10076 = vmatprep.subr.mxu0 0.0
    %10077 = vmatpush1.msra.mxu0 0.0
    %10078 = vmatprep.subr.mxu0 0.0
    %10079 = vmatpush1.msra.mxu0 0.0
    %10080 = vmatprep.subr.mxu0 0.0
    %10081 = vmatpush1.msra.mxu0 0.0
    %10082 = vmatprep.subr.mxu0 0.0
    %10083 = vmatpush1.msra.mxu0 0.0
    %10084 = vmatprep.subr.mxu0 0.0
    %10085 = vmatpush1.msra.mxu0 0.0
    %10086 = vmatprep.subr.mxu0 0.0
    %10087 = vmatpush1.msra.mxu0 0.0
    %10088 = vmatprep.subr.mxu0 0.0
    %10089 = vmatpush1.msra.mxu0 0.0
    %10090 = vmatprep.subr.mxu0 0.0
    %10091 = vmatpush1.msra.mxu0 0.0
    %10092 = vmatprep.subr.mxu0 0.0
    %10093 = vmatpush1.msra.mxu0 0.0
    %10094 = vmatprep.subr.mxu0 0.0
    %10095 = vmatpush1.msra.mxu0 0.0
    %10096 = vmatprep.subr.mxu0 0.0
    %10097 = vmatpush1.msra.mxu0 0.0
    %10098 = vmatprep.subr.mxu0 0.0
    %10099 = vmatpush1.msra.mxu0 0.0
    %10100 = vmatprep.subr.mxu0 0.0
    %10101 = vmatpush1.msra.mxu0 0.0
    %10102 = vmatprep.subr.mxu0 0.0
    %10103 = vmatpush1.msra.mxu0 0.0
    %10104 = vmatprep.subr.mxu0 0.0
    %10105 = vmatpush1.msra.mxu0 0.0
    %10106 = vmatprep.subr.mxu0 0.0
    %10107 = vmatpush1.msra.mxu0 0.0
    %10108 = vmatprep.subr.mxu0 0.0
    %10109 = vmatpush1.msra.mxu0 0.0
    %10110 = vmatprep.subr.mxu0 0.0
    %10111 = vmatpush1.msra.mxu0 0.0
    %10112 = vmatprep.subr.mxu0 0.0
    %10113 = vmatpush1.msra.mxu0 0.0
    %10114 = vmatprep.mubr.f32.mxu0 0.0
    %10115 = vmatmul.mubr.f32.gmra.mrb[0].mxu0 %v7421
    %v10116 = vpop.f32.mrb[0].mxu0
    %v10117 = vadd.f32 0.0, %v10116
    %v10118 = vpop.f32.mrb[0].mxu0
    %10119 = vdwg.mxu0
    %v10121 = vsel %vm7423, %v9606, 0
    %10123 = vmatprep.subr.mxu0 0.0
    %10124 = vmatpush1.msra.mxu0 %v10121
    %10125 = vmatprep.subr.mxu0 0.0
    %10126 = vmatpush1.msra.mxu0 0.0
    %10127 = vmatprep.subr.mxu0 0.0
    %10128 = vmatpush1.msra.mxu0 0.0
    %10129 = vmatprep.subr.mxu0 0.0
    %10130 = vmatpush1.msra.mxu0 0.0
    %10131 = vmatprep.subr.mxu0 0.0
    %10132 = vmatpush1.msra.mxu0 0.0
    %10133 = vmatprep.subr.mxu0 0.0
    %10134 = vmatpush1.msra.mxu0 0.0
    %10135 = vmatprep.subr.mxu0 0.0
    %10136 = vmatpush1.msra.mxu0 0.0
    %10137 = vmatprep.subr.mxu0 0.0
    %10138 = vmatpush1.msra.mxu0 0.0
    %10139 = vmatprep.subr.mxu0 0.0
    %10140 = vmatpush1.msra.mxu0 0.0
    %10141 = vmatprep.subr.mxu0 0.0
    %10142 = vmatpush1.msra.mxu0 0.0
    %10143 = vmatprep.subr.mxu0 0.0
    %10144 = vmatpush1.msra.mxu0 0.0
    %10145 = vmatprep.subr.mxu0 0.0
    %10146 = vmatpush1.msra.mxu0 0.0
    %10147 = vmatprep.subr.mxu0 0.0
    %10148 = vmatpush1.msra.mxu0 0.0
    %10149 = vmatprep.subr.mxu0 0.0
    %10150 = vmatpush1.msra.mxu0 0.0
    %10151 = vmatprep.subr.mxu0 0.0
    %10152 = vmatpush1.msra.mxu0 0.0
    %10153 = vmatprep.subr.mxu0 0.0
    %10154 = vmatpush1.msra.mxu0 0.0
    %10155 = vmatprep.subr.mxu0 0.0
    %10156 = vmatpush1.msra.mxu0 0.0
    %10157 = vmatprep.subr.mxu0 0.0
    %10158 = vmatpush1.msra.mxu0 0.0
    %10159 = vmatprep.subr.mxu0 0.0
    %10160 = vmatpush1.msra.mxu0 0.0
    %10161 = vmatprep.subr.mxu0 0.0
    %10162 = vmatpush1.msra.mxu0 0.0
    %10163 = vmatprep.subr.mxu0 0.0
    %10164 = vmatpush1.msra.mxu0 0.0
    %10165 = vmatprep.subr.mxu0 0.0
    %10166 = vmatpush1.msra.mxu0 0.0
    %10167 = vmatprep.subr.mxu0 0.0
    %10168 = vmatpush1.msra.mxu0 0.0
    %10169 = vmatprep.subr.mxu0 0.0
    %10170 = vmatpush1.msra.mxu0 0.0
    %10171 = vmatprep.subr.mxu0 0.0
    %10172 = vmatpush1.msra.mxu0 0.0
    %10173 = vmatprep.subr.mxu0 0.0
    %10174 = vmatpush1.msra.mxu0 0.0
    %10175 = vmatprep.subr.mxu0 0.0
    %10176 = vmatpush1.msra.mxu0 0.0
    %10177 = vmatprep.subr.mxu0 0.0
    %10178 = vmatpush1.msra.mxu0 0.0
    %10179 = vmatprep.subr.mxu0 0.0
    %10180 = vmatpush1.msra.mxu0 0.0
    %10181 = vmatprep.subr.mxu0 0.0
    %10182 = vmatpush1.msra.mxu0 0.0
    %10183 = vmatprep.subr.mxu0 0.0
    %10184 = vmatpush1.msra.mxu0 0.0
    %10185 = vmatprep.subr.mxu0 0.0
    %10186 = vmatpush1.msra.mxu0 0.0
    %10187 = vmatprep.mubr.f32.mxu0 0.0
    %10188 = vmatmul.mubr.f32.gmra.mrb[0].mxu0 %v7421
    %v10189 = vpop.f32.mrb[0].mxu0
    %v10190 = vadd.f32 0.0, %v10189
    %v10191 = vpop.f32.mrb[0].mxu0
    %10192 = vdwg.mxu0
    %v10194 = vsel %vm7423, %v9679, 0
    %10196 = vmatprep.subr.mxu0 0.0
    %10197 = vmatpush1.msra.mxu0 %v10194
    %10198 = vmatprep.subr.mxu0 0.0
    %10199 = vmatpush1.msra.mxu0 0.0
    %10200 = vmatprep.subr.mxu0 0.0
    %10201 = vmatpush1.msra.mxu0 0.0
    %10202 = vmatprep.subr.mxu0 0.0
    %10203 = vmatpush1.msra.mxu0 0.0
    %10204 = vmatprep.subr.mxu0 0.0
    %10205 = vmatpush1.msra.mxu0 0.0
    %10206 = vmatprep.subr.mxu0 0.0
    %10207 = vmatpush1.msra.mxu0 0.0
    %10208 = vmatprep.subr.mxu0 0.0
    %10209 = vmatpush1.msra.mxu0 0.0
    %10210 = vmatprep.subr.mxu0 0.0
    %10211 = vmatpush1.msra.mxu0 0.0
    %10212 = vmatprep.subr.mxu0 0.0
    %10213 = vmatpush1.msra.mxu0 0.0
    %10214 = vmatprep.subr.mxu0 0.0
    %10215 = vmatpush1.msra.mxu0 0.0
    %10216 = vmatprep.subr.mxu0 0.0
    %10217 = vmatpush1.msra.mxu0 0.0
    %10218 = vmatprep.subr.mxu0 0.0
    %10219 = vmatpush1.msra.mxu0 0.0
    %10220 = vmatprep.subr.mxu0 0.0
    %10221 = vmatpush1.msra.mxu0 0.0
    %10222 = vmatprep.subr.mxu0 0.0
    %10223 = vmatpush1.msra.mxu0 0.0
    %10224 = vmatprep.subr.mxu0 0.0
    %10225 = vmatpush1.msra.mxu0 0.0
    %10226 = vmatprep.subr.mxu0 0.0
    %10227 = vmatpush1.msra.mxu0 0.0
    %10228 = vmatprep.subr.mxu0 0.0
    %10229 = vmatpush1.msra.mxu0 0.0
    %10230 = vmatprep.subr.mxu0 0.0
    %10231 = vmatpush1.msra.mxu0 0.0
    %10232 = vmatprep.subr.mxu0 0.0
    %10233 = vmatpush1.msra.mxu0 0.0
    %10234 = vmatprep.subr.mxu0 0.0
    %10235 = vmatpush1.msra.mxu0 0.0
    %10236 = vmatprep.subr.mxu0 0.0
    %10237 = vmatpush1.msra.mxu0 0.0
    %10238 = vmatprep.subr.mxu0 0.0
    %10239 = vmatpush1.msra.mxu0 0.0
    %10240 = vmatprep.subr.mxu0 0.0
    %10241 = vmatpush1.msra.mxu0 0.0
    %10242 = vmatprep.subr.mxu0 0.0
    %10243 = vmatpush1.msra.mxu0 0.0
    %10244 = vmatprep.subr.mxu0 0.0
    %10245 = vmatpush1.msra.mxu0 0.0
    %10246 = vmatprep.subr.mxu0 0.0
    %10247 = vmatpush1.msra.mxu0 0.0
    %10248 = vmatprep.subr.mxu0 0.0
    %10249 = vmatpush1.msra.mxu0 0.0
    %10250 = vmatprep.subr.mxu0 0.0
    %10251 = vmatpush1.msra.mxu0 0.0
    %10252 = vmatprep.subr.mxu0 0.0
    %10253 = vmatpush1.msra.mxu0 0.0
    %10254 = vmatprep.subr.mxu0 0.0
    %10255 = vmatpush1.msra.mxu0 0.0
    %10256 = vmatprep.subr.mxu0 0.0
    %10257 = vmatpush1.msra.mxu0 0.0
    %10258 = vmatprep.subr.mxu0 0.0
    %10259 = vmatpush1.msra.mxu0 0.0
    %10260 = vmatprep.mubr.f32.mxu0 0.0
    %10261 = vmatmul.mubr.f32.gmra.mrb[0].mxu0 %v7421
    %v10262 = vpop.f32.mrb[0].mxu0
    %v10263 = vadd.f32 0.0, %v10262
    %v10264 = vpop.f32.mrb[0].mxu0
    %10265 = vdwg.mxu0
    %v10267 = vsel %vm7423, %v9752, 0
    %10269 = vmatprep.subr.mxu0 0.0
    %10270 = vmatpush1.msra.mxu0 %v10267
    %10271 = vmatprep.subr.mxu0 0.0
    %10272 = vmatpush1.msra.mxu0 0.0
    %10273 = vmatprep.subr.mxu0 0.0
    %10274 = vmatpush1.msra.mxu0 0.0
    %10275 = vmatprep.subr.mxu0 0.0
    %10276 = vmatpush1.msra.mxu0 0.0
    %10277 = vmatprep.subr.mxu0 0.0
    %10278 = vmatpush1.msra.mxu0 0.0
    %10279 = vmatprep.subr.mxu0 0.0
    %10280 = vmatpush1.msra.mxu0 0.0
    %10281 = vmatprep.subr.mxu0 0.0
    %10282 = vmatpush1.msra.mxu0 0.0
    %10283 = vmatprep.subr.mxu0 0.0
    %10284 = vmatpush1.msra.mxu0 0.0
    %10285 = vmatprep.subr.mxu0 0.0
    %10286 = vmatpush1.msra.mxu0 0.0
    %10287 = vmatprep.subr.mxu0 0.0
    %10288 = vmatpush1.msra.mxu0 0.0
    %10289 = vmatprep.subr.mxu0 0.0
    %10290 = vmatpush1.msra.mxu0 0.0
    %10291 = vmatprep.subr.mxu0 0.0
    %10292 = vmatpush1.msra.mxu0 0.0
    %10293 = vmatprep.subr.mxu0 0.0
    %10294 = vmatpush1.msra.mxu0 0.0
    %10295 = vmatprep.subr.mxu0 0.0
    %10296 = vmatpush1.msra.mxu0 0.0
    %10297 = vmatprep.subr.mxu0 0.0
    %10298 = vmatpush1.msra.mxu0 0.0
    %10299 = vmatprep.subr.mxu0 0.0
    %10300 = vmatpush1.msra.mxu0 0.0
    %10301 = vmatprep.subr.mxu0 0.0
    %10302 = vmatpush1.msra.mxu0 0.0
    %10303 = vmatprep.subr.mxu0 0.0
    %10304 = vmatpush1.msra.mxu0 0.0
    %10305 = vmatprep.subr.mxu0 0.0
    %10306 = vmatpush1.msra.mxu0 0.0
    %10307 = vmatprep.subr.mxu0 0.0
    %10308 = vmatpush1.msra.mxu0 0.0
    %10309 = vmatprep.subr.mxu0 0.0
    %10310 = vmatpush1.msra.mxu0 0.0
    %10311 = vmatprep.subr.mxu0 0.0
    %10312 = vmatpush1.msra.mxu0 0.0
    %10313 = vmatprep.subr.mxu0 0.0
    %10314 = vmatpush1.msra.mxu0 0.0
    %10315 = vmatprep.subr.mxu0 0.0
    %10316 = vmatpush1.msra.mxu0 0.0
    %10317 = vmatprep.subr.mxu0 0.0
    %10318 = vmatpush1.msra.mxu0 0.0
    %10319 = vmatprep.subr.mxu0 0.0
    %10320 = vmatpush1.msra.mxu0 0.0
    %10321 = vmatprep.subr.mxu0 0.0
    %10322 = vmatpush1.msra.mxu0 0.0
    %10323 = vmatprep.subr.mxu0 0.0
    %10324 = vmatpush1.msra.mxu0 0.0
    %10325 = vmatprep.subr.mxu0 0.0
    %10326 = vmatpush1.msra.mxu0 0.0
    %10327 = vmatprep.subr.mxu0 0.0
    %10328 = vmatpush1.msra.mxu0 0.0
    %10329 = vmatprep.subr.mxu0 0.0
    %10330 = vmatpush1.msra.mxu0 0.0
    %10331 = vmatprep.subr.mxu0 0.0
    %10332 = vmatpush1.msra.mxu0 0.0
    %10333 = vmatprep.mubr.f32.mxu0 0.0
    %10334 = vmatmul.mubr.f32.gmra.mrb[0].mxu0 %v7421
    %v10335 = vpop.f32.mrb[0].mxu0
    %v10336 = vadd.f32 0.0, %v10335
    %v10337 = vpop.f32.mrb[0].mxu0
    %10338 = vdwg.mxu0
    %v10340 = vsel %vm7419, %v9825, 0
    %10342 = vmatprep.subr.mxu0 0.0
    %10343 = vmatpush1.msra.mxu0 %v8012
    %10344 = vmatprep.subr.mxu0 0.0
    %10345 = vmatpush1.msra.mxu0 0.0
    %10346 = vmatprep.subr.mxu0 0.0
    %10347 = vmatpush1.msra.mxu0 0.0
    %10348 = vmatprep.subr.mxu0 0.0
    %10349 = vmatpush1.msra.mxu0 0.0
    %10350 = vmatprep.subr.mxu0 0.0
    %10351 = vmatpush1.msra.mxu0 0.0
    %10352 = vmatprep.subr.mxu0 0.0
    %10353 = vmatpush1.msra.mxu0 0.0
    %10354 = vmatprep.subr.mxu0 0.0
    %10355 = vmatpush1.msra.mxu0 0.0
    %10356 = vmatprep.subr.mxu0 0.0
    %10357 = vmatpush1.msra.mxu0 0.0
    %10358 = vmatprep.subr.mxu0 0.0
    %10359 = vmatpush1.msra.mxu0 0.0
    %10360 = vmatprep.subr.mxu0 0.0
    %10361 = vmatpush1.msra.mxu0 0.0
    %10362 = vmatprep.subr.mxu0 0.0
    %10363 = vmatpush1.msra.mxu0 0.0
    %10364 = vmatprep.subr.mxu0 0.0
    %10365 = vmatpush1.msra.mxu0 0.0
    %10366 = vmatprep.subr.mxu0 0.0
    %10367 = vmatpush1.msra.mxu0 0.0
    %10368 = vmatprep.subr.mxu0 0.0
    %10369 = vmatpush1.msra.mxu0 0.0
    %10370 = vmatprep.subr.mxu0 0.0
    %10371 = vmatpush1.msra.mxu0 0.0
    %10372 = vmatprep.subr.mxu0 0.0
    %10373 = vmatpush1.msra.mxu0 0.0
    %10374 = vmatprep.subr.mxu0 0.0
    %10375 = vmatpush1.msra.mxu0 0.0
    %10376 = vmatprep.subr.mxu0 0.0
    %10377 = vmatpush1.msra.mxu0 0.0
    %10378 = vmatprep.subr.mxu0 0.0
    %10379 = vmatpush1.msra.mxu0 0.0
    %10380 = vmatprep.subr.mxu0 0.0
    %10381 = vmatpush1.msra.mxu0 0.0
    %10382 = vmatprep.subr.mxu0 0.0
    %10383 = vmatpush1.msra.mxu0 0.0
    %10384 = vmatprep.subr.mxu0 0.0
    %10385 = vmatpush1.msra.mxu0 0.0
    %10386 = vmatprep.subr.mxu0 0.0
    %10387 = vmatpush1.msra.mxu0 0.0
    %10388 = vmatprep.subr.mxu0 0.0
    %10389 = vmatpush1.msra.mxu0 0.0
    %10390 = vmatprep.subr.mxu0 0.0
    %10391 = vmatpush1.msra.mxu0 0.0
    %10392 = vmatprep.subr.mxu0 0.0
    %10393 = vmatpush1.msra.mxu0 0.0
    %10394 = vmatprep.subr.mxu0 0.0
    %10395 = vmatpush1.msra.mxu0 0.0
    %10396 = vmatprep.subr.mxu0 0.0
    %10397 = vmatpush1.msra.mxu0 0.0
    %10398 = vmatprep.subr.mxu0 0.0
    %10399 = vmatpush1.msra.mxu0 0.0
    %10400 = vmatprep.subr.mxu0 0.0
    %10401 = vmatpush1.msra.mxu0 0.0
    %10402 = vmatprep.subr.mxu0 0.0
    %10403 = vmatpush1.msra.mxu0 0.0
    %10404 = vmatprep.subr.mxu0 0.0
    %10405 = vmatpush1.msra.mxu0 0.0
    %10406 = vmatprep.mubr.f32.mxu0 0.0
    %10407 = vmatmul.mubr.f32.gmra.mrb[0].mxu0 %v10340
    %v10408 = vpop.f32.mrb[0].mxu0
    %v10409 = vadd.f32 0.0, %v10408
    %v10410 = vpop.f32.mrb[0].mxu0
    %10411 = vdwg.mxu0
    %v10413 = vsel %vm7419, %v9898, 0
    %10415 = vmatprep.subr.mxu0 0.0
    %10416 = vmatpush1.msra.mxu0 %v8012
    %10417 = vmatprep.subr.mxu0 0.0
    %10418 = vmatpush1.msra.mxu0 0.0
    %10419 = vmatprep.subr.mxu0 0.0
    %10420 = vmatpush1.msra.mxu0 0.0
    %10421 = vmatprep.subr.mxu0 0.0
    %10422 = vmatpush1.msra.mxu0 0.0
    %10423 = vmatprep.subr.mxu0 0.0
    %10424 = vmatpush1.msra.mxu0 0.0
    %10425 = vmatprep.subr.mxu0 0.0
    %10426 = vmatpush1.msra.mxu0 0.0
    %10427 = vmatprep.subr.mxu0 0.0
    %10428 = vmatpush1.msra.mxu0 0.0
    %10429 = vmatprep.subr.mxu0 0.0
    %10430 = vmatpush1.msra.mxu0 0.0
    %10431 = vmatprep.subr.mxu0 0.0
    %10432 = vmatpush1.msra.mxu0 0.0
    %10433 = vmatprep.subr.mxu0 0.0
    %10434 = vmatpush1.msra.mxu0 0.0
    %10435 = vmatprep.subr.mxu0 0.0
    %10436 = vmatpush1.msra.mxu0 0.0
    %10437 = vmatprep.subr.mxu0 0.0
    %10438 = vmatpush1.msra.mxu0 0.0
    %10439 = vmatprep.subr.mxu0 0.0
    %10440 = vmatpush1.msra.mxu0 0.0
    %10441 = vmatprep.subr.mxu0 0.0
    %10442 = vmatpush1.msra.mxu0 0.0
    %10443 = vmatprep.subr.mxu0 0.0
    %10444 = vmatpush1.msra.mxu0 0.0
    %10445 = vmatprep.subr.mxu0 0.0
    %10446 = vmatpush1.msra.mxu0 0.0
    %10447 = vmatprep.subr.mxu0 0.0
    %10448 = vmatpush1.msra.mxu0 0.0
    %10449 = vmatprep.subr.mxu0 0.0
    %10450 = vmatpush1.msra.mxu0 0.0
    %10451 = vmatprep.subr.mxu0 0.0
    %10452 = vmatpush1.msra.mxu0 0.0
    %10453 = vmatprep.subr.mxu0 0.0
    %10454 = vmatpush1.msra.mxu0 0.0
    %10455 = vmatprep.subr.mxu0 0.0
    %10456 = vmatpush1.msra.mxu0 0.0
    %10457 = vmatprep.subr.mxu0 0.0
    %10458 = vmatpush1.msra.mxu0 0.0
    %10459 = vmatprep.subr.mxu0 0.0
    %10460 = vmatpush1.msra.mxu0 0.0
    %10461 = vmatprep.subr.mxu0 0.0
    %10462 = vmatpush1.msra.mxu0 0.0
    %10463 = vmatprep.subr.mxu0 0.0
    %10464 = vmatpush1.msra.mxu0 0.0
    %10465 = vmatprep.subr.mxu0 0.0
    %10466 = vmatpush1.msra.mxu0 0.0
    %10467 = vmatprep.subr.mxu0 0.0
    %10468 = vmatpush1.msra.mxu0 0.0
    %10469 = vmatprep.subr.mxu0 0.0
    %10470 = vmatpush1.msra.mxu0 0.0
    %10471 = vmatprep.subr.mxu0 0.0
    %10472 = vmatpush1.msra.mxu0 0.0
    %10473 = vmatprep.subr.mxu0 0.0
    %10474 = vmatpush1.msra.mxu0 0.0
    %10475 = vmatprep.subr.mxu0 0.0
    %10476 = vmatpush1.msra.mxu0 0.0
    %10477 = vmatprep.subr.mxu0 0.0
    %10478 = vmatpush1.msra.mxu0 0.0
    %10479 = vmatprep.mubr.f32.mxu0 0.0
    %10480 = vmatmul.mubr.f32.gmra.mrb[0].mxu0 %v10413
    %v10481 = vpop.f32.mrb[0].mxu0
    %v10482 = vadd.f32 0.0, %v10481
    %v10483 = vpop.f32.mrb[0].mxu0
    %10484 = vdwg.mxu0
    %v10486 = vsel %vm7419, %v9971, 0
    %10488 = vmatprep.subr.mxu0 0.0
    %10489 = vmatpush1.msra.mxu0 %v8012
    %10490 = vmatprep.subr.mxu0 0.0
    %10491 = vmatpush1.msra.mxu0 0.0
    %10492 = vmatprep.subr.mxu0 0.0
    %10493 = vmatpush1.msra.mxu0 0.0
    %10494 = vmatprep.subr.mxu0 0.0
    %10495 = vmatpush1.msra.mxu0 0.0
    %10496 = vmatprep.subr.mxu0 0.0
    %10497 = vmatpush1.msra.mxu0 0.0
    %10498 = vmatprep.subr.mxu0 0.0
    %10499 = vmatpush1.msra.mxu0 0.0
    %10500 = vmatprep.subr.mxu0 0.0
    %10501 = vmatpush1.msra.mxu0 0.0
    %10502 = vmatprep.subr.mxu0 0.0
    %10503 = vmatpush1.msra.mxu0 0.0
    %10504 = vmatprep.subr.mxu0 0.0
    %10505 = vmatpush1.msra.mxu0 0.0
    %10506 = vmatprep.subr.mxu0 0.0
    %10507 = vmatpush1.msra.mxu0 0.0
    %10508 = vmatprep.subr.mxu0 0.0
    %10509 = vmatpush1.msra.mxu0 0.0
    %10510 = vmatprep.subr.mxu0 0.0
    %10511 = vmatpush1.msra.mxu0 0.0
    %10512 = vmatprep.subr.mxu0 0.0
    %10513 = vmatpush1.msra.mxu0 0.0
    %10514 = vmatprep.subr.mxu0 0.0
    %10515 = vmatpush1.msra.mxu0 0.0
    %10516 = vmatprep.subr.mxu0 0.0
    %10517 = vmatpush1.msra.mxu0 0.0
    %10518 = vmatprep.subr.mxu0 0.0
    %10519 = vmatpush1.msra.mxu0 0.0
    %10520 = vmatprep.subr.mxu0 0.0
    %10521 = vmatpush1.msra.mxu0 0.0
    %10522 = vmatprep.subr.mxu0 0.0
    %10523 = vmatpush1.msra.mxu0 0.0
    %10524 = vmatprep.subr.mxu0 0.0
    %10525 = vmatpush1.msra.mxu0 0.0
    %10526 = vmatprep.subr.mxu0 0.0
    %10527 = vmatpush1.msra.mxu0 0.0
    %10528 = vmatprep.subr.mxu0 0.0
    %10529 = vmatpush1.msra.mxu0 0.0
    %10530 = vmatprep.subr.mxu0 0.0
    %10531 = vmatpush1.msra.mxu0 0.0
    %10532 = vmatprep.subr.mxu0 0.0
    %10533 = vmatpush1.msra.mxu0 0.0
    %10534 = vmatprep.subr.mxu0 0.0
    %10535 = vmatpush1.msra.mxu0 0.0
    %10536 = vmatprep.subr.mxu0 0.0
    %10537 = vmatpush1.msra.mxu0 0.0
    %10538 = vmatprep.subr.mxu0 0.0
    %10539 = vmatpush1.msra.mxu0 0.0
    %10540 = vmatprep.subr.mxu0 0.0
    %10541 = vmatpush1.msra.mxu0 0.0
    %10542 = vmatprep.subr.mxu0 0.0
    %10543 = vmatpush1.msra.mxu0 0.0
    %10544 = vmatprep.subr.mxu0 0.0
    %10545 = vmatpush1.msra.mxu0 0.0
    %10546 = vmatprep.subr.mxu0 0.0
    %10547 = vmatpush1.msra.mxu0 0.0
    %10548 = vmatprep.subr.mxu0 0.0
    %10549 = vmatpush1.msra.mxu0 0.0
    %10550 = vmatprep.subr.mxu0 0.0
    %10551 = vmatpush1.msra.mxu0 0.0
    %10552 = vmatprep.mubr.f32.mxu0 0.0
    %10553 = vmatmul.mubr.f32.gmra.mrb[0].mxu0 %v10486
    %v10554 = vpop.f32.mrb[0].mxu0
    %v10555 = vadd.f32 0.0, %v10554
    %v10556 = vpop.f32.mrb[0].mxu0
    %10557 = vdwg.mxu0
    %v10559 = vsel %vm7419, %v10044, 0
    %10561 = vmatprep.subr.mxu0 0.0
    %10562 = vmatpush1.msra.mxu0 %v8012
    %10563 = vmatprep.subr.mxu0 0.0
    %10564 = vmatpush1.msra.mxu0 0.0
    %10565 = vmatprep.subr.mxu0 0.0
    %10566 = vmatpush1.msra.mxu0 0.0
    %10567 = vmatprep.subr.mxu0 0.0
    %10568 = vmatpush1.msra.mxu0 0.0
    %10569 = vmatprep.subr.mxu0 0.0
    %10570 = vmatpush1.msra.mxu0 0.0
    %10571 = vmatprep.subr.mxu0 0.0
    %10572 = vmatpush1.msra.mxu0 0.0
    %10573 = vmatprep.subr.mxu0 0.0
    %10574 = vmatpush1.msra.mxu0 0.0
    %10575 = vmatprep.subr.mxu0 0.0
    %10576 = vmatpush1.msra.mxu0 0.0
    %10577 = vmatprep.subr.mxu0 0.0
    %10578 = vmatpush1.msra.mxu0 0.0
    %10579 = vmatprep.subr.mxu0 0.0
    %10580 = vmatpush1.msra.mxu0 0.0
    %10581 = vmatprep.subr.mxu0 0.0
    %10582 = vmatpush1.msra.mxu0 0.0
    %10583 = vmatprep.subr.mxu0 0.0
    %10584 = vmatpush1.msra.mxu0 0.0
    %10585 = vmatprep.subr.mxu0 0.0
    %10586 = vmatpush1.msra.mxu0 0.0
    %10587 = vmatprep.subr.mxu0 0.0
    %10588 = vmatpush1.msra.mxu0 0.0
    %10589 = vmatprep.subr.mxu0 0.0
    %10590 = vmatpush1.msra.mxu0 0.0
    %10591 = vmatprep.subr.mxu0 0.0
    %10592 = vmatpush1.msra.mxu0 0.0
    %10593 = vmatprep.subr.mxu0 0.0
    %10594 = vmatpush1.msra.mxu0 0.0
    %10595 = vmatprep.subr.mxu0 0.0
    %10596 = vmatpush1.msra.mxu0 0.0
    %10597 = vmatprep.subr.mxu0 0.0
    %10598 = vmatpush1.msra.mxu0 0.0
    %10599 = vmatprep.subr.mxu0 0.0
    %10600 = vmatpush1.msra.mxu0 0.0
    %10601 = vmatprep.subr.mxu0 0.0
    %10602 = vmatpush1.msra.mxu0 0.0
    %10603 = vmatprep.subr.mxu0 0.0
    %10604 = vmatpush1.msra.mxu0 0.0
    %10605 = vmatprep.subr.mxu0 0.0
    %10606 = vmatpush1.msra.mxu0 0.0
    %10607 = vmatprep.subr.mxu0 0.0
    %10608 = vmatpush1.msra.mxu0 0.0
    %10609 = vmatprep.subr.mxu0 0.0
    %10610 = vmatpush1.msra.mxu0 0.0
    %10611 = vmatprep.subr.mxu0 0.0
    %10612 = vmatpush1.msra.mxu0 0.0
    %10613 = vmatprep.subr.mxu0 0.0
    %10614 = vmatpush1.msra.mxu0 0.0
    %10615 = vmatprep.subr.mxu0 0.0
    %10616 = vmatpush1.msra.mxu0 0.0
    %10617 = vmatprep.subr.mxu0 0.0
    %10618 = vmatpush1.msra.mxu0 0.0
    %10619 = vmatprep.subr.mxu0 0.0
    %10620 = vmatpush1.msra.mxu0 0.0
    %10621 = vmatprep.subr.mxu0 0.0
    %10622 = vmatpush1.msra.mxu0 0.0
    %10623 = vmatprep.subr.mxu0 0.0
    %10624 = vmatpush1.msra.mxu0 0.0
    %10625 = vmatprep.mubr.f32.mxu0 0.0
    %10626 = vmatmul.mubr.f32.gmra.mrb[0].mxu0 %v10559
    %v10627 = vpop.f32.mrb[0].mxu0
    %v10628 = vadd.f32 0.0, %v10627
    %v10629 = vpop.f32.mrb[0].mxu0
    %10630 = vdwg.mxu0
    %v10632 = vsel %vm7419, %v10117, 0
    %10634 = vmatprep.subr.mxu0 0.0
    %10635 = vmatpush1.msra.mxu0 %v8012
    %10636 = vmatprep.subr.mxu0 0.0
    %10637 = vmatpush1.msra.mxu0 0.0
    %10638 = vmatprep.subr.mxu0 0.0
    %10639 = vmatpush1.msra.mxu0 0.0
    %10640 = vmatprep.subr.mxu0 0.0
    %10641 = vmatpush1.msra.mxu0 0.0
    %10642 = vmatprep.subr.mxu0 0.0
    %10643 = vmatpush1.msra.mxu0 0.0
    %10644 = vmatprep.subr.mxu0 0.0
    %10645 = vmatpush1.msra.mxu0 0.0
    %10646 = vmatprep.subr.mxu0 0.0
    %10647 = vmatpush1.msra.mxu0 0.0
    %10648 = vmatprep.subr.mxu0 0.0
    %10649 = vmatpush1.msra.mxu0 0.0
    %10650 = vmatprep.subr.mxu0 0.0
    %10651 = vmatpush1.msra.mxu0 0.0
    %10652 = vmatprep.subr.mxu0 0.0
    %10653 = vmatpush1.msra.mxu0 0.0
    %10654 = vmatprep.subr.mxu0 0.0
    %10655 = vmatpush1.msra.mxu0 0.0
    %10656 = vmatprep.subr.mxu0 0.0
    %10657 = vmatpush1.msra.mxu0 0.0
    %10658 = vmatprep.subr.mxu0 0.0
    %10659 = vmatpush1.msra.mxu0 0.0
    %10660 = vmatprep.subr.mxu0 0.0
    %10661 = vmatpush1.msra.mxu0 0.0
    %10662 = vmatprep.subr.mxu0 0.0
    %10663 = vmatpush1.msra.mxu0 0.0
    %10664 = vmatprep.subr.mxu0 0.0
    %10665 = vmatpush1.msra.mxu0 0.0
    %10666 = vmatprep.subr.mxu0 0.0
    %10667 = vmatpush1.msra.mxu0 0.0
    %10668 = vmatprep.subr.mxu0 0.0
    %10669 = vmatpush1.msra.mxu0 0.0
    %10670 = vmatprep.subr.mxu0 0.0
    %10671 = vmatpush1.msra.mxu0 0.0
    %10672 = vmatprep.subr.mxu0 0.0
    %10673 = vmatpush1.msra.mxu0 0.0
    %10674 = vmatprep.subr.mxu0 0.0
    %10675 = vmatpush1.msra.mxu0 0.0
    %10676 = vmatprep.subr.mxu0 0.0
    %10677 = vmatpush1.msra.mxu0 0.0
    %10678 = vmatprep.subr.mxu0 0.0
    %10679 = vmatpush1.msra.mxu0 0.0
    %10680 = vmatprep.subr.mxu0 0.0
    %10681 = vmatpush1.msra.mxu0 0.0
    %10682 = vmatprep.subr.mxu0 0.0
    %10683 = vmatpush1.msra.mxu0 0.0
    %10684 = vmatprep.subr.mxu0 0.0
    %10685 = vmatpush1.msra.mxu0 0.0
    %10686 = vmatprep.subr.mxu0 0.0
    %10687 = vmatpush1.msra.mxu0 0.0
    %10688 = vmatprep.subr.mxu0 0.0
    %10689 = vmatpush1.msra.mxu0 0.0
    %10690 = vmatprep.subr.mxu0 0.0
    %10691 = vmatpush1.msra.mxu0 0.0
    %10692 = vmatprep.subr.mxu0 0.0
    %10693 = vmatpush1.msra.mxu0 0.0
    %10694 = vmatprep.subr.mxu0 0.0
    %10695 = vmatpush1.msra.mxu0 0.0
    %10696 = vmatprep.subr.mxu0 0.0
    %10697 = vmatpush1.msra.mxu0 0.0
    %10698 = vmatprep.mubr.f32.mxu0 0.0
    %10699 = vmatmul.mubr.f32.gmra.mrb[0].mxu0 %v10632
    %v10700 = vpop.f32.mrb[0].mxu0
    %v10701 = vadd.f32 0.0, %v10700
    %v10702 = vpop.f32.mrb[0].mxu0
    %10703 = vdwg.mxu0
    %v10705 = vsel %vm7419, %v10190, 0
    %10707 = vmatprep.subr.mxu0 0.0
    %10708 = vmatpush1.msra.mxu0 %v8012
    %10709 = vmatprep.subr.mxu0 0.0
    %10710 = vmatpush1.msra.mxu0 0.0
    %10711 = vmatprep.subr.mxu0 0.0
    %10712 = vmatpush1.msra.mxu0 0.0
    %10713 = vmatprep.subr.mxu0 0.0
    %10714 = vmatpush1.msra.mxu0 0.0
    %10715 = vmatprep.subr.mxu0 0.0
    %10716 = vmatpush1.msra.mxu0 0.0
    %10717 = vmatprep.subr.mxu0 0.0
    %10718 = vmatpush1.msra.mxu0 0.0
    %10719 = vmatprep.subr.mxu0 0.0
    %10720 = vmatpush1.msra.mxu0 0.0
    %10721 = vmatprep.subr.mxu0 0.0
    %10722 = vmatpush1.msra.mxu0 0.0
    %10723 = vmatprep.subr.mxu0 0.0
    %10724 = vmatpush1.msra.mxu0 0.0
    %10725 = vmatprep.subr.mxu0 0.0
    %10726 = vmatpush1.msra.mxu0 0.0
    %10727 = vmatprep.subr.mxu0 0.0
    %10728 = vmatpush1.msra.mxu0 0.0
    %10729 = vmatprep.subr.mxu0 0.0
    %10730 = vmatpush1.msra.mxu0 0.0
    %10731 = vmatprep.subr.mxu0 0.0
    %10732 = vmatpush1.msra.mxu0 0.0
    %10733 = vmatprep.subr.mxu0 0.0
    %10734 = vmatpush1.msra.mxu0 0.0
    %10735 = vmatprep.subr.mxu0 0.0
    %10736 = vmatpush1.msra.mxu0 0.0
    %10737 = vmatprep.subr.mxu0 0.0
    %10738 = vmatpush1.msra.mxu0 0.0
    %10739 = vmatprep.subr.mxu0 0.0
    %10740 = vmatpush1.msra.mxu0 0.0
    %10741 = vmatprep.subr.mxu0 0.0
    %10742 = vmatpush1.msra.mxu0 0.0
    %10743 = vmatprep.subr.mxu0 0.0
    %10744 = vmatpush1.msra.mxu0 0.0
    %10745 = vmatprep.subr.mxu0 0.0
    %10746 = vmatpush1.msra.mxu0 0.0
    %10747 = vmatprep.subr.mxu0 0.0
    %10748 = vmatpush1.msra.mxu0 0.0
    %10749 = vmatprep.subr.mxu0 0.0
    %10750 = vmatpush1.msra.mxu0 0.0
    %10751 = vmatprep.subr.mxu0 0.0
    %10752 = vmatpush1.msra.mxu0 0.0
    %10753 = vmatprep.subr.mxu0 0.0
    %10754 = vmatpush1.msra.mxu0 0.0
    %10755 = vmatprep.subr.mxu0 0.0
    %10756 = vmatpush1.msra.mxu0 0.0
    %10757 = vmatprep.subr.mxu0 0.0
    %10758 = vmatpush1.msra.mxu0 0.0
    %10759 = vmatprep.subr.mxu0 0.0
    %10760 = vmatpush1.msra.mxu0 0.0
    %10761 = vmatprep.subr.mxu0 0.0
    %10762 = vmatpush1.msra.mxu0 0.0
    %10763 = vmatprep.subr.mxu0 0.0
    %10764 = vmatpush1.msra.mxu0 0.0
    %10765 = vmatprep.subr.mxu0 0.0
    %10766 = vmatpush1.msra.mxu0 0.0
    %10767 = vmatprep.subr.mxu0 0.0
    %10768 = vmatpush1.msra.mxu0 0.0
    %10769 = vmatprep.subr.mxu0 0.0
    %10770 = vmatpush1.msra.mxu0 0.0
    %10771 = vmatprep.mubr.f32.mxu0 0.0
    %10772 = vmatmul.mubr.f32.gmra.mrb[0].mxu0 %v10705
    %v10773 = vpop.f32.mrb[0].mxu0
    %v10774 = vadd.f32 0.0, %v10773
    %v10775 = vpop.f32.mrb[0].mxu0
    %10776 = vdwg.mxu0
    %v10778 = vsel %vm7419, %v10263, 0
    %10780 = vmatprep.subr.mxu0 0.0
    %10781 = vmatpush1.msra.mxu0 %v8012
    %10782 = vmatprep.subr.mxu0 0.0
    %10783 = vmatpush1.msra.mxu0 0.0
    %10784 = vmatprep.subr.mxu0 0.0
    %10785 = vmatpush1.msra.mxu0 0.0
    %10786 = vmatprep.subr.mxu0 0.0
    %10787 = vmatpush1.msra.mxu0 0.0
    %10788 = vmatprep.subr.mxu0 0.0
    %10789 = vmatpush1.msra.mxu0 0.0
    %10790 = vmatprep.subr.mxu0 0.0
    %10791 = vmatpush1.msra.mxu0 0.0
    %10792 = vmatprep.subr.mxu0 0.0
    %10793 = vmatpush1.msra.mxu0 0.0
    %10794 = vmatprep.subr.mxu0 0.0
    %10795 = vmatpush1.msra.mxu0 0.0
    %10796 = vmatprep.subr.mxu0 0.0
    %10797 = vmatpush1.msra.mxu0 0.0
    %10798 = vmatprep.subr.mxu0 0.0
    %10799 = vmatpush1.msra.mxu0 0.0
    %10800 = vmatprep.subr.mxu0 0.0
    %10801 = vmatpush1.msra.mxu0 0.0
    %10802 = vmatprep.subr.mxu0 0.0
    %10803 = vmatpush1.msra.mxu0 0.0
    %10804 = vmatprep.subr.mxu0 0.0
    %10805 = vmatpush1.msra.mxu0 0.0
    %10806 = vmatprep.subr.mxu0 0.0
    %10807 = vmatpush1.msra.mxu0 0.0
    %10808 = vmatprep.subr.mxu0 0.0
    %10809 = vmatpush1.msra.mxu0 0.0
    %10810 = vmatprep.subr.mxu0 0.0
    %10811 = vmatpush1.msra.mxu0 0.0
    %10812 = vmatprep.subr.mxu0 0.0
    %10813 = vmatpush1.msra.mxu0 0.0
    %10814 = vmatprep.subr.mxu0 0.0
    %10815 = vmatpush1.msra.mxu0 0.0
    %10816 = vmatprep.subr.mxu0 0.0
    %10817 = vmatpush1.msra.mxu0 0.0
    %10818 = vmatprep.subr.mxu0 0.0
    %10819 = vmatpush1.msra.mxu0 0.0
    %10820 = vmatprep.subr.mxu0 0.0
    %10821 = vmatpush1.msra.mxu0 0.0
    %10822 = vmatprep.subr.mxu0 0.0
    %10823 = vmatpush1.msra.mxu0 0.0
    %10824 = vmatprep.subr.mxu0 0.0
    %10825 = vmatpush1.msra.mxu0 0.0
    %10826 = vmatprep.subr.mxu0 0.0
    %10827 = vmatpush1.msra.mxu0 0.0
    %10828 = vmatprep.subr.mxu0 0.0
    %10829 = vmatpush1.msra.mxu0 0.0
    %10830 = vmatprep.subr.mxu0 0.0
    %10831 = vmatpush1.msra.mxu0 0.0
    %10832 = vmatprep.subr.mxu0 0.0
    %10833 = vmatpush1.msra.mxu0 0.0
    %10834 = vmatprep.subr.mxu0 0.0
    %10835 = vmatpush1.msra.mxu0 0.0
    %10836 = vmatprep.subr.mxu0 0.0
    %10837 = vmatpush1.msra.mxu0 0.0
    %10838 = vmatprep.subr.mxu0 0.0
    %10839 = vmatpush1.msra.mxu0 0.0
    %10840 = vmatprep.subr.mxu0 0.0
    %10841 = vmatpush1.msra.mxu0 0.0
    %10842 = vmatprep.subr.mxu0 0.0
    %10843 = vmatpush1.msra.mxu0 0.0
    %10844 = vmatprep.mubr.f32.mxu0 0.0
    %10845 = vmatmul.mubr.f32.gmra.mrb[0].mxu0 %v10778
    %v10846 = vpop.f32.mrb[0].mxu0
    %v10847 = vadd.f32 0.0, %v10846
    %v10848 = vpop.f32.mrb[0].mxu0
    %10849 = vdwg.mxu0
    %v10851 = vsel %vm7419, %v10336, 0
    %10853 = vmatprep.subr.mxu0 0.0
    %10854 = vmatpush1.msra.mxu0 %v8012
    %10855 = vmatprep.subr.mxu0 0.0
    %10856 = vmatpush1.msra.mxu0 0.0
    %10857 = vmatprep.subr.mxu0 0.0
    %10858 = vmatpush1.msra.mxu0 0.0
    %10859 = vmatprep.subr.mxu0 0.0
    %10860 = vmatpush1.msra.mxu0 0.0
    %10861 = vmatprep.subr.mxu0 0.0
    %10862 = vmatpush1.msra.mxu0 0.0
    %10863 = vmatprep.subr.mxu0 0.0
    %10864 = vmatpush1.msra.mxu0 0.0
    %10865 = vmatprep.subr.mxu0 0.0
    %10866 = vmatpush1.msra.mxu0 0.0
    %10867 = vmatprep.subr.mxu0 0.0
    %10868 = vmatpush1.msra.mxu0 0.0
    %10869 = vmatprep.subr.mxu0 0.0
    %10870 = vmatpush1.msra.mxu0 0.0
    %10871 = vmatprep.subr.mxu0 0.0
    %10872 = vmatpush1.msra.mxu0 0.0
    %10873 = vmatprep.subr.mxu0 0.0
    %10874 = vmatpush1.msra.mxu0 0.0
    %10875 = vmatprep.subr.mxu0 0.0
    %10876 = vmatpush1.msra.mxu0 0.0
    %10877 = vmatprep.subr.mxu0 0.0
    %10878 = vmatpush1.msra.mxu0 0.0
    %10879 = vmatprep.subr.mxu0 0.0
    %10880 = vmatpush1.msra.mxu0 0.0
    %10881 = vmatprep.subr.mxu0 0.0
    %10882 = vmatpush1.msra.mxu0 0.0
    %10883 = vmatprep.subr.mxu0 0.0
    %10884 = vmatpush1.msra.mxu0 0.0
    %10885 = vmatprep.subr.mxu0 0.0
    %10886 = vmatpush1.msra.mxu0 0.0
    %10887 = vmatprep.subr.mxu0 0.0
    %10888 = vmatpush1.msra.mxu0 0.0
    %10889 = vmatprep.subr.mxu0 0.0
    %10890 = vmatpush1.msra.mxu0 0.0
    %10891 = vmatprep.subr.mxu0 0.0
    %10892 = vmatpush1.msra.mxu0 0.0
    %10893 = vmatprep.subr.mxu0 0.0
    %10894 = vmatpush1.msra.mxu0 0.0
    %10895 = vmatprep.subr.mxu0 0.0
    %10896 = vmatpush1.msra.mxu0 0.0
    %10897 = vmatprep.subr.mxu0 0.0
    %10898 = vmatpush1.msra.mxu0 0.0
    %10899 = vmatprep.subr.mxu0 0.0
    %10900 = vmatpush1.msra.mxu0 0.0
    %10901 = vmatprep.subr.mxu0 0.0
    %10902 = vmatpush1.msra.mxu0 0.0
    %10903 = vmatprep.subr.mxu0 0.0
    %10904 = vmatpush1.msra.mxu0 0.0
    %10905 = vmatprep.subr.mxu0 0.0
    %10906 = vmatpush1.msra.mxu0 0.0
    %10907 = vmatprep.subr.mxu0 0.0
    %10908 = vmatpush1.msra.mxu0 0.0
    %10909 = vmatprep.subr.mxu0 0.0
    %10910 = vmatpush1.msra.mxu0 0.0
    %10911 = vmatprep.subr.mxu0 0.0
    %10912 = vmatpush1.msra.mxu0 0.0
    %10913 = vmatprep.subr.mxu0 0.0
    %10914 = vmatpush1.msra.mxu0 0.0
    %10915 = vmatprep.subr.mxu0 0.0
    %10916 = vmatpush1.msra.mxu0 0.0
    %10917 = vmatprep.mubr.f32.mxu0 0.0
    %10918 = vmatmul.mubr.f32.gmra.mrb[0].mxu0 %v10851
    %v10919 = vpop.f32.mrb[0].mxu0
    %v10920 = vadd.f32 0.0, %v10919
    %v10921 = vpop.f32.mrb[0].mxu0
    %10922 = vdwg.mxu0
    %v10923 = vsub.f32 %v3575, %v8081
    %v10924 = vsub.f32 %v3645, %v8154
    %v10925 = vsub.f32 %v3715, %v8227
    %v10926 = vsub.f32 %v3785, %v8300
    %v10927 = vsub.f32 %v3855, %v8373
    %v10928 = vsub.f32 %v3925, %v8446
    %v10929 = vsub.f32 %v3995, %v8519
    %v10930 = vsub.f32 %v4065, %v8592
    %v10931 = vsub.f32 %v4985, %v10409
    %v10932 = vsub.f32 %v5055, %v10482
    %v10933 = vsub.f32 %v5125, %v10555
    %v10934 = vsub.f32 %v5195, %v10628
    %v10935 = vsub.f32 %v5265, %v10701
    %v10936 = vsub.f32 %v5335, %v10774
    %v10937 = vsub.f32 %v5405, %v10847
    %v10938 = vsub.f32 %v5475, %v10920
    %v10939 = vsub.f32 %v10923, %v10931
    %v10940 = vsub.f32 %v10924, %v10932
    %v10941 = vsub.f32 %v10925, %v10933
    %v10942 = vsub.f32 %v10926, %v10934
    %v10943 = vsub.f32 %v10927, %v10935
    %v10944 = vsub.f32 %v10928, %v10936
    %v10945 = vsub.f32 %v10929, %v10937
    %v10946 = vsub.f32 %v10930, %v10938
    %v10947 = vand.u32 2147483647, %v10939
    %v10948 = vand.u32 2147483647, %v10940
    %v10949 = vand.u32 2147483647, %v10941
    %v10950 = vand.u32 2147483647, %v10942
    %v10951 = vand.u32 2147483647, %v10943
    %v10952 = vand.u32 2147483647, %v10944
    %v10953 = vand.u32 2147483647, %v10945
    %v10954 = vand.u32 2147483647, %v10946
    %vm10955 = vcmask 27648
    %v10956 = vsel %vm10955, %v10947, 0.0
    %v10957 = vsel %vm10955, %v10948, 0.0
    %v10958 = vadd.f32 %v10956, %v10957
    %v10959 = vsel %vm10955, %v10949, 0.0
    %v10960 = vadd.f32 %v10958, %v10959
    %v10961 = vsel %vm10955, %v10950, 0.0
    %v10962 = vadd.f32 %v10960, %v10961
    %v10963 = vsel %vm10955, %v10951, 0.0
    %v10964 = vadd.f32 %v10962, %v10963
    %v10965 = vsel %vm10955, %v10952, 0.0
    %v10966 = vadd.f32 %v10964, %v10965
    %v10967 = vsel %vm10955, %v10953, 0.0
    %v10968 = vadd.f32 %v10966, %v10967
    %v10969 = vsel %vm10955, %v10954, 0.0
    %v10970 = vadd.f32 %v10968, %v10969
    %10971 = vadd.xlane.f32.xlu0 %v10970
    %v10972 = vpop.xlane.xlu0 %10971
    %v10973 = vrot.slane %v10972, 4
    %v10974 = vadd.f32 %v10972, %v10973
    %v10975 = vrot.slane %v10974, 2
    %v10976 = vadd.f32 %v10974, %v10975
    %v10977 = vrot.slane %v10976, 1
    %v10978 = vadd.f32 %v10976, %v10977
    %s10979 = vtos %v10978
    %v10980 = vstv %s10979
    %10981 = vst [vmem:[%s16] sm:$0xff] %v10980
    %v10982 = vsub.f32 %v6905, %v9241
    %v10983 = vsub.f32 %v6978, %v9314
    %v10984 = vsub.f32 %v7051, %v9387
    %v10985 = vsub.f32 %v7124, %v9460
    %v10986 = vsub.f32 %v7197, %v9533
    %v10987 = vsub.f32 %v7270, %v9606
    %v10988 = vsub.f32 %v7343, %v9679
    %v10989 = vsub.f32 %v7416, %v9752
    %v10990 = vand.u32 2147483647, %v10982
    %v10991 = vand.u32 2147483647, %v10983
    %v10992 = vand.u32 2147483647, %v10984
    %v10993 = vand.u32 2147483647, %v10985
    %v10994 = vand.u32 2147483647, %v10986
    %v10995 = vand.u32 2147483647, %v10987
    %v10996 = vand.u32 2147483647, %v10988
    %v10997 = vand.u32 2147483647, %v10989
    %vm10998 = vcmask 9216
    %v10999 = vsel %vm10998, %v10990, 0.0
    %v11000 = vsel %vm10998, %v10991, 0.0
    %v11001 = vadd.f32 %v10999, %v11000
    %v11002 = vsel %vm10998, %v10992, 0.0
    %v11003 = vadd.f32 %v11001, %v11002
    %v11004 = vsel %vm10998, %v10993, 0.0
    %v11005 = vadd.f32 %v11003, %v11004
    %v11006 = vsel %vm10998, %v10994, 0.0
    %v11007 = vadd.f32 %v11005, %v11006
    %v11008 = vsel %vm10998, %v10995, 0.0
    %v11009 = vadd.f32 %v11007, %v11008
    %v11010 = vsel %vm10998, %v10996, 0.0
    %v11011 = vadd.f32 %v11009, %v11010
    %v11012 = vsel %vm10998, %v10997, 0.0
    %v11013 = vadd.f32 %v11011, %v11012
    %11014 = vadd.xlane.f32.xlu0 %v11013
    %v11015 = vpop.xlane.xlu0 %11014
    %v11016 = vrot.slane %v11015, 4
    %v11017 = vadd.f32 %v11015, %v11016
    %v11018 = vrot.slane %v11017, 2
    %v11019 = vadd.f32 %v11017, %v11018
    %v11020 = vrot.slane %v11019, 1
    %v11021 = vadd.f32 %v11019, %v11020
    %s11022 = vtos %v11021
    %v11023 = vstv %s11022
    %11024 = vst [vmem:[%s17] sm:$0xff] %v11023
    // Predicated region
    $region82: #{laplacian_pyramid_loss.1} parent=1 // pred_check
      _
    $region83: #{laplacian_pyramid_loss.1} parent=1 // pred_check_branch
      %11026 = sbr.rel (0) target = $region85
    $region84: #{laplacian_pyramid_loss.1} parent=1 // pred_region
      _
    $region85: #{laplacian_pyramid_loss.1} parent=1 // pred_fallthru
      _
    // Predicated region
    $region86: #{laplacian_pyramid_loss.1} parent=1 // pred_check
      _
    $region87: #{laplacian_pyramid_loss.1} parent=1 // pred_check_branch
      %11028 = sbr.rel (0) target = $region89
    $region88: #{laplacian_pyramid_loss.1} parent=1 // pred_region
      _
    $region89: #{laplacian_pyramid_loss.1} parent=1 // pred_fallthru
      _
    // Predicated region
    $region90: #{laplacian_pyramid_loss.1} parent=1 // pred_check
      _
    $region91: #{laplacian_pyramid_loss.1} parent=1 // pred_check_branch
      %11030 = sbr.rel (0) target = $region93
    $region92: #{laplacian_pyramid_loss.1} parent=1 // pred_region
      _
    $region93: #{laplacian_pyramid_loss.1} parent=1 // pred_fallthru
      _
    // Predicated region
    $region94: #{laplacian_pyramid_loss.1} parent=1 // pred_check
      _
    $region95: #{laplacian_pyramid_loss.1} parent=1 // pred_check_branch
      %11032 = sbr.rel (0) target = $region97
    $region96: #{laplacian_pyramid_loss.1} parent=1 // pred_region
      _
    $region97: #{laplacian_pyramid_loss.1} parent=1 // pred_fallthru
      _
    // Predicated region
    $region98: #{laplacian_pyramid_loss.1} parent=1 // pred_check
      _
    $region99: #{laplacian_pyramid_loss.1} parent=1 // pred_check_branch
      %11034 = sbr.rel (0) target = $region101
    $region100: #{laplacian_pyramid_loss.1} parent=1 // pred_region
      _
    $region101: #{laplacian_pyramid_loss.1} parent=1 // pred_fallthru
      _
    // Predicated region
    $region102: #{laplacian_pyramid_loss.1} parent=1 // pred_check
      _
    $region103: #{laplacian_pyramid_loss.1} parent=1 // pred_check_branch
      %11036 = sbr.rel (0) target = $region105
    $region104: #{laplacian_pyramid_loss.1} parent=1 // pred_region
      _
    $region105: #{laplacian_pyramid_loss.1} parent=1 // pred_fallthru
      _
    // Predicated region
    $region106: #{laplacian_pyramid_loss.1} parent=1 // pred_check
      _
    $region107: #{laplacian_pyramid_loss.1} parent=1 // pred_check_branch
      %11038 = sbr.rel (0) target = $region109
    $region108: #{laplacian_pyramid_loss.1} parent=1 // pred_region
      _
    $region109: #{laplacian_pyramid_loss.1} parent=1 // pred_fallthru
      _
    // Predicated region
    $region110: #{laplacian_pyramid_loss.1} parent=1 // pred_check
      _
    $region111: #{laplacian_pyramid_loss.1} parent=1 // pred_check_branch
      %11040 = sbr.rel (0) target = $region113
    $region112: #{laplacian_pyramid_loss.1} parent=1 // pred_region
      _
    $region113: #{laplacian_pyramid_loss.1} parent=1 // pred_fallthru
      _
    %11041 = vsyncpa [#allocation3], 1
    %11042 = vsyncpa [#allocation5], 1
    %11043 = vsyncpa [#allocation8], 1
    %11044 = vsyncpa [#allocation11], 1

</llo_original>
